<compile_context>
chip_gen: v7x
topology: tpu7x:2x2x1
jax: 0.10.0
libtpu: 0.0.40
codegen_flags: <defaults>
</compile_context>

<pallas_src>
import functools

import jax
import jax.numpy as jnp
from jax import lax
from jax.experimental import pallas as pl
from jax.experimental.pallas import tpu as pltpu

# ----------------- small, self-consistent config -----------------
IN_CH = 6          # in_channels
NUM_CLASSES = 5    # num_classes
ENC_DIM = 32       # encoder_dim
DEPTH = 2          # depth
NUM_HEADS = 4      # num_heads
MLP_RATIO = 2.0    # mlp_ratio
NUM_GROUPS = 16    # embed_args.num_groups
GROUP_SIZE = 8     # embed_args.group_size
EMBED_DIM = 32     # embed_args.embed_dim
NUM_POINTS = [32, 16]
FP_MLPS = [[32, 32], [32, 32]]
HEAD_HIDDEN = 64
B = 2
N_PTS = 64
LN_EPS = 1e-6      # norm_args.eps


def _full_spec(shape):
    """Whole-array block, replicated across (1-D) grid steps."""
    nd = len(shape)
    return pl.BlockSpec(tuple(shape), lambda i, _nd=nd: (0,) * _nd)


def _gelu(x):
    # TODO(synk): PyTorch nn.GELU default is exact erf-GELU; tanh approximation
    # is used here for guaranteed Mosaic lowering (small numeric drift).
    return jax.nn.gelu(x, approximate=True)


# ===================== fused ViT encoder kernel =====================
# One grid step == one batch element.  Everything VMEM / vreg resident.

def _encoder_kernel(*args, depth, num_heads, eps, group_size, num_groups):
    n_in = 3 + 10 + 12 * depth + 2
    grouped_ref = args[0]      # (1, K*G, Cin)   rows ordered k-major, g-minor
    center_ref = args[1]       # (1, G, 3)
    cls_ref = args[2]          # (1, D)          cls_token + cls_pos
    wrefs = args[3:n_in]
    out_ref = args[n_in]       # (1, G, D)
    x_scr = args[n_in + 1]     # VMEM scratch (G+1, D)

    def rd(i):
        return wrefs[i][...]

    pe1_w, pe1_b, pe2_w, pe2_b = rd(0), rd(1), rd(2), rd(3)
    proj_w, proj_b = rd(4), rd(5)
    pos1_w, pos1_b, pos2_w, pos2_b = rd(6), rd(7), rd(8), rd(9)

    # ---- patch embedding: shared MLP + max over the K neighbours ----
    pts = grouped_ref[0]                                                  # (K*G, Cin)
    h = _gelu(jnp.dot(pts, pe1_w, preferred_element_type=jnp.float32) + pe1_b)
    h = jnp.dot(h, pe2_w, preferred_element_type=jnp.float32) + pe2_b     # (K*G, E)
    tok = h[0:num_groups, :]
    for kk in range(1, group_size):                                       # epilogue max
        tok = jnp.maximum(tok, h[kk * num_groups:(kk + 1) * num_groups, :])
    tok = jnp.dot(tok, proj_w, preferred_element_type=jnp.float32) + proj_b  # (G, D)

    # ---- positional embedding MLP on centre xyz ----
    ctr = center_ref[0]                                                   # (G, 3)
    pos = _gelu(jnp.dot(ctr, pos1_w, preferred_element_type=jnp.float32) + pos1_b)
    pos = jnp.dot(pos, pos2_w, preferred_element_type=jnp.float32) + pos2_b  # (G, D)

    # ---- assemble tokens (cls placed last: attention is permutation equivariant,
    #      group-token outputs are unchanged; keeps all slices 8-aligned) ----
    x_scr[0:num_groups, :] = tok + pos
    x_scr[num_groups:num_groups + 1, :] = cls_ref[...]
    x = x_scr[...]                                                        # (G+1, D)

    D = x.shape[-1]
    dh = D // num_heads
    scale = 1.0 / (dh ** 0.5)

    def ln(v, g, b):
        mu = jnp.mean(v, axis=-1, keepdims=True)
        var = jnp.mean((v - mu) ** 2, axis=-1, keepdims=True)
        return (v - mu) * lax.rsqrt(var + eps) * g + b

    base = 10
    for blk in range(depth):
        o = base + blk * 12
        ln1_g, ln1_b = rd(o), rd(o + 1)
        qkv_w, qkv_b = rd(o + 2), rd(o + 3)
        pw, pb = rd(o + 4), rd(o + 5)
        ln2_g, ln2_b = rd(o + 6), rd(o + 7)
        f1w, f1b = rd(o + 8), rd(o + 9)
        f2w, f2b = rd(o + 10), rd(o + 11)

        # --- attention sub-block (pre-LN), per-head via static lane slices ---
        xn = ln(x, ln1_g, ln1_b)
        qkv = jnp.dot(xn, qkv_w, preferred_element_type=jnp.float32) + qkv_b  # (S, 3D)
        attn = None
        for hh in range(num_heads):
            q = qkv[:, hh * dh:(hh + 1) * dh]
            k = qkv[:, D + hh * dh:D + (hh + 1) * dh]
            v = qkv[:, 2 * D + hh * dh:2 * D + (hh + 1) * dh]
            s = lax.dot_general(q, k, (((1,), (1,)), ((), ())),
                                preferred_element_type=jnp.float32) * scale   # (S, S)
            s = s - jnp.max(s, axis=-1, keepdims=True)
            p = jnp.exp(s)
            p = p * pl.reciprocal(jnp.sum(p, axis=-1, keepdims=True), approx=True)
            o_h = jnp.dot(p, v, preferred_element_type=jnp.float32)           # (S, dh)
            # fold the head-concat directly into the output projection
            contrib = jnp.dot(o_h, pw[hh * dh:(hh + 1) * dh, :],
                              preferred_element_type=jnp.float32)             # (S, D)
            attn = contrib if attn is None else attn + contrib
        x = x + attn + pb

        # --- MLP sub-block (pre-LN) ---
        xn2 = ln(x, ln2_g, ln2_b)
        h1 = _gelu(jnp.dot(xn2, f1w, preferred_element_type=jnp.float32) + f1b)
        x = x + jnp.dot(h1, f2w, preferred_element_type=jnp.float32) + f2b

    fin_g, fin_b = rd(base + depth * 12), rd(base + depth * 12 + 1)
    x = ln(x, fin_g, fin_b)
    out_ref[0] = x[0:num_groups, :]          # group tokens only (cls dropped)


def run_encoder(p, grouped_kg, center_xyz):
    """grouped_kg: (B, K*G, Cin); center_xyz: (B, G, 3) -> tokens (B, G, ENC_DIM)."""
    Bb = grouped_kg.shape[0]
    cls_init = (p["cls_token"] + p["cls_pos"]).reshape(1, ENC_DIM)

    def b2(v):  # biases / LN params as 2-D lane vectors
        return v.reshape(1, -1)

    ops = [grouped_kg, center_xyz, cls_init,
           p["pe1"][0], b2(p["pe1"][1]), p["pe2"][0], b2(p["pe2"][1]),
           p["proj"][0], b2(p["proj"][1]),
           p["pos1"][0], b2(p["pos1"][1]), p["pos2"][0], b2(p["pos2"][1])]
    for blk in p["blocks"]:
        ops += [b2(blk["ln1"][0]), b2(blk["ln1"][1]),
                blk["qkv"][0], b2(blk["qkv"][1]),
                blk["attn_proj"][0], b2(blk["attn_proj"][1]),
                b2(blk["ln2"][0]), b2(blk["ln2"][1]),
                blk["fc1"][0], b2(blk["fc1"][1]),
                blk["fc2"][0], b2(blk["fc2"][1])]
    ops += [b2(p["final_ln"][0]), b2(p["final_ln"][1])]

    in_specs = [
        pl.BlockSpec((1, GROUP_SIZE * NUM_GROUPS, IN_CH), lambda b: (b, 0, 0)),
        pl.BlockSpec((1, NUM_GROUPS, 3), lambda b: (b, 0, 0)),
    ] + [_full_spec(o.shape) for o in ops[2:]]

    return pl.pallas_call(
        functools.partial(_encoder_kernel, depth=DEPTH, num_heads=NUM_HEADS,
                          eps=LN_EPS, group_size=GROUP_SIZE, num_groups=NUM_GROUPS),
        out_shape=jax.ShapeDtypeStruct((Bb, NUM_GROUPS, ENC_DIM), jnp.float32),
        grid=(Bb,),
        in_specs=in_specs,
        out_specs=pl.BlockSpec((1, NUM_GROUPS, ENC_DIM), lambda b: (b, 0, 0)),
        scratch_shapes=[pltpu.VMEM((NUM_GROUPS + 1, ENC_DIM), jnp.float32)],
        compiler_params=pltpu.CompilerParams(dimension_semantics=("parallel",)),
    )(*ops)


# ===================== fused MLP-chain kernel (FP stacks / seg head) =====================

def _mlp_kernel(*args, acts):
    n = len(acts)
    x = args[0][...]
    out_ref = args[1 + 2 * n]
    for i in range(n):
        w = args[1 + 2 * i][...]
        b = args[2 + 2 * i][...]
        x = jnp.dot(x, w, preferred_element_type=jnp.float32) + b
        if acts[i] == "gelu":
            x = _gelu(x)
        elif acts[i] == "relu":
            x = jnp.maximum(x, 0.0)
    out_ref[...] = x.astype(out_ref.dtype)


def fused_mlp(x, layers, acts):
    """y = chain of (x @ w + b -> act).  x: (M, K); single grid step, all in VMEM."""
    M = x.shape[0]
    n_out = layers[-1][0].shape[1]
    ops = [x]
    for (w, b) in layers:
        ops += [w, b.reshape(1, -1)]
    return pl.pallas_call(
        functools.partial(_mlp_kernel, acts=tuple(acts)),
        out_shape=jax.ShapeDtypeStruct((M, n_out), jnp.float32),
        grid=(1,),
        in_specs=[_full_spec(o.shape) for o in ops],
        out_specs=pl.BlockSpec((M, n_out), lambda i: (0, 0)),
        compiler_params=pltpu.CompilerParams(dimension_semantics=("arbitrary",)),
    )(*ops)


# ===================== plain-JAX glue (index search / gathers) =====================
# TODO(synk): furthest_point_sample is a sequential data-dependent argmax; kept in JAX.

def furthest_point_sample(xyz, npoint):
    """xyz: (B, N, 3) -> int32 indices (B, npoint)."""
    Bb, N, _ = xyz.shape

    def body(i, state):
        idx, dists, farthest = state
        idx = idx.at[:, i].set(farthest)
        centroid = jax.vmap(lambda p, j: p[j])(xyz, farthest)        # (B, 3)
        d = jnp.sum((xyz - centroid[:, None, :]) ** 2, axis=-1)      # (B, N)
        dists = jnp.minimum(dists, d)
        farthest = jnp.argmax(dists, axis=-1).astype(jnp.int32)
        return idx, dists, farthest

    idx0 = jnp.zeros((Bb, npoint), jnp.int32)
    dists0 = jnp.full((Bb, N), 1e10, jnp.float32)
    far0 = jnp.zeros((Bb,), jnp.int32)
    idx, _, _ = lax.fori_loop(0, npoint, body, (idx0, dists0, far0))
    return idx


def gather_points(points_bnc, idx):
    """points: (B, N, C), idx: (B, ...) -> (B, ..., C)."""
    return jax.vmap(lambda p, i: p[i])(points_bnc, idx)


def sqdist(a, b):
    """a: (B, M, 3), b: (B, N, 3) -> (B, M, N) squared distances."""
    return jnp.sum((a[:, :, None, :] - b[:, None, :, :]) ** 2, axis=-1)


def fp_concat(xyz1, xyz2, feat1_bcn, feat2_bnc):
    """3-NN inverse-distance interpolation of coarse feat2 onto xyz1 + skip concat.
    xyz1: (B,N1,3) fine; xyz2: (B,N2,3) coarse; feat1: (B,C1,N1) channel-first skip;
    feat2: (B,N2,C2) row layout.  Returns (B, N1, C2+C1)."""
    d2 = sqdist(xyz1, xyz2)                                          # (B, N1, N2)
    neg, idx = lax.top_k(-d2, 3)                                     # (B, N1, 3)
    dist = jnp.sqrt(jnp.maximum(-neg, 0.0))
    w = 1.0 / (dist + 1e-8)
    w = w / jnp.sum(w, axis=-1, keepdims=True)
    gathered = gather_points(feat2_bnc, idx)                         # (B, N1, 3, C2)
    interp = jnp.sum(gathered * w[..., None], axis=2)                # (B, N1, C2)
    return jnp.concatenate([interp, jnp.transpose(feat1_bcn, (0, 2, 1))], axis=-1)


# ===================== parameter init (deterministic) =====================

def init_params(key):
    keys = iter(jax.random.split(key, 128))

    def lin(cin, cout):
        w = jax.random.normal(next(keys), (cin, cout), jnp.float32) * (2.0 / cin) ** 0.5
        b = jnp.zeros((cout,), jnp.float32)
        return (w, b)

    p = {}
    # patch embed (groupembed, feature_type='fj'): shared MLP Cin -> 32 -> EMBED_DIM, max over K
    # TODO(synk): BatchNorm inside the shared MLP / FP blocks / seg head is omitted.
    p["pe1"] = lin(IN_CH, 32)
    p["pe2"] = lin(32, EMBED_DIM)
    p["proj"] = lin(EMBED_DIM, ENC_DIM)
    p["pos1"] = lin(3, 32)
    p["pos2"] = lin(32, ENC_DIM)
    p["cls_token"] = jnp.zeros((1, 1, ENC_DIM), jnp.float32)
    p["cls_pos"] = jax.random.normal(next(keys), (1, 1, ENC_DIM), jnp.float32) * 0.02

    blocks = []
    hid = int(ENC_DIM * MLP_RATIO)
    for _ in range(DEPTH):
        blk = {
            "ln1": (jnp.ones(ENC_DIM, jnp.float32), jnp.zeros(ENC_DIM, jnp.float32)),
            "qkv": (jax.random.normal(next(keys), (ENC_DIM, 3 * ENC_DIM), jnp.float32)
                    * (2.0 / ENC_DIM) ** 0.5,
                    jnp.zeros((3 * ENC_DIM,), jnp.float32)),  # qkv_bias=False -> zero bias
            "attn_proj": lin(ENC_DIM, ENC_DIM),
            "ln2": (jnp.ones(ENC_DIM, jnp.float32), jnp.zeros(ENC_DIM, jnp.float32)),
            "fc1": lin(ENC_DIM, hid),
            "fc2": lin(hid, ENC_DIM),
        }
        blocks.append(blk)
    p["blocks"] = blocks
    p["final_ln"] = (jnp.ones(ENC_DIM, jnp.float32), jnp.zeros(ENC_DIM, jnp.float32))

    # PointNet2Decoder FP modules (skip_channel_list = [IN_CH]*(len(NUM_POINTS)+1)+[ENC_DIM])
    fps = []
    for k_i in range(len(FP_MLPS)):
        pre = FP_MLPS[k_i + 1][-1] if k_i + 1 < len(FP_MLPS) else ENC_DIM
        cin = pre + IN_CH
        layers = []
        for cout in FP_MLPS[k_i]:
            layers.append(lin(cin, cout))
            cin = cout
        fps.append(layers)
    p["fp"] = fps

    # SceneSegHeadPointNet: 1x1 conv -> ReLU -> 1x1 conv
    p["head1"] = lin(FP_MLPS[0][0], HEAD_HIDDEN)
    p["head2"] = lin(HEAD_HIDDEN, NUM_CLASSES)
    return p


# ===================== model forward =====================

def point_vit_encoder(p, xyz, features):
    """Returns (center_xyz (B,G,3), group tokens (B, G, ENC_DIM) row layout)."""
    Bb = xyz.shape[0]
    center_idx = furthest_point_sample(xyz, NUM_GROUPS)                  # (B, G)
    center_xyz = gather_points(xyz, center_idx)                          # (B, G, 3)
    d2 = sqdist(center_xyz, xyz)                                         # (B, G, N)
    _, knn_idx = lax.top_k(-d2, GROUP_SIZE)                              # (B, G, K)
    feats_bnc = jnp.transpose(features, (0, 2, 1))                       # (B, N, Cin)
    grouped = gather_points(feats_bnc, knn_idx)                          # (B, G, K, Cin)
    # k-major / g-minor row ordering so the in-kernel max over K uses aligned slices
    grouped_kg = jnp.transpose(grouped, (0, 2, 1, 3)).reshape(
        Bb, GROUP_SIZE * NUM_GROUPS, IN_CH)
    tokens = run_encoder(p, grouped_kg, center_xyz)                      # (B, G, D)
    return center_xyz, tokens


def point_vit_seg_forward(params, xyz, features):
    """xyz: (B, N, 3); features: (B, IN_CH, N) -> logits (B, NUM_CLASSES, N)."""
    Bb, N, _ = xyz.shape
    center_xyz, enc_rows = point_vit_encoder(params, xyz, features)      # (B,G,3), (B,G,D)

    l_xyz, skip_cf = [xyz], [features]
    for npoints in NUM_POINTS[:-1]:
        idx = furthest_point_sample(xyz, npoints)                        # (B, npoints)
        l_xyz.append(gather_points(xyz, idx))                            # (B, npoints, 3)
        skip_cf.append(jax.vmap(lambda f, i: f[:, i])(features, idx))    # (B, C, npoints)
    l_xyz.append(center_xyz)

    # PointNet2Decoder: propagate coarse -> fine (coarsest FP first)
    n_fp = len(FP_MLPS)
    feat_rows = enc_rows                                                 # row layout (B, Nk, C)
    for k in range(n_fp - 1, 0, -1):
        c = fp_concat(l_xyz[k], l_xyz[k + 1], skip_cf[k], feat_rows)     # (B, Nk, Cin_k)
        m = c.shape[0] * c.shape[1]
        y = fused_mlp(c.reshape(m, c.shape[2]), params["fp"][k],
                      ["gelu"] * len(params["fp"][k]))
        feat_rows = y.reshape(c.shape[0], c.shape[1], -1)

    # finest FP stack fused with SceneSegHeadPointNet (conv -> ReLU -> conv)
    c = fp_concat(l_xyz[0], l_xyz[1], skip_cf[0], feat_rows)             # (B, N, Cin_0)
    layers = list(params["fp"][0]) + [params["head1"], params["head2"]]
    acts = ["gelu"] * len(params["fp"][0]) + ["relu", None]
    logits_rows = fused_mlp(c.reshape(Bb * N, -1), layers, acts)         # (B*N, classes)
    logits = jnp.transpose(logits_rows.reshape(Bb, N, NUM_CLASSES), (0, 2, 1))
    return logits


# ===================== main =====================

if __name__ == "__main__":
    key = jax.random.PRNGKey(0)
    k_xyz, k_feat, k_param = jax.random.split(key, 3)
    xyz = jax.random.normal(k_xyz, (B, N_PTS, 3), jnp.float32)
    features = jax.random.normal(k_feat, (B, IN_CH, N_PTS), jnp.float32)
    params = init_params(k_param)

    fwd = jax.jit(point_vit_seg_forward)
    out = fwd(params, xyz, features)
    out = jax.block_until_ready(out)
    assert out.shape == (B, NUM_CLASSES, N_PTS), out.shape
    assert bool(jnp.all(jnp.isfinite(out)))
    print("KERNEL_OK")
</pallas_src>

<mosaic_0001>
module attributes {stable_mosaic.version = 11 : i64} {
  func.func @_encoder_kernel(%arg0: i32, %arg1: memref<1x128x6xf32, #tpu.memory_space<vmem>>, %arg2: memref<1x16x3xf32, #tpu.memory_space<vmem>>, %arg3: memref<1x32xf32, #tpu.memory_space<vmem>>, %arg4: memref<6x32xf32, #tpu.memory_space<vmem>>, %arg5: memref<1x32xf32, #tpu.memory_space<vmem>>, %arg6: memref<32x32xf32, #tpu.memory_space<vmem>>, %arg7: memref<1x32xf32, #tpu.memory_space<vmem>>, %arg8: memref<32x32xf32, #tpu.memory_space<vmem>>, %arg9: memref<1x32xf32, #tpu.memory_space<vmem>>, %arg10: memref<3x32xf32, #tpu.memory_space<vmem>>, %arg11: memref<1x32xf32, #tpu.memory_space<vmem>>, %arg12: memref<32x32xf32, #tpu.memory_space<vmem>>, %arg13: memref<1x32xf32, #tpu.memory_space<vmem>>, %arg14: memref<1x32xf32, #tpu.memory_space<vmem>>, %arg15: memref<1x32xf32, #tpu.memory_space<vmem>>, %arg16: memref<32x96xf32, #tpu.memory_space<vmem>>, %arg17: memref<1x96xf32, #tpu.memory_space<vmem>>, %arg18: memref<32x32xf32, #tpu.memory_space<vmem>>, %arg19: memref<1x32xf32, #tpu.memory_space<vmem>>, %arg20: memref<1x32xf32, #tpu.memory_space<vmem>>, %arg21: memref<1x32xf32, #tpu.memory_space<vmem>>, %arg22: memref<32x64xf32, #tpu.memory_space<vmem>>, %arg23: memref<1x64xf32, #tpu.memory_space<vmem>>, %arg24: memref<64x32xf32, #tpu.memory_space<vmem>>, %arg25: memref<1x32xf32, #tpu.memory_space<vmem>>, %arg26: memref<1x32xf32, #tpu.memory_space<vmem>>, %arg27: memref<1x32xf32, #tpu.memory_space<vmem>>, %arg28: memref<32x96xf32, #tpu.memory_space<vmem>>, %arg29: memref<1x96xf32, #tpu.memory_space<vmem>>, %arg30: memref<32x32xf32, #tpu.memory_space<vmem>>, %arg31: memref<1x32xf32, #tpu.memory_space<vmem>>, %arg32: memref<1x32xf32, #tpu.memory_space<vmem>>, %arg33: memref<1x32xf32, #tpu.memory_space<vmem>>, %arg34: memref<32x64xf32, #tpu.memory_space<vmem>>, %arg35: memref<1x64xf32, #tpu.memory_space<vmem>>, %arg36: memref<64x32xf32, #tpu.memory_space<vmem>>, %arg37: memref<1x32xf32, #tpu.memory_space<vmem>>, %arg38: memref<1x32xf32, #tpu.memory_space<vmem>>, %arg39: memref<1x32xf32, #tpu.memory_space<vmem>>, %arg40: memref<1x16x32xf32, #tpu.memory_space<vmem>>, %arg41: memref<17x32xf32, #tpu.memory_space<vmem>>) attributes {dimension_semantics = [#tpu.dimension_semantics<parallel>], iteration_bounds = array<i64: 2>, scalar_prefetch = 0 : i64, scratch_operands = 1 : i64, tpu.core_type = #tpu.core_type<tc>, window_params = [{transform_indices = @transform_0, window_bounds = array<i64: 1, 128, 6>}, {transform_indices = @transform_1, window_bounds = array<i64: 1, 16, 3>}, {pipeline_mode = #tpu.pipeline_mode<synchronous>, transform_indices = @transform_2, window_bounds = array<i64: 1, 32>}, {pipeline_mode = #tpu.pipeline_mode<synchronous>, transform_indices = @transform_3, window_bounds = array<i64: 6, 32>}, {pipeline_mode = #tpu.pipeline_mode<synchronous>, transform_indices = @transform_4, window_bounds = array<i64: 1, 32>}, {pipeline_mode = #tpu.pipeline_mode<synchronous>, transform_indices = @transform_5, window_bounds = array<i64: 32, 32>}, {pipeline_mode = #tpu.pipeline_mode<synchronous>, transform_indices = @transform_6, window_bounds = array<i64: 1, 32>}, {pipeline_mode = #tpu.pipeline_mode<synchronous>, transform_indices = @transform_7, window_bounds = array<i64: 32, 32>}, {pipeline_mode = #tpu.pipeline_mode<synchronous>, transform_indices = @transform_8, window_bounds = array<i64: 1, 32>}, {pipeline_mode = #tpu.pipeline_mode<synchronous>, transform_indices = @transform_9, window_bounds = array<i64: 3, 32>}, {pipeline_mode = #tpu.pipeline_mode<synchronous>, transform_indices = @transform_10, window_bounds = array<i64: 1, 32>}, {pipeline_mode = #tpu.pipeline_mode<synchronous>, transform_indices = @transform_11, window_bounds = array<i64: 32, 32>}, {pipeline_mode = #tpu.pipeline_mode<synchronous>, transform_indices = @transform_12, window_bounds = array<i64: 1, 32>}, {pipeline_mode = #tpu.pipeline_mode<synchronous>, transform_indices = @transform_13, window_bounds = array<i64: 1, 32>}, {pipeline_mode = #tpu.pipeline_mode<synchronous>, transform_indices = @transform_14, window_bounds = array<i64: 1, 32>}, {pipeline_mode = #tpu.pipeline_mode<synchronous>, transform_indices = @transform_15, window_bounds = array<i64: 32, 96>}, {pipeline_mode = #tpu.pipeline_mode<synchronous>, transform_indices = @transform_16, window_bounds = array<i64: 1, 96>}, {pipeline_mode = #tpu.pipeline_mode<synchronous>, transform_indices = @transform_17, window_bounds = array<i64: 32, 32>}, {pipeline_mode = #tpu.pipeline_mode<synchronous>, transform_indices = @transform_18, window_bounds = array<i64: 1, 32>}, {pipeline_mode = #tpu.pipeline_mode<synchronous>, transform_indices = @transform_19, window_bounds = array<i64: 1, 32>}, {pipeline_mode = #tpu.pipeline_mode<synchronous>, transform_indices = @transform_20, window_bounds = array<i64: 1, 32>}, {pipeline_mode = #tpu.pipeline_mode<synchronous>, transform_indices = @transform_21, window_bounds = array<i64: 32, 64>}, {pipeline_mode = #tpu.pipeline_mode<synchronous>, transform_indices = @transform_22, window_bounds = array<i64: 1, 64>}, {pipeline_mode = #tpu.pipeline_mode<synchronous>, transform_indices = @transform_23, window_bounds = array<i64: 64, 32>}, {pipeline_mode = #tpu.pipeline_mode<synchronous>, transform_indices = @transform_24, window_bounds = array<i64: 1, 32>}, {pipeline_mode = #tpu.pipeline_mode<synchronous>, transform_indices = @transform_25, window_bounds = array<i64: 1, 32>}, {pipeline_mode = #tpu.pipeline_mode<synchronous>, transform_indices = @transform_26, window_bounds = array<i64: 1, 32>}, {pipeline_mode = #tpu.pipeline_mode<synchronous>, transform_indices = @transform_27, window_bounds = array<i64: 32, 96>}, {pipeline_mode = #tpu.pipeline_mode<synchronous>, transform_indices = @transform_28, window_bounds = array<i64: 1, 96>}, {pipeline_mode = #tpu.pipeline_mode<synchronous>, transform_indices = @transform_29, window_bounds = array<i64: 32, 32>}, {pipeline_mode = #tpu.pipeline_mode<synchronous>, transform_indices = @transform_30, window_bounds = array<i64: 1, 32>}, {pipeline_mode = #tpu.pipeline_mode<synchronous>, transform_indices = @transform_31, window_bounds = array<i64: 1, 32>}, {pipeline_mode = #tpu.pipeline_mode<synchronous>, transform_indices = @transform_32, window_bounds = array<i64: 1, 32>}, {pipeline_mode = #tpu.pipeline_mode<synchronous>, transform_indices = @transform_33, window_bounds = array<i64: 32, 64>}, {pipeline_mode = #tpu.pipeline_mode<synchronous>, transform_indices = @transform_34, window_bounds = array<i64: 1, 64>}, {pipeline_mode = #tpu.pipeline_mode<synchronous>, transform_indices = @transform_35, window_bounds = array<i64: 64, 32>}, {pipeline_mode = #tpu.pipeline_mode<synchronous>, transform_indices = @transform_36, window_bounds = array<i64: 1, 32>}, {pipeline_mode = #tpu.pipeline_mode<synchronous>, transform_indices = @transform_37, window_bounds = array<i64: 1, 32>}, {pipeline_mode = #tpu.pipeline_mode<synchronous>, transform_indices = @transform_38, window_bounds = array<i64: 1, 32>}, {transform_indices = @transform_39, window_bounds = array<i64: 1, 16, 32>}]} {
    %c0 = arith.constant 0 : index
    %c0_0 = arith.constant 0 : index
    %0 = vector.load %arg4[%c0, %c0_0] : memref<6x32xf32, #tpu.memory_space<vmem>>, vector<6x32xf32>
    %c0_1 = arith.constant 0 : index
    %c0_2 = arith.constant 0 : index
    %1 = vector.load %arg5[%c0_1, %c0_2] : memref<1x32xf32, #tpu.memory_space<vmem>>, vector<1x32xf32>
    %c0_3 = arith.constant 0 : index
    %c0_4 = arith.constant 0 : index
    %2 = vector.load %arg6[%c0_3, %c0_4] : memref<32x32xf32, #tpu.memory_space<vmem>>, vector<32x32xf32>
    %c0_5 = arith.constant 0 : index
    %c0_6 = arith.constant 0 : index
    %3 = vector.load %arg7[%c0_5, %c0_6] : memref<1x32xf32, #tpu.memory_space<vmem>>, vector<1x32xf32>
    %c0_7 = arith.constant 0 : index
    %c0_8 = arith.constant 0 : index
    %4 = vector.load %arg8[%c0_7, %c0_8] : memref<32x32xf32, #tpu.memory_space<vmem>>, vector<32x32xf32>
    %c0_9 = arith.constant 0 : index
    %c0_10 = arith.constant 0 : index
    %5 = vector.load %arg9[%c0_9, %c0_10] : memref<1x32xf32, #tpu.memory_space<vmem>>, vector<1x32xf32>
    %c0_11 = arith.constant 0 : index
    %c0_12 = arith.constant 0 : index
    %6 = vector.load %arg10[%c0_11, %c0_12] : memref<3x32xf32, #tpu.memory_space<vmem>>, vector<3x32xf32>
    %c0_13 = arith.constant 0 : index
    %c0_14 = arith.constant 0 : index
    %7 = vector.load %arg11[%c0_13, %c0_14] : memref<1x32xf32, #tpu.memory_space<vmem>>, vector<1x32xf32>
    %c0_15 = arith.constant 0 : index
    %c0_16 = arith.constant 0 : index
    %8 = vector.load %arg12[%c0_15, %c0_16] : memref<32x32xf32, #tpu.memory_space<vmem>>, vector<32x32xf32>
    %c0_17 = arith.constant 0 : index
    %c0_18 = arith.constant 0 : index
    %9 = vector.load %arg13[%c0_17, %c0_18] : memref<1x32xf32, #tpu.memory_space<vmem>>, vector<1x32xf32>
    %c0_19 = arith.constant 0 : index
    %c0_20 = arith.constant 0 : index
    %c0_21 = arith.constant 0 : index
    %10 = vector.load %arg1[%c0_19, %c0_20, %c0_21] : memref<1x128x6xf32, #tpu.memory_space<vmem>>, vector<1x128x6xf32>
    %11 = vector.shape_cast %10 : vector<1x128x6xf32> to vector<128x6xf32>
    %cst = arith.constant dense<0.000000e+00> : vector<128x32xf32>
    %12 = tpu.matmul %11, %0, %cst {dimension_numbers = #tpu.dot_dimension_numbers<[1], [0], [0], [1], [0, 0, 1, 1], [], []>} : vector<128x6xf32>, vector<6x32xf32>, vector<128x32xf32> -> vector<128x32xf32>
    %13 = vector.broadcast %1 : vector<1x32xf32> to vector<128x32xf32>
    %14 = arith.addf %12, %13 : vector<128x32xf32>
    %15 = arith.mulf %14, %14 : vector<128x32xf32>
    %16 = arith.mulf %14, %15 : vector<128x32xf32>
    %cst_22 = arith.constant 4.471500e-02 : f32
    %17 = vector.broadcast %cst_22 : f32 to vector<128x32xf32>
    %18 = arith.mulf %17, %16 : vector<128x32xf32>
    %19 = arith.addf %14, %18 : vector<128x32xf32>
    %cst_23 = arith.constant 0.797884583 : f32
    %20 = vector.broadcast %cst_23 : f32 to vector<128x32xf32>
    %21 = arith.mulf %20, %19 : vector<128x32xf32>
    %22 = math.tanh %21 : vector<128x32xf32>
    %cst_24 = arith.constant 1.000000e+00 : f32
    %23 = vector.broadcast %cst_24 : f32 to vector<128x32xf32>
    %24 = arith.addf %23, %22 : vector<128x32xf32>
    %cst_25 = arith.constant 5.000000e-01 : f32
    %25 = vector.broadcast %cst_25 : f32 to vector<128x32xf32>
    %26 = arith.mulf %25, %24 : vector<128x32xf32>
    %27 = arith.mulf %14, %26 : vector<128x32xf32>
    %cst_26 = arith.constant dense<0.000000e+00> : vector<128x32xf32>
    %28 = tpu.matmul %27, %2, %cst_26 {dimension_numbers = #tpu.dot_dimension_numbers<[1], [0], [0], [1], [0, 0, 1, 1], [], []>} : vector<128x32xf32>, vector<32x32xf32>, vector<128x32xf32> -> vector<128x32xf32>
    %29 = vector.broadcast %3 : vector<1x32xf32> to vector<128x32xf32>
    %30 = arith.addf %28, %29 : vector<128x32xf32>
    %31 = vector.extract_strided_slice %30 {offsets = [0, 0], sizes = [16, 32], strides = [1, 1]} : vector<128x32xf32> to vector<16x32xf32>
    %32 = vector.extract_strided_slice %30 {offsets = [16, 0], sizes = [16, 32], strides = [1, 1]} : vector<128x32xf32> to vector<16x32xf32>
    %33 = arith.maximumf %31, %32 : vector<16x32xf32>
    %34 = vector.extract_strided_slice %30 {offsets = [32, 0], sizes = [16, 32], strides = [1, 1]} : vector<128x32xf32> to vector<16x32xf32>
    %35 = arith.maximumf %33, %34 : vector<16x32xf32>
    %36 = vector.extract_strided_slice %30 {offsets = [48, 0], sizes = [16, 32], strides = [1, 1]} : vector<128x32xf32> to vector<16x32xf32>
    %37 = arith.maximumf %35, %36 : vector<16x32xf32>
    %38 = vector.extract_strided_slice %30 {offsets = [64, 0], sizes = [16, 32], strides = [1, 1]} : vector<128x32xf32> to vector<16x32xf32>
    %39 = arith.maximumf %37, %38 : vector<16x32xf32>
    %40 = vector.extract_strided_slice %30 {offsets = [80, 0], sizes = [16, 32], strides = [1, 1]} : vector<128x32xf32> to vector<16x32xf32>
    %41 = arith.maximumf %39, %40 : vector<16x32xf32>
    %42 = vector.extract_strided_slice %30 {offsets = [96, 0], sizes = [16, 32], strides = [1, 1]} : vector<128x32xf32> to vector<16x32xf32>
    %43 = arith.maximumf %41, %42 : vector<16x32xf32>
    %44 = vector.extract_strided_slice %30 {offsets = [112, 0], sizes = [16, 32], strides = [1, 1]} : vector<128x32xf32> to vector<16x32xf32>
    %45 = arith.maximumf %43, %44 : vector<16x32xf32>
    %cst_27 = arith.constant dense<0.000000e+00> : vector<16x32xf32>
    %46 = tpu.matmul %45, %4, %cst_27 {dimension_numbers = #tpu.dot_dimension_numbers<[1], [0], [0], [1], [0, 0, 1, 1], [], []>} : vector<16x32xf32>, vector<32x32xf32>, vector<16x32xf32> -> vector<16x32xf32>
    %47 = vector.broadcast %5 : vector<1x32xf32> to vector<16x32xf32>
    %48 = arith.addf %46, %47 : vector<16x32xf32>
    %c0_28 = arith.constant 0 : index
    %c0_29 = arith.constant 0 : index
    %c0_30 = arith.constant 0 : index
    %49 = vector.load %arg2[%c0_28, %c0_29, %c0_30] : memref<1x16x3xf32, #tpu.memory_space<vmem>>, vector<1x16x3xf32>
    %50 = vector.shape_cast %49 : vector<1x16x3xf32> to vector<16x3xf32>
    %cst_31 = arith.constant dense<0.000000e+00> : vector<16x32xf32>
    %51 = tpu.matmul %50, %6, %cst_31 {dimension_numbers = #tpu.dot_dimension_numbers<[1], [0], [0], [1], [0, 0, 1, 1], [], []>} : vector<16x3xf32>, vector<3x32xf32>, vector<16x32xf32> -> vector<16x32xf32>
    %52 = vector.broadcast %7 : vector<1x32xf32> to vector<16x32xf32>
    %53 = arith.addf %51, %52 : vector<16x32xf32>
    %54 = arith.mulf %53, %53 : vector<16x32xf32>
    %55 = arith.mulf %53, %54 : vector<16x32xf32>
    %cst_32 = arith.constant 4.471500e-02 : f32
    %56 = vector.broadcast %cst_32 : f32 to vector<16x32xf32>
    %57 = arith.mulf %56, %55 : vector<16x32xf32>
    %58 = arith.addf %53, %57 : vector<16x32xf32>
    %cst_33 = arith.constant 0.797884583 : f32
    %59 = vector.broadcast %cst_33 : f32 to vector<16x32xf32>
    %60 = arith.mulf %59, %58 : vector<16x32xf32>
    %61 = math.tanh %60 : vector<16x32xf32>
    %cst_34 = arith.constant 1.000000e+00 : f32
    %62 = vector.broadcast %cst_34 : f32 to vector<16x32xf32>
    %63 = arith.addf %62, %61 : vector<16x32xf32>
    %cst_35 = arith.constant 5.000000e-01 : f32
    %64 = vector.broadcast %cst_35 : f32 to vector<16x32xf32>
    %65 = arith.mulf %64, %63 : vector<16x32xf32>
    %66 = arith.mulf %53, %65 : vector<16x32xf32>
    %cst_36 = arith.constant dense<0.000000e+00> : vector<16x32xf32>
    %67 = tpu.matmul %66, %8, %cst_36 {dimension_numbers = #tpu.dot_dimension_numbers<[1], [0], [0], [1], [0, 0, 1, 1], [], []>} : vector<16x32xf32>, vector<32x32xf32>, vector<16x32xf32> -> vector<16x32xf32>
    %68 = vector.broadcast %9 : vector<1x32xf32> to vector<16x32xf32>
    %69 = arith.addf %67, %68 : vector<16x32xf32>
    %70 = arith.addf %48, %69 : vector<16x32xf32>
    %c0_37 = arith.constant 0 : index
    %c0_38 = arith.constant 0 : index
    %71 = vector.load %arg41[%c0_37, %c0_38] : memref<17x32xf32, #tpu.memory_space<vmem>>, vector<16x32xf32>
    tpu.vector_store %arg41[%c0_37, %c0_38], %70 {strides = array<i32>} : memref<17x32xf32, #tpu.memory_space<vmem>>, vector<16x32xf32>,
    %c0_39 = arith.constant 0 : index
    %c0_40 = arith.constant 0 : index
    %72 = vector.load %arg3[%c0_39, %c0_40] : memref<1x32xf32, #tpu.memory_space<vmem>>, vector<1x32xf32>
    %c16 = arith.constant 16 : index
    %c0_41 = arith.constant 0 : index
    %73 = vector.load %arg41[%c16, %c0_41] : memref<17x32xf32, #tpu.memory_space<vmem>>, vector<1x32xf32>
    tpu.vector_store %arg41[%c16, %c0_41], %72 {strides = array<i32>} : memref<17x32xf32, #tpu.memory_space<vmem>>, vector<1x32xf32>,
    %c0_42 = arith.constant 0 : index
    %c0_43 = arith.constant 0 : index
    %74 = vector.load %arg41[%c0_42, %c0_43] : memref<17x32xf32, #tpu.memory_space<vmem>>, vector<17x32xf32>
    %c0_44 = arith.constant 0 : index
    %c0_45 = arith.constant 0 : index
    %75 = vector.load %arg14[%c0_44, %c0_45] : memref<1x32xf32, #tpu.memory_space<vmem>>, vector<1x32xf32>
    %c0_46 = arith.constant 0 : index
    %c0_47 = arith.constant 0 : index
    %76 = vector.load %arg15[%c0_46, %c0_47] : memref<1x32xf32, #tpu.memory_space<vmem>>, vector<1x32xf32>
    %c0_48 = arith.constant 0 : index
    %c0_49 = arith.constant 0 : index
    %77 = vector.load %arg16[%c0_48, %c0_49] : memref<32x96xf32, #tpu.memory_space<vmem>>, vector<32x96xf32>
    %c0_50 = arith.constant 0 : index
    %c0_51 = arith.constant 0 : index
    %78 = vector.load %arg17[%c0_50, %c0_51] : memref<1x96xf32, #tpu.memory_space<vmem>>, vector<1x96xf32>
    %c0_52 = arith.constant 0 : index
    %c0_53 = arith.constant 0 : index
    %79 = vector.load %arg18[%c0_52, %c0_53] : memref<32x32xf32, #tpu.memory_space<vmem>>, vector<32x32xf32>
    %c0_54 = arith.constant 0 : index
    %c0_55 = arith.constant 0 : index
    %80 = vector.load %arg19[%c0_54, %c0_55] : memref<1x32xf32, #tpu.memory_space<vmem>>, vector<1x32xf32>
    %c0_56 = arith.constant 0 : index
    %c0_57 = arith.constant 0 : index
    %81 = vector.load %arg20[%c0_56, %c0_57] : memref<1x32xf32, #tpu.memory_space<vmem>>, vector<1x32xf32>
    %c0_58 = arith.constant 0 : index
    %c0_59 = arith.constant 0 : index
    %82 = vector.load %arg21[%c0_58, %c0_59] : memref<1x32xf32, #tpu.memory_space<vmem>>, vector<1x32xf32>
    %c0_60 = arith.constant 0 : index
    %c0_61 = arith.constant 0 : index
    %83 = vector.load %arg22[%c0_60, %c0_61] : memref<32x64xf32, #tpu.memory_space<vmem>>, vector<32x64xf32>
    %c0_62 = arith.constant 0 : index
    %c0_63 = arith.constant 0 : index
    %84 = vector.load %arg23[%c0_62, %c0_63] : memref<1x64xf32, #tpu.memory_space<vmem>>, vector<1x64xf32>
    %c0_64 = arith.constant 0 : index
    %c0_65 = arith.constant 0 : index
    %85 = vector.load %arg24[%c0_64, %c0_65] : memref<64x32xf32, #tpu.memory_space<vmem>>, vector<64x32xf32>
    %c0_66 = arith.constant 0 : index
    %c0_67 = arith.constant 0 : index
    %86 = vector.load %arg25[%c0_66, %c0_67] : memref<1x32xf32, #tpu.memory_space<vmem>>, vector<1x32xf32>
    %cst_68 = arith.constant dense<0.000000e+00> : vector<17xf32>
    %87 = vector.multi_reduction <add>, %74, %cst_68 [1] : vector<17x32xf32> to vector<17xf32>
    %88 = vector.shape_cast %87 : vector<17xf32> to vector<17x1xf32>
    %cst_69 = arith.constant 3.200000e+01 : f32
    %89 = vector.broadcast %cst_69 : f32 to vector<17x1xf32>
    %90 = arith.divf %88, %89 : vector<17x1xf32>
    %91 = vector.broadcast %90 : vector<17x1xf32> to vector<17x32xf32>
    %92 = arith.subf %74, %91 : vector<17x32xf32>
    %93 = arith.mulf %92, %92 : vector<17x32xf32>
    %cst_70 = arith.constant dense<0.000000e+00> : vector<17xf32>
    %94 = vector.multi_reduction <add>, %93, %cst_70 [1] : vector<17x32xf32> to vector<17xf32>
    %95 = vector.shape_cast %94 : vector<17xf32> to vector<17x1xf32>
    %cst_71 = arith.constant 3.200000e+01 : f32
    %96 = vector.broadcast %cst_71 : f32 to vector<17x1xf32>
    %97 = arith.divf %95, %96 : vector<17x1xf32>
    %98 = vector.broadcast %90 : vector<17x1xf32> to vector<17x32xf32>
    %99 = arith.subf %74, %98 : vector<17x32xf32>
    %cst_72 = arith.constant 9.99999997E-7 : f32
    %100 = vector.broadcast %cst_72 : f32 to vector<17x1xf32>
    %101 = arith.addf %97, %100 : vector<17x1xf32>
    %102 = math.rsqrt %101 : vector<17x1xf32>
    %103 = vector.broadcast %102 : vector<17x1xf32> to vector<17x32xf32>
    %104 = arith.mulf %99, %103 : vector<17x32xf32>
    %105 = vector.broadcast %75 : vector<1x32xf32> to vector<17x32xf32>
    %106 = arith.mulf %104, %105 : vector<17x32xf32>
    %107 = vector.broadcast %76 : vector<1x32xf32> to vector<17x32xf32>
    %108 = arith.addf %106, %107 : vector<17x32xf32>
    %cst_73 = arith.constant dense<0.000000e+00> : vector<17x96xf32>
    %109 = tpu.matmul %108, %77, %cst_73 {dimension_numbers = #tpu.dot_dimension_numbers<[1], [0], [0], [1], [0, 0, 1, 1], [], []>} : vector<17x32xf32>, vector<32x96xf32>, vector<17x96xf32> -> vector<17x96xf32>
    %110 = vector.broadcast %78 : vector<1x96xf32> to vector<17x96xf32>
    %111 = arith.addf %109, %110 : vector<17x96xf32>
    %112 = vector.extract_strided_slice %111 {offsets = [0, 0], sizes = [17, 8], strides = [1, 1]} : vector<17x96xf32> to vector<17x8xf32>
    %113 = vector.extract_strided_slice %111 {offsets = [0, 32], sizes = [17, 8], strides = [1, 1]} : vector<17x96xf32> to vector<17x8xf32>
    %114 = vector.extract_strided_slice %111 {offsets = [0, 64], sizes = [17, 8], strides = [1, 1]} : vector<17x96xf32> to vector<17x8xf32>
    %cst_74 = arith.constant dense<0.000000e+00> : vector<17x17xf32>
    %115 = tpu.matmul %112, %113, %cst_74 {dimension_numbers = #tpu.dot_dimension_numbers<[1], [1], [0], [0], [0, 0, 1, 0], [], []>} : vector<17x8xf32>, vector<17x8xf32>, vector<17x17xf32> -> vector<17x17xf32>
    %cst_75 = arith.constant 0.353553385 : f32
    %116 = vector.broadcast %cst_75 : f32 to vector<17x17xf32>
    %117 = arith.mulf %115, %116 : vector<17x17xf32>
    %cst_76 = arith.constant dense<0xFF800000> : vector<17xf32>
    %118 = vector.multi_reduction <maximumf>, %117, %cst_76 [1] : vector<17x17xf32> to vector<17xf32>
    %119 = vector.shape_cast %118 : vector<17xf32> to vector<17x1xf32>
    %120 = vector.broadcast %119 : vector<17x1xf32> to vector<17x17xf32>
    %121 = arith.subf %117, %120 : vector<17x17xf32>
    %122 = math.exp %121 : vector<17x17xf32>
    %cst_77 = arith.constant dense<0.000000e+00> : vector<17xf32>
    %123 = vector.multi_reduction <add>, %122, %cst_77 [1] : vector<17x17xf32> to vector<17xf32>
    %124 = vector.shape_cast %123 : vector<17xf32> to vector<17x1xf32>
    %125 = tpu.reciprocal %124 {approx = true} : vector<17x1xf32> -> vector<17x1xf32>
    %126 = vector.broadcast %125 : vector<17x1xf32> to vector<17x17xf32>
    %127 = arith.mulf %122, %126 : vector<17x17xf32>
    %cst_78 = arith.constant dense<0.000000e+00> : vector<17x8xf32>
    %128 = tpu.matmul %127, %114, %cst_78 {dimension_numbers = #tpu.dot_dimension_numbers<[1], [0], [0], [1], [0, 0, 1, 1], [], []>} : vector<17x17xf32>, vector<17x8xf32>, vector<17x8xf32> -> vector<17x8xf32>
    %129 = vector.extract_strided_slice %79 {offsets = [0, 0], sizes = [8, 32], strides = [1, 1]} : vector<32x32xf32> to vector<8x32xf32>
    %cst_79 = arith.constant dense<0.000000e+00> : vector<17x32xf32>
    %130 = tpu.matmul %128, %129, %cst_79 {dimension_numbers = #tpu.dot_dimension_numbers<[1], [0], [0], [1], [0, 0, 1, 1], [], []>} : vector<17x8xf32>, vector<8x32xf32>, vector<17x32xf32> -> vector<17x32xf32>
    %131 = vector.extract_strided_slice %111 {offsets = [0, 8], sizes = [17, 8], strides = [1, 1]} : vector<17x96xf32> to vector<17x8xf32>
    %132 = vector.extract_strided_slice %111 {offsets = [0, 40], sizes = [17, 8], strides = [1, 1]} : vector<17x96xf32> to vector<17x8xf32>
    %133 = vector.extract_strided_slice %111 {offsets = [0, 72], sizes = [17, 8], strides = [1, 1]} : vector<17x96xf32> to vector<17x8xf32>
    %cst_80 = arith.constant dense<0.000000e+00> : vector<17x17xf32>
    %134 = tpu.matmul %131, %132, %cst_80 {dimension_numbers = #tpu.dot_dimension_numbers<[1], [1], [0], [0], [0, 0, 1, 0], [], []>} : vector<17x8xf32>, vector<17x8xf32>, vector<17x17xf32> -> vector<17x17xf32>
    %cst_81 = arith.constant 0.353553385 : f32
    %135 = vector.broadcast %cst_81 : f32 to vector<17x17xf32>
    %136 = arith.mulf %134, %135 : vector<17x17xf32>
    %cst_82 = arith.constant dense<0xFF800000> : vector<17xf32>
    %137 = vector.multi_reduction <maximumf>, %136, %cst_82 [1] : vector<17x17xf32> to vector<17xf32>
    %138 = vector.shape_cast %137 : vector<17xf32> to vector<17x1xf32>
    %139 = vector.broadcast %138 : vector<17x1xf32> to vector<17x17xf32>
    %140 = arith.subf %136, %139 : vector<17x17xf32>
    %141 = math.exp %140 : vector<17x17xf32>
    %cst_83 = arith.constant dense<0.000000e+00> : vector<17xf32>
    %142 = vector.multi_reduction <add>, %141, %cst_83 [1] : vector<17x17xf32> to vector<17xf32>
    %143 = vector.shape_cast %142 : vector<17xf32> to vector<17x1xf32>
    %144 = tpu.reciprocal %143 {approx = true} : vector<17x1xf32> -> vector<17x1xf32>
    %145 = vector.broadcast %144 : vector<17x1xf32> to vector<17x17xf32>
    %146 = arith.mulf %141, %145 : vector<17x17xf32>
    %cst_84 = arith.constant dense<0.000000e+00> : vector<17x8xf32>
    %147 = tpu.matmul %146, %133, %cst_84 {dimension_numbers = #tpu.dot_dimension_numbers<[1], [0], [0], [1], [0, 0, 1, 1], [], []>} : vector<17x17xf32>, vector<17x8xf32>, vector<17x8xf32> -> vector<17x8xf32>
    %148 = vector.extract_strided_slice %79 {offsets = [8, 0], sizes = [8, 32], strides = [1, 1]} : vector<32x32xf32> to vector<8x32xf32>
    %cst_85 = arith.constant dense<0.000000e+00> : vector<17x32xf32>
    %149 = tpu.matmul %147, %148, %cst_85 {dimension_numbers = #tpu.dot_dimension_numbers<[1], [0], [0], [1], [0, 0, 1, 1], [], []>} : vector<17x8xf32>, vector<8x32xf32>, vector<17x32xf32> -> vector<17x32xf32>
    %150 = arith.addf %130, %149 : vector<17x32xf32>
    %151 = vector.extract_strided_slice %111 {offsets = [0, 16], sizes = [17, 8], strides = [1, 1]} : vector<17x96xf32> to vector<17x8xf32>
    %152 = vector.extract_strided_slice %111 {offsets = [0, 48], sizes = [17, 8], strides = [1, 1]} : vector<17x96xf32> to vector<17x8xf32>
    %153 = vector.extract_strided_slice %111 {offsets = [0, 80], sizes = [17, 8], strides = [1, 1]} : vector<17x96xf32> to vector<17x8xf32>
    %cst_86 = arith.constant dense<0.000000e+00> : vector<17x17xf32>
    %154 = tpu.matmul %151, %152, %cst_86 {dimension_numbers = #tpu.dot_dimension_numbers<[1], [1], [0], [0], [0, 0, 1, 0], [], []>} : vector<17x8xf32>, vector<17x8xf32>, vector<17x17xf32> -> vector<17x17xf32>
    %cst_87 = arith.constant 0.353553385 : f32
    %155 = vector.broadcast %cst_87 : f32 to vector<17x17xf32>
    %156 = arith.mulf %154, %155 : vector<17x17xf32>
    %cst_88 = arith.constant dense<0xFF800000> : vector<17xf32>
    %157 = vector.multi_reduction <maximumf>, %156, %cst_88 [1] : vector<17x17xf32> to vector<17xf32>
    %158 = vector.shape_cast %157 : vector<17xf32> to vector<17x1xf32>
    %159 = vector.broadcast %158 : vector<17x1xf32> to vector<17x17xf32>
    %160 = arith.subf %156, %159 : vector<17x17xf32>
    %161 = math.exp %160 : vector<17x17xf32>
    %cst_89 = arith.constant dense<0.000000e+00> : vector<17xf32>
    %162 = vector.multi_reduction <add>, %161, %cst_89 [1] : vector<17x17xf32> to vector<17xf32>
    %163 = vector.shape_cast %162 : vector<17xf32> to vector<17x1xf32>
    %164 = tpu.reciprocal %163 {approx = true} : vector<17x1xf32> -> vector<17x1xf32>
    %165 = vector.broadcast %164 : vector<17x1xf32> to vector<17x17xf32>
    %166 = arith.mulf %161, %165 : vector<17x17xf32>
    %cst_90 = arith.constant dense<0.000000e+00> : vector<17x8xf32>
    %167 = tpu.matmul %166, %153, %cst_90 {dimension_numbers = #tpu.dot_dimension_numbers<[1], [0], [0], [1], [0, 0, 1, 1], [], []>} : vector<17x17xf32>, vector<17x8xf32>, vector<17x8xf32> -> vector<17x8xf32>
    %168 = vector.extract_strided_slice %79 {offsets = [16, 0], sizes = [8, 32], strides = [1, 1]} : vector<32x32xf32> to vector<8x32xf32>
    %cst_91 = arith.constant dense<0.000000e+00> : vector<17x32xf32>
    %169 = tpu.matmul %167, %168, %cst_91 {dimension_numbers = #tpu.dot_dimension_numbers<[1], [0], [0], [1], [0, 0, 1, 1], [], []>} : vector<17x8xf32>, vector<8x32xf32>, vector<17x32xf32> -> vector<17x32xf32>
    %170 = arith.addf %150, %169 : vector<17x32xf32>
    %171 = vector.extract_strided_slice %111 {offsets = [0, 24], sizes = [17, 8], strides = [1, 1]} : vector<17x96xf32> to vector<17x8xf32>
    %172 = vector.extract_strided_slice %111 {offsets = [0, 56], sizes = [17, 8], strides = [1, 1]} : vector<17x96xf32> to vector<17x8xf32>
    %173 = vector.extract_strided_slice %111 {offsets = [0, 88], sizes = [17, 8], strides = [1, 1]} : vector<17x96xf32> to vector<17x8xf32>
    %cst_92 = arith.constant dense<0.000000e+00> : vector<17x17xf32>
    %174 = tpu.matmul %171, %172, %cst_92 {dimension_numbers = #tpu.dot_dimension_numbers<[1], [1], [0], [0], [0, 0, 1, 0], [], []>} : vector<17x8xf32>, vector<17x8xf32>, vector<17x17xf32> -> vector<17x17xf32>
    %cst_93 = arith.constant 0.353553385 : f32
    %175 = vector.broadcast %cst_93 : f32 to vector<17x17xf32>
    %176 = arith.mulf %174, %175 : vector<17x17xf32>
    %cst_94 = arith.constant dense<0xFF800000> : vector<17xf32>
    %177 = vector.multi_reduction <maximumf>, %176, %cst_94 [1] : vector<17x17xf32> to vector<17xf32>
    %178 = vector.shape_cast %177 : vector<17xf32> to vector<17x1xf32>
    %179 = vector.broadcast %178 : vector<17x1xf32> to vector<17x17xf32>
    %180 = arith.subf %176, %179 : vector<17x17xf32>
    %181 = math.exp %180 : vector<17x17xf32>
    %cst_95 = arith.constant dense<0.000000e+00> : vector<17xf32>
    %182 = vector.multi_reduction <add>, %181, %cst_95 [1] : vector<17x17xf32> to vector<17xf32>
    %183 = vector.shape_cast %182 : vector<17xf32> to vector<17x1xf32>
    %184 = tpu.reciprocal %183 {approx = true} : vector<17x1xf32> -> vector<17x1xf32>
    %185 = vector.broadcast %184 : vector<17x1xf32> to vector<17x17xf32>
    %186 = arith.mulf %181, %185 : vector<17x17xf32>
    %cst_96 = arith.constant dense<0.000000e+00> : vector<17x8xf32>
    %187 = tpu.matmul %186, %173, %cst_96 {dimension_numbers = #tpu.dot_dimension_numbers<[1], [0], [0], [1], [0, 0, 1, 1], [], []>} : vector<17x17xf32>, vector<17x8xf32>, vector<17x8xf32> -> vector<17x8xf32>
    %188 = vector.extract_strided_slice %79 {offsets = [24, 0], sizes = [8, 32], strides = [1, 1]} : vector<32x32xf32> to vector<8x32xf32>
    %cst_97 = arith.constant dense<0.000000e+00> : vector<17x32xf32>
    %189 = tpu.matmul %187, %188, %cst_97 {dimension_numbers = #tpu.dot_dimension_numbers<[1], [0], [0], [1], [0, 0, 1, 1], [], []>} : vector<17x8xf32>, vector<8x32xf32>, vector<17x32xf32> -> vector<17x32xf32>
    %190 = arith.addf %170, %189 : vector<17x32xf32>
    %191 = arith.addf %74, %190 : vector<17x32xf32>
    %192 = vector.broadcast %80 : vector<1x32xf32> to vector<17x32xf32>
    %193 = arith.addf %191, %192 : vector<17x32xf32>
    %cst_98 = arith.constant dense<0.000000e+00> : vector<17xf32>
    %194 = vector.multi_reduction <add>, %193, %cst_98 [1] : vector<17x32xf32> to vector<17xf32>
    %195 = vector.shape_cast %194 : vector<17xf32> to vector<17x1xf32>
    %cst_99 = arith.constant 3.200000e+01 : f32
    %196 = vector.broadcast %cst_99 : f32 to vector<17x1xf32>
    %197 = arith.divf %195, %196 : vector<17x1xf32>
    %198 = vector.broadcast %197 : vector<17x1xf32> to vector<17x32xf32>
    %199 = arith.subf %193, %198 : vector<17x32xf32>
    %200 = arith.mulf %199, %199 : vector<17x32xf32>
    %cst_100 = arith.constant dense<0.000000e+00> : vector<17xf32>
    %201 = vector.multi_reduction <add>, %200, %cst_100 [1] : vector<17x32xf32> to vector<17xf32>
    %202 = vector.shape_cast %201 : vector<17xf32> to vector<17x1xf32>
    %cst_101 = arith.constant 3.200000e+01 : f32
    %203 = vector.broadcast %cst_101 : f32 to vector<17x1xf32>
    %204 = arith.divf %202, %203 : vector<17x1xf32>
    %205 = vector.broadcast %197 : vector<17x1xf32> to vector<17x32xf32>
    %206 = arith.subf %193, %205 : vector<17x32xf32>
    %cst_102 = arith.constant 9.99999997E-7 : f32
    %207 = vector.broadcast %cst_102 : f32 to vector<17x1xf32>
    %208 = arith.addf %204, %207 : vector<17x1xf32>
    %209 = math.rsqrt %208 : vector<17x1xf32>
    %210 = vector.broadcast %209 : vector<17x1xf32> to vector<17x32xf32>
    %211 = arith.mulf %206, %210 : vector<17x32xf32>
    %212 = vector.broadcast %81 : vector<1x32xf32> to vector<17x32xf32>
    %213 = arith.mulf %211, %212 : vector<17x32xf32>
    %214 = vector.broadcast %82 : vector<1x32xf32> to vector<17x32xf32>
    %215 = arith.addf %213, %214 : vector<17x32xf32>
    %cst_103 = arith.constant dense<0.000000e+00> : vector<17x64xf32>
    %216 = tpu.matmul %215, %83, %cst_103 {dimension_numbers = #tpu.dot_dimension_numbers<[1], [0], [0], [1], [0, 0, 1, 1], [], []>} : vector<17x32xf32>, vector<32x64xf32>, vector<17x64xf32> -> vector<17x64xf32>
    %217 = vector.broadcast %84 : vector<1x64xf32> to vector<17x64xf32>
    %218 = arith.addf %216, %217 : vector<17x64xf32>
    %219 = arith.mulf %218, %218 : vector<17x64xf32>
    %220 = arith.mulf %218, %219 : vector<17x64xf32>
    %cst_104 = arith.constant 4.471500e-02 : f32
    %221 = vector.broadcast %cst_104 : f32 to vector<17x64xf32>
    %222 = arith.mulf %221, %220 : vector<17x64xf32>
    %223 = arith.addf %218, %222 : vector<17x64xf32>
    %cst_105 = arith.constant 0.797884583 : f32
    %224 = vector.broadcast %cst_105 : f32 to vector<17x64xf32>
    %225 = arith.mulf %224, %223 : vector<17x64xf32>
    %226 = math.tanh %225 : vector<17x64xf32>
    %cst_106 = arith.constant 1.000000e+00 : f32
    %227 = vector.broadcast %cst_106 : f32 to vector<17x64xf32>
    %228 = arith.addf %227, %226 : vector<17x64xf32>
    %cst_107 = arith.constant 5.000000e-01 : f32
    %229 = vector.broadcast %cst_107 : f32 to vector<17x64xf32>
    %230 = arith.mulf %229, %228 : vector<17x64xf32>
    %231 = arith.mulf %218, %230 : vector<17x64xf32>
    %cst_108 = arith.constant dense<0.000000e+00> : vector<17x32xf32>
    %232 = tpu.matmul %231, %85, %cst_108 {dimension_numbers = #tpu.dot_dimension_numbers<[1], [0], [0], [1], [0, 0, 1, 1], [], []>} : vector<17x64xf32>, vector<64x32xf32>, vector<17x32xf32> -> vector<17x32xf32>
    %233 = arith.addf %193, %232 : vector<17x32xf32>
    %234 = vector.broadcast %86 : vector<1x32xf32> to vector<17x32xf32>
    %235 = arith.addf %233, %234 : vector<17x32xf32>
    %c0_109 = arith.constant 0 : index
    %c0_110 = arith.constant 0 : index
    %236 = vector.load %arg26[%c0_109, %c0_110] : memref<1x32xf32, #tpu.memory_space<vmem>>, vector<1x32xf32>
    %c0_111 = arith.constant 0 : index
    %c0_112 = arith.constant 0 : index
    %237 = vector.load %arg27[%c0_111, %c0_112] : memref<1x32xf32, #tpu.memory_space<vmem>>, vector<1x32xf32>
    %c0_113 = arith.constant 0 : index
    %c0_114 = arith.constant 0 : index
    %238 = vector.load %arg28[%c0_113, %c0_114] : memref<32x96xf32, #tpu.memory_space<vmem>>, vector<32x96xf32>
    %c0_115 = arith.constant 0 : index
    %c0_116 = arith.constant 0 : index
    %239 = vector.load %arg29[%c0_115, %c0_116] : memref<1x96xf32, #tpu.memory_space<vmem>>, vector<1x96xf32>
    %c0_117 = arith.constant 0 : index
    %c0_118 = arith.constant 0 : index
    %240 = vector.load %arg30[%c0_117, %c0_118] : memref<32x32xf32, #tpu.memory_space<vmem>>, vector<32x32xf32>
    %c0_119 = arith.constant 0 : index
    %c0_120 = arith.constant 0 : index
    %241 = vector.load %arg31[%c0_119, %c0_120] : memref<1x32xf32, #tpu.memory_space<vmem>>, vector<1x32xf32>
    %c0_121 = arith.constant 0 : index
    %c0_122 = arith.constant 0 : index
    %242 = vector.load %arg32[%c0_121, %c0_122] : memref<1x32xf32, #tpu.memory_space<vmem>>, vector<1x32xf32>
    %c0_123 = arith.constant 0 : index
    %c0_124 = arith.constant 0 : index
    %243 = vector.load %arg33[%c0_123, %c0_124] : memref<1x32xf32, #tpu.memory_space<vmem>>, vector<1x32xf32>
    %c0_125 = arith.constant 0 : index
    %c0_126 = arith.constant 0 : index
    %244 = vector.load %arg34[%c0_125, %c0_126] : memref<32x64xf32, #tpu.memory_space<vmem>>, vector<32x64xf32>
    %c0_127 = arith.constant 0 : index
    %c0_128 = arith.constant 0 : index
    %245 = vector.load %arg35[%c0_127, %c0_128] : memref<1x64xf32, #tpu.memory_space<vmem>>, vector<1x64xf32>
    %c0_129 = arith.constant 0 : index
    %c0_130 = arith.constant 0 : index
    %246 = vector.load %arg36[%c0_129, %c0_130] : memref<64x32xf32, #tpu.memory_space<vmem>>, vector<64x32xf32>
    %c0_131 = arith.constant 0 : index
    %c0_132 = arith.constant 0 : index
    %247 = vector.load %arg37[%c0_131, %c0_132] : memref<1x32xf32, #tpu.memory_space<vmem>>, vector<1x32xf32>
    %cst_133 = arith.constant dense<0.000000e+00> : vector<17xf32>
    %248 = vector.multi_reduction <add>, %235, %cst_133 [1] : vector<17x32xf32> to vector<17xf32>
    %249 = vector.shape_cast %248 : vector<17xf32> to vector<17x1xf32>
    %cst_134 = arith.constant 3.200000e+01 : f32
    %250 = vector.broadcast %cst_134 : f32 to vector<17x1xf32>
    %251 = arith.divf %249, %250 : vector<17x1xf32>
    %252 = vector.broadcast %251 : vector<17x1xf32> to vector<17x32xf32>
    %253 = arith.subf %235, %252 : vector<17x32xf32>
    %254 = arith.mulf %253, %253 : vector<17x32xf32>
    %cst_135 = arith.constant dense<0.000000e+00> : vector<17xf32>
    %255 = vector.multi_reduction <add>, %254, %cst_135 [1] : vector<17x32xf32> to vector<17xf32>
    %256 = vector.shape_cast %255 : vector<17xf32> to vector<17x1xf32>
    %cst_136 = arith.constant 3.200000e+01 : f32
    %257 = vector.broadcast %cst_136 : f32 to vector<17x1xf32>
    %258 = arith.divf %256, %257 : vector<17x1xf32>
    %259 = vector.broadcast %251 : vector<17x1xf32> to vector<17x32xf32>
    %260 = arith.subf %235, %259 : vector<17x32xf32>
    %cst_137 = arith.constant 9.99999997E-7 : f32
    %261 = vector.broadcast %cst_137 : f32 to vector<17x1xf32>
    %262 = arith.addf %258, %261 : vector<17x1xf32>
    %263 = math.rsqrt %262 : vector<17x1xf32>
    %264 = vector.broadcast %263 : vector<17x1xf32> to vector<17x32xf32>
    %265 = arith.mulf %260, %264 : vector<17x32xf32>
    %266 = vector.broadcast %236 : vector<1x32xf32> to vector<17x32xf32>
    %267 = arith.mulf %265, %266 : vector<17x32xf32>
    %268 = vector.broadcast %237 : vector<1x32xf32> to vector<17x32xf32>
    %269 = arith.addf %267, %268 : vector<17x32xf32>
    %cst_138 = arith.constant dense<0.000000e+00> : vector<17x96xf32>
    %270 = tpu.matmul %269, %238, %cst_138 {dimension_numbers = #tpu.dot_dimension_numbers<[1], [0], [0], [1], [0, 0, 1, 1], [], []>} : vector<17x32xf32>, vector<32x96xf32>, vector<17x96xf32> -> vector<17x96xf32>
    %271 = vector.broadcast %239 : vector<1x96xf32> to vector<17x96xf32>
    %272 = arith.addf %270, %271 : vector<17x96xf32>
    %273 = vector.extract_strided_slice %272 {offsets = [0, 0], sizes = [17, 8], strides = [1, 1]} : vector<17x96xf32> to vector<17x8xf32>
    %274 = vector.extract_strided_slice %272 {offsets = [0, 32], sizes = [17, 8], strides = [1, 1]} : vector<17x96xf32> to vector<17x8xf32>
    %275 = vector.extract_strided_slice %272 {offsets = [0, 64], sizes = [17, 8], strides = [1, 1]} : vector<17x96xf32> to vector<17x8xf32>
    %cst_139 = arith.constant dense<0.000000e+00> : vector<17x17xf32>
    %276 = tpu.matmul %273, %274, %cst_139 {dimension_numbers = #tpu.dot_dimension_numbers<[1], [1], [0], [0], [0, 0, 1, 0], [], []>} : vector<17x8xf32>, vector<17x8xf32>, vector<17x17xf32> -> vector<17x17xf32>
    %cst_140 = arith.constant 0.353553385 : f32
    %277 = vector.broadcast %cst_140 : f32 to vector<17x17xf32>
    %278 = arith.mulf %276, %277 : vector<17x17xf32>
    %cst_141 = arith.constant dense<0xFF800000> : vector<17xf32>
    %279 = vector.multi_reduction <maximumf>, %278, %cst_141 [1] : vector<17x17xf32> to vector<17xf32>
    %280 = vector.shape_cast %279 : vector<17xf32> to vector<17x1xf32>
    %281 = vector.broadcast %280 : vector<17x1xf32> to vector<17x17xf32>
    %282 = arith.subf %278, %281 : vector<17x17xf32>
    %283 = math.exp %282 : vector<17x17xf32>
    %cst_142 = arith.constant dense<0.000000e+00> : vector<17xf32>
    %284 = vector.multi_reduction <add>, %283, %cst_142 [1] : vector<17x17xf32> to vector<17xf32>
    %285 = vector.shape_cast %284 : vector<17xf32> to vector<17x1xf32>
    %286 = tpu.reciprocal %285 {approx = true} : vector<17x1xf32> -> vector<17x1xf32>
    %287 = vector.broadcast %286 : vector<17x1xf32> to vector<17x17xf32>
    %288 = arith.mulf %283, %287 : vector<17x17xf32>
    %cst_143 = arith.constant dense<0.000000e+00> : vector<17x8xf32>
    %289 = tpu.matmul %288, %275, %cst_143 {dimension_numbers = #tpu.dot_dimension_numbers<[1], [0], [0], [1], [0, 0, 1, 1], [], []>} : vector<17x17xf32>, vector<17x8xf32>, vector<17x8xf32> -> vector<17x8xf32>
    %290 = vector.extract_strided_slice %240 {offsets = [0, 0], sizes = [8, 32], strides = [1, 1]} : vector<32x32xf32> to vector<8x32xf32>
    %cst_144 = arith.constant dense<0.000000e+00> : vector<17x32xf32>
    %291 = tpu.matmul %289, %290, %cst_144 {dimension_numbers = #tpu.dot_dimension_numbers<[1], [0], [0], [1], [0, 0, 1, 1], [], []>} : vector<17x8xf32>, vector<8x32xf32>, vector<17x32xf32> -> vector<17x32xf32>
    %292 = vector.extract_strided_slice %272 {offsets = [0, 8], sizes = [17, 8], strides = [1, 1]} : vector<17x96xf32> to vector<17x8xf32>
    %293 = vector.extract_strided_slice %272 {offsets = [0, 40], sizes = [17, 8], strides = [1, 1]} : vector<17x96xf32> to vector<17x8xf32>
    %294 = vector.extract_strided_slice %272 {offsets = [0, 72], sizes = [17, 8], strides = [1, 1]} : vector<17x96xf32> to vector<17x8xf32>
    %cst_145 = arith.constant dense<0.000000e+00> : vector<17x17xf32>
    %295 = tpu.matmul %292, %293, %cst_145 {dimension_numbers = #tpu.dot_dimension_numbers<[1], [1], [0], [0], [0, 0, 1, 0], [], []>} : vector<17x8xf32>, vector<17x8xf32>, vector<17x17xf32> -> vector<17x17xf32>
    %cst_146 = arith.constant 0.353553385 : f32
    %296 = vector.broadcast %cst_146 : f32 to vector<17x17xf32>
    %297 = arith.mulf %295, %296 : vector<17x17xf32>
    %cst_147 = arith.constant dense<0xFF800000> : vector<17xf32>
    %298 = vector.multi_reduction <maximumf>, %297, %cst_147 [1] : vector<17x17xf32> to vector<17xf32>
    %299 = vector.shape_cast %298 : vector<17xf32> to vector<17x1xf32>
    %300 = vector.broadcast %299 : vector<17x1xf32> to vector<17x17xf32>
    %301 = arith.subf %297, %300 : vector<17x17xf32>
    %302 = math.exp %301 : vector<17x17xf32>
    %cst_148 = arith.constant dense<0.000000e+00> : vector<17xf32>
    %303 = vector.multi_reduction <add>, %302, %cst_148 [1] : vector<17x17xf32> to vector<17xf32>
    %304 = vector.shape_cast %303 : vector<17xf32> to vector<17x1xf32>
    %305 = tpu.reciprocal %304 {approx = true} : vector<17x1xf32> -> vector<17x1xf32>
    %306 = vector.broadcast %305 : vector<17x1xf32> to vector<17x17xf32>
    %307 = arith.mulf %302, %306 : vector<17x17xf32>
    %cst_149 = arith.constant dense<0.000000e+00> : vector<17x8xf32>
    %308 = tpu.matmul %307, %294, %cst_149 {dimension_numbers = #tpu.dot_dimension_numbers<[1], [0], [0], [1], [0, 0, 1, 1], [], []>} : vector<17x17xf32>, vector<17x8xf32>, vector<17x8xf32> -> vector<17x8xf32>
    %309 = vector.extract_strided_slice %240 {offsets = [8, 0], sizes = [8, 32], strides = [1, 1]} : vector<32x32xf32> to vector<8x32xf32>
    %cst_150 = arith.constant dense<0.000000e+00> : vector<17x32xf32>
    %310 = tpu.matmul %308, %309, %cst_150 {dimension_numbers = #tpu.dot_dimension_numbers<[1], [0], [0], [1], [0, 0, 1, 1], [], []>} : vector<17x8xf32>, vector<8x32xf32>, vector<17x32xf32> -> vector<17x32xf32>
    %311 = arith.addf %291, %310 : vector<17x32xf32>
    %312 = vector.extract_strided_slice %272 {offsets = [0, 16], sizes = [17, 8], strides = [1, 1]} : vector<17x96xf32> to vector<17x8xf32>
    %313 = vector.extract_strided_slice %272 {offsets = [0, 48], sizes = [17, 8], strides = [1, 1]} : vector<17x96xf32> to vector<17x8xf32>
    %314 = vector.extract_strided_slice %272 {offsets = [0, 80], sizes = [17, 8], strides = [1, 1]} : vector<17x96xf32> to vector<17x8xf32>
    %cst_151 = arith.constant dense<0.000000e+00> : vector<17x17xf32>
    %315 = tpu.matmul %312, %313, %cst_151 {dimension_numbers = #tpu.dot_dimension_numbers<[1], [1], [0], [0], [0, 0, 1, 0], [], []>} : vector<17x8xf32>, vector<17x8xf32>, vector<17x17xf32> -> vector<17x17xf32>
    %cst_152 = arith.constant 0.353553385 : f32
    %316 = vector.broadcast %cst_152 : f32 to vector<17x17xf32>
    %317 = arith.mulf %315, %316 : vector<17x17xf32>
    %cst_153 = arith.constant dense<0xFF800000> : vector<17xf32>
    %318 = vector.multi_reduction <maximumf>, %317, %cst_153 [1] : vector<17x17xf32> to vector<17xf32>
    %319 = vector.shape_cast %318 : vector<17xf32> to vector<17x1xf32>
    %320 = vector.broadcast %319 : vector<17x1xf32> to vector<17x17xf32>
    %321 = arith.subf %317, %320 : vector<17x17xf32>
    %322 = math.exp %321 : vector<17x17xf32>
    %cst_154 = arith.constant dense<0.000000e+00> : vector<17xf32>
    %323 = vector.multi_reduction <add>, %322, %cst_154 [1] : vector<17x17xf32> to vector<17xf32>
    %324 = vector.shape_cast %323 : vector<17xf32> to vector<17x1xf32>
    %325 = tpu.reciprocal %324 {approx = true} : vector<17x1xf32> -> vector<17x1xf32>
    %326 = vector.broadcast %325 : vector<17x1xf32> to vector<17x17xf32>
    %327 = arith.mulf %322, %326 : vector<17x17xf32>
    %cst_155 = arith.constant dense<0.000000e+00> : vector<17x8xf32>
    %328 = tpu.matmul %327, %314, %cst_155 {dimension_numbers = #tpu.dot_dimension_numbers<[1], [0], [0], [1], [0, 0, 1, 1], [], []>} : vector<17x17xf32>, vector<17x8xf32>, vector<17x8xf32> -> vector<17x8xf32>
    %329 = vector.extract_strided_slice %240 {offsets = [16, 0], sizes = [8, 32], strides = [1, 1]} : vector<32x32xf32> to vector<8x32xf32>
    %cst_156 = arith.constant dense<0.000000e+00> : vector<17x32xf32>
    %330 = tpu.matmul %328, %329, %cst_156 {dimension_numbers = #tpu.dot_dimension_numbers<[1], [0], [0], [1], [0, 0, 1, 1], [], []>} : vector<17x8xf32>, vector<8x32xf32>, vector<17x32xf32> -> vector<17x32xf32>
    %331 = arith.addf %311, %330 : vector<17x32xf32>
    %332 = vector.extract_strided_slice %272 {offsets = [0, 24], sizes = [17, 8], strides = [1, 1]} : vector<17x96xf32> to vector<17x8xf32>
    %333 = vector.extract_strided_slice %272 {offsets = [0, 56], sizes = [17, 8], strides = [1, 1]} : vector<17x96xf32> to vector<17x8xf32>
    %334 = vector.extract_strided_slice %272 {offsets = [0, 88], sizes = [17, 8], strides = [1, 1]} : vector<17x96xf32> to vector<17x8xf32>
    %cst_157 = arith.constant dense<0.000000e+00> : vector<17x17xf32>
    %335 = tpu.matmul %332, %333, %cst_157 {dimension_numbers = #tpu.dot_dimension_numbers<[1], [1], [0], [0], [0, 0, 1, 0], [], []>} : vector<17x8xf32>, vector<17x8xf32>, vector<17x17xf32> -> vector<17x17xf32>
    %cst_158 = arith.constant 0.353553385 : f32
    %336 = vector.broadcast %cst_158 : f32 to vector<17x17xf32>
    %337 = arith.mulf %335, %336 : vector<17x17xf32>
    %cst_159 = arith.constant dense<0xFF800000> : vector<17xf32>
    %338 = vector.multi_reduction <maximumf>, %337, %cst_159 [1] : vector<17x17xf32> to vector<17xf32>
    %339 = vector.shape_cast %338 : vector<17xf32> to vector<17x1xf32>
    %340 = vector.broadcast %339 : vector<17x1xf32> to vector<17x17xf32>
    %341 = arith.subf %337, %340 : vector<17x17xf32>
    %342 = math.exp %341 : vector<17x17xf32>
    %cst_160 = arith.constant dense<0.000000e+00> : vector<17xf32>
    %343 = vector.multi_reduction <add>, %342, %cst_160 [1] : vector<17x17xf32> to vector<17xf32>
    %344 = vector.shape_cast %343 : vector<17xf32> to vector<17x1xf32>
    %345 = tpu.reciprocal %344 {approx = true} : vector<17x1xf32> -> vector<17x1xf32>
    %346 = vector.broadcast %345 : vector<17x1xf32> to vector<17x17xf32>
    %347 = arith.mulf %342, %346 : vector<17x17xf32>
    %cst_161 = arith.constant dense<0.000000e+00> : vector<17x8xf32>
    %348 = tpu.matmul %347, %334, %cst_161 {dimension_numbers = #tpu.dot_dimension_numbers<[1], [0], [0], [1], [0, 0, 1, 1], [], []>} : vector<17x17xf32>, vector<17x8xf32>, vector<17x8xf32> -> vector<17x8xf32>
    %349 = vector.extract_strided_slice %240 {offsets = [24, 0], sizes = [8, 32], strides = [1, 1]} : vector<32x32xf32> to vector<8x32xf32>
    %cst_162 = arith.constant dense<0.000000e+00> : vector<17x32xf32>
    %350 = tpu.matmul %348, %349, %cst_162 {dimension_numbers = #tpu.dot_dimension_numbers<[1], [0], [0], [1], [0, 0, 1, 1], [], []>} : vector<17x8xf32>, vector<8x32xf32>, vector<17x32xf32> -> vector<17x32xf32>
    %351 = arith.addf %331, %350 : vector<17x32xf32>
    %352 = arith.addf %235, %351 : vector<17x32xf32>
    %353 = vector.broadcast %241 : vector<1x32xf32> to vector<17x32xf32>
    %354 = arith.addf %352, %353 : vector<17x32xf32>
    %cst_163 = arith.constant dense<0.000000e+00> : vector<17xf32>
    %355 = vector.multi_reduction <add>, %354, %cst_163 [1] : vector<17x32xf32> to vector<17xf32>
    %356 = vector.shape_cast %355 : vector<17xf32> to vector<17x1xf32>
    %cst_164 = arith.constant 3.200000e+01 : f32
    %357 = vector.broadcast %cst_164 : f32 to vector<17x1xf32>
    %358 = arith.divf %356, %357 : vector<17x1xf32>
    %359 = vector.broadcast %358 : vector<17x1xf32> to vector<17x32xf32>
    %360 = arith.subf %354, %359 : vector<17x32xf32>
    %361 = arith.mulf %360, %360 : vector<17x32xf32>
    %cst_165 = arith.constant dense<0.000000e+00> : vector<17xf32>
    %362 = vector.multi_reduction <add>, %361, %cst_165 [1] : vector<17x32xf32> to vector<17xf32>
    %363 = vector.shape_cast %362 : vector<17xf32> to vector<17x1xf32>
    %cst_166 = arith.constant 3.200000e+01 : f32
    %364 = vector.broadcast %cst_166 : f32 to vector<17x1xf32>
    %365 = arith.divf %363, %364 : vector<17x1xf32>
    %366 = vector.broadcast %358 : vector<17x1xf32> to vector<17x32xf32>
    %367 = arith.subf %354, %366 : vector<17x32xf32>
    %cst_167 = arith.constant 9.99999997E-7 : f32
    %368 = vector.broadcast %cst_167 : f32 to vector<17x1xf32>
    %369 = arith.addf %365, %368 : vector<17x1xf32>
    %370 = math.rsqrt %369 : vector<17x1xf32>
    %371 = vector.broadcast %370 : vector<17x1xf32> to vector<17x32xf32>
    %372 = arith.mulf %367, %371 : vector<17x32xf32>
    %373 = vector.broadcast %242 : vector<1x32xf32> to vector<17x32xf32>
    %374 = arith.mulf %372, %373 : vector<17x32xf32>
    %375 = vector.broadcast %243 : vector<1x32xf32> to vector<17x32xf32>
    %376 = arith.addf %374, %375 : vector<17x32xf32>
    %cst_168 = arith.constant dense<0.000000e+00> : vector<17x64xf32>
    %377 = tpu.matmul %376, %244, %cst_168 {dimension_numbers = #tpu.dot_dimension_numbers<[1], [0], [0], [1], [0, 0, 1, 1], [], []>} : vector<17x32xf32>, vector<32x64xf32>, vector<17x64xf32> -> vector<17x64xf32>
    %378 = vector.broadcast %245 : vector<1x64xf32> to vector<17x64xf32>
    %379 = arith.addf %377, %378 : vector<17x64xf32>
    %380 = arith.mulf %379, %379 : vector<17x64xf32>
    %381 = arith.mulf %379, %380 : vector<17x64xf32>
    %cst_169 = arith.constant 4.471500e-02 : f32
    %382 = vector.broadcast %cst_169 : f32 to vector<17x64xf32>
    %383 = arith.mulf %382, %381 : vector<17x64xf32>
    %384 = arith.addf %379, %383 : vector<17x64xf32>
    %cst_170 = arith.constant 0.797884583 : f32
    %385 = vector.broadcast %cst_170 : f32 to vector<17x64xf32>
    %386 = arith.mulf %385, %384 : vector<17x64xf32>
    %387 = math.tanh %386 : vector<17x64xf32>
    %cst_171 = arith.constant 1.000000e+00 : f32
    %388 = vector.broadcast %cst_171 : f32 to vector<17x64xf32>
    %389 = arith.addf %388, %387 : vector<17x64xf32>
    %cst_172 = arith.constant 5.000000e-01 : f32
    %390 = vector.broadcast %cst_172 : f32 to vector<17x64xf32>
    %391 = arith.mulf %390, %389 : vector<17x64xf32>
    %392 = arith.mulf %379, %391 : vector<17x64xf32>
    %cst_173 = arith.constant dense<0.000000e+00> : vector<17x32xf32>
    %393 = tpu.matmul %392, %246, %cst_173 {dimension_numbers = #tpu.dot_dimension_numbers<[1], [0], [0], [1], [0, 0, 1, 1], [], []>} : vector<17x64xf32>, vector<64x32xf32>, vector<17x32xf32> -> vector<17x32xf32>
    %394 = arith.addf %354, %393 : vector<17x32xf32>
    %395 = vector.broadcast %247 : vector<1x32xf32> to vector<17x32xf32>
    %396 = arith.addf %394, %395 : vector<17x32xf32>
    %c0_174 = arith.constant 0 : index
    %c0_175 = arith.constant 0 : index
    %397 = vector.load %arg38[%c0_174, %c0_175] : memref<1x32xf32, #tpu.memory_space<vmem>>, vector<1x32xf32>
    %c0_176 = arith.constant 0 : index
    %c0_177 = arith.constant 0 : index
    %398 = vector.load %arg39[%c0_176, %c0_177] : memref<1x32xf32, #tpu.memory_space<vmem>>, vector<1x32xf32>
    %cst_178 = arith.constant dense<0.000000e+00> : vector<17xf32>
    %399 = vector.multi_reduction <add>, %396, %cst_178 [1] : vector<17x32xf32> to vector<17xf32>
    %400 = vector.shape_cast %399 : vector<17xf32> to vector<17x1xf32>
    %cst_179 = arith.constant 3.200000e+01 : f32
    %401 = vector.broadcast %cst_179 : f32 to vector<17x1xf32>
    %402 = arith.divf %400, %401 : vector<17x1xf32>
    %403 = vector.broadcast %402 : vector<17x1xf32> to vector<17x32xf32>
    %404 = arith.subf %396, %403 : vector<17x32xf32>
    %405 = arith.mulf %404, %404 : vector<17x32xf32>
    %cst_180 = arith.constant dense<0.000000e+00> : vector<17xf32>
    %406 = vector.multi_reduction <add>, %405, %cst_180 [1] : vector<17x32xf32> to vector<17xf32>
    %407 = vector.shape_cast %406 : vector<17xf32> to vector<17x1xf32>
    %cst_181 = arith.constant 3.200000e+01 : f32
    %408 = vector.broadcast %cst_181 : f32 to vector<17x1xf32>
    %409 = arith.divf %407, %408 : vector<17x1xf32>
    %410 = vector.broadcast %402 : vector<17x1xf32> to vector<17x32xf32>
    %411 = arith.subf %396, %410 : vector<17x32xf32>
    %cst_182 = arith.constant 9.99999997E-7 : f32
    %412 = vector.broadcast %cst_182 : f32 to vector<17x1xf32>
    %413 = arith.addf %409, %412 : vector<17x1xf32>
    %414 = math.rsqrt %413 : vector<17x1xf32>
    %415 = vector.broadcast %414 : vector<17x1xf32> to vector<17x32xf32>
    %416 = arith.mulf %411, %415 : vector<17x32xf32>
    %417 = vector.broadcast %397 : vector<1x32xf32> to vector<17x32xf32>
    %418 = arith.mulf %416, %417 : vector<17x32xf32>
    %419 = vector.broadcast %398 : vector<1x32xf32> to vector<17x32xf32>
    %420 = arith.addf %418, %419 : vector<17x32xf32>
    %421 = vector.extract_strided_slice %420 {offsets = [0, 0], sizes = [16, 32], strides = [1, 1]} : vector<17x32xf32> to vector<16x32xf32>
    %c0_183 = arith.constant 0 : index
    %c0_184 = arith.constant 0 : index
    %c0_185 = arith.constant 0 : index
    %422 = vector.load %arg40[%c0_183, %c0_184, %c0_185] : memref<1x16x32xf32, #tpu.memory_space<vmem>>, vector<1x16x32xf32>
    %423 = vector.shape_cast %422 : vector<1x16x32xf32> to vector<16x32xf32>
    %424 = vector.shape_cast %421 : vector<16x32xf32> to vector<1x16x32xf32>
    tpu.vector_store %arg40[%c0_183, %c0_184, %c0_185], %424 {strides = array<i32>} : memref<1x16x32xf32, #tpu.memory_space<vmem>>, vector<1x16x32xf32>,
    return
  }
  func.func @transform_0(%arg0: i32) -> (i32, i32, i32) {
    %c0_i32 = arith.constant 0 : i32
    %c0_i32_0 = arith.constant 0 : i32
    %c0_i32_1 = arith.constant 0 : i32
    return %arg0, %c0_i32, %c0_i32_0 : i32, i32, i32
  }
  func.func @transform_1(%arg0: i32) -> (i32, i32, i32) {
    %c0_i32 = arith.constant 0 : i32
    %c0_i32_0 = arith.constant 0 : i32
    %c0_i32_1 = arith.constant 0 : i32
    return %arg0, %c0_i32, %c0_i32_0 : i32, i32, i32
  }
  func.func @transform_2(%arg0: i32) -> (i32, i32) {
    %c0_i32 = arith.constant 0 : i32
    %c0_i32_0 = arith.constant 0 : i32
    %c0_i32_1 = arith.constant 0 : i32
    return %c0_i32, %c0_i32_0 : i32, i32
  }
  func.func @transform_3(%arg0: i32) -> (i32, i32) {
    %c0_i32 = arith.constant 0 : i32
    %c0_i32_0 = arith.constant 0 : i32
    %c0_i32_1 = arith.constant 0 : i32
    return %c0_i32, %c0_i32_0 : i32, i32
  }
  func.func @transform_4(%arg0: i32) -> (i32, i32) {
    %c0_i32 = arith.constant 0 : i32
    %c0_i32_0 = arith.constant 0 : i32
    %c0_i32_1 = arith.constant 0 : i32
    return %c0_i32, %c0_i32_0 : i32, i32
  }
  func.func @transform_5(%arg0: i32) -> (i32, i32) {
    %c0_i32 = arith.constant 0 : i32
    %c0_i32_0 = arith.constant 0 : i32
    %c0_i32_1 = arith.constant 0 : i32
    return %c0_i32, %c0_i32_0 : i32, i32
  }
  func.func @transform_6(%arg0: i32) -> (i32, i32) {
    %c0_i32 = arith.constant 0 : i32
    %c0_i32_0 = arith.constant 0 : i32
    %c0_i32_1 = arith.constant 0 : i32
    return %c0_i32, %c0_i32_0 : i32, i32
  }
  func.func @transform_7(%arg0: i32) -> (i32, i32) {
    %c0_i32 = arith.constant 0 : i32
    %c0_i32_0 = arith.constant 0 : i32
    %c0_i32_1 = arith.constant 0 : i32
    return %c0_i32, %c0_i32_0 : i32, i32
  }
  func.func @transform_8(%arg0: i32) -> (i32, i32) {
    %c0_i32 = arith.constant 0 : i32
    %c0_i32_0 = arith.constant 0 : i32
    %c0_i32_1 = arith.constant 0 : i32
    return %c0_i32, %c0_i32_0 : i32, i32
  }
  func.func @transform_9(%arg0: i32) -> (i32, i32) {
    %c0_i32 = arith.constant 0 : i32
    %c0_i32_0 = arith.constant 0 : i32
    %c0_i32_1 = arith.constant 0 : i32
    return %c0_i32, %c0_i32_0 : i32, i32
  }
  func.func @transform_10(%arg0: i32) -> (i32, i32) {
    %c0_i32 = arith.constant 0 : i32
    %c0_i32_0 = arith.constant 0 : i32
    %c0_i32_1 = arith.constant 0 : i32
    return %c0_i32, %c0_i32_0 : i32, i32
  }
  func.func @transform_11(%arg0: i32) -> (i32, i32) {
    %c0_i32 = arith.constant 0 : i32
    %c0_i32_0 = arith.constant 0 : i32
    %c0_i32_1 = arith.constant 0 : i32
    return %c0_i32, %c0_i32_0 : i32, i32
  }
  func.func @transform_12(%arg0: i32) -> (i32, i32) {
    %c0_i32 = arith.constant 0 : i32
    %c0_i32_0 = arith.constant 0 : i32
    %c0_i32_1 = arith.constant 0 : i32
    return %c0_i32, %c0_i32_0 : i32, i32
  }
  func.func @transform_13(%arg0: i32) -> (i32, i32) {
    %c0_i32 = arith.constant 0 : i32
    %c0_i32_0 = arith.constant 0 : i32
    %c0_i32_1 = arith.constant 0 : i32
    return %c0_i32, %c0_i32_0 : i32, i32
  }
  func.func @transform_14(%arg0: i32) -> (i32, i32) {
    %c0_i32 = arith.constant 0 : i32
    %c0_i32_0 = arith.constant 0 : i32
    %c0_i32_1 = arith.constant 0 : i32
    return %c0_i32, %c0_i32_0 : i32, i32
  }
  func.func @transform_15(%arg0: i32) -> (i32, i32) {
    %c0_i32 = arith.constant 0 : i32
    %c0_i32_0 = arith.constant 0 : i32
    %c0_i32_1 = arith.constant 0 : i32
    return %c0_i32, %c0_i32_0 : i32, i32
  }
  func.func @transform_16(%arg0: i32) -> (i32, i32) {
    %c0_i32 = arith.constant 0 : i32
    %c0_i32_0 = arith.constant 0 : i32
    %c0_i32_1 = arith.constant 0 : i32
    return %c0_i32, %c0_i32_0 : i32, i32
  }
  func.func @transform_17(%arg0: i32) -> (i32, i32) {
    %c0_i32 = arith.constant 0 : i32
    %c0_i32_0 = arith.constant 0 : i32
    %c0_i32_1 = arith.constant 0 : i32
    return %c0_i32, %c0_i32_0 : i32, i32
  }
  func.func @transform_18(%arg0: i32) -> (i32, i32) {
    %c0_i32 = arith.constant 0 : i32
    %c0_i32_0 = arith.constant 0 : i32
    %c0_i32_1 = arith.constant 0 : i32
    return %c0_i32, %c0_i32_0 : i32, i32
  }
  func.func @transform_19(%arg0: i32) -> (i32, i32) {
    %c0_i32 = arith.constant 0 : i32
    %c0_i32_0 = arith.constant 0 : i32
    %c0_i32_1 = arith.constant 0 : i32
    return %c0_i32, %c0_i32_0 : i32, i32
  }
  func.func @transform_20(%arg0: i32) -> (i32, i32) {
    %c0_i32 = arith.constant 0 : i32
    %c0_i32_0 = arith.constant 0 : i32
    %c0_i32_1 = arith.constant 0 : i32
    return %c0_i32, %c0_i32_0 : i32, i32
  }
  func.func @transform_21(%arg0: i32) -> (i32, i32) {
    %c0_i32 = arith.constant 0 : i32
    %c0_i32_0 = arith.constant 0 : i32
    %c0_i32_1 = arith.constant 0 : i32
    return %c0_i32, %c0_i32_0 : i32, i32
  }
  func.func @transform_22(%arg0: i32) -> (i32, i32) {
    %c0_i32 = arith.constant 0 : i32
    %c0_i32_0 = arith.constant 0 : i32
    %c0_i32_1 = arith.constant 0 : i32
    return %c0_i32, %c0_i32_0 : i32, i32
  }
  func.func @transform_23(%arg0: i32) -> (i32, i32) {
    %c0_i32 = arith.constant 0 : i32
    %c0_i32_0 = arith.constant 0 : i32
    %c0_i32_1 = arith.constant 0 : i32
    return %c0_i32, %c0_i32_0 : i32, i32
  }
  func.func @transform_24(%arg0: i32) -> (i32, i32) {
    %c0_i32 = arith.constant 0 : i32
    %c0_i32_0 = arith.constant 0 : i32
    %c0_i32_1 = arith.constant 0 : i32
    return %c0_i32, %c0_i32_0 : i32, i32
  }
  func.func @transform_25(%arg0: i32) -> (i32, i32) {
    %c0_i32 = arith.constant 0 : i32
    %c0_i32_0 = arith.constant 0 : i32
    %c0_i32_1 = arith.constant 0 : i32
    return %c0_i32, %c0_i32_0 : i32, i32
  }
  func.func @transform_26(%arg0: i32) -> (i32, i32) {
    %c0_i32 = arith.constant 0 : i32
    %c0_i32_0 = arith.constant 0 : i32
    %c0_i32_1 = arith.constant 0 : i32
    return %c0_i32, %c0_i32_0 : i32, i32
  }
  func.func @transform_27(%arg0: i32) -> (i32, i32) {
    %c0_i32 = arith.constant 0 : i32
    %c0_i32_0 = arith.constant 0 : i32
    %c0_i32_1 = arith.constant 0 : i32
    return %c0_i32, %c0_i32_0 : i32, i32
  }
  func.func @transform_28(%arg0: i32) -> (i32, i32) {
    %c0_i32 = arith.constant 0 : i32
    %c0_i32_0 = arith.constant 0 : i32
    %c0_i32_1 = arith.constant 0 : i32
    return %c0_i32, %c0_i32_0 : i32, i32
  }
  func.func @transform_29(%arg0: i32) -> (i32, i32) {
    %c0_i32 = arith.constant 0 : i32
    %c0_i32_0 = arith.constant 0 : i32
    %c0_i32_1 = arith.constant 0 : i32
    return %c0_i32, %c0_i32_0 : i32, i32
  }
  func.func @transform_30(%arg0: i32) -> (i32, i32) {
    %c0_i32 = arith.constant 0 : i32
    %c0_i32_0 = arith.constant 0 : i32
    %c0_i32_1 = arith.constant 0 : i32
    return %c0_i32, %c0_i32_0 : i32, i32
  }
  func.func @transform_31(%arg0: i32) -> (i32, i32) {
    %c0_i32 = arith.constant 0 : i32
    %c0_i32_0 = arith.constant 0 : i32
    %c0_i32_1 = arith.constant 0 : i32
    return %c0_i32, %c0_i32_0 : i32, i32
  }
  func.func @transform_32(%arg0: i32) -> (i32, i32) {
    %c0_i32 = arith.constant 0 : i32
    %c0_i32_0 = arith.constant 0 : i32
    %c0_i32_1 = arith.constant 0 : i32
    return %c0_i32, %c0_i32_0 : i32, i32
  }
  func.func @transform_33(%arg0: i32) -> (i32, i32) {
    %c0_i32 = arith.constant 0 : i32
    %c0_i32_0 = arith.constant 0 : i32
    %c0_i32_1 = arith.constant 0 : i32
    return %c0_i32, %c0_i32_0 : i32, i32
  }
  func.func @transform_34(%arg0: i32) -> (i32, i32) {
    %c0_i32 = arith.constant 0 : i32
    %c0_i32_0 = arith.constant 0 : i32
    %c0_i32_1 = arith.constant 0 : i32
    return %c0_i32, %c0_i32_0 : i32, i32
  }
  func.func @transform_35(%arg0: i32) -> (i32, i32) {
    %c0_i32 = arith.constant 0 : i32
    %c0_i32_0 = arith.constant 0 : i32
    %c0_i32_1 = arith.constant 0 : i32
    return %c0_i32, %c0_i32_0 : i32, i32
  }
  func.func @transform_36(%arg0: i32) -> (i32, i32) {
    %c0_i32 = arith.constant 0 : i32
    %c0_i32_0 = arith.constant 0 : i32
    %c0_i32_1 = arith.constant 0 : i32
    return %c0_i32, %c0_i32_0 : i32, i32
  }
  func.func @transform_37(%arg0: i32) -> (i32, i32) {
    %c0_i32 = arith.constant 0 : i32
    %c0_i32_0 = arith.constant 0 : i32
    %c0_i32_1 = arith.constant 0 : i32
    return %c0_i32, %c0_i32_0 : i32, i32
  }
  func.func @transform_38(%arg0: i32) -> (i32, i32) {
    %c0_i32 = arith.constant 0 : i32
    %c0_i32_0 = arith.constant 0 : i32
    %c0_i32_1 = arith.constant 0 : i32
    return %c0_i32, %c0_i32_0 : i32, i32
  }
  func.func @transform_39(%arg0: i32) -> (i32, i32, i32) {
    %c0_i32 = arith.constant 0 : i32
    %c0_i32_0 = arith.constant 0 : i32
    %c0_i32_1 = arith.constant 0 : i32
    return %arg0, %c0_i32, %c0_i32_0 : i32, i32, i32
  }
}

module attributes {stable_mosaic.version = 11 : i64} {
  func.func @_mlp_kernel(%arg0: i32, %arg1: memref<64x38xf32, #tpu.memory_space<vmem>>, %arg2: memref<38x32xf32, #tpu.memory_space<vmem>>, %arg3: memref<1x32xf32, #tpu.memory_space<vmem>>, %arg4: memref<32x32xf32, #tpu.memory_space<vmem>>, %arg5: memref<1x32xf32, #tpu.memory_space<vmem>>, %arg6: memref<64x32xf32, #tpu.memory_space<vmem>>) attributes {dimension_semantics = [#tpu.dimension_semantics<arbitrary>], iteration_bounds = array<i64: 1>, scalar_prefetch = 0 : i64, scratch_operands = 0 : i64, tpu.core_type = #tpu.core_type<tc>, window_params = [{pipeline_mode = #tpu.pipeline_mode<synchronous>, transform_indices = @transform_0, window_bounds = array<i64: 64, 38>}, {pipeline_mode = #tpu.pipeline_mode<synchronous>, transform_indices = @transform_1, window_bounds = array<i64: 38, 32>}, {pipeline_mode = #tpu.pipeline_mode<synchronous>, transform_indices = @transform_2, window_bounds = array<i64: 1, 32>}, {pipeline_mode = #tpu.pipeline_mode<synchronous>, transform_indices = @transform_3, window_bounds = array<i64: 32, 32>}, {pipeline_mode = #tpu.pipeline_mode<synchronous>, transform_indices = @transform_4, window_bounds = array<i64: 1, 32>}, {pipeline_mode = #tpu.pipeline_mode<synchronous>, transform_indices = @transform_5, window_bounds = array<i64: 64, 32>}]} {
    %c0 = arith.constant 0 : index
    %c0_0 = arith.constant 0 : index
    %0 = vector.load %arg1[%c0, %c0_0] : memref<64x38xf32, #tpu.memory_space<vmem>>, vector<64x38xf32>
    %c0_1 = arith.constant 0 : index
    %c0_2 = arith.constant 0 : index
    %1 = vector.load %arg2[%c0_1, %c0_2] : memref<38x32xf32, #tpu.memory_space<vmem>>, vector<38x32xf32>
    %c0_3 = arith.constant 0 : index
    %c0_4 = arith.constant 0 : index
    %2 = vector.load %arg3[%c0_3, %c0_4] : memref<1x32xf32, #tpu.memory_space<vmem>>, vector<1x32xf32>
    %cst = arith.constant dense<0.000000e+00> : vector<64x32xf32>
    %3 = tpu.matmul %0, %1, %cst {dimension_numbers = #tpu.dot_dimension_numbers<[1], [0], [0], [1], [0, 0, 1, 1], [], []>} : vector<64x38xf32>, vector<38x32xf32>, vector<64x32xf32> -> vector<64x32xf32>
    %4 = vector.broadcast %2 : vector<1x32xf32> to vector<64x32xf32>
    %5 = arith.addf %3, %4 : vector<64x32xf32>
    %6 = arith.mulf %5, %5 : vector<64x32xf32>
    %7 = arith.mulf %5, %6 : vector<64x32xf32>
    %cst_5 = arith.constant 4.471500e-02 : f32
    %8 = vector.broadcast %cst_5 : f32 to vector<64x32xf32>
    %9 = arith.mulf %8, %7 : vector<64x32xf32>
    %10 = arith.addf %5, %9 : vector<64x32xf32>
    %cst_6 = arith.constant 0.797884583 : f32
    %11 = vector.broadcast %cst_6 : f32 to vector<64x32xf32>
    %12 = arith.mulf %11, %10 : vector<64x32xf32>
    %13 = math.tanh %12 : vector<64x32xf32>
    %cst_7 = arith.constant 1.000000e+00 : f32
    %14 = vector.broadcast %cst_7 : f32 to vector<64x32xf32>
    %15 = arith.addf %14, %13 : vector<64x32xf32>
    %cst_8 = arith.constant 5.000000e-01 : f32
    %16 = vector.broadcast %cst_8 : f32 to vector<64x32xf32>
    %17 = arith.mulf %16, %15 : vector<64x32xf32>
    %18 = arith.mulf %5, %17 : vector<64x32xf32>
    %c0_9 = arith.constant 0 : index
    %c0_10 = arith.constant 0 : index
    %19 = vector.load %arg4[%c0_9, %c0_10] : memref<32x32xf32, #tpu.memory_space<vmem>>, vector<32x32xf32>
    %c0_11 = arith.constant 0 : index
    %c0_12 = arith.constant 0 : index
    %20 = vector.load %arg5[%c0_11, %c0_12] : memref<1x32xf32, #tpu.memory_space<vmem>>, vector<1x32xf32>
    %cst_13 = arith.constant dense<0.000000e+00> : vector<64x32xf32>
    %21 = tpu.matmul %18, %19, %cst_13 {dimension_numbers = #tpu.dot_dimension_numbers<[1], [0], [0], [1], [0, 0, 1, 1], [], []>} : vector<64x32xf32>, vector<32x32xf32>, vector<64x32xf32> -> vector<64x32xf32>
    %22 = vector.broadcast %20 : vector<1x32xf32> to vector<64x32xf32>
    %23 = arith.addf %21, %22 : vector<64x32xf32>
    %24 = arith.mulf %23, %23 : vector<64x32xf32>
    %25 = arith.mulf %23, %24 : vector<64x32xf32>
    %cst_14 = arith.constant 4.471500e-02 : f32
    %26 = vector.broadcast %cst_14 : f32 to vector<64x32xf32>
    %27 = arith.mulf %26, %25 : vector<64x32xf32>
    %28 = arith.addf %23, %27 : vector<64x32xf32>
    %cst_15 = arith.constant 0.797884583 : f32
    %29 = vector.broadcast %cst_15 : f32 to vector<64x32xf32>
    %30 = arith.mulf %29, %28 : vector<64x32xf32>
    %31 = math.tanh %30 : vector<64x32xf32>
    %cst_16 = arith.constant 1.000000e+00 : f32
    %32 = vector.broadcast %cst_16 : f32 to vector<64x32xf32>
    %33 = arith.addf %32, %31 : vector<64x32xf32>
    %cst_17 = arith.constant 5.000000e-01 : f32
    %34 = vector.broadcast %cst_17 : f32 to vector<64x32xf32>
    %35 = arith.mulf %34, %33 : vector<64x32xf32>
    %36 = arith.mulf %23, %35 : vector<64x32xf32>
    %c0_18 = arith.constant 0 : index
    %c0_19 = arith.constant 0 : index
    %37 = vector.load %arg6[%c0_18, %c0_19] : memref<64x32xf32, #tpu.memory_space<vmem>>, vector<64x32xf32>
    tpu.vector_store %arg6[%c0_18, %c0_19], %36 {strides = array<i32>} : memref<64x32xf32, #tpu.memory_space<vmem>>, vector<64x32xf32>,
    return
  }
  func.func @transform_0(%arg0: i32) -> (i32, i32) {
    %c0_i32 = arith.constant 0 : i32
    %c0_i32_0 = arith.constant 0 : i32
    %c0_i32_1 = arith.constant 0 : i32
    return %c0_i32, %c0_i32_0 : i32, i32
  }
  func.func @transform_1(%arg0: i32) -> (i32, i32) {
    %c0_i32 = arith.constant 0 : i32
    %c0_i32_0 = arith.constant 0 : i32
    %c0_i32_1 = arith.constant 0 : i32
    return %c0_i32, %c0_i32_0 : i32, i32
  }
  func.func @transform_2(%arg0: i32) -> (i32, i32) {
    %c0_i32 = arith.constant 0 : i32
    %c0_i32_0 = arith.constant 0 : i32
    %c0_i32_1 = arith.constant 0 : i32
    return %c0_i32, %c0_i32_0 : i32, i32
  }
  func.func @transform_3(%arg0: i32) -> (i32, i32) {
    %c0_i32 = arith.constant 0 : i32
    %c0_i32_0 = arith.constant 0 : i32
    %c0_i32_1 = arith.constant 0 : i32
    return %c0_i32, %c0_i32_0 : i32, i32
  }
  func.func @transform_4(%arg0: i32) -> (i32, i32) {
    %c0_i32 = arith.constant 0 : i32
    %c0_i32_0 = arith.constant 0 : i32
    %c0_i32_1 = arith.constant 0 : i32
    return %c0_i32, %c0_i32_0 : i32, i32
  }
  func.func @transform_5(%arg0: i32) -> (i32, i32) {
    %c0_i32 = arith.constant 0 : i32
    %c0_i32_0 = arith.constant 0 : i32
    %c0_i32_1 = arith.constant 0 : i32
    return %c0_i32, %c0_i32_0 : i32, i32
  }
}

module attributes {stable_mosaic.version = 11 : i64} {
  func.func @_mlp_kernel(%arg0: i32, %arg1: memref<128x38xf32, #tpu.memory_space<vmem>>, %arg2: memref<38x32xf32, #tpu.memory_space<vmem>>, %arg3: memref<1x32xf32, #tpu.memory_space<vmem>>, %arg4: memref<32x32xf32, #tpu.memory_space<vmem>>, %arg5: memref<1x32xf32, #tpu.memory_space<vmem>>, %arg6: memref<32x64xf32, #tpu.memory_space<vmem>>, %arg7: memref<1x64xf32, #tpu.memory_space<vmem>>, %arg8: memref<64x5xf32, #tpu.memory_space<vmem>>, %arg9: memref<1x5xf32, #tpu.memory_space<vmem>>, %arg10: memref<128x5xf32, #tpu.memory_space<vmem>>) attributes {dimension_semantics = [#tpu.dimension_semantics<arbitrary>], iteration_bounds = array<i64: 1>, scalar_prefetch = 0 : i64, scratch_operands = 0 : i64, tpu.core_type = #tpu.core_type<tc>, window_params = [{pipeline_mode = #tpu.pipeline_mode<synchronous>, transform_indices = @transform_0, window_bounds = array<i64: 128, 38>}, {pipeline_mode = #tpu.pipeline_mode<synchronous>, transform_indices = @transform_1, window_bounds = array<i64: 38, 32>}, {pipeline_mode = #tpu.pipeline_mode<synchronous>, transform_indices = @transform_2, window_bounds = array<i64: 1, 32>}, {pipeline_mode = #tpu.pipeline_mode<synchronous>, transform_indices = @transform_3, window_bounds = array<i64: 32, 32>}, {pipeline_mode = #tpu.pipeline_mode<synchronous>, transform_indices = @transform_4, window_bounds = array<i64: 1, 32>}, {pipeline_mode = #tpu.pipeline_mode<synchronous>, transform_indices = @transform_5, window_bounds = array<i64: 32, 64>}, {pipeline_mode = #tpu.pipeline_mode<synchronous>, transform_indices = @transform_6, window_bounds = array<i64: 1, 64>}, {pipeline_mode = #tpu.pipeline_mode<synchronous>, transform_indices = @transform_7, window_bounds = array<i64: 64, 5>}, {pipeline_mode = #tpu.pipeline_mode<synchronous>, transform_indices = @transform_8, window_bounds = array<i64: 1, 5>}, {pipeline_mode = #tpu.pipeline_mode<synchronous>, transform_indices = @transform_9, window_bounds = array<i64: 128, 5>}]} {
    %c0 = arith.constant 0 : index
    %c0_0 = arith.constant 0 : index
    %0 = vector.load %arg1[%c0, %c0_0] : memref<128x38xf32, #tpu.memory_space<vmem>>, vector<128x38xf32>
    %c0_1 = arith.constant 0 : index
    %c0_2 = arith.constant 0 : index
    %1 = vector.load %arg2[%c0_1, %c0_2] : memref<38x32xf32, #tpu.memory_space<vmem>>, vector<38x32xf32>
    %c0_3 = arith.constant 0 : index
    %c0_4 = arith.constant 0 : index
    %2 = vector.load %arg3[%c0_3, %c0_4] : memref<1x32xf32, #tpu.memory_space<vmem>>, vector<1x32xf32>
    %cst = arith.constant dense<0.000000e+00> : vector<128x32xf32>
    %3 = tpu.matmul %0, %1, %cst {dimension_numbers = #tpu.dot_dimension_numbers<[1], [0], [0], [1], [0, 0, 1, 1], [], []>} : vector<128x38xf32>, vector<38x32xf32>, vector<128x32xf32> -> vector<128x32xf32>
    %4 = vector.broadcast %2 : vector<1x32xf32> to vector<128x32xf32>
    %5 = arith.addf %3, %4 : vector<128x32xf32>
    %6 = arith.mulf %5, %5 : vector<128x32xf32>
    %7 = arith.mulf %5, %6 : vector<128x32xf32>
    %cst_5 = arith.constant 4.471500e-02 : f32
    %8 = vector.broadcast %cst_5 : f32 to vector<128x32xf32>
    %9 = arith.mulf %8, %7 : vector<128x32xf32>
    %10 = arith.addf %5, %9 : vector<128x32xf32>
    %cst_6 = arith.constant 0.797884583 : f32
    %11 = vector.broadcast %cst_6 : f32 to vector<128x32xf32>
    %12 = arith.mulf %11, %10 : vector<128x32xf32>
    %13 = math.tanh %12 : vector<128x32xf32>
    %cst_7 = arith.constant 1.000000e+00 : f32
    %14 = vector.broadcast %cst_7 : f32 to vector<128x32xf32>
    %15 = arith.addf %14, %13 : vector<128x32xf32>
    %cst_8 = arith.constant 5.000000e-01 : f32
    %16 = vector.broadcast %cst_8 : f32 to vector<128x32xf32>
    %17 = arith.mulf %16, %15 : vector<128x32xf32>
    %18 = arith.mulf %5, %17 : vector<128x32xf32>
    %c0_9 = arith.constant 0 : index
    %c0_10 = arith.constant 0 : index
    %19 = vector.load %arg4[%c0_9, %c0_10] : memref<32x32xf32, #tpu.memory_space<vmem>>, vector<32x32xf32>
    %c0_11 = arith.constant 0 : index
    %c0_12 = arith.constant 0 : index
    %20 = vector.load %arg5[%c0_11, %c0_12] : memref<1x32xf32, #tpu.memory_space<vmem>>, vector<1x32xf32>
    %cst_13 = arith.constant dense<0.000000e+00> : vector<128x32xf32>
    %21 = tpu.matmul %18, %19, %cst_13 {dimension_numbers = #tpu.dot_dimension_numbers<[1], [0], [0], [1], [0, 0, 1, 1], [], []>} : vector<128x32xf32>, vector<32x32xf32>, vector<128x32xf32> -> vector<128x32xf32>
    %22 = vector.broadcast %20 : vector<1x32xf32> to vector<128x32xf32>
    %23 = arith.addf %21, %22 : vector<128x32xf32>
    %24 = arith.mulf %23, %23 : vector<128x32xf32>
    %25 = arith.mulf %23, %24 : vector<128x32xf32>
    %cst_14 = arith.constant 4.471500e-02 : f32
    %26 = vector.broadcast %cst_14 : f32 to vector<128x32xf32>
    %27 = arith.mulf %26, %25 : vector<128x32xf32>
    %28 = arith.addf %23, %27 : vector<128x32xf32>
    %cst_15 = arith.constant 0.797884583 : f32
    %29 = vector.broadcast %cst_15 : f32 to vector<128x32xf32>
    %30 = arith.mulf %29, %28 : vector<128x32xf32>
    %31 = math.tanh %30 : vector<128x32xf32>
    %cst_16 = arith.constant 1.000000e+00 : f32
    %32 = vector.broadcast %cst_16 : f32 to vector<128x32xf32>
    %33 = arith.addf %32, %31 : vector<128x32xf32>
    %cst_17 = arith.constant 5.000000e-01 : f32
    %34 = vector.broadcast %cst_17 : f32 to vector<128x32xf32>
    %35 = arith.mulf %34, %33 : vector<128x32xf32>
    %36 = arith.mulf %23, %35 : vector<128x32xf32>
    %c0_18 = arith.constant 0 : index
    %c0_19 = arith.constant 0 : index
    %37 = vector.load %arg6[%c0_18, %c0_19] : memref<32x64xf32, #tpu.memory_space<vmem>>, vector<32x64xf32>
    %c0_20 = arith.constant 0 : index
    %c0_21 = arith.constant 0 : index
    %38 = vector.load %arg7[%c0_20, %c0_21] : memref<1x64xf32, #tpu.memory_space<vmem>>, vector<1x64xf32>
    %cst_22 = arith.constant dense<0.000000e+00> : vector<128x64xf32>
    %39 = tpu.matmul %36, %37, %cst_22 {dimension_numbers = #tpu.dot_dimension_numbers<[1], [0], [0], [1], [0, 0, 1, 1], [], []>} : vector<128x32xf32>, vector<32x64xf32>, vector<128x64xf32> -> vector<128x64xf32>
    %40 = vector.broadcast %38 : vector<1x64xf32> to vector<128x64xf32>
    %41 = arith.addf %39, %40 : vector<128x64xf32>
    %cst_23 = arith.constant 0.000000e+00 : f32
    %42 = vector.broadcast %cst_23 : f32 to vector<128x64xf32>
    %43 = arith.maximumf %41, %42 : vector<128x64xf32>
    %c0_24 = arith.constant 0 : index
    %c0_25 = arith.constant 0 : index
    %44 = vector.load %arg8[%c0_24, %c0_25] : memref<64x5xf32, #tpu.memory_space<vmem>>, vector<64x5xf32>
    %c0_26 = arith.constant 0 : index
    %c0_27 = arith.constant 0 : index
    %45 = vector.load %arg9[%c0_26, %c0_27] : memref<1x5xf32, #tpu.memory_space<vmem>>, vector<1x5xf32>
    %cst_28 = arith.constant dense<0.000000e+00> : vector<128x5xf32>
    %46 = tpu.matmul %43, %44, %cst_28 {dimension_numbers = #tpu.dot_dimension_numbers<[1], [0], [0], [1], [0, 0, 1, 1], [], []>} : vector<128x64xf32>, vector<64x5xf32>, vector<128x5xf32> -> vector<128x5xf32>
    %47 = vector.broadcast %45 : vector<1x5xf32> to vector<128x5xf32>
    %48 = arith.addf %46, %47 : vector<128x5xf32>
    %c0_29 = arith.constant 0 : index
    %c0_30 = arith.constant 0 : index
    %49 = vector.load %arg10[%c0_29, %c0_30] : memref<128x5xf32, #tpu.memory_space<vmem>>, vector<128x5xf32>
    tpu.vector_store %arg10[%c0_29, %c0_30], %48 {strides = array<i32>} : memref<128x5xf32, #tpu.memory_space<vmem>>, vector<128x5xf32>,
    return
  }
  func.func @transform_0(%arg0: i32) -> (i32, i32) {
    %c0_i32 = arith.constant 0 : i32
    %c0_i32_0 = arith.constant 0 : i32
    %c0_i32_1 = arith.constant 0 : i32
    return %c0_i32, %c0_i32_0 : i32, i32
  }
  func.func @transform_1(%arg0: i32) -> (i32, i32) {
    %c0_i32 = arith.constant 0 : i32
    %c0_i32_0 = arith.constant 0 : i32
    %c0_i32_1 = arith.constant 0 : i32
    return %c0_i32, %c0_i32_0 : i32, i32
  }
  func.func @transform_2(%arg0: i32) -> (i32, i32) {
    %c0_i32 = arith.constant 0 : i32
    %c0_i32_0 = arith.constant 0 : i32
    %c0_i32_1 = arith.constant 0 : i32
    return %c0_i32, %c0_i32_0 : i32, i32
  }
  func.func @transform_3(%arg0: i32) -> (i32, i32) {
    %c0_i32 = arith.constant 0 : i32
    %c0_i32_0 = arith.constant 0 : i32
    %c0_i32_1 = arith.constant 0 : i32
    return %c0_i32, %c0_i32_0 : i32, i32
  }
  func.func @transform_4(%arg0: i32) -> (i32, i32) {
    %c0_i32 = arith.constant 0 : i32
    %c0_i32_0 = arith.constant 0 : i32
    %c0_i32_1 = arith.constant 0 : i32
    return %c0_i32, %c0_i32_0 : i32, i32
  }
  func.func @transform_5(%arg0: i32) -> (i32, i32) {
    %c0_i32 = arith.constant 0 : i32
    %c0_i32_0 = arith.constant 0 : i32
    %c0_i32_1 = arith.constant 0 : i32
    return %c0_i32, %c0_i32_0 : i32, i32
  }
  func.func @transform_6(%arg0: i32) -> (i32, i32) {
    %c0_i32 = arith.constant 0 : i32
    %c0_i32_0 = arith.constant 0 : i32
    %c0_i32_1 = arith.constant 0 : i32
    return %c0_i32, %c0_i32_0 : i32, i32
  }
  func.func @transform_7(%arg0: i32) -> (i32, i32) {
    %c0_i32 = arith.constant 0 : i32
    %c0_i32_0 = arith.constant 0 : i32
    %c0_i32_1 = arith.constant 0 : i32
    return %c0_i32, %c0_i32_0 : i32, i32
  }
  func.func @transform_8(%arg0: i32) -> (i32, i32) {
    %c0_i32 = arith.constant 0 : i32
    %c0_i32_0 = arith.constant 0 : i32
    %c0_i32_1 = arith.constant 0 : i32
    return %c0_i32, %c0_i32_0 : i32, i32
  }
  func.func @transform_9(%arg0: i32) -> (i32, i32) {
    %c0_i32 = arith.constant 0 : i32
    %c0_i32_0 = arith.constant 0 : i32
    %c0_i32_1 = arith.constant 0 : i32
    return %c0_i32, %c0_i32_0 : i32, i32
  }
}

</mosaic_0001>

<llo_original>
// kernel: custom-call.17
$region0: #{custom-call.17}
  %s0 = inlined_call_operand.vmem [shape: f32[2,64], index: 0, kind: output, shape index: {}]

// kernel: neg.6
$region0: #{neg.6}
  #allocation0 [shape = 's32[1]{0}', space=sflag, size = 0x4, scoped, tag = 'scoped memory for neg.6']
  %s0 = inlined_call_operand.vmem [shape: f32[2,32,16], index: 0, kind: input, shape index: {}]
  %s1 = inlined_call_operand.vmem [shape: f32[2,32,16], index: 1, kind: output, shape index: {}]
  %v2 = vld [vmem:[%s0] sm:$0xff]
  %3 = xla_tuple %v2
  %4 = xla_tuple %3
  %v5 = vxor.u32 %v2, 2147483648
  %6 = xla_tuple %v5
  %7 = vst [vmem:[%s1] sm:$0xff] %v5
  %s8 = scalar_lea.vmem %s0, 16
  %v9 = vld [vmem:[%s8] sm:$0xff]
  %10 = xla_tuple %v9
  %11 = xla_tuple %10
  %v12 = vxor.u32 %v9, 2147483648
  %13 = xla_tuple %v12
  %s14 = scalar_lea.vmem %s1, 16
  %15 = vst [vmem:[%s14] sm:$0xff] %v12
  %s16 = scalar_lea.vmem %s0, 8
  %v17 = vld [vmem:[%s16] sm:$0xff]
  %18 = xla_tuple %v17
  %19 = xla_tuple %18
  %v20 = vxor.u32 %v17, 2147483648
  %21 = xla_tuple %v20
  %s22 = scalar_lea.vmem %s1, 8
  %23 = vst [vmem:[%s22] sm:$0xff] %v20
  %s24 = scalar_lea.vmem %s0, 24
  %v25 = vld [vmem:[%s24] sm:$0xff]
  %26 = xla_tuple %v25
  %27 = xla_tuple %26
  %v28 = vxor.u32 %v25, 2147483648
  %29 = xla_tuple %v28
  %s30 = scalar_lea.vmem %s1, 24
  %31 = vst [vmem:[%s30] sm:$0xff] %v28

// kernel: neg.5
$region0: #{neg.5}
  #allocation0 [shape = 's32[1]{0}', space=sflag, size = 0x4, scoped, tag = 'scoped memory for neg.5']
  %s0 = inlined_call_operand.vmem [shape: f32[2,16,64], index: 0, kind: input, shape index: {}]
  %s1 = inlined_call_operand.vmem [shape: f32[2,16,64], index: 1, kind: output, shape index: {}]
  %v2 = vld [vmem:[%s0] sm:$0xff]
  %3 = xla_tuple %v2
  %4 = xla_tuple %3
  %v5 = vxor.u32 %v2, 2147483648
  %6 = xla_tuple %v5
  %7 = vst [vmem:[%s1] sm:$0xff] %v5
  %s8 = scalar_lea.vmem %s0, 16
  %v9 = vld [vmem:[%s8] sm:$0xff]
  %10 = xla_tuple %v9
  %11 = xla_tuple %10
  %v12 = vxor.u32 %v9, 2147483648
  %13 = xla_tuple %v12
  %s14 = scalar_lea.vmem %s1, 16
  %15 = vst [vmem:[%s14] sm:$0xff] %v12
  %s16 = scalar_lea.vmem %s0, 8
  %v17 = vld [vmem:[%s16] sm:$0xff]
  %18 = xla_tuple %v17
  %19 = xla_tuple %18
  %v20 = vxor.u32 %v17, 2147483648
  %21 = xla_tuple %v20
  %s22 = scalar_lea.vmem %s1, 8
  %23 = vst [vmem:[%s22] sm:$0xff] %v20
  %s24 = scalar_lea.vmem %s0, 24
  %v25 = vld [vmem:[%s24] sm:$0xff]
  %26 = xla_tuple %v25
  %27 = xla_tuple %26
  %v28 = vxor.u32 %v25, 2147483648
  %29 = xla_tuple %v28
  %s30 = scalar_lea.vmem %s1, 24
  %31 = vst [vmem:[%s30] sm:$0xff] %v28

// kernel: point_vit_seg_forward.3
$region0: #{point_vit_seg_forward.3}
  #allocation0 [shape = 'u32[]', space=smem, size = 0x4, offset = 0x4, fixed_abs, tag = 'smem constant byte address 0x4 - core index']
  #allocation1 [shape = 'u32[144,128]{1,0:T(1,128)}', space=vmem, size = 0x12000, scoped, tag = 'internal scratch']
  #allocation2 [shape = 'f32[17,32]{1,0:T(8,128)}', space=vmem, size = 0x3000, scoped, tag = 'scratch operand']
  %s0 = inlined_call_operand.smem [shape: u32[40], index: -1, kind: input, shape index: {}]
  %s1 = sld [smem:[%s0]]
  %s2 = scalar_lea.smem %s0, 1
  %s3 = sld [smem:[%s2]]
  %s4 = scalar_lea.smem %s0, 2
  %s5 = sld [smem:[%s4]]
  %s6 = scalar_lea.smem %s0, 3
  %s7 = sld [smem:[%s6]]
  %s8 = scalar_lea.smem %s0, 4
  %s9 = sld [smem:[%s8]]
  %s10 = scalar_lea.smem %s0, 5
  %s11 = sld [smem:[%s10]]
  %s12 = scalar_lea.smem %s0, 6
  %s13 = sld [smem:[%s12]]
  %s14 = scalar_lea.smem %s0, 7
  %s15 = sld [smem:[%s14]]
  %s16 = scalar_lea.smem %s0, 8
  %s17 = sld [smem:[%s16]]
  %s18 = scalar_lea.smem %s0, 9
  %s19 = sld [smem:[%s18]]
  %s20 = scalar_lea.smem %s0, 10
  %s21 = sld [smem:[%s20]]
  %s22 = scalar_lea.smem %s0, 11
  %s23 = sld [smem:[%s22]]
  %s24 = scalar_lea.smem %s0, 12
  %s25 = sld [smem:[%s24]]
  %s26 = scalar_lea.smem %s0, 13
  %s27 = sld [smem:[%s26]]
  %s28 = scalar_lea.smem %s0, 14
  %s29 = sld [smem:[%s28]]
  %s30 = scalar_lea.smem %s0, 15
  %s31 = sld [smem:[%s30]]
  %s32 = scalar_lea.smem %s0, 16
  %s33 = sld [smem:[%s32]]
  %s34 = scalar_lea.smem %s0, 17
  %s35 = sld [smem:[%s34]]
  %s36 = scalar_lea.smem %s0, 18
  %s37 = sld [smem:[%s36]]
  %s38 = scalar_lea.smem %s0, 19
  %s39 = sld [smem:[%s38]]
  %s40 = scalar_lea.smem %s0, 20
  %s41 = sld [smem:[%s40]]
  %s42 = scalar_lea.smem %s0, 21
  %s43 = sld [smem:[%s42]]
  %s44 = scalar_lea.smem %s0, 22
  %s45 = sld [smem:[%s44]]
  %s46 = scalar_lea.smem %s0, 23
  %s47 = sld [smem:[%s46]]
  %s48 = scalar_lea.smem %s0, 24
  %s49 = sld [smem:[%s48]]
  %s50 = scalar_lea.smem %s0, 25
  %s51 = sld [smem:[%s50]]
  %s52 = scalar_lea.smem %s0, 26
  %s53 = sld [smem:[%s52]]
  %s54 = scalar_lea.smem %s0, 27
  %s55 = sld [smem:[%s54]]
  %s56 = scalar_lea.smem %s0, 28
  %s57 = sld [smem:[%s56]]
  %s58 = scalar_lea.smem %s0, 29
  %s59 = sld [smem:[%s58]]
  %s60 = scalar_lea.smem %s0, 30
  %s61 = sld [smem:[%s60]]
  %s62 = scalar_lea.smem %s0, 31
  %s63 = sld [smem:[%s62]]
  %s64 = scalar_lea.smem %s0, 32
  %s65 = sld [smem:[%s64]]
  %s66 = scalar_lea.smem %s0, 33
  %s67 = sld [smem:[%s66]]
  %s68 = scalar_lea.smem %s0, 34
  %s69 = sld [smem:[%s68]]
  %s70 = scalar_lea.smem %s0, 35
  %s71 = sld [smem:[%s70]]
  %s72 = scalar_lea.smem %s0, 36
  %s73 = sld [smem:[%s72]]
  %s74 = scalar_lea.smem %s0, 37
  %s75 = sld [smem:[%s74]]
  %s76 = scalar_lea.smem %s0, 38
  %s77 = sld [smem:[%s76]]
  %s78 = scalar_lea.smem %s0, 39
  %s79 = sld [smem:[%s78]]
  %s80 = sld [smem:[#allocation0]]
  $region189: #{point_vit_seg_forward.3} parent=0
    _
  %s82 = ssub.s32 1, %s80
  %s83 = scalar_select 0, %s82, %s80
  loop: start=0, step=1, limit=4
  $region2: #{point_vit_seg_forward.3} parent=0 // loop_pre_header
    _
  $region3: #{point_vit_seg_forward.3} parent=0 // loop_header
    %s85 = sphi 0, %s89
    %p86 = scmp.ge.s32.totalorder %s85, 4
    %s95 = sphi 0, %s97
    %s98 = sphi 0, %s95
    %s99 = sphi 0, %s98
    %s115 = sphi 0, %s99
    %s121 = sphi 0, %s123
    %s124 = sphi 0, %s121
    %s125 = sphi 0, %s124
    %s141 = sphi 0, %s125
    %s145 = sphi 0, %s145
    %s147 = sphi 0, %s145
    %s148 = sphi 0, %s147
    %s162 = sphi 0, %s148
    %s166 = sphi 0, %s166
    %s168 = sphi 0, %s166
    %s169 = sphi 0, %s168
    %s183 = sphi 0, %s169
    %s187 = sphi 0, %s187
    %s189 = sphi 0, %s187
    %s190 = sphi 0, %s189
    %s204 = sphi 0, %s190
    %s208 = sphi 0, %s208
    %s210 = sphi 0, %s208
    %s211 = sphi 0, %s210
    %s225 = sphi 0, %s211
    %s229 = sphi 0, %s229
    %s231 = sphi 0, %s229
    %s232 = sphi 0, %s231
    %s246 = sphi 0, %s232
    %s250 = sphi 0, %s250
    %s252 = sphi 0, %s250
    %s253 = sphi 0, %s252
    %s267 = sphi 0, %s253
    %s271 = sphi 0, %s271
    %s273 = sphi 0, %s271
    %s274 = sphi 0, %s273
    %s288 = sphi 0, %s274
    %s292 = sphi 0, %s292
    %s294 = sphi 0, %s292
    %s295 = sphi 0, %s294
    %s309 = sphi 0, %s295
    %s313 = sphi 0, %s313
    %s315 = sphi 0, %s313
    %s316 = sphi 0, %s315
    %s330 = sphi 0, %s316
    %s334 = sphi 0, %s334
    %s336 = sphi 0, %s334
    %s337 = sphi 0, %s336
    %s351 = sphi 0, %s337
    %s355 = sphi 0, %s355
    %s357 = sphi 0, %s355
    %s358 = sphi 0, %s357
    %s372 = sphi 0, %s358
    %s376 = sphi 0, %s376
    %s378 = sphi 0, %s376
    %s379 = sphi 0, %s378
    %s393 = sphi 0, %s379
    %s397 = sphi 0, %s397
    %s399 = sphi 0, %s397
    %s400 = sphi 0, %s399
    %s414 = sphi 0, %s400
    %s418 = sphi 0, %s418
    %s420 = sphi 0, %s418
    %s421 = sphi 0, %s420
    %s435 = sphi 0, %s421
    %s439 = sphi 0, %s439
    %s441 = sphi 0, %s439
    %s442 = sphi 0, %s441
    %s456 = sphi 0, %s442
    %s460 = sphi 0, %s460
    %s462 = sphi 0, %s460
    %s463 = sphi 0, %s462
    %s477 = sphi 0, %s463
    %s481 = sphi 0, %s481
    %s483 = sphi 0, %s481
    %s484 = sphi 0, %s483
    %s498 = sphi 0, %s484
    %s502 = sphi 0, %s502
    %s504 = sphi 0, %s502
    %s505 = sphi 0, %s504
    %s519 = sphi 0, %s505
    %s523 = sphi 0, %s523
    %s525 = sphi 0, %s523
    %s526 = sphi 0, %s525
    %s540 = sphi 0, %s526
    %s544 = sphi 0, %s544
    %s546 = sphi 0, %s544
    %s547 = sphi 0, %s546
    %s561 = sphi 0, %s547
    %s565 = sphi 0, %s565
    %s567 = sphi 0, %s565
    %s568 = sphi 0, %s567
    %s582 = sphi 0, %s568
    %s586 = sphi 0, %s586
    %s588 = sphi 0, %s586
    %s589 = sphi 0, %s588
    %s603 = sphi 0, %s589
    %s607 = sphi 0, %s607
    %s609 = sphi 0, %s607
    %s610 = sphi 0, %s609
    %s624 = sphi 0, %s610
    %s628 = sphi 0, %s628
    %s630 = sphi 0, %s628
    %s631 = sphi 0, %s630
    %s645 = sphi 0, %s631
    %s649 = sphi 0, %s649
    %s651 = sphi 0, %s649
    %s652 = sphi 0, %s651
    %s666 = sphi 0, %s652
    %s670 = sphi 0, %s670
    %s672 = sphi 0, %s670
    %s673 = sphi 0, %s672
    %s687 = sphi 0, %s673
    %s691 = sphi 0, %s691
    %s693 = sphi 0, %s691
    %s694 = sphi 0, %s693
    %s708 = sphi 0, %s694
    %s712 = sphi 0, %s712
    %s714 = sphi 0, %s712
    %s715 = sphi 0, %s714
    %s729 = sphi 0, %s715
    %s733 = sphi 0, %s733
    %s735 = sphi 0, %s733
    %s736 = sphi 0, %s735
    %s750 = sphi 0, %s736
    %s754 = sphi 0, %s754
    %s756 = sphi 0, %s754
    %s757 = sphi 0, %s756
    %s771 = sphi 0, %s757
    %s775 = sphi 0, %s775
    %s777 = sphi 0, %s775
    %s778 = sphi 0, %s777
    %s792 = sphi 0, %s778
    %s796 = sphi 0, %s796
    %s798 = sphi 0, %s796
    %s799 = sphi 0, %s798
    %s813 = sphi 0, %s799
    %s817 = sphi 0, %s817
    %s819 = sphi 0, %s817
    %s820 = sphi 0, %s819
    %s834 = sphi 0, %s820
    %s838 = sphi 0, %s838
    %s840 = sphi 0, %s838
    %s841 = sphi 0, %s840
    %s855 = sphi 0, %s841
    %s859 = sphi 0, %s859
    %s861 = sphi 0, %s859
    %s862 = sphi 0, %s861
    %s876 = sphi 0, %s862
    %s880 = sphi 0, %s880
    %s882 = sphi 0, %s880
    %s883 = sphi 0, %s882
    %s897 = sphi 0, %s883
    %s901 = sphi 0, %s901
    %s903 = sphi 0, %s901
    %s904 = sphi 0, %s903
    %s918 = sphi 0, %s904
    %s924 = sphi 0, %s926
    %s927 = sphi 0, %s924
    %s928 = sphi 0, %s927
    %s944 = sphi 0, %s928
  $region4: #{point_vit_seg_forward.3} parent=0 // loop_header_branch
    %88 = sbr.rel (%p86) target = $region8
  $region5: #{point_vit_seg_forward.3} parent=0 // loop_body
    %s90 = ssub.s32 %s85, 1
    %s91 = ssub.s32 %s85, 2
    %s92 = sadd.s32 %s85, 1
    %s93 = ssub.s32 %s85, %s92
    %p94 = scmp.eq.s32.totalorder %s93, 0
    %s96 = sadd.s32 %s95, 1
    %s97 = scalar_select %p94, %s95, %s96
    %p100 = pneg %p94
    %p101 = scmp.eq.s32.totalorder %s85, 1
    %p102 = por %p100, %p101
    %p103 = scmp.ne.s32.totalorder %s95, %s98
    %p104 = scmp.eq.s32.totalorder %s85, 0
    %p105 = por %p103, %p104
    %p106 = scmp.ne.s32.totalorder %s95, %s98
    %p107 = scmp.eq.s32.totalorder %s90, 1
    %p108 = por %p106, %p107
    %p109 = scmp.ne.s32.totalorder %s98, %s99
    %p110 = scmp.eq.s32.totalorder %s90, 0
    %p111 = por %p109, %p110
    %p112 = scmp.ne.s32.totalorder %s98, %s99
    %p113 = scmp.eq.s32.totalorder %s91, 1
    %p114 = por %p112, %p113
    %p116 = scmp.ne.s32.totalorder %s99, %s115
    %p117 = scmp.eq.s32.totalorder %s91, 0
    %p118 = por %p116, %p117
    %s119 = ssub.s32 %s85, %s92
    %p120 = scmp.eq.s32.totalorder %s119, 0
    %s122 = sadd.s32 %s121, 1
    %s123 = scalar_select %p120, %s121, %s122
    %p126 = pneg %p120
    %p127 = scmp.eq.s32.totalorder %s85, 1
    %p128 = por %p126, %p127
    %p129 = scmp.ne.s32.totalorder %s121, %s124
    %p130 = scmp.eq.s32.totalorder %s85, 0
    %p131 = por %p129, %p130
    %p132 = scmp.ne.s32.totalorder %s121, %s124
    %p133 = scmp.eq.s32.totalorder %s90, 1
    %p134 = por %p132, %p133
    %p135 = scmp.ne.s32.totalorder %s124, %s125
    %p136 = scmp.eq.s32.totalorder %s90, 0
    %p137 = por %p135, %p136
    %p138 = scmp.ne.s32.totalorder %s124, %s125
    %p139 = scmp.eq.s32.totalorder %s91, 1
    %p140 = por %p138, %p139
    %p142 = scmp.ne.s32.totalorder %s125, %s141
    %p143 = scmp.eq.s32.totalorder %s91, 0
    %p144 = por %p142, %p143
    %s146 = sadd.s32 %s145, 1
    %p149 = scmp.eq.s32.totalorder %s85, 1
    %p150 = scmp.ne.s32.totalorder %s145, %s147
    %p151 = scmp.eq.s32.totalorder %s85, 0
    %p152 = por %p150, %p151
    %p153 = scmp.ne.s32.totalorder %s145, %s147
    %p154 = scmp.eq.s32.totalorder %s90, 1
    %p155 = por %p153, %p154
    %p156 = scmp.ne.s32.totalorder %s147, %s148
    %p157 = scmp.eq.s32.totalorder %s90, 0
    %p158 = por %p156, %p157
    %p159 = scmp.ne.s32.totalorder %s147, %s148
    %p160 = scmp.eq.s32.totalorder %s91, 1
    %p161 = por %p159, %p160
    %p163 = scmp.ne.s32.totalorder %s148, %s162
    %p164 = scmp.eq.s32.totalorder %s91, 0
    %p165 = por %p163, %p164
    %s167 = sadd.s32 %s166, 1
    %p170 = scmp.eq.s32.totalorder %s85, 1
    %p171 = scmp.ne.s32.totalorder %s166, %s168
    %p172 = scmp.eq.s32.totalorder %s85, 0
    %p173 = por %p171, %p172
    %p174 = scmp.ne.s32.totalorder %s166, %s168
    %p175 = scmp.eq.s32.totalorder %s90, 1
    %p176 = por %p174, %p175
    %p177 = scmp.ne.s32.totalorder %s168, %s169
    %p178 = scmp.eq.s32.totalorder %s90, 0
    %p179 = por %p177, %p178
    %p180 = scmp.ne.s32.totalorder %s168, %s169
    %p181 = scmp.eq.s32.totalorder %s91, 1
    %p182 = por %p180, %p181
    %p184 = scmp.ne.s32.totalorder %s169, %s183
    %p185 = scmp.eq.s32.totalorder %s91, 0
    %p186 = por %p184, %p185
    %s188 = sadd.s32 %s187, 1
    %p191 = scmp.eq.s32.totalorder %s85, 1
    %p192 = scmp.ne.s32.totalorder %s187, %s189
    %p193 = scmp.eq.s32.totalorder %s85, 0
    %p194 = por %p192, %p193
    %p195 = scmp.ne.s32.totalorder %s187, %s189
    %p196 = scmp.eq.s32.totalorder %s90, 1
    %p197 = por %p195, %p196
    %p198 = scmp.ne.s32.totalorder %s189, %s190
    %p199 = scmp.eq.s32.totalorder %s90, 0
    %p200 = por %p198, %p199
    %p201 = scmp.ne.s32.totalorder %s189, %s190
    %p202 = scmp.eq.s32.totalorder %s91, 1
    %p203 = por %p201, %p202
    %p205 = scmp.ne.s32.totalorder %s190, %s204
    %p206 = scmp.eq.s32.totalorder %s91, 0
    %p207 = por %p205, %p206
    %s209 = sadd.s32 %s208, 1
    %p212 = scmp.eq.s32.totalorder %s85, 1
    %p213 = scmp.ne.s32.totalorder %s208, %s210
    %p214 = scmp.eq.s32.totalorder %s85, 0
    %p215 = por %p213, %p214
    %p216 = scmp.ne.s32.totalorder %s208, %s210
    %p217 = scmp.eq.s32.totalorder %s90, 1
    %p218 = por %p216, %p217
    %p219 = scmp.ne.s32.totalorder %s210, %s211
    %p220 = scmp.eq.s32.totalorder %s90, 0
    %p221 = por %p219, %p220
    %p222 = scmp.ne.s32.totalorder %s210, %s211
    %p223 = scmp.eq.s32.totalorder %s91, 1
    %p224 = por %p222, %p223
    %p226 = scmp.ne.s32.totalorder %s211, %s225
    %p227 = scmp.eq.s32.totalorder %s91, 0
    %p228 = por %p226, %p227
    %s230 = sadd.s32 %s229, 1
    %p233 = scmp.eq.s32.totalorder %s85, 1
    %p234 = scmp.ne.s32.totalorder %s229, %s231
    %p235 = scmp.eq.s32.totalorder %s85, 0
    %p236 = por %p234, %p235
    %p237 = scmp.ne.s32.totalorder %s229, %s231
    %p238 = scmp.eq.s32.totalorder %s90, 1
    %p239 = por %p237, %p238
    %p240 = scmp.ne.s32.totalorder %s231, %s232
    %p241 = scmp.eq.s32.totalorder %s90, 0
    %p242 = por %p240, %p241
    %p243 = scmp.ne.s32.totalorder %s231, %s232
    %p244 = scmp.eq.s32.totalorder %s91, 1
    %p245 = por %p243, %p244
    %p247 = scmp.ne.s32.totalorder %s232, %s246
    %p248 = scmp.eq.s32.totalorder %s91, 0
    %p249 = por %p247, %p248
    %s251 = sadd.s32 %s250, 1
    %p254 = scmp.eq.s32.totalorder %s85, 1
    %p255 = scmp.ne.s32.totalorder %s250, %s252
    %p256 = scmp.eq.s32.totalorder %s85, 0
    %p257 = por %p255, %p256
    %p258 = scmp.ne.s32.totalorder %s250, %s252
    %p259 = scmp.eq.s32.totalorder %s90, 1
    %p260 = por %p258, %p259
    %p261 = scmp.ne.s32.totalorder %s252, %s253
    %p262 = scmp.eq.s32.totalorder %s90, 0
    %p263 = por %p261, %p262
    %p264 = scmp.ne.s32.totalorder %s252, %s253
    %p265 = scmp.eq.s32.totalorder %s91, 1
    %p266 = por %p264, %p265
    %p268 = scmp.ne.s32.totalorder %s253, %s267
    %p269 = scmp.eq.s32.totalorder %s91, 0
    %p270 = por %p268, %p269
    %s272 = sadd.s32 %s271, 1
    %p275 = scmp.eq.s32.totalorder %s85, 1
    %p276 = scmp.ne.s32.totalorder %s271, %s273
    %p277 = scmp.eq.s32.totalorder %s85, 0
    %p278 = por %p276, %p277
    %p279 = scmp.ne.s32.totalorder %s271, %s273
    %p280 = scmp.eq.s32.totalorder %s90, 1
    %p281 = por %p279, %p280
    %p282 = scmp.ne.s32.totalorder %s273, %s274
    %p283 = scmp.eq.s32.totalorder %s90, 0
    %p284 = por %p282, %p283
    %p285 = scmp.ne.s32.totalorder %s273, %s274
    %p286 = scmp.eq.s32.totalorder %s91, 1
    %p287 = por %p285, %p286
    %p289 = scmp.ne.s32.totalorder %s274, %s288
    %p290 = scmp.eq.s32.totalorder %s91, 0
    %p291 = por %p289, %p290
    %s293 = sadd.s32 %s292, 1
    %p296 = scmp.eq.s32.totalorder %s85, 1
    %p297 = scmp.ne.s32.totalorder %s292, %s294
    %p298 = scmp.eq.s32.totalorder %s85, 0
    %p299 = por %p297, %p298
    %p300 = scmp.ne.s32.totalorder %s292, %s294
    %p301 = scmp.eq.s32.totalorder %s90, 1
    %p302 = por %p300, %p301
    %p303 = scmp.ne.s32.totalorder %s294, %s295
    %p304 = scmp.eq.s32.totalorder %s90, 0
    %p305 = por %p303, %p304
    %p306 = scmp.ne.s32.totalorder %s294, %s295
    %p307 = scmp.eq.s32.totalorder %s91, 1
    %p308 = por %p306, %p307
    %p310 = scmp.ne.s32.totalorder %s295, %s309
    %p311 = scmp.eq.s32.totalorder %s91, 0
    %p312 = por %p310, %p311
    %s314 = sadd.s32 %s313, 1
    %p317 = scmp.eq.s32.totalorder %s85, 1
    %p318 = scmp.ne.s32.totalorder %s313, %s315
    %p319 = scmp.eq.s32.totalorder %s85, 0
    %p320 = por %p318, %p319
    %p321 = scmp.ne.s32.totalorder %s313, %s315
    %p322 = scmp.eq.s32.totalorder %s90, 1
    %p323 = por %p321, %p322
    %p324 = scmp.ne.s32.totalorder %s315, %s316
    %p325 = scmp.eq.s32.totalorder %s90, 0
    %p326 = por %p324, %p325
    %p327 = scmp.ne.s32.totalorder %s315, %s316
    %p328 = scmp.eq.s32.totalorder %s91, 1
    %p329 = por %p327, %p328
    %p331 = scmp.ne.s32.totalorder %s316, %s330
    %p332 = scmp.eq.s32.totalorder %s91, 0
    %p333 = por %p331, %p332
    %s335 = sadd.s32 %s334, 1
    %p338 = scmp.eq.s32.totalorder %s85, 1
    %p339 = scmp.ne.s32.totalorder %s334, %s336
    %p340 = scmp.eq.s32.totalorder %s85, 0
    %p341 = por %p339, %p340
    %p342 = scmp.ne.s32.totalorder %s334, %s336
    %p343 = scmp.eq.s32.totalorder %s90, 1
    %p344 = por %p342, %p343
    %p345 = scmp.ne.s32.totalorder %s336, %s337
    %p346 = scmp.eq.s32.totalorder %s90, 0
    %p347 = por %p345, %p346
    %p348 = scmp.ne.s32.totalorder %s336, %s337
    %p349 = scmp.eq.s32.totalorder %s91, 1
    %p350 = por %p348, %p349
    %p352 = scmp.ne.s32.totalorder %s337, %s351
    %p353 = scmp.eq.s32.totalorder %s91, 0
    %p354 = por %p352, %p353
    %s356 = sadd.s32 %s355, 1
    %p359 = scmp.eq.s32.totalorder %s85, 1
    %p360 = scmp.ne.s32.totalorder %s355, %s357
    %p361 = scmp.eq.s32.totalorder %s85, 0
    %p362 = por %p360, %p361
    %p363 = scmp.ne.s32.totalorder %s355, %s357
    %p364 = scmp.eq.s32.totalorder %s90, 1
    %p365 = por %p363, %p364
    %p366 = scmp.ne.s32.totalorder %s357, %s358
    %p367 = scmp.eq.s32.totalorder %s90, 0
    %p368 = por %p366, %p367
    %p369 = scmp.ne.s32.totalorder %s357, %s358
    %p370 = scmp.eq.s32.totalorder %s91, 1
    %p371 = por %p369, %p370
    %p373 = scmp.ne.s32.totalorder %s358, %s372
    %p374 = scmp.eq.s32.totalorder %s91, 0
    %p375 = por %p373, %p374
    %s377 = sadd.s32 %s376, 1
    %p380 = scmp.eq.s32.totalorder %s85, 1
    %p381 = scmp.ne.s32.totalorder %s376, %s378
    %p382 = scmp.eq.s32.totalorder %s85, 0
    %p383 = por %p381, %p382
    %p384 = scmp.ne.s32.totalorder %s376, %s378
    %p385 = scmp.eq.s32.totalorder %s90, 1
    %p386 = por %p384, %p385
    %p387 = scmp.ne.s32.totalorder %s378, %s379
    %p388 = scmp.eq.s32.totalorder %s90, 0
    %p389 = por %p387, %p388
    %p390 = scmp.ne.s32.totalorder %s378, %s379
    %p391 = scmp.eq.s32.totalorder %s91, 1
    %p392 = por %p390, %p391
    %p394 = scmp.ne.s32.totalorder %s379, %s393
    %p395 = scmp.eq.s32.totalorder %s91, 0
    %p396 = por %p394, %p395
    %s398 = sadd.s32 %s397, 1
    %p401 = scmp.eq.s32.totalorder %s85, 1
    %p402 = scmp.ne.s32.totalorder %s397, %s399
    %p403 = scmp.eq.s32.totalorder %s85, 0
    %p404 = por %p402, %p403
    %p405 = scmp.ne.s32.totalorder %s397, %s399
    %p406 = scmp.eq.s32.totalorder %s90, 1
    %p407 = por %p405, %p406
    %p408 = scmp.ne.s32.totalorder %s399, %s400
    %p409 = scmp.eq.s32.totalorder %s90, 0
    %p410 = por %p408, %p409
    %p411 = scmp.ne.s32.totalorder %s399, %s400
    %p412 = scmp.eq.s32.totalorder %s91, 1
    %p413 = por %p411, %p412
    %p415 = scmp.ne.s32.totalorder %s400, %s414
    %p416 = scmp.eq.s32.totalorder %s91, 0
    %p417 = por %p415, %p416
    %s419 = sadd.s32 %s418, 1
    %p422 = scmp.eq.s32.totalorder %s85, 1
    %p423 = scmp.ne.s32.totalorder %s418, %s420
    %p424 = scmp.eq.s32.totalorder %s85, 0
    %p425 = por %p423, %p424
    %p426 = scmp.ne.s32.totalorder %s418, %s420
    %p427 = scmp.eq.s32.totalorder %s90, 1
    %p428 = por %p426, %p427
    %p429 = scmp.ne.s32.totalorder %s420, %s421
    %p430 = scmp.eq.s32.totalorder %s90, 0
    %p431 = por %p429, %p430
    %p432 = scmp.ne.s32.totalorder %s420, %s421
    %p433 = scmp.eq.s32.totalorder %s91, 1
    %p434 = por %p432, %p433
    %p436 = scmp.ne.s32.totalorder %s421, %s435
    %p437 = scmp.eq.s32.totalorder %s91, 0
    %p438 = por %p436, %p437
    %s440 = sadd.s32 %s439, 1
    %p443 = scmp.eq.s32.totalorder %s85, 1
    %p444 = scmp.ne.s32.totalorder %s439, %s441
    %p445 = scmp.eq.s32.totalorder %s85, 0
    %p446 = por %p444, %p445
    %p447 = scmp.ne.s32.totalorder %s439, %s441
    %p448 = scmp.eq.s32.totalorder %s90, 1
    %p449 = por %p447, %p448
    %p450 = scmp.ne.s32.totalorder %s441, %s442
    %p451 = scmp.eq.s32.totalorder %s90, 0
    %p452 = por %p450, %p451
    %p453 = scmp.ne.s32.totalorder %s441, %s442
    %p454 = scmp.eq.s32.totalorder %s91, 1
    %p455 = por %p453, %p454
    %p457 = scmp.ne.s32.totalorder %s442, %s456
    %p458 = scmp.eq.s32.totalorder %s91, 0
    %p459 = por %p457, %p458
    %s461 = sadd.s32 %s460, 1
    %p464 = scmp.eq.s32.totalorder %s85, 1
    %p465 = scmp.ne.s32.totalorder %s460, %s462
    %p466 = scmp.eq.s32.totalorder %s85, 0
    %p467 = por %p465, %p466
    %p468 = scmp.ne.s32.totalorder %s460, %s462
    %p469 = scmp.eq.s32.totalorder %s90, 1
    %p470 = por %p468, %p469
    %p471 = scmp.ne.s32.totalorder %s462, %s463
    %p472 = scmp.eq.s32.totalorder %s90, 0
    %p473 = por %p471, %p472
    %p474 = scmp.ne.s32.totalorder %s462, %s463
    %p475 = scmp.eq.s32.totalorder %s91, 1
    %p476 = por %p474, %p475
    %p478 = scmp.ne.s32.totalorder %s463, %s477
    %p479 = scmp.eq.s32.totalorder %s91, 0
    %p480 = por %p478, %p479
    %s482 = sadd.s32 %s481, 1
    %p485 = scmp.eq.s32.totalorder %s85, 1
    %p486 = scmp.ne.s32.totalorder %s481, %s483
    %p487 = scmp.eq.s32.totalorder %s85, 0
    %p488 = por %p486, %p487
    %p489 = scmp.ne.s32.totalorder %s481, %s483
    %p490 = scmp.eq.s32.totalorder %s90, 1
    %p491 = por %p489, %p490
    %p492 = scmp.ne.s32.totalorder %s483, %s484
    %p493 = scmp.eq.s32.totalorder %s90, 0
    %p494 = por %p492, %p493
    %p495 = scmp.ne.s32.totalorder %s483, %s484
    %p496 = scmp.eq.s32.totalorder %s91, 1
    %p497 = por %p495, %p496
    %p499 = scmp.ne.s32.totalorder %s484, %s498
    %p500 = scmp.eq.s32.totalorder %s91, 0
    %p501 = por %p499, %p500
    %s503 = sadd.s32 %s502, 1
    %p506 = scmp.eq.s32.totalorder %s85, 1
    %p507 = scmp.ne.s32.totalorder %s502, %s504
    %p508 = scmp.eq.s32.totalorder %s85, 0
    %p509 = por %p507, %p508
    %p510 = scmp.ne.s32.totalorder %s502, %s504
    %p511 = scmp.eq.s32.totalorder %s90, 1
    %p512 = por %p510, %p511
    %p513 = scmp.ne.s32.totalorder %s504, %s505
    %p514 = scmp.eq.s32.totalorder %s90, 0
    %p515 = por %p513, %p514
    %p516 = scmp.ne.s32.totalorder %s504, %s505
    %p517 = scmp.eq.s32.totalorder %s91, 1
    %p518 = por %p516, %p517
    %p520 = scmp.ne.s32.totalorder %s505, %s519
    %p521 = scmp.eq.s32.totalorder %s91, 0
    %p522 = por %p520, %p521
    %s524 = sadd.s32 %s523, 1
    %p527 = scmp.eq.s32.totalorder %s85, 1
    %p528 = scmp.ne.s32.totalorder %s523, %s525
    %p529 = scmp.eq.s32.totalorder %s85, 0
    %p530 = por %p528, %p529
    %p531 = scmp.ne.s32.totalorder %s523, %s525
    %p532 = scmp.eq.s32.totalorder %s90, 1
    %p533 = por %p531, %p532
    %p534 = scmp.ne.s32.totalorder %s525, %s526
    %p535 = scmp.eq.s32.totalorder %s90, 0
    %p536 = por %p534, %p535
    %p537 = scmp.ne.s32.totalorder %s525, %s526
    %p538 = scmp.eq.s32.totalorder %s91, 1
    %p539 = por %p537, %p538
    %p541 = scmp.ne.s32.totalorder %s526, %s540
    %p542 = scmp.eq.s32.totalorder %s91, 0
    %p543 = por %p541, %p542
    %s545 = sadd.s32 %s544, 1
    %p548 = scmp.eq.s32.totalorder %s85, 1
    %p549 = scmp.ne.s32.totalorder %s544, %s546
    %p550 = scmp.eq.s32.totalorder %s85, 0
    %p551 = por %p549, %p550
    %p552 = scmp.ne.s32.totalorder %s544, %s546
    %p553 = scmp.eq.s32.totalorder %s90, 1
    %p554 = por %p552, %p553
    %p555 = scmp.ne.s32.totalorder %s546, %s547
    %p556 = scmp.eq.s32.totalorder %s90, 0
    %p557 = por %p555, %p556
    %p558 = scmp.ne.s32.totalorder %s546, %s547
    %p559 = scmp.eq.s32.totalorder %s91, 1
    %p560 = por %p558, %p559
    %p562 = scmp.ne.s32.totalorder %s547, %s561
    %p563 = scmp.eq.s32.totalorder %s91, 0
    %p564 = por %p562, %p563
    %s566 = sadd.s32 %s565, 1
    %p569 = scmp.eq.s32.totalorder %s85, 1
    %p570 = scmp.ne.s32.totalorder %s565, %s567
    %p571 = scmp.eq.s32.totalorder %s85, 0
    %p572 = por %p570, %p571
    %p573 = scmp.ne.s32.totalorder %s565, %s567
    %p574 = scmp.eq.s32.totalorder %s90, 1
    %p575 = por %p573, %p574
    %p576 = scmp.ne.s32.totalorder %s567, %s568
    %p577 = scmp.eq.s32.totalorder %s90, 0
    %p578 = por %p576, %p577
    %p579 = scmp.ne.s32.totalorder %s567, %s568
    %p580 = scmp.eq.s32.totalorder %s91, 1
    %p581 = por %p579, %p580
    %p583 = scmp.ne.s32.totalorder %s568, %s582
    %p584 = scmp.eq.s32.totalorder %s91, 0
    %p585 = por %p583, %p584
    %s587 = sadd.s32 %s586, 1
    %p590 = scmp.eq.s32.totalorder %s85, 1
    %p591 = scmp.ne.s32.totalorder %s586, %s588
    %p592 = scmp.eq.s32.totalorder %s85, 0
    %p593 = por %p591, %p592
    %p594 = scmp.ne.s32.totalorder %s586, %s588
    %p595 = scmp.eq.s32.totalorder %s90, 1
    %p596 = por %p594, %p595
    %p597 = scmp.ne.s32.totalorder %s588, %s589
    %p598 = scmp.eq.s32.totalorder %s90, 0
    %p599 = por %p597, %p598
    %p600 = scmp.ne.s32.totalorder %s588, %s589
    %p601 = scmp.eq.s32.totalorder %s91, 1
    %p602 = por %p600, %p601
    %p604 = scmp.ne.s32.totalorder %s589, %s603
    %p605 = scmp.eq.s32.totalorder %s91, 0
    %p606 = por %p604, %p605
    %s608 = sadd.s32 %s607, 1
    %p611 = scmp.eq.s32.totalorder %s85, 1
    %p612 = scmp.ne.s32.totalorder %s607, %s609
    %p613 = scmp.eq.s32.totalorder %s85, 0
    %p614 = por %p612, %p613
    %p615 = scmp.ne.s32.totalorder %s607, %s609
    %p616 = scmp.eq.s32.totalorder %s90, 1
    %p617 = por %p615, %p616
    %p618 = scmp.ne.s32.totalorder %s609, %s610
    %p619 = scmp.eq.s32.totalorder %s90, 0
    %p620 = por %p618, %p619
    %p621 = scmp.ne.s32.totalorder %s609, %s610
    %p622 = scmp.eq.s32.totalorder %s91, 1
    %p623 = por %p621, %p622
    %p625 = scmp.ne.s32.totalorder %s610, %s624
    %p626 = scmp.eq.s32.totalorder %s91, 0
    %p627 = por %p625, %p626
    %s629 = sadd.s32 %s628, 1
    %p632 = scmp.eq.s32.totalorder %s85, 1
    %p633 = scmp.ne.s32.totalorder %s628, %s630
    %p634 = scmp.eq.s32.totalorder %s85, 0
    %p635 = por %p633, %p634
    %p636 = scmp.ne.s32.totalorder %s628, %s630
    %p637 = scmp.eq.s32.totalorder %s90, 1
    %p638 = por %p636, %p637
    %p639 = scmp.ne.s32.totalorder %s630, %s631
    %p640 = scmp.eq.s32.totalorder %s90, 0
    %p641 = por %p639, %p640
    %p642 = scmp.ne.s32.totalorder %s630, %s631
    %p643 = scmp.eq.s32.totalorder %s91, 1
    %p644 = por %p642, %p643
    %p646 = scmp.ne.s32.totalorder %s631, %s645
    %p647 = scmp.eq.s32.totalorder %s91, 0
    %p648 = por %p646, %p647
    %s650 = sadd.s32 %s649, 1
    %p653 = scmp.eq.s32.totalorder %s85, 1
    %p654 = scmp.ne.s32.totalorder %s649, %s651
    %p655 = scmp.eq.s32.totalorder %s85, 0
    %p656 = por %p654, %p655
    %p657 = scmp.ne.s32.totalorder %s649, %s651
    %p658 = scmp.eq.s32.totalorder %s90, 1
    %p659 = por %p657, %p658
    %p660 = scmp.ne.s32.totalorder %s651, %s652
    %p661 = scmp.eq.s32.totalorder %s90, 0
    %p662 = por %p660, %p661
    %p663 = scmp.ne.s32.totalorder %s651, %s652
    %p664 = scmp.eq.s32.totalorder %s91, 1
    %p665 = por %p663, %p664
    %p667 = scmp.ne.s32.totalorder %s652, %s666
    %p668 = scmp.eq.s32.totalorder %s91, 0
    %p669 = por %p667, %p668
    %s671 = sadd.s32 %s670, 1
    %p674 = scmp.eq.s32.totalorder %s85, 1
    %p675 = scmp.ne.s32.totalorder %s670, %s672
    %p676 = scmp.eq.s32.totalorder %s85, 0
    %p677 = por %p675, %p676
    %p678 = scmp.ne.s32.totalorder %s670, %s672
    %p679 = scmp.eq.s32.totalorder %s90, 1
    %p680 = por %p678, %p679
    %p681 = scmp.ne.s32.totalorder %s672, %s673
    %p682 = scmp.eq.s32.totalorder %s90, 0
    %p683 = por %p681, %p682
    %p684 = scmp.ne.s32.totalorder %s672, %s673
    %p685 = scmp.eq.s32.totalorder %s91, 1
    %p686 = por %p684, %p685
    %p688 = scmp.ne.s32.totalorder %s673, %s687
    %p689 = scmp.eq.s32.totalorder %s91, 0
    %p690 = por %p688, %p689
    %s692 = sadd.s32 %s691, 1
    %p695 = scmp.eq.s32.totalorder %s85, 1
    %p696 = scmp.ne.s32.totalorder %s691, %s693
    %p697 = scmp.eq.s32.totalorder %s85, 0
    %p698 = por %p696, %p697
    %p699 = scmp.ne.s32.totalorder %s691, %s693
    %p700 = scmp.eq.s32.totalorder %s90, 1
    %p701 = por %p699, %p700
    %p702 = scmp.ne.s32.totalorder %s693, %s694
    %p703 = scmp.eq.s32.totalorder %s90, 0
    %p704 = por %p702, %p703
    %p705 = scmp.ne.s32.totalorder %s693, %s694
    %p706 = scmp.eq.s32.totalorder %s91, 1
    %p707 = por %p705, %p706
    %p709 = scmp.ne.s32.totalorder %s694, %s708
    %p710 = scmp.eq.s32.totalorder %s91, 0
    %p711 = por %p709, %p710
    %s713 = sadd.s32 %s712, 1
    %p716 = scmp.eq.s32.totalorder %s85, 1
    %p717 = scmp.ne.s32.totalorder %s712, %s714
    %p718 = scmp.eq.s32.totalorder %s85, 0
    %p719 = por %p717, %p718
    %p720 = scmp.ne.s32.totalorder %s712, %s714
    %p721 = scmp.eq.s32.totalorder %s90, 1
    %p722 = por %p720, %p721
    %p723 = scmp.ne.s32.totalorder %s714, %s715
    %p724 = scmp.eq.s32.totalorder %s90, 0
    %p725 = por %p723, %p724
    %p726 = scmp.ne.s32.totalorder %s714, %s715
    %p727 = scmp.eq.s32.totalorder %s91, 1
    %p728 = por %p726, %p727
    %p730 = scmp.ne.s32.totalorder %s715, %s729
    %p731 = scmp.eq.s32.totalorder %s91, 0
    %p732 = por %p730, %p731
    %s734 = sadd.s32 %s733, 1
    %p737 = scmp.eq.s32.totalorder %s85, 1
    %p738 = scmp.ne.s32.totalorder %s733, %s735
    %p739 = scmp.eq.s32.totalorder %s85, 0
    %p740 = por %p738, %p739
    %p741 = scmp.ne.s32.totalorder %s733, %s735
    %p742 = scmp.eq.s32.totalorder %s90, 1
    %p743 = por %p741, %p742
    %p744 = scmp.ne.s32.totalorder %s735, %s736
    %p745 = scmp.eq.s32.totalorder %s90, 0
    %p746 = por %p744, %p745
    %p747 = scmp.ne.s32.totalorder %s735, %s736
    %p748 = scmp.eq.s32.totalorder %s91, 1
    %p749 = por %p747, %p748
    %p751 = scmp.ne.s32.totalorder %s736, %s750
    %p752 = scmp.eq.s32.totalorder %s91, 0
    %p753 = por %p751, %p752
    %s755 = sadd.s32 %s754, 1
    %p758 = scmp.eq.s32.totalorder %s85, 1
    %p759 = scmp.ne.s32.totalorder %s754, %s756
    %p760 = scmp.eq.s32.totalorder %s85, 0
    %p761 = por %p759, %p760
    %p762 = scmp.ne.s32.totalorder %s754, %s756
    %p763 = scmp.eq.s32.totalorder %s90, 1
    %p764 = por %p762, %p763
    %p765 = scmp.ne.s32.totalorder %s756, %s757
    %p766 = scmp.eq.s32.totalorder %s90, 0
    %p767 = por %p765, %p766
    %p768 = scmp.ne.s32.totalorder %s756, %s757
    %p769 = scmp.eq.s32.totalorder %s91, 1
    %p770 = por %p768, %p769
    %p772 = scmp.ne.s32.totalorder %s757, %s771
    %p773 = scmp.eq.s32.totalorder %s91, 0
    %p774 = por %p772, %p773
    %s776 = sadd.s32 %s775, 1
    %p779 = scmp.eq.s32.totalorder %s85, 1
    %p780 = scmp.ne.s32.totalorder %s775, %s777
    %p781 = scmp.eq.s32.totalorder %s85, 0
    %p782 = por %p780, %p781
    %p783 = scmp.ne.s32.totalorder %s775, %s777
    %p784 = scmp.eq.s32.totalorder %s90, 1
    %p785 = por %p783, %p784
    %p786 = scmp.ne.s32.totalorder %s777, %s778
    %p787 = scmp.eq.s32.totalorder %s90, 0
    %p788 = por %p786, %p787
    %p789 = scmp.ne.s32.totalorder %s777, %s778
    %p790 = scmp.eq.s32.totalorder %s91, 1
    %p791 = por %p789, %p790
    %p793 = scmp.ne.s32.totalorder %s778, %s792
    %p794 = scmp.eq.s32.totalorder %s91, 0
    %p795 = por %p793, %p794
    %s797 = sadd.s32 %s796, 1
    %p800 = scmp.eq.s32.totalorder %s85, 1
    %p801 = scmp.ne.s32.totalorder %s796, %s798
    %p802 = scmp.eq.s32.totalorder %s85, 0
    %p803 = por %p801, %p802
    %p804 = scmp.ne.s32.totalorder %s796, %s798
    %p805 = scmp.eq.s32.totalorder %s90, 1
    %p806 = por %p804, %p805
    %p807 = scmp.ne.s32.totalorder %s798, %s799
    %p808 = scmp.eq.s32.totalorder %s90, 0
    %p809 = por %p807, %p808
    %p810 = scmp.ne.s32.totalorder %s798, %s799
    %p811 = scmp.eq.s32.totalorder %s91, 1
    %p812 = por %p810, %p811
    %p814 = scmp.ne.s32.totalorder %s799, %s813
    %p815 = scmp.eq.s32.totalorder %s91, 0
    %p816 = por %p814, %p815
    %s818 = sadd.s32 %s817, 1
    %p821 = scmp.eq.s32.totalorder %s85, 1
    %p822 = scmp.ne.s32.totalorder %s817, %s819
    %p823 = scmp.eq.s32.totalorder %s85, 0
    %p824 = por %p822, %p823
    %p825 = scmp.ne.s32.totalorder %s817, %s819
    %p826 = scmp.eq.s32.totalorder %s90, 1
    %p827 = por %p825, %p826
    %p828 = scmp.ne.s32.totalorder %s819, %s820
    %p829 = scmp.eq.s32.totalorder %s90, 0
    %p830 = por %p828, %p829
    %p831 = scmp.ne.s32.totalorder %s819, %s820
    %p832 = scmp.eq.s32.totalorder %s91, 1
    %p833 = por %p831, %p832
    %p835 = scmp.ne.s32.totalorder %s820, %s834
    %p836 = scmp.eq.s32.totalorder %s91, 0
    %p837 = por %p835, %p836
    %s839 = sadd.s32 %s838, 1
    %p842 = scmp.eq.s32.totalorder %s85, 1
    %p843 = scmp.ne.s32.totalorder %s838, %s840
    %p844 = scmp.eq.s32.totalorder %s85, 0
    %p845 = por %p843, %p844
    %p846 = scmp.ne.s32.totalorder %s838, %s840
    %p847 = scmp.eq.s32.totalorder %s90, 1
    %p848 = por %p846, %p847
    %p849 = scmp.ne.s32.totalorder %s840, %s841
    %p850 = scmp.eq.s32.totalorder %s90, 0
    %p851 = por %p849, %p850
    %p852 = scmp.ne.s32.totalorder %s840, %s841
    %p853 = scmp.eq.s32.totalorder %s91, 1
    %p854 = por %p852, %p853
    %p856 = scmp.ne.s32.totalorder %s841, %s855
    %p857 = scmp.eq.s32.totalorder %s91, 0
    %p858 = por %p856, %p857
    %s860 = sadd.s32 %s859, 1
    %p863 = scmp.eq.s32.totalorder %s85, 1
    %p864 = scmp.ne.s32.totalorder %s859, %s861
    %p865 = scmp.eq.s32.totalorder %s85, 0
    %p866 = por %p864, %p865
    %p867 = scmp.ne.s32.totalorder %s859, %s861
    %p868 = scmp.eq.s32.totalorder %s90, 1
    %p869 = por %p867, %p868
    %p870 = scmp.ne.s32.totalorder %s861, %s862
    %p871 = scmp.eq.s32.totalorder %s90, 0
    %p872 = por %p870, %p871
    %p873 = scmp.ne.s32.totalorder %s861, %s862
    %p874 = scmp.eq.s32.totalorder %s91, 1
    %p875 = por %p873, %p874
    %p877 = scmp.ne.s32.totalorder %s862, %s876
    %p878 = scmp.eq.s32.totalorder %s91, 0
    %p879 = por %p877, %p878
    %s881 = sadd.s32 %s880, 1
    %p884 = scmp.eq.s32.totalorder %s85, 1
    %p885 = scmp.ne.s32.totalorder %s880, %s882
    %p886 = scmp.eq.s32.totalorder %s85, 0
    %p887 = por %p885, %p886
    %p888 = scmp.ne.s32.totalorder %s880, %s882
    %p889 = scmp.eq.s32.totalorder %s90, 1
    %p890 = por %p888, %p889
    %p891 = scmp.ne.s32.totalorder %s882, %s883
    %p892 = scmp.eq.s32.totalorder %s90, 0
    %p893 = por %p891, %p892
    %p894 = scmp.ne.s32.totalorder %s882, %s883
    %p895 = scmp.eq.s32.totalorder %s91, 1
    %p896 = por %p894, %p895
    %p898 = scmp.ne.s32.totalorder %s883, %s897
    %p899 = scmp.eq.s32.totalorder %s91, 0
    %p900 = por %p898, %p899
    %s902 = sadd.s32 %s901, 1
    %p905 = scmp.eq.s32.totalorder %s85, 1
    %p906 = scmp.ne.s32.totalorder %s901, %s903
    %p907 = scmp.eq.s32.totalorder %s85, 0
    %p908 = por %p906, %p907
    %p909 = scmp.ne.s32.totalorder %s901, %s903
    %p910 = scmp.eq.s32.totalorder %s90, 1
    %p911 = por %p909, %p910
    %p912 = scmp.ne.s32.totalorder %s903, %s904
    %p913 = scmp.eq.s32.totalorder %s90, 0
    %p914 = por %p912, %p913
    %p915 = scmp.ne.s32.totalorder %s903, %s904
    %p916 = scmp.eq.s32.totalorder %s91, 1
    %p917 = por %p915, %p916
    %p919 = scmp.ne.s32.totalorder %s904, %s918
    %p920 = scmp.eq.s32.totalorder %s91, 0
    %p921 = por %p919, %p920
    %s922 = ssub.s32 %s85, %s92
    %p923 = scmp.eq.s32.totalorder %s922, 0
    %s925 = sadd.s32 %s924, 1
    %s926 = scalar_select %p923, %s924, %s925
    %p929 = pneg %p923
    %p930 = scmp.eq.s32.totalorder %s85, 1
    %p931 = por %p929, %p930
    %p932 = scmp.ne.s32.totalorder %s924, %s927
    %p933 = scmp.eq.s32.totalorder %s85, 0
    %p934 = por %p932, %p933
    %p935 = scmp.ne.s32.totalorder %s924, %s927
    %p936 = scmp.eq.s32.totalorder %s90, 1
    %p937 = por %p935, %p936
    %p938 = scmp.ne.s32.totalorder %s927, %s928
    %p939 = scmp.eq.s32.totalorder %s90, 0
    %p940 = por %p938, %p939
    %p941 = scmp.ne.s32.totalorder %s927, %s928
    %p942 = scmp.eq.s32.totalorder %s91, 1
    %p943 = por %p941, %p942
    %p945 = scmp.ne.s32.totalorder %s928, %s944
    %p946 = scmp.eq.s32.totalorder %s91, 0
    %p947 = por %p945, %p946
    %p948 = scmp.le.s32.totalorder 1, %s85
    %p949 = scmp.lt.s32.totalorder %s85, 3
    %p950 = pnand %p948, %p949
    %p951 = pneg %p950
    // Predicated region
    $region9: #{point_vit_seg_forward.3} parent=5 // pred_check
      _
    $region10: #{point_vit_seg_forward.3} parent=5 // pred_check_branch
      %953 = sbr.rel (%p950) target = $region12
    $region11: #{point_vit_seg_forward.3} parent=5 // pred_region
      %s954 = ssub.s32 %s85, 1
      // Predicated region
      $region13: #{point_vit_seg_forward.3} parent=11 // pred_check
        %p955 = pneg %p158
      $region14: #{point_vit_seg_forward.3} parent=11 // pred_check_branch
        %957 = sbr.rel (%p955) target = $region16
      $region15: #{point_vit_seg_forward.3} parent=11 // pred_region
        _
      $region16: #{point_vit_seg_forward.3} parent=11 // pred_fallthru
        _
      // Predicated region
      $region17: #{point_vit_seg_forward.3} parent=11 // pred_check
        %p958 = pneg %p179
      $region18: #{point_vit_seg_forward.3} parent=11 // pred_check_branch
        %960 = sbr.rel (%p958) target = $region20
      $region19: #{point_vit_seg_forward.3} parent=11 // pred_region
        _
      $region20: #{point_vit_seg_forward.3} parent=11 // pred_fallthru
        _
      // Predicated region
      $region21: #{point_vit_seg_forward.3} parent=11 // pred_check
        %p961 = pneg %p200
      $region22: #{point_vit_seg_forward.3} parent=11 // pred_check_branch
        %963 = sbr.rel (%p961) target = $region24
      $region23: #{point_vit_seg_forward.3} parent=11 // pred_region
        _
      $region24: #{point_vit_seg_forward.3} parent=11 // pred_fallthru
        _
      // Predicated region
      $region25: #{point_vit_seg_forward.3} parent=11 // pred_check
        %p964 = pneg %p221
      $region26: #{point_vit_seg_forward.3} parent=11 // pred_check_branch
        %966 = sbr.rel (%p964) target = $region28
      $region27: #{point_vit_seg_forward.3} parent=11 // pred_region
        _
      $region28: #{point_vit_seg_forward.3} parent=11 // pred_fallthru
        _
      // Predicated region
      $region29: #{point_vit_seg_forward.3} parent=11 // pred_check
        %p967 = pneg %p242
      $region30: #{point_vit_seg_forward.3} parent=11 // pred_check_branch
        %969 = sbr.rel (%p967) target = $region32
      $region31: #{point_vit_seg_forward.3} parent=11 // pred_region
        _
      $region32: #{point_vit_seg_forward.3} parent=11 // pred_fallthru
        _
      // Predicated region
      $region33: #{point_vit_seg_forward.3} parent=11 // pred_check
        %p970 = pneg %p263
      $region34: #{point_vit_seg_forward.3} parent=11 // pred_check_branch
        %972 = sbr.rel (%p970) target = $region36
      $region35: #{point_vit_seg_forward.3} parent=11 // pred_region
        _
      $region36: #{point_vit_seg_forward.3} parent=11 // pred_fallthru
        _
      // Predicated region
      $region37: #{point_vit_seg_forward.3} parent=11 // pred_check
        %p973 = pneg %p284
      $region38: #{point_vit_seg_forward.3} parent=11 // pred_check_branch
        %975 = sbr.rel (%p973) target = $region40
      $region39: #{point_vit_seg_forward.3} parent=11 // pred_region
        _
      $region40: #{point_vit_seg_forward.3} parent=11 // pred_fallthru
        _
      // Predicated region
      $region41: #{point_vit_seg_forward.3} parent=11 // pred_check
        %p976 = pneg %p305
      $region42: #{point_vit_seg_forward.3} parent=11 // pred_check_branch
        %978 = sbr.rel (%p976) target = $region44
      $region43: #{point_vit_seg_forward.3} parent=11 // pred_region
        _
      $region44: #{point_vit_seg_forward.3} parent=11 // pred_fallthru
        _
      // Predicated region
      $region45: #{point_vit_seg_forward.3} parent=11 // pred_check
        %p979 = pneg %p326
      $region46: #{point_vit_seg_forward.3} parent=11 // pred_check_branch
        %981 = sbr.rel (%p979) target = $region48
      $region47: #{point_vit_seg_forward.3} parent=11 // pred_region
        _
      $region48: #{point_vit_seg_forward.3} parent=11 // pred_fallthru
        _
      // Predicated region
      $region49: #{point_vit_seg_forward.3} parent=11 // pred_check
        %p982 = pneg %p347
      $region50: #{point_vit_seg_forward.3} parent=11 // pred_check_branch
        %984 = sbr.rel (%p982) target = $region52
      $region51: #{point_vit_seg_forward.3} parent=11 // pred_region
        _
      $region52: #{point_vit_seg_forward.3} parent=11 // pred_fallthru
        _
      // Predicated region
      $region53: #{point_vit_seg_forward.3} parent=11 // pred_check
        %p985 = pneg %p368
      $region54: #{point_vit_seg_forward.3} parent=11 // pred_check_branch
        %987 = sbr.rel (%p985) target = $region56
      $region55: #{point_vit_seg_forward.3} parent=11 // pred_region
        _
      $region56: #{point_vit_seg_forward.3} parent=11 // pred_fallthru
        _
      // Predicated region
      $region57: #{point_vit_seg_forward.3} parent=11 // pred_check
        %p988 = pneg %p389
      $region58: #{point_vit_seg_forward.3} parent=11 // pred_check_branch
        %990 = sbr.rel (%p988) target = $region60
      $region59: #{point_vit_seg_forward.3} parent=11 // pred_region
        _
      $region60: #{point_vit_seg_forward.3} parent=11 // pred_fallthru
        _
      // Predicated region
      $region61: #{point_vit_seg_forward.3} parent=11 // pred_check
        %p991 = pneg %p410
      $region62: #{point_vit_seg_forward.3} parent=11 // pred_check_branch
        %993 = sbr.rel (%p991) target = $region64
      $region63: #{point_vit_seg_forward.3} parent=11 // pred_region
        _
      $region64: #{point_vit_seg_forward.3} parent=11 // pred_fallthru
        _
      // Predicated region
      $region65: #{point_vit_seg_forward.3} parent=11 // pred_check
        %p994 = pneg %p431
      $region66: #{point_vit_seg_forward.3} parent=11 // pred_check_branch
        %996 = sbr.rel (%p994) target = $region68
      $region67: #{point_vit_seg_forward.3} parent=11 // pred_region
        _
      $region68: #{point_vit_seg_forward.3} parent=11 // pred_fallthru
        _
      // Predicated region
      $region69: #{point_vit_seg_forward.3} parent=11 // pred_check
        %p997 = pneg %p452
      $region70: #{point_vit_seg_forward.3} parent=11 // pred_check_branch
        %999 = sbr.rel (%p997) target = $region72
      $region71: #{point_vit_seg_forward.3} parent=11 // pred_region
        _
      $region72: #{point_vit_seg_forward.3} parent=11 // pred_fallthru
        _
      // Predicated region
      $region73: #{point_vit_seg_forward.3} parent=11 // pred_check
        %p1000 = pneg %p473
      $region74: #{point_vit_seg_forward.3} parent=11 // pred_check_branch
        %1002 = sbr.rel (%p1000) target = $region76
      $region75: #{point_vit_seg_forward.3} parent=11 // pred_region
        _
      $region76: #{point_vit_seg_forward.3} parent=11 // pred_fallthru
        _
      // Predicated region
      $region77: #{point_vit_seg_forward.3} parent=11 // pred_check
        %p1003 = pneg %p494
      $region78: #{point_vit_seg_forward.3} parent=11 // pred_check_branch
        %1005 = sbr.rel (%p1003) target = $region80
      $region79: #{point_vit_seg_forward.3} parent=11 // pred_region
        _
      $region80: #{point_vit_seg_forward.3} parent=11 // pred_fallthru
        _
      // Predicated region
      $region81: #{point_vit_seg_forward.3} parent=11 // pred_check
        %p1006 = pneg %p515
      $region82: #{point_vit_seg_forward.3} parent=11 // pred_check_branch
        %1008 = sbr.rel (%p1006) target = $region84
      $region83: #{point_vit_seg_forward.3} parent=11 // pred_region
        _
      $region84: #{point_vit_seg_forward.3} parent=11 // pred_fallthru
        _
      // Predicated region
      $region85: #{point_vit_seg_forward.3} parent=11 // pred_check
        %p1009 = pneg %p536
      $region86: #{point_vit_seg_forward.3} parent=11 // pred_check_branch
        %1011 = sbr.rel (%p1009) target = $region88
      $region87: #{point_vit_seg_forward.3} parent=11 // pred_region
        _
      $region88: #{point_vit_seg_forward.3} parent=11 // pred_fallthru
        _
      // Predicated region
      $region89: #{point_vit_seg_forward.3} parent=11 // pred_check
        %p1012 = pneg %p557
      $region90: #{point_vit_seg_forward.3} parent=11 // pred_check_branch
        %1014 = sbr.rel (%p1012) target = $region92
      $region91: #{point_vit_seg_forward.3} parent=11 // pred_region
        _
      $region92: #{point_vit_seg_forward.3} parent=11 // pred_fallthru
        _
      // Predicated region
      $region93: #{point_vit_seg_forward.3} parent=11 // pred_check
        %p1015 = pneg %p578
      $region94: #{point_vit_seg_forward.3} parent=11 // pred_check_branch
        %1017 = sbr.rel (%p1015) target = $region96
      $region95: #{point_vit_seg_forward.3} parent=11 // pred_region
        _
      $region96: #{point_vit_seg_forward.3} parent=11 // pred_fallthru
        _
      // Predicated region
      $region97: #{point_vit_seg_forward.3} parent=11 // pred_check
        %p1018 = pneg %p599
      $region98: #{point_vit_seg_forward.3} parent=11 // pred_check_branch
        %1020 = sbr.rel (%p1018) target = $region100
      $region99: #{point_vit_seg_forward.3} parent=11 // pred_region
        _
      $region100: #{point_vit_seg_forward.3} parent=11 // pred_fallthru
        _
      // Predicated region
      $region101: #{point_vit_seg_forward.3} parent=11 // pred_check
        %p1021 = pneg %p620
      $region102: #{point_vit_seg_forward.3} parent=11 // pred_check_branch
        %1023 = sbr.rel (%p1021) target = $region104
      $region103: #{point_vit_seg_forward.3} parent=11 // pred_region
        _
      $region104: #{point_vit_seg_forward.3} parent=11 // pred_fallthru
        _
      // Predicated region
      $region105: #{point_vit_seg_forward.3} parent=11 // pred_check
        %p1024 = pneg %p641
      $region106: #{point_vit_seg_forward.3} parent=11 // pred_check_branch
        %1026 = sbr.rel (%p1024) target = $region108
      $region107: #{point_vit_seg_forward.3} parent=11 // pred_region
        _
      $region108: #{point_vit_seg_forward.3} parent=11 // pred_fallthru
        _
      // Predicated region
      $region109: #{point_vit_seg_forward.3} parent=11 // pred_check
        %p1027 = pneg %p662
      $region110: #{point_vit_seg_forward.3} parent=11 // pred_check_branch
        %1029 = sbr.rel (%p1027) target = $region112
      $region111: #{point_vit_seg_forward.3} parent=11 // pred_region
        _
      $region112: #{point_vit_seg_forward.3} parent=11 // pred_fallthru
        _
      // Predicated region
      $region113: #{point_vit_seg_forward.3} parent=11 // pred_check
        %p1030 = pneg %p683
      $region114: #{point_vit_seg_forward.3} parent=11 // pred_check_branch
        %1032 = sbr.rel (%p1030) target = $region116
      $region115: #{point_vit_seg_forward.3} parent=11 // pred_region
        _
      $region116: #{point_vit_seg_forward.3} parent=11 // pred_fallthru
        _
      // Predicated region
      $region117: #{point_vit_seg_forward.3} parent=11 // pred_check
        %p1033 = pneg %p704
      $region118: #{point_vit_seg_forward.3} parent=11 // pred_check_branch
        %1035 = sbr.rel (%p1033) target = $region120
      $region119: #{point_vit_seg_forward.3} parent=11 // pred_region
        _
      $region120: #{point_vit_seg_forward.3} parent=11 // pred_fallthru
        _
      // Predicated region
      $region121: #{point_vit_seg_forward.3} parent=11 // pred_check
        %p1036 = pneg %p725
      $region122: #{point_vit_seg_forward.3} parent=11 // pred_check_branch
        %1038 = sbr.rel (%p1036) target = $region124
      $region123: #{point_vit_seg_forward.3} parent=11 // pred_region
        _
      $region124: #{point_vit_seg_forward.3} parent=11 // pred_fallthru
        _
      // Predicated region
      $region125: #{point_vit_seg_forward.3} parent=11 // pred_check
        %p1039 = pneg %p746
      $region126: #{point_vit_seg_forward.3} parent=11 // pred_check_branch
        %1041 = sbr.rel (%p1039) target = $region128
      $region127: #{point_vit_seg_forward.3} parent=11 // pred_region
        _
      $region128: #{point_vit_seg_forward.3} parent=11 // pred_fallthru
        _
      // Predicated region
      $region129: #{point_vit_seg_forward.3} parent=11 // pred_check
        %p1042 = pneg %p767
      $region130: #{point_vit_seg_forward.3} parent=11 // pred_check_branch
        %1044 = sbr.rel (%p1042) target = $region132
      $region131: #{point_vit_seg_forward.3} parent=11 // pred_region
        _
      $region132: #{point_vit_seg_forward.3} parent=11 // pred_fallthru
        _
      // Predicated region
      $region133: #{point_vit_seg_forward.3} parent=11 // pred_check
        %p1045 = pneg %p788
      $region134: #{point_vit_seg_forward.3} parent=11 // pred_check_branch
        %1047 = sbr.rel (%p1045) target = $region136
      $region135: #{point_vit_seg_forward.3} parent=11 // pred_region
        _
      $region136: #{point_vit_seg_forward.3} parent=11 // pred_fallthru
        _
      // Predicated region
      $region137: #{point_vit_seg_forward.3} parent=11 // pred_check
        %p1048 = pneg %p809
      $region138: #{point_vit_seg_forward.3} parent=11 // pred_check_branch
        %1050 = sbr.rel (%p1048) target = $region140
      $region139: #{point_vit_seg_forward.3} parent=11 // pred_region
        _
      $region140: #{point_vit_seg_forward.3} parent=11 // pred_fallthru
        _
      // Predicated region
      $region141: #{point_vit_seg_forward.3} parent=11 // pred_check
        %p1051 = pneg %p830
      $region142: #{point_vit_seg_forward.3} parent=11 // pred_check_branch
        %1053 = sbr.rel (%p1051) target = $region144
      $region143: #{point_vit_seg_forward.3} parent=11 // pred_region
        _
      $region144: #{point_vit_seg_forward.3} parent=11 // pred_fallthru
        _
      // Predicated region
      $region145: #{point_vit_seg_forward.3} parent=11 // pred_check
        %p1054 = pneg %p851
      $region146: #{point_vit_seg_forward.3} parent=11 // pred_check_branch
        %1056 = sbr.rel (%p1054) target = $region148
      $region147: #{point_vit_seg_forward.3} parent=11 // pred_region
        _
      $region148: #{point_vit_seg_forward.3} parent=11 // pred_fallthru
        _
      // Predicated region
      $region149: #{point_vit_seg_forward.3} parent=11 // pred_check
        %p1057 = pneg %p872
      $region150: #{point_vit_seg_forward.3} parent=11 // pred_check_branch
        %1059 = sbr.rel (%p1057) target = $region152
      $region151: #{point_vit_seg_forward.3} parent=11 // pred_region
        _
      $region152: #{point_vit_seg_forward.3} parent=11 // pred_fallthru
        _
      // Predicated region
      $region153: #{point_vit_seg_forward.3} parent=11 // pred_check
        %p1060 = pneg %p893
      $region154: #{point_vit_seg_forward.3} parent=11 // pred_check_branch
        %1062 = sbr.rel (%p1060) target = $region156
      $region155: #{point_vit_seg_forward.3} parent=11 // pred_region
        _
      $region156: #{point_vit_seg_forward.3} parent=11 // pred_fallthru
        _
      // Predicated region
      $region157: #{point_vit_seg_forward.3} parent=11 // pred_check
        %p1063 = pneg %p914
      $region158: #{point_vit_seg_forward.3} parent=11 // pred_check_branch
        %1065 = sbr.rel (%p1063) target = $region160
      $region159: #{point_vit_seg_forward.3} parent=11 // pred_region
        _
      $region160: #{point_vit_seg_forward.3} parent=11 // pred_fallthru
        _
    $region12: #{point_vit_seg_forward.3} parent=5 // pred_fallthru
      _
    %p1066 = scmp.lt.s32.totalorder %s85, 2
    // Predicated region
    $region161: #{point_vit_seg_forward.3} parent=5 // pred_check
      %p1067 = pneg %p1066
    $region162: #{point_vit_seg_forward.3} parent=5 // pred_check_branch
      %1069 = sbr.rel (%p1067) target = $region164
    $region163: #{point_vit_seg_forward.3} parent=5 // pred_region
      // Predicated region
      $region165: #{point_vit_seg_forward.3} parent=163 // pred_check
        %p1070 = pneg %p105
      $region166: #{point_vit_seg_forward.3} parent=163 // pred_check_branch
        %1072 = sbr.rel (%p1070) target = $region168
      $region167: #{point_vit_seg_forward.3} parent=163 // pred_region
        %p1073 = scmp.lt.s32.totalorder %s85, 1
        %s1074 = scalar_select %p1073, %s85, 1
        %s1075 = smul.addr %s1074, 16
        %s1076 = smul.addr %s1075, 8
        %s1077 = scalar_lea.vmem %s1, %s1076
      $region168: #{point_vit_seg_forward.3} parent=163 // pred_fallthru
        _
      // Predicated region
      $region169: #{point_vit_seg_forward.3} parent=163 // pred_check
        %p1078 = pneg %p131
      $region170: #{point_vit_seg_forward.3} parent=163 // pred_check_branch
        %1080 = sbr.rel (%p1078) target = $region172
      $region171: #{point_vit_seg_forward.3} parent=163 // pred_region
        %p1081 = scmp.lt.s32.totalorder %s85, 1
        %s1082 = scalar_select %p1081, %s85, 1
        %s1083 = smul.addr %s1082, 2
        %s1084 = smul.addr %s1083, 8
        %s1085 = scalar_lea.vmem %s3, %s1084
      $region172: #{point_vit_seg_forward.3} parent=163 // pred_fallthru
        _
    $region164: #{point_vit_seg_forward.3} parent=5 // pred_fallthru
      _
    %p1086 = scmp.le.s32.totalorder 1, %s85
    %p1087 = scmp.lt.s32.totalorder %s85, 3
    %p1088 = pnand %p1086, %p1087
    %p1089 = pneg %p1088
    // Predicated region
    $region173: #{point_vit_seg_forward.3} parent=5 // pred_check
      _
    $region174: #{point_vit_seg_forward.3} parent=5 // pred_check_branch
      %1091 = sbr.rel (%p1088) target = $region176
    $region175: #{point_vit_seg_forward.3} parent=5 // pred_region
      %s1092 = ssub.s32 %s85, 1
      %p1093 = scmp.lt.s32.totalorder %s90, 1
      %s1094 = scalar_select %p1093, %s90, 1
      %s1095 = smul.addr %s1094, 16
      %s1096 = smul.addr %s1095, 8
      %s1097 = scalar_lea.vmem %s1, %s1096
      %p1098 = pneg %p111
      %p1099 = pneg %p108
      %p1100 = scmp.lt.s32.totalorder %s90, 1
      %s1101 = scalar_select %p1100, %s90, 1
      %s1102 = smul.addr %s1101, 2
      %s1103 = smul.addr %s1102, 8
      %s1104 = scalar_lea.vmem %s3, %s1103
      %p1105 = pneg %p137
      %p1106 = pneg %p134
      %p1107 = pneg %p158
      %p1108 = pneg %p155
      %p1109 = pneg %p179
      %p1110 = pneg %p176
      %p1111 = pneg %p200
      %p1112 = pneg %p197
      %p1113 = pneg %p221
      %p1114 = pneg %p218
      %p1115 = pneg %p242
      %p1116 = pneg %p239
      %p1117 = pneg %p263
      %p1118 = pneg %p260
      %p1119 = pneg %p284
      %p1120 = pneg %p281
      %p1121 = pneg %p305
      %p1122 = pneg %p302
      %p1123 = pneg %p326
      %p1124 = pneg %p323
      %p1125 = pneg %p347
      %p1126 = pneg %p344
      %p1127 = pneg %p368
      %p1128 = pneg %p365
      %p1129 = pneg %p389
      %p1130 = pneg %p386
      %p1131 = pneg %p410
      %p1132 = pneg %p407
      %p1133 = pneg %p431
      %p1134 = pneg %p428
      %p1135 = pneg %p452
      %p1136 = pneg %p449
      %p1137 = pneg %p473
      %p1138 = pneg %p470
      %p1139 = pneg %p494
      %p1140 = pneg %p491
      %p1141 = pneg %p515
      %p1142 = pneg %p512
      %p1143 = pneg %p536
      %p1144 = pneg %p533
      %p1145 = pneg %p557
      %p1146 = pneg %p554
      %p1147 = pneg %p578
      %p1148 = pneg %p575
      %p1149 = pneg %p599
      %p1150 = pneg %p596
      %p1151 = pneg %p620
      %p1152 = pneg %p617
      %p1153 = pneg %p641
      %p1154 = pneg %p638
      %p1155 = pneg %p662
      %p1156 = pneg %p659
      %p1157 = pneg %p683
      %p1158 = pneg %p680
      %p1159 = pneg %p704
      %p1160 = pneg %p701
      %p1161 = pneg %p725
      %p1162 = pneg %p722
      %p1163 = pneg %p746
      %p1164 = pneg %p743
      %p1165 = pneg %p767
      %p1166 = pneg %p764
      %p1167 = pneg %p788
      %p1168 = pneg %p785
      %p1169 = pneg %p809
      %p1170 = pneg %p806
      %p1171 = pneg %p830
      %p1172 = pneg %p827
      %p1173 = pneg %p851
      %p1174 = pneg %p848
      %p1175 = pneg %p872
      %p1176 = pneg %p869
      %p1177 = pneg %p893
      %p1178 = pneg %p890
      %p1179 = pneg %p914
      %p1180 = pneg %p911
      %p1181 = pneg %p940
      %p1182 = pneg %p937
      %p1183 = scmp.lt.s32.totalorder %s90, 1
      %s1184 = scalar_select %p1183, %s90, 1
      %s1185 = smul.addr %s1184, 2
      %s1186 = smul.addr %s1185, 8
      %s1187 = scalar_lea.vmem %s79, %s1186
      %p1188 = scmp.lt.s32.totalorder %s90, 1
      %s1189 = scalar_select %p1188, %s90, 1
      %s1190 = smul.addr %s1189, 16
      %s1191 = smul.addr %s1190, 8
      %s1192 = scalar_lea.vmem %s1, %s1191
      %p1193 = scmp.lt.s32.totalorder %s90, 1
      %s1194 = scalar_select %p1193, %s90, 1
      %s1195 = smul.addr %s1194, 2
      %s1196 = smul.addr %s1195, 8
      %s1197 = scalar_lea.vmem %s3, %s1196
      %p1198 = scmp.lt.s32.totalorder %s90, 1
      %s1199 = scalar_select %p1198, %s90, 1
      %s1200 = smul.addr %s1199, 2
      %s1201 = smul.addr %s1200, 8
      %s1202 = scalar_lea.vmem %s79, %s1201
      %v1203 = vld [vmem:[%s7] sm:$0x3f]
      %v1204 = vld [vmem:[%s9] sm:$0x1]
      %v1205 = vld [vmem:[%s11] sm:$0xff]
      %v1206 = vld [vmem:[%s11 + $0x8] sm:$0xff]
      %v1207 = vld [vmem:[%s11 + $0x10] sm:$0xff]
      %v1208 = vld [vmem:[%s11 + $0x18] sm:$0xff]
      %v1209 = vld [vmem:[%s13] sm:$0x1]
      %v1210 = vld [vmem:[%s15] sm:$0xff]
      %v1211 = vld [vmem:[%s15 + $0x8] sm:$0xff]
      %v1212 = vld [vmem:[%s15 + $0x10] sm:$0xff]
      %v1213 = vld [vmem:[%s15 + $0x18] sm:$0xff]
      %v1214 = vld [vmem:[%s17] sm:$0x1]
      %v1215 = vld [vmem:[%s19] sm:$0x7]
      %v1216 = vld [vmem:[%s21] sm:$0x1]
      %v1217 = vld [vmem:[%s23] sm:$0xff]
      %v1218 = vld [vmem:[%s23 + $0x8] sm:$0xff]
      %v1219 = vld [vmem:[%s23 + $0x10] sm:$0xff]
      %v1220 = vld [vmem:[%s23 + $0x18] sm:$0xff]
      %v1221 = vld [vmem:[%s25] sm:$0x1]
      %v1222 = vld [vmem:[%s1192] sm:$0xff]
      %v1223 = vld [vmem:[%s1192 + $0x8] sm:$0xff]
      %v1224 = vld [vmem:[%s1192 + $0x10] sm:$0xff]
      %v1225 = vld [vmem:[%s1192 + $0x18] sm:$0xff]
      %v1226 = vld [vmem:[%s1192 + $0x20] sm:$0xff]
      %v1227 = vld [vmem:[%s1192 + $0x28] sm:$0xff]
      %v1228 = vld [vmem:[%s1192 + $0x30] sm:$0xff]
      %v1229 = vld [vmem:[%s1192 + $0x38] sm:$0xff]
      %v1230 = vld [vmem:[%s1192 + $0x40] sm:$0xff]
      %v1231 = vld [vmem:[%s1192 + $0x48] sm:$0xff]
      %v1232 = vld [vmem:[%s1192 + $0x50] sm:$0xff]
      %v1233 = vld [vmem:[%s1192 + $0x58] sm:$0xff]
      %v1234 = vld [vmem:[%s1192 + $0x60] sm:$0xff]
      %v1235 = vld [vmem:[%s1192 + $0x68] sm:$0xff]
      %v1236 = vld [vmem:[%s1192 + $0x70] sm:$0xff]
      %v1237 = vld [vmem:[%s1192 + $0x78] sm:$0xff]
      %v1239 = vlaneseq
      %v1240 = vshrl.u32 %v1239, 7
      %v1241 = vsub.s32 0, %v1240
      %v1242 = vrot.slane %v1204, %v1241
      %vm1244 = vcmask 48128
      %v1246 = vsel %vm1244, %v1222, 0
      %v1249 = vsel %vm1244, %v1223, 0
      %v1252 = vsel %vm1244, %v1224, 0
      %v1255 = vsel %vm1244, %v1225, 0
      %v1258 = vsel %vm1244, %v1226, 0
      %v1261 = vsel %vm1244, %v1227, 0
      %v1264 = vsel %vm1244, %v1228, 0
      %v1267 = vsel %vm1244, %v1229, 0
      %v1270 = vsel %vm1244, %v1230, 0
      %v1273 = vsel %vm1244, %v1231, 0
      %v1276 = vsel %vm1244, %v1232, 0
      %v1279 = vsel %vm1244, %v1233, 0
      %v1282 = vsel %vm1244, %v1234, 0
      %v1285 = vsel %vm1244, %v1235, 0
      %v1288 = vsel %vm1244, %v1236, 0
      %v1291 = vsel %vm1244, %v1237, 0
      %vm1293 = vcmask 1045504
      %v1295 = vsel %vm1293, %v1203, 0
      %1297 = vmatprep.subr.mxu0 0.0
      %1298 = vmatpush1.msra.mxu0 %v1295
      %1299 = vmatprep.subr.mxu0 0.0
      %1300 = vmatpush1.msra.mxu0 0.0
      %1301 = vmatprep.subr.mxu0 0.0
      %1302 = vmatpush1.msra.mxu0 0.0
      %1303 = vmatprep.subr.mxu0 0.0
      %1304 = vmatpush1.msra.mxu0 0.0
      %1305 = vmatprep.subr.mxu0 0.0
      %1306 = vmatpush1.msra.mxu0 0.0
      %1307 = vmatprep.subr.mxu0 0.0
      %1308 = vmatpush1.msra.mxu0 0.0
      %1309 = vmatprep.subr.mxu0 0.0
      %1310 = vmatpush1.msra.mxu0 0.0
      %1311 = vmatprep.subr.mxu0 0.0
      %1312 = vmatpush1.msra.mxu0 0.0
      %1313 = vmatprep.subr.mxu0 0.0
      %1314 = vmatpush1.msra.mxu0 0.0
      %1315 = vmatprep.subr.mxu0 0.0
      %1316 = vmatpush1.msra.mxu0 0.0
      %1317 = vmatprep.subr.mxu0 0.0
      %1318 = vmatpush1.msra.mxu0 0.0
      %1319 = vmatprep.subr.mxu0 0.0
      %1320 = vmatpush1.msra.mxu0 0.0
      %1321 = vmatprep.subr.mxu0 0.0
      %1322 = vmatpush1.msra.mxu0 0.0
      %1323 = vmatprep.subr.mxu0 0.0
      %1324 = vmatpush1.msra.mxu0 0.0
      %1325 = vmatprep.subr.mxu0 0.0
      %1326 = vmatpush1.msra.mxu0 0.0
      %1327 = vmatprep.subr.mxu0 0.0
      %1328 = vmatpush1.msra.mxu0 0.0
      %1329 = vmatprep.subr.mxu0 0.0
      %1330 = vmatpush1.msra.mxu0 0.0
      %1331 = vmatprep.subr.mxu0 0.0
      %1332 = vmatpush1.msra.mxu0 0.0
      %1333 = vmatprep.subr.mxu0 0.0
      %1334 = vmatpush1.msra.mxu0 0.0
      %1335 = vmatprep.subr.mxu0 0.0
      %1336 = vmatpush1.msra.mxu0 0.0
      %1337 = vmatprep.subr.mxu0 0.0
      %1338 = vmatpush1.msra.mxu0 0.0
      %1339 = vmatprep.subr.mxu0 0.0
      %1340 = vmatpush1.msra.mxu0 0.0
      %1341 = vmatprep.subr.mxu0 0.0
      %1342 = vmatpush1.msra.mxu0 0.0
      %1343 = vmatprep.subr.mxu0 0.0
      %1344 = vmatpush1.msra.mxu0 0.0
      %1345 = vmatprep.subr.mxu0 0.0
      %1346 = vmatpush1.msra.mxu0 0.0
      %1347 = vmatprep.subr.mxu0 0.0
      %1348 = vmatpush1.msra.mxu0 0.0
      %1349 = vmatprep.subr.mxu0 0.0
      %1350 = vmatpush1.msra.mxu0 0.0
      %1351 = vmatprep.subr.mxu0 0.0
      %1352 = vmatpush1.msra.mxu0 0.0
      %1353 = vmatprep.subr.mxu0 0.0
      %1354 = vmatpush1.msra.mxu0 0.0
      %1355 = vmatprep.subr.mxu0 0.0
      %1356 = vmatpush1.msra.mxu0 0.0
      %1357 = vmatprep.subr.mxu0 0.0
      %1358 = vmatpush1.msra.mxu0 0.0
      %1359 = vmatprep.subr.mxu0 0.0
      %1360 = vmatpush1.msra.mxu0 0.0
      %1361 = vmatprep.mubr.f32.mxu0 0.0
      %1362 = vmatmul.mubr.f32.gmra.mrb[0].mxu0 %v1246
      %v1363 = vpop.f32.mrb[0].mxu0
      %v1364 = vadd.f32 %v1242, %v1363
      %v1365 = vpop.f32.mrb[0].mxu0
      %1366 = vmatprep.mubr.f32.mxu0 0.0
      %1367 = vmatmul.mubr.f32.gmra.mrb[0].mxu0 %v1249
      %v1368 = vpop.f32.mrb[0].mxu0
      %v1369 = vadd.f32 %v1242, %v1368
      %v1370 = vpop.f32.mrb[0].mxu0
      %1371 = vmatprep.mubr.f32.mxu0 0.0
      %1372 = vmatmul.mubr.f32.gmra.mrb[0].mxu0 %v1252
      %v1373 = vpop.f32.mrb[0].mxu0
      %v1374 = vadd.f32 %v1242, %v1373
      %v1375 = vpop.f32.mrb[0].mxu0
      %1376 = vmatprep.mubr.f32.mxu0 0.0
      %1377 = vmatmul.mubr.f32.gmra.mrb[0].mxu0 %v1255
      %v1378 = vpop.f32.mrb[0].mxu0
      %v1379 = vadd.f32 %v1242, %v1378
      %v1380 = vpop.f32.mrb[0].mxu0
      %1381 = vmatprep.mubr.f32.mxu0 0.0
      %1382 = vmatmul.mubr.f32.gmra.mrb[0].mxu0 %v1258
      %v1383 = vpop.f32.mrb[0].mxu0
      %v1384 = vadd.f32 %v1242, %v1383
      %v1385 = vpop.f32.mrb[0].mxu0
      %1386 = vmatprep.mubr.f32.mxu0 0.0
      %1387 = vmatmul.mubr.f32.gmra.mrb[0].mxu0 %v1261
      %v1388 = vpop.f32.mrb[0].mxu0
      %v1389 = vadd.f32 %v1242, %v1388
      %v1390 = vpop.f32.mrb[0].mxu0
      %1391 = vmatprep.mubr.f32.mxu0 0.0
      %1392 = vmatmul.mubr.f32.gmra.mrb[0].mxu0 %v1264
      %v1393 = vpop.f32.mrb[0].mxu0
      %v1394 = vadd.f32 %v1242, %v1393
      %v1395 = vpop.f32.mrb[0].mxu0
      %1396 = vmatprep.mubr.f32.mxu0 0.0
      %1397 = vmatmul.mubr.f32.gmra.mrb[0].mxu0 %v1267
      %v1398 = vpop.f32.mrb[0].mxu0
      %v1399 = vadd.f32 %v1242, %v1398
      %v1400 = vpop.f32.mrb[0].mxu0
      %1401 = vmatprep.mubr.f32.mxu0 0.0
      %1402 = vmatmul.mubr.f32.gmra.mrb[0].mxu0 %v1270
      %v1403 = vpop.f32.mrb[0].mxu0
      %v1404 = vadd.f32 %v1242, %v1403
      %v1405 = vpop.f32.mrb[0].mxu0
      %1406 = vmatprep.mubr.f32.mxu0 0.0
      %1407 = vmatmul.mubr.f32.gmra.mrb[0].mxu0 %v1273
      %v1408 = vpop.f32.mrb[0].mxu0
      %v1409 = vadd.f32 %v1242, %v1408
      %v1410 = vpop.f32.mrb[0].mxu0
      %1411 = vmatprep.mubr.f32.mxu0 0.0
      %1412 = vmatmul.mubr.f32.gmra.mrb[0].mxu0 %v1276
      %v1413 = vpop.f32.mrb[0].mxu0
      %v1414 = vadd.f32 %v1242, %v1413
      %v1415 = vpop.f32.mrb[0].mxu0
      %1416 = vmatprep.mubr.f32.mxu0 0.0
      %1417 = vmatmul.mubr.f32.gmra.mrb[0].mxu0 %v1279
      %v1418 = vpop.f32.mrb[0].mxu0
      %v1419 = vadd.f32 %v1242, %v1418
      %v1420 = vpop.f32.mrb[0].mxu0
      %1421 = vmatprep.mubr.f32.mxu0 0.0
      %1422 = vmatmul.mubr.f32.gmra.mrb[0].mxu0 %v1282
      %v1423 = vpop.f32.mrb[0].mxu0
      %v1424 = vadd.f32 %v1242, %v1423
      %v1425 = vpop.f32.mrb[0].mxu0
      %1426 = vmatprep.mubr.f32.mxu0 0.0
      %1427 = vmatmul.mubr.f32.gmra.mrb[0].mxu0 %v1285
      %v1428 = vpop.f32.mrb[0].mxu0
      %v1429 = vadd.f32 %v1242, %v1428
      %v1430 = vpop.f32.mrb[0].mxu0
      %1431 = vmatprep.mubr.f32.mxu0 0.0
      %1432 = vmatmul.mubr.f32.gmra.mrb[0].mxu0 %v1288
      %v1433 = vpop.f32.mrb[0].mxu0
      %v1434 = vadd.f32 %v1242, %v1433
      %v1435 = vpop.f32.mrb[0].mxu0
      %1436 = vmatprep.mubr.f32.mxu0 0.0
      %1437 = vmatmul.mubr.f32.gmra.mrb[0].mxu0 %v1291
      %v1438 = vpop.f32.mrb[0].mxu0
      %v1439 = vadd.f32 %v1242, %v1438
      %v1440 = vpop.f32.mrb[0].mxu0
      %1441 = vdwg.mxu0
      %v1442 = vmul.f32 %v1364, %v1364
      %v1443 = vmul.f32 %v1369, %v1369
      %v1444 = vmul.f32 %v1374, %v1374
      %v1445 = vmul.f32 %v1379, %v1379
      %v1446 = vmul.f32 %v1384, %v1384
      %v1447 = vmul.f32 %v1389, %v1389
      %v1448 = vmul.f32 %v1394, %v1394
      %v1449 = vmul.f32 %v1399, %v1399
      %v1450 = vmul.f32 %v1404, %v1404
      %v1451 = vmul.f32 %v1409, %v1409
      %v1452 = vmul.f32 %v1414, %v1414
      %v1453 = vmul.f32 %v1419, %v1419
      %v1454 = vmul.f32 %v1424, %v1424
      %v1455 = vmul.f32 %v1429, %v1429
      %v1456 = vmul.f32 %v1434, %v1434
      %v1457 = vmul.f32 %v1439, %v1439
      %v1458 = vmul.f32 %v1364, %v1442
      %v1459 = vmul.f32 %v1369, %v1443
      %v1460 = vmul.f32 %v1374, %v1444
      %v1461 = vmul.f32 %v1379, %v1445
      %v1462 = vmul.f32 %v1384, %v1446
      %v1463 = vmul.f32 %v1389, %v1447
      %v1464 = vmul.f32 %v1394, %v1448
      %v1465 = vmul.f32 %v1399, %v1449
      %v1466 = vmul.f32 %v1404, %v1450
      %v1467 = vmul.f32 %v1409, %v1451
      %v1468 = vmul.f32 %v1414, %v1452
      %v1469 = vmul.f32 %v1419, %v1453
      %v1470 = vmul.f32 %v1424, %v1454
      %v1471 = vmul.f32 %v1429, %v1455
      %v1472 = vmul.f32 %v1434, %v1456
      %v1473 = vmul.f32 %v1439, %v1457
      %v1474 = vmul.f32 %v1458, 0.044715
      %v1475 = vmul.f32 %v1459, 0.044715
      %v1476 = vmul.f32 %v1460, 0.044715
      %v1477 = vmul.f32 %v1461, 0.044715
      %v1478 = vmul.f32 %v1462, 0.044715
      %v1479 = vmul.f32 %v1463, 0.044715
      %v1480 = vmul.f32 %v1464, 0.044715
      %v1481 = vmul.f32 %v1465, 0.044715
      %v1482 = vmul.f32 %v1466, 0.044715
      %v1483 = vmul.f32 %v1467, 0.044715
      %v1484 = vmul.f32 %v1468, 0.044715
      %v1485 = vmul.f32 %v1469, 0.044715
      %v1486 = vmul.f32 %v1470, 0.044715
      %v1487 = vmul.f32 %v1471, 0.044715
      %v1488 = vmul.f32 %v1472, 0.044715
      %v1489 = vmul.f32 %v1473, 0.044715
      %v1490 = vadd.f32 %v1364, %v1474
      %v1491 = vadd.f32 %v1369, %v1475
      %v1492 = vadd.f32 %v1374, %v1476
      %v1493 = vadd.f32 %v1379, %v1477
      %v1494 = vadd.f32 %v1384, %v1478
      %v1495 = vadd.f32 %v1389, %v1479
      %v1496 = vadd.f32 %v1394, %v1480
      %v1497 = vadd.f32 %v1399, %v1481
      %v1498 = vadd.f32 %v1404, %v1482
      %v1499 = vadd.f32 %v1409, %v1483
      %v1500 = vadd.f32 %v1414, %v1484
      %v1501 = vadd.f32 %v1419, %v1485
      %v1502 = vadd.f32 %v1424, %v1486
      %v1503 = vadd.f32 %v1429, %v1487
      %v1504 = vadd.f32 %v1434, %v1488
      %v1505 = vadd.f32 %v1439, %v1489
      %v1506 = vmul.f32 %v1490, 0.7978846
      %v1507 = vmul.f32 %v1491, 0.7978846
      %v1508 = vmul.f32 %v1492, 0.7978846
      %v1509 = vmul.f32 %v1493, 0.7978846
      %v1510 = vmul.f32 %v1494, 0.7978846
      %v1511 = vmul.f32 %v1495, 0.7978846
      %v1512 = vmul.f32 %v1496, 0.7978846
      %v1513 = vmul.f32 %v1497, 0.7978846
      %v1514 = vmul.f32 %v1498, 0.7978846
      %v1515 = vmul.f32 %v1499, 0.7978846
      %v1516 = vmul.f32 %v1500, 0.7978846
      %v1517 = vmul.f32 %v1501, 0.7978846
      %v1518 = vmul.f32 %v1502, 0.7978846
      %v1519 = vmul.f32 %v1503, 0.7978846
      %v1520 = vmul.f32 %v1504, 0.7978846
      %v1521 = vmul.f32 %v1505, 0.7978846
      %v1522 = vtanh.pop %v1506
      %v1523 = vtanh.pop %v1507
      %v1524 = vtanh.pop %v1508
      %v1525 = vtanh.pop %v1509
      %v1526 = vtanh.pop %v1510
      %v1527 = vtanh.pop %v1511
      %v1528 = vtanh.pop %v1512
      %v1529 = vtanh.pop %v1513
      %v1530 = vtanh.pop %v1514
      %v1531 = vtanh.pop %v1515
      %v1532 = vtanh.pop %v1516
      %v1533 = vtanh.pop %v1517
      %v1534 = vtanh.pop %v1518
      %v1535 = vtanh.pop %v1519
      %v1536 = vtanh.pop %v1520
      %v1537 = vtanh.pop %v1521
      %v1538 = vadd.f32 %v1522, 1.0
      %v1539 = vadd.f32 %v1523, 1.0
      %v1540 = vadd.f32 %v1524, 1.0
      %v1541 = vadd.f32 %v1525, 1.0
      %v1542 = vadd.f32 %v1526, 1.0
      %v1543 = vadd.f32 %v1527, 1.0
      %v1544 = vadd.f32 %v1528, 1.0
      %v1545 = vadd.f32 %v1529, 1.0
      %v1546 = vadd.f32 %v1530, 1.0
      %v1547 = vadd.f32 %v1531, 1.0
      %v1548 = vadd.f32 %v1532, 1.0
      %v1549 = vadd.f32 %v1533, 1.0
      %v1550 = vadd.f32 %v1534, 1.0
      %v1551 = vadd.f32 %v1535, 1.0
      %v1552 = vadd.f32 %v1536, 1.0
      %v1553 = vadd.f32 %v1537, 1.0
      %v1554 = vmul.f32 %v1538, 0.5
      %v1555 = vmul.f32 %v1539, 0.5
      %v1556 = vmul.f32 %v1540, 0.5
      %v1557 = vmul.f32 %v1541, 0.5
      %v1558 = vmul.f32 %v1542, 0.5
      %v1559 = vmul.f32 %v1543, 0.5
      %v1560 = vmul.f32 %v1544, 0.5
      %v1561 = vmul.f32 %v1545, 0.5
      %v1562 = vmul.f32 %v1546, 0.5
      %v1563 = vmul.f32 %v1547, 0.5
      %v1564 = vmul.f32 %v1548, 0.5
      %v1565 = vmul.f32 %v1549, 0.5
      %v1566 = vmul.f32 %v1550, 0.5
      %v1567 = vmul.f32 %v1551, 0.5
      %v1568 = vmul.f32 %v1552, 0.5
      %v1569 = vmul.f32 %v1553, 0.5
      %v1570 = vmul.f32 %v1364, %v1554
      %v1571 = vmul.f32 %v1369, %v1555
      %v1572 = vmul.f32 %v1374, %v1556
      %v1573 = vmul.f32 %v1379, %v1557
      %v1574 = vmul.f32 %v1384, %v1558
      %v1575 = vmul.f32 %v1389, %v1559
      %v1576 = vmul.f32 %v1394, %v1560
      %v1577 = vmul.f32 %v1399, %v1561
      %v1578 = vmul.f32 %v1404, %v1562
      %v1579 = vmul.f32 %v1409, %v1563
      %v1580 = vmul.f32 %v1414, %v1564
      %v1581 = vmul.f32 %v1419, %v1565
      %v1582 = vmul.f32 %v1424, %v1566
      %v1583 = vmul.f32 %v1429, %v1567
      %v1584 = vmul.f32 %v1434, %v1568
      %v1585 = vmul.f32 %v1439, %v1569
      %v1587 = vlaneseq
      %v1588 = vshrl.u32 %v1587, 7
      %v1589 = vsub.s32 0, %v1588
      %v1590 = vrot.slane %v1209, %v1589
      %vm1592 = vcmask 261120
      %v1594 = vsel %vm1592, %v1570, 0
      %v1597 = vsel %vm1592, %v1571, 0
      %v1600 = vsel %vm1592, %v1572, 0
      %v1603 = vsel %vm1592, %v1573, 0
      %v1606 = vsel %vm1592, %v1574, 0
      %v1609 = vsel %vm1592, %v1575, 0
      %v1612 = vsel %vm1592, %v1576, 0
      %v1615 = vsel %vm1592, %v1577, 0
      %v1618 = vsel %vm1592, %v1578, 0
      %v1621 = vsel %vm1592, %v1579, 0
      %v1624 = vsel %vm1592, %v1580, 0
      %v1627 = vsel %vm1592, %v1581, 0
      %v1630 = vsel %vm1592, %v1582, 0
      %v1633 = vsel %vm1592, %v1583, 0
      %v1636 = vsel %vm1592, %v1584, 0
      %v1639 = vsel %vm1592, %v1585, 0
      %1641 = vmatprep.subr.mxu0 0.0
      %1642 = vmatpush1.msra.mxu0 %v1205
      %1643 = vmatprep.subr.mxu0 0.0
      %1644 = vmatpush1.msra.mxu0 %v1206
      %1645 = vmatprep.subr.mxu0 0.0
      %1646 = vmatpush1.msra.mxu0 %v1207
      %1647 = vmatprep.subr.mxu0 0.0
      %1648 = vmatpush1.msra.mxu0 %v1208
      %1649 = vmatprep.subr.mxu0 0.0
      %1650 = vmatpush1.msra.mxu0 0.0
      %1651 = vmatprep.subr.mxu0 0.0
      %1652 = vmatpush1.msra.mxu0 0.0
      %1653 = vmatprep.subr.mxu0 0.0
      %1654 = vmatpush1.msra.mxu0 0.0
      %1655 = vmatprep.subr.mxu0 0.0
      %1656 = vmatpush1.msra.mxu0 0.0
      %1657 = vmatprep.subr.mxu0 0.0
      %1658 = vmatpush1.msra.mxu0 0.0
      %1659 = vmatprep.subr.mxu0 0.0
      %1660 = vmatpush1.msra.mxu0 0.0
      %1661 = vmatprep.subr.mxu0 0.0
      %1662 = vmatpush1.msra.mxu0 0.0
      %1663 = vmatprep.subr.mxu0 0.0
      %1664 = vmatpush1.msra.mxu0 0.0
      %1665 = vmatprep.subr.mxu0 0.0
      %1666 = vmatpush1.msra.mxu0 0.0
      %1667 = vmatprep.subr.mxu0 0.0
      %1668 = vmatpush1.msra.mxu0 0.0
      %1669 = vmatprep.subr.mxu0 0.0
      %1670 = vmatpush1.msra.mxu0 0.0
      %1671 = vmatprep.subr.mxu0 0.0
      %1672 = vmatpush1.msra.mxu0 0.0
      %1673 = vmatprep.subr.mxu0 0.0
      %1674 = vmatpush1.msra.mxu0 0.0
      %1675 = vmatprep.subr.mxu0 0.0
      %1676 = vmatpush1.msra.mxu0 0.0
      %1677 = vmatprep.subr.mxu0 0.0
      %1678 = vmatpush1.msra.mxu0 0.0
      %1679 = vmatprep.subr.mxu0 0.0
      %1680 = vmatpush1.msra.mxu0 0.0
      %1681 = vmatprep.subr.mxu0 0.0
      %1682 = vmatpush1.msra.mxu0 0.0
      %1683 = vmatprep.subr.mxu0 0.0
      %1684 = vmatpush1.msra.mxu0 0.0
      %1685 = vmatprep.subr.mxu0 0.0
      %1686 = vmatpush1.msra.mxu0 0.0
      %1687 = vmatprep.subr.mxu0 0.0
      %1688 = vmatpush1.msra.mxu0 0.0
      %1689 = vmatprep.subr.mxu0 0.0
      %1690 = vmatpush1.msra.mxu0 0.0
      %1691 = vmatprep.subr.mxu0 0.0
      %1692 = vmatpush1.msra.mxu0 0.0
      %1693 = vmatprep.subr.mxu0 0.0
      %1694 = vmatpush1.msra.mxu0 0.0
      %1695 = vmatprep.subr.mxu0 0.0
      %1696 = vmatpush1.msra.mxu0 0.0
      %1697 = vmatprep.subr.mxu0 0.0
      %1698 = vmatpush1.msra.mxu0 0.0
      %1699 = vmatprep.subr.mxu0 0.0
      %1700 = vmatpush1.msra.mxu0 0.0
      %1701 = vmatprep.subr.mxu0 0.0
      %1702 = vmatpush1.msra.mxu0 0.0
      %1703 = vmatprep.subr.mxu0 0.0
      %1704 = vmatpush1.msra.mxu0 0.0
      %1705 = vmatprep.mubr.f32.mxu0 0.0
      %1706 = vmatmul.mubr.f32.gmra.mrb[0].mxu0 %v1594
      %v1707 = vpop.f32.mrb[0].mxu0
      %v1708 = vadd.f32 %v1590, %v1707
      %v1709 = vpop.f32.mrb[0].mxu0
      %1710 = vmatprep.mubr.f32.mxu0 0.0
      %1711 = vmatmul.mubr.f32.gmra.mrb[0].mxu0 %v1597
      %v1712 = vpop.f32.mrb[0].mxu0
      %v1713 = vadd.f32 %v1590, %v1712
      %v1714 = vpop.f32.mrb[0].mxu0
      %1715 = vmatprep.mubr.f32.mxu0 0.0
      %1716 = vmatmul.mubr.f32.gmra.mrb[0].mxu0 %v1600
      %v1717 = vpop.f32.mrb[0].mxu0
      %v1718 = vadd.f32 %v1590, %v1717
      %v1719 = vpop.f32.mrb[0].mxu0
      %1720 = vmatprep.mubr.f32.mxu0 0.0
      %1721 = vmatmul.mubr.f32.gmra.mrb[0].mxu0 %v1603
      %v1722 = vpop.f32.mrb[0].mxu0
      %v1723 = vadd.f32 %v1590, %v1722
      %v1724 = vpop.f32.mrb[0].mxu0
      %1725 = vmatprep.mubr.f32.mxu0 0.0
      %1726 = vmatmul.mubr.f32.gmra.mrb[0].mxu0 %v1606
      %v1727 = vpop.f32.mrb[0].mxu0
      %v1728 = vadd.f32 %v1590, %v1727
      %v1729 = vpop.f32.mrb[0].mxu0
      %1730 = vmatprep.mubr.f32.mxu0 0.0
      %1731 = vmatmul.mubr.f32.gmra.mrb[0].mxu0 %v1609
      %v1732 = vpop.f32.mrb[0].mxu0
      %v1733 = vadd.f32 %v1590, %v1732
      %v1734 = vpop.f32.mrb[0].mxu0
      %1735 = vmatprep.mubr.f32.mxu0 0.0
      %1736 = vmatmul.mubr.f32.gmra.mrb[0].mxu0 %v1612
      %v1737 = vpop.f32.mrb[0].mxu0
      %v1738 = vadd.f32 %v1590, %v1737
      %v1739 = vpop.f32.mrb[0].mxu0
      %1740 = vmatprep.mubr.f32.mxu0 0.0
      %1741 = vmatmul.mubr.f32.gmra.mrb[0].mxu0 %v1615
      %v1742 = vpop.f32.mrb[0].mxu0
      %v1743 = vadd.f32 %v1590, %v1742
      %v1744 = vpop.f32.mrb[0].mxu0
      %1745 = vmatprep.mubr.f32.mxu0 0.0
      %1746 = vmatmul.mubr.f32.gmra.mrb[0].mxu0 %v1618
      %v1747 = vpop.f32.mrb[0].mxu0
      %v1748 = vadd.f32 %v1590, %v1747
      %v1749 = vpop.f32.mrb[0].mxu0
      %1750 = vmatprep.mubr.f32.mxu0 0.0
      %1751 = vmatmul.mubr.f32.gmra.mrb[0].mxu0 %v1621
      %v1752 = vpop.f32.mrb[0].mxu0
      %v1753 = vadd.f32 %v1590, %v1752
      %v1754 = vpop.f32.mrb[0].mxu0
      %1755 = vmatprep.mubr.f32.mxu0 0.0
      %1756 = vmatmul.mubr.f32.gmra.mrb[0].mxu0 %v1624
      %v1757 = vpop.f32.mrb[0].mxu0
      %v1758 = vadd.f32 %v1590, %v1757
      %v1759 = vpop.f32.mrb[0].mxu0
      %1760 = vmatprep.mubr.f32.mxu0 0.0
      %1761 = vmatmul.mubr.f32.gmra.mrb[0].mxu0 %v1627
      %v1762 = vpop.f32.mrb[0].mxu0
      %v1763 = vadd.f32 %v1590, %v1762
      %v1764 = vpop.f32.mrb[0].mxu0
      %1765 = vmatprep.mubr.f32.mxu0 0.0
      %1766 = vmatmul.mubr.f32.gmra.mrb[0].mxu0 %v1630
      %v1767 = vpop.f32.mrb[0].mxu0
      %v1768 = vadd.f32 %v1590, %v1767
      %v1769 = vpop.f32.mrb[0].mxu0
      %1770 = vmatprep.mubr.f32.mxu0 0.0
      %1771 = vmatmul.mubr.f32.gmra.mrb[0].mxu0 %v1633
      %v1772 = vpop.f32.mrb[0].mxu0
      %v1773 = vadd.f32 %v1590, %v1772
      %v1774 = vpop.f32.mrb[0].mxu0
      %1775 = vmatprep.mubr.f32.mxu0 0.0
      %1776 = vmatmul.mubr.f32.gmra.mrb[0].mxu0 %v1636
      %v1777 = vpop.f32.mrb[0].mxu0
      %v1778 = vadd.f32 %v1590, %v1777
      %v1779 = vpop.f32.mrb[0].mxu0
      %1780 = vmatprep.mubr.f32.mxu0 0.0
      %1781 = vmatmul.mubr.f32.gmra.mrb[0].mxu0 %v1639
      %v1782 = vpop.f32.mrb[0].mxu0
      %v1783 = vadd.f32 %v1590, %v1782
      %v1784 = vpop.f32.mrb[0].mxu0
      %1785 = vdwg.mxu0
      %v1786 = vmax.f32 %v1708, %v1718
      %v1787 = vmax.f32 %v1713, %v1723
      %v1788 = vmax.f32 %v1786, %v1728
      %v1789 = vmax.f32 %v1787, %v1733
      %v1790 = vmax.f32 %v1788, %v1738
      %v1791 = vmax.f32 %v1789, %v1743
      %v1792 = vmax.f32 %v1790, %v1748
      %v1793 = vmax.f32 %v1791, %v1753
      %v1794 = vmax.f32 %v1792, %v1758
      %v1795 = vmax.f32 %v1793, %v1763
      %v1796 = vmax.f32 %v1794, %v1768
      %v1797 = vmax.f32 %v1795, %v1773
      %v1798 = vmax.f32 %v1796, %v1778
      %v1799 = vmax.f32 %v1797, %v1783
      %v1801 = vlaneseq
      %v1802 = vshrl.u32 %v1801, 7
      %v1803 = vsub.s32 0, %v1802
      %v1804 = vrot.slane %v1214, %v1803
      %v1807 = vsel %vm1592, %v1798, 0
      %v1810 = vsel %vm1592, %v1799, 0
      %1812 = vmatprep.subr.mxu0 0.0
      %1813 = vmatpush1.msra.mxu0 %v1210
      %1814 = vmatprep.subr.mxu0 0.0
      %1815 = vmatpush1.msra.mxu0 %v1211
      %1816 = vmatprep.subr.mxu0 0.0
      %1817 = vmatpush1.msra.mxu0 %v1212
      %1818 = vmatprep.subr.mxu0 0.0
      %1819 = vmatpush1.msra.mxu0 %v1213
      %1820 = vmatprep.subr.mxu0 0.0
      %1821 = vmatpush1.msra.mxu0 0.0
      %1822 = vmatprep.subr.mxu0 0.0
      %1823 = vmatpush1.msra.mxu0 0.0
      %1824 = vmatprep.subr.mxu0 0.0
      %1825 = vmatpush1.msra.mxu0 0.0
      %1826 = vmatprep.subr.mxu0 0.0
      %1827 = vmatpush1.msra.mxu0 0.0
      %1828 = vmatprep.subr.mxu0 0.0
      %1829 = vmatpush1.msra.mxu0 0.0
      %1830 = vmatprep.subr.mxu0 0.0
      %1831 = vmatpush1.msra.mxu0 0.0
      %1832 = vmatprep.subr.mxu0 0.0
      %1833 = vmatpush1.msra.mxu0 0.0
      %1834 = vmatprep.subr.mxu0 0.0
      %1835 = vmatpush1.msra.mxu0 0.0
      %1836 = vmatprep.subr.mxu0 0.0
      %1837 = vmatpush1.msra.mxu0 0.0
      %1838 = vmatprep.subr.mxu0 0.0
      %1839 = vmatpush1.msra.mxu0 0.0
      %1840 = vmatprep.subr.mxu0 0.0
      %1841 = vmatpush1.msra.mxu0 0.0
      %1842 = vmatprep.subr.mxu0 0.0
      %1843 = vmatpush1.msra.mxu0 0.0
      %1844 = vmatprep.subr.mxu0 0.0
      %1845 = vmatpush1.msra.mxu0 0.0
      %1846 = vmatprep.subr.mxu0 0.0
      %1847 = vmatpush1.msra.mxu0 0.0
      %1848 = vmatprep.subr.mxu0 0.0
      %1849 = vmatpush1.msra.mxu0 0.0
      %1850 = vmatprep.subr.mxu0 0.0
      %1851 = vmatpush1.msra.mxu0 0.0
      %1852 = vmatprep.subr.mxu0 0.0
      %1853 = vmatpush1.msra.mxu0 0.0
      %1854 = vmatprep.subr.mxu0 0.0
      %1855 = vmatpush1.msra.mxu0 0.0
      %1856 = vmatprep.subr.mxu0 0.0
      %1857 = vmatpush1.msra.mxu0 0.0
      %1858 = vmatprep.subr.mxu0 0.0
      %1859 = vmatpush1.msra.mxu0 0.0
      %1860 = vmatprep.subr.mxu0 0.0
      %1861 = vmatpush1.msra.mxu0 0.0
      %1862 = vmatprep.subr.mxu0 0.0
      %1863 = vmatpush1.msra.mxu0 0.0
      %1864 = vmatprep.subr.mxu0 0.0
      %1865 = vmatpush1.msra.mxu0 0.0
      %1866 = vmatprep.subr.mxu0 0.0
      %1867 = vmatpush1.msra.mxu0 0.0
      %1868 = vmatprep.subr.mxu0 0.0
      %1869 = vmatpush1.msra.mxu0 0.0
      %1870 = vmatprep.subr.mxu0 0.0
      %1871 = vmatpush1.msra.mxu0 0.0
      %1872 = vmatprep.subr.mxu0 0.0
      %1873 = vmatpush1.msra.mxu0 0.0
      %1874 = vmatprep.subr.mxu0 0.0
      %1875 = vmatpush1.msra.mxu0 0.0
      %1876 = vmatprep.mubr.f32.mxu0 0.0
      %1877 = vmatmul.mubr.f32.gmra.mrb[0].mxu0 %v1807
      %v1878 = vpop.f32.mrb[0].mxu0
      %v1879 = vadd.f32 %v1804, %v1878
      %v1880 = vpop.f32.mrb[0].mxu0
      %1881 = vmatprep.mubr.f32.mxu0 0.0
      %1882 = vmatmul.mubr.f32.gmra.mrb[0].mxu0 %v1810
      %v1883 = vpop.f32.mrb[0].mxu0
      %v1884 = vadd.f32 %v1804, %v1883
      %v1885 = vpop.f32.mrb[0].mxu0
      %1886 = vdwg.mxu0
      %v1887 = vld [vmem:[%s1197] sm:$0xff]
      %v1888 = vld [vmem:[%s1197 + $0x8] sm:$0xff]
      %v1890 = vlaneseq
      %v1891 = vshrl.u32 %v1890, 7
      %v1892 = vsub.s32 0, %v1891
      %v1893 = vrot.slane %v1216, %v1892
      %vm1895 = vcmask 23552
      %v1897 = vsel %vm1895, %v1887, 0
      %v1900 = vsel %vm1895, %v1888, 0
      %vm1902 = vcmask 1042432
      %v1904 = vsel %vm1902, %v1215, 0
      %1906 = vmatprep.subr.mxu0 0.0
      %1907 = vmatpush1.msra.mxu0 %v1904
      %1908 = vmatprep.subr.mxu0 0.0
      %1909 = vmatpush1.msra.mxu0 0.0
      %1910 = vmatprep.subr.mxu0 0.0
      %1911 = vmatpush1.msra.mxu0 0.0
      %1912 = vmatprep.subr.mxu0 0.0
      %1913 = vmatpush1.msra.mxu0 0.0
      %1914 = vmatprep.subr.mxu0 0.0
      %1915 = vmatpush1.msra.mxu0 0.0
      %1916 = vmatprep.subr.mxu0 0.0
      %1917 = vmatpush1.msra.mxu0 0.0
      %1918 = vmatprep.subr.mxu0 0.0
      %1919 = vmatpush1.msra.mxu0 0.0
      %1920 = vmatprep.subr.mxu0 0.0
      %1921 = vmatpush1.msra.mxu0 0.0
      %1922 = vmatprep.subr.mxu0 0.0
      %1923 = vmatpush1.msra.mxu0 0.0
      %1924 = vmatprep.subr.mxu0 0.0
      %1925 = vmatpush1.msra.mxu0 0.0
      %1926 = vmatprep.subr.mxu0 0.0
      %1927 = vmatpush1.msra.mxu0 0.0
      %1928 = vmatprep.subr.mxu0 0.0
      %1929 = vmatpush1.msra.mxu0 0.0
      %1930 = vmatprep.subr.mxu0 0.0
      %1931 = vmatpush1.msra.mxu0 0.0
      %1932 = vmatprep.subr.mxu0 0.0
      %1933 = vmatpush1.msra.mxu0 0.0
      %1934 = vmatprep.subr.mxu0 0.0
      %1935 = vmatpush1.msra.mxu0 0.0
      %1936 = vmatprep.subr.mxu0 0.0
      %1937 = vmatpush1.msra.mxu0 0.0
      %1938 = vmatprep.subr.mxu0 0.0
      %1939 = vmatpush1.msra.mxu0 0.0
      %1940 = vmatprep.subr.mxu0 0.0
      %1941 = vmatpush1.msra.mxu0 0.0
      %1942 = vmatprep.subr.mxu0 0.0
      %1943 = vmatpush1.msra.mxu0 0.0
      %1944 = vmatprep.subr.mxu0 0.0
      %1945 = vmatpush1.msra.mxu0 0.0
      %1946 = vmatprep.subr.mxu0 0.0
      %1947 = vmatpush1.msra.mxu0 0.0
      %1948 = vmatprep.subr.mxu0 0.0
      %1949 = vmatpush1.msra.mxu0 0.0
      %1950 = vmatprep.subr.mxu0 0.0
      %1951 = vmatpush1.msra.mxu0 0.0
      %1952 = vmatprep.subr.mxu0 0.0
      %1953 = vmatpush1.msra.mxu0 0.0
      %1954 = vmatprep.subr.mxu0 0.0
      %1955 = vmatpush1.msra.mxu0 0.0
      %1956 = vmatprep.subr.mxu0 0.0
      %1957 = vmatpush1.msra.mxu0 0.0
      %1958 = vmatprep.subr.mxu0 0.0
      %1959 = vmatpush1.msra.mxu0 0.0
      %1960 = vmatprep.subr.mxu0 0.0
      %1961 = vmatpush1.msra.mxu0 0.0
      %1962 = vmatprep.subr.mxu0 0.0
      %1963 = vmatpush1.msra.mxu0 0.0
      %1964 = vmatprep.subr.mxu0 0.0
      %1965 = vmatpush1.msra.mxu0 0.0
      %1966 = vmatprep.subr.mxu0 0.0
      %1967 = vmatpush1.msra.mxu0 0.0
      %1968 = vmatprep.subr.mxu0 0.0
      %1969 = vmatpush1.msra.mxu0 0.0
      %1970 = vmatprep.mubr.f32.mxu0 0.0
      %1971 = vmatmul.mubr.f32.gmra.mrb[0].mxu0 %v1897
      %v1972 = vpop.f32.mrb[0].mxu0
      %v1973 = vadd.f32 %v1893, %v1972
      %v1974 = vpop.f32.mrb[0].mxu0
      %1975 = vmatprep.mubr.f32.mxu0 0.0
      %1976 = vmatmul.mubr.f32.gmra.mrb[0].mxu0 %v1900
      %v1977 = vpop.f32.mrb[0].mxu0
      %v1978 = vadd.f32 %v1893, %v1977
      %v1979 = vpop.f32.mrb[0].mxu0
      %1980 = vdwg.mxu0
      %v1981 = vmul.f32 %v1973, %v1973
      %v1982 = vmul.f32 %v1978, %v1978
      %v1983 = vmul.f32 %v1973, %v1981
      %v1984 = vmul.f32 %v1978, %v1982
      %v1985 = vmul.f32 %v1983, 0.044715
      %v1986 = vmul.f32 %v1984, 0.044715
      %v1987 = vadd.f32 %v1973, %v1985
      %v1988 = vadd.f32 %v1978, %v1986
      %v1989 = vmul.f32 %v1987, 0.7978846
      %v1990 = vmul.f32 %v1988, 0.7978846
      %v1991 = vtanh.pop %v1989
      %v1992 = vtanh.pop %v1990
      %v1993 = vadd.f32 %v1991, 1.0
      %v1994 = vadd.f32 %v1992, 1.0
      %v1995 = vmul.f32 %v1993, 0.5
      %v1996 = vmul.f32 %v1994, 0.5
      %v1997 = vmul.f32 %v1973, %v1995
      %v1998 = vmul.f32 %v1978, %v1996
      %v2000 = vlaneseq
      %v2001 = vshrl.u32 %v2000, 7
      %v2002 = vsub.s32 0, %v2001
      %v2003 = vrot.slane %v1221, %v2002
      %v2006 = vsel %vm1592, %v1997, 0
      %v2009 = vsel %vm1592, %v1998, 0
      %2011 = vmatprep.subr.mxu0 0.0
      %2012 = vmatpush1.msra.mxu0 %v1217
      %2013 = vmatprep.subr.mxu0 0.0
      %2014 = vmatpush1.msra.mxu0 %v1218
      %2015 = vmatprep.subr.mxu0 0.0
      %2016 = vmatpush1.msra.mxu0 %v1219
      %2017 = vmatprep.subr.mxu0 0.0
      %2018 = vmatpush1.msra.mxu0 %v1220
      %2019 = vmatprep.subr.mxu0 0.0
      %2020 = vmatpush1.msra.mxu0 0.0
      %2021 = vmatprep.subr.mxu0 0.0
      %2022 = vmatpush1.msra.mxu0 0.0
      %2023 = vmatprep.subr.mxu0 0.0
      %2024 = vmatpush1.msra.mxu0 0.0
      %2025 = vmatprep.subr.mxu0 0.0
      %2026 = vmatpush1.msra.mxu0 0.0
      %2027 = vmatprep.subr.mxu0 0.0
      %2028 = vmatpush1.msra.mxu0 0.0
      %2029 = vmatprep.subr.mxu0 0.0
      %2030 = vmatpush1.msra.mxu0 0.0
      %2031 = vmatprep.subr.mxu0 0.0
      %2032 = vmatpush1.msra.mxu0 0.0
      %2033 = vmatprep.subr.mxu0 0.0
      %2034 = vmatpush1.msra.mxu0 0.0
      %2035 = vmatprep.subr.mxu0 0.0
      %2036 = vmatpush1.msra.mxu0 0.0
      %2037 = vmatprep.subr.mxu0 0.0
      %2038 = vmatpush1.msra.mxu0 0.0
      %2039 = vmatprep.subr.mxu0 0.0
      %2040 = vmatpush1.msra.mxu0 0.0
      %2041 = vmatprep.subr.mxu0 0.0
      %2042 = vmatpush1.msra.mxu0 0.0
      %2043 = vmatprep.subr.mxu0 0.0
      %2044 = vmatpush1.msra.mxu0 0.0
      %2045 = vmatprep.subr.mxu0 0.0
      %2046 = vmatpush1.msra.mxu0 0.0
      %2047 = vmatprep.subr.mxu0 0.0
      %2048 = vmatpush1.msra.mxu0 0.0
      %2049 = vmatprep.subr.mxu0 0.0
      %2050 = vmatpush1.msra.mxu0 0.0
      %2051 = vmatprep.subr.mxu0 0.0
      %2052 = vmatpush1.msra.mxu0 0.0
      %2053 = vmatprep.subr.mxu0 0.0
      %2054 = vmatpush1.msra.mxu0 0.0
      %2055 = vmatprep.subr.mxu0 0.0
      %2056 = vmatpush1.msra.mxu0 0.0
      %2057 = vmatprep.subr.mxu0 0.0
      %2058 = vmatpush1.msra.mxu0 0.0
      %2059 = vmatprep.subr.mxu0 0.0
      %2060 = vmatpush1.msra.mxu0 0.0
      %2061 = vmatprep.subr.mxu0 0.0
      %2062 = vmatpush1.msra.mxu0 0.0
      %2063 = vmatprep.subr.mxu0 0.0
      %2064 = vmatpush1.msra.mxu0 0.0
      %2065 = vmatprep.subr.mxu0 0.0
      %2066 = vmatpush1.msra.mxu0 0.0
      %2067 = vmatprep.subr.mxu0 0.0
      %2068 = vmatpush1.msra.mxu0 0.0
      %2069 = vmatprep.subr.mxu0 0.0
      %2070 = vmatpush1.msra.mxu0 0.0
      %2071 = vmatprep.subr.mxu0 0.0
      %2072 = vmatpush1.msra.mxu0 0.0
      %2073 = vmatprep.subr.mxu0 0.0
      %2074 = vmatpush1.msra.mxu0 0.0
      %2075 = vmatprep.mubr.f32.mxu0 0.0
      %2076 = vmatmul.mubr.f32.gmra.mrb[0].mxu0 %v2006
      %v2077 = vpop.f32.mrb[0].mxu0
      %v2078 = vadd.f32 %v2003, %v2077
      %v2079 = vpop.f32.mrb[0].mxu0
      %2080 = vmatprep.mubr.f32.mxu0 0.0
      %2081 = vmatmul.mubr.f32.gmra.mrb[0].mxu0 %v2009
      %v2082 = vpop.f32.mrb[0].mxu0
      %v2083 = vadd.f32 %v2003, %v2082
      %v2084 = vpop.f32.mrb[0].mxu0
      %2085 = vdwg.mxu0
      %v2086 = vadd.f32 %v1879, %v2078
      %v2087 = vadd.f32 %v1884, %v2083
      %2088 = vst.msk [vmem:[#allocation2] sm:$0xff] %vm1592, %v2086
      %2089 = vst.msk [vmem:[#allocation2 + $0x8] sm:$0xff] %vm1592, %v2087
      %v2090 = vld [vmem:[%s5] sm:$0x1]
      %vm2091 = vcmask 253952
      %2092 = vst.msk [vmem:[#allocation2 + $0x10] sm:$0x1] %vm2091, %v2090
      %v2093 = vld [vmem:[#allocation2] sm:$0xff]
      %v2094 = vld [vmem:[#allocation2 + $0x8] sm:$0xff]
      %v2095 = vld [vmem:[#allocation2 + $0x10] sm:$0x1]
      %v2096 = vld [vmem:[%s27] sm:$0x1]
      %v2097 = vld [vmem:[%s29] sm:$0x1]
      %v2098 = vld [vmem:[%s31] sm:$0xff]
      %v2099 = vld [vmem:[%s31 + $0x8] sm:$0xff]
      %v2100 = vld [vmem:[%s31 + $0x10] sm:$0xff]
      %v2101 = vld [vmem:[%s31 + $0x18] sm:$0xff]
      %v2102 = vld [vmem:[%s33] sm:$0x1]
      %v2103 = vld [vmem:[%s35] sm:$0xff]
      %v2104 = vld [vmem:[%s35 + $0x8] sm:$0xff]
      %v2105 = vld [vmem:[%s35 + $0x10] sm:$0xff]
      %v2106 = vld [vmem:[%s35 + $0x18] sm:$0xff]
      %v2107 = vld [vmem:[%s37] sm:$0x1]
      %v2108 = vld [vmem:[%s39] sm:$0x1]
      %v2109 = vld [vmem:[%s41] sm:$0x1]
      %v2110 = vld [vmem:[%s43] sm:$0xff]
      %v2111 = vld [vmem:[%s43 + $0x8] sm:$0xff]
      %v2112 = vld [vmem:[%s43 + $0x10] sm:$0xff]
      %v2113 = vld [vmem:[%s43 + $0x18] sm:$0xff]
      %v2114 = vld [vmem:[%s45] sm:$0x1]
      %v2115 = vld [vmem:[%s47] sm:$0xff]
      %v2116 = vld [vmem:[%s47 + $0x8] sm:$0xff]
      %v2117 = vld [vmem:[%s47 + $0x10] sm:$0xff]
      %v2118 = vld [vmem:[%s47 + $0x18] sm:$0xff]
      %v2119 = vld [vmem:[%s47 + $0x20] sm:$0xff]
      %v2120 = vld [vmem:[%s47 + $0x28] sm:$0xff]
      %v2121 = vld [vmem:[%s47 + $0x30] sm:$0xff]
      %v2122 = vld [vmem:[%s47 + $0x38] sm:$0xff]
      %v2123 = vld [vmem:[%s49] sm:$0x1]
      %v2124 = vsel %vm1592, %v2093, 0.0
      %2125 = vadd.xlane.f32.xlu0 %v2124
      %v2126 = vpop.xlane.xlu0 %2125
      %v2127 = vsel %vm1592, %v2094, 0.0
      %2128 = vadd.xlane.f32.xlu0 %v2127
      %v2129 = vpop.xlane.xlu0 %2128
      %v2130 = vsel %vm2091, %v2095, 0.0
      %2131 = vadd.xlane.f32.xlu0 %v2130
      %v2132 = vpop.xlane.xlu0 %2131
      %v2133 = vrcp.pop 32.0
      %v2134 = vmul.f32 %v2126, %v2133
      %v2135 = vmul.f32 %v2129, %v2133
      %v2136 = vmul.f32 %v2132, %v2133
      %v2137 = vsub.f32 %v2093, %v2134
      %v2138 = vsub.f32 %v2094, %v2135
      %v2139 = vsub.f32 %v2095, %v2136
      %v2140 = vmul.f32 %v2137, %v2137
      %v2141 = vmul.f32 %v2138, %v2138
      %v2142 = vmul.f32 %v2139, %v2139
      %v2143 = vsel %vm1592, %v2140, 0.0
      %2144 = vadd.xlane.f32.xlu0 %v2143
      %v2145 = vpop.xlane.xlu0 %2144
      %v2146 = vsel %vm1592, %v2141, 0.0
      %2147 = vadd.xlane.f32.xlu0 %v2146
      %v2148 = vpop.xlane.xlu0 %2147
      %v2149 = vsel %vm2091, %v2142, 0.0
      %2150 = vadd.xlane.f32.xlu0 %v2149
      %v2151 = vpop.xlane.xlu0 %2150
      %v2152 = vmul.f32 %v2145, %v2133
      %v2153 = vmul.f32 %v2148, %v2133
      %v2154 = vmul.f32 %v2151, %v2133
      %v2155 = vadd.f32 %v2152, 1e-06
      %v2156 = vadd.f32 %v2153, 1e-06
      %v2157 = vadd.f32 %v2154, 1e-06
      %v2158 = vrsqrt.pop %v2155
      %v2159 = vrsqrt.pop %v2156
      %v2160 = vrsqrt.pop %v2157
      %v2161 = vmul.f32 %v2137, %v2158
      %v2162 = vmul.f32 %v2138, %v2159
      %v2163 = vmul.f32 %v2139, %v2160
      %v2165 = vlaneseq
      %v2166 = vshrl.u32 %v2165, 7
      %v2167 = vsub.s32 0, %v2166
      %v2168 = vrot.slane %v2096, %v2167
      %v2170 = vmul.f32 %v2161, %v2168
      %v2171 = vmul.f32 %v2162, %v2168
      %v2172 = vmul.f32 %v2163, %v2168
      %v2174 = vlaneseq
      %v2175 = vshrl.u32 %v2174, 7
      %v2176 = vsub.s32 0, %v2175
      %v2177 = vrot.slane %v2097, %v2176
      %v2179 = vadd.f32 %v2170, %v2177
      %v2180 = vadd.f32 %v2171, %v2177
      %v2181 = vadd.f32 %v2172, %v2177
      %v2183 = vlaneseq
      %v2184 = vshrl.u32 %v2183, 7
      %v2185 = vsub.s32 0, %v2184
      %v2186 = vrot.slane %v2102, %v2185
      %v2189 = vsel %vm1592, %v2179, 0
      %v2192 = vsel %vm1592, %v2180, 0
      %v2195 = vsel %vm1592, %v2181, 0
      %2197 = vmatprep.subr.mxu0 0.0
      %2198 = vmatpush1.msra.mxu0 %v2098
      %2199 = vmatprep.subr.mxu0 0.0
      %2200 = vmatpush1.msra.mxu0 %v2099
      %2201 = vmatprep.subr.mxu0 0.0
      %2202 = vmatpush1.msra.mxu0 %v2100
      %2203 = vmatprep.subr.mxu0 0.0
      %2204 = vmatpush1.msra.mxu0 %v2101
      %2205 = vmatprep.subr.mxu0 0.0
      %2206 = vmatpush1.msra.mxu0 0.0
      %2207 = vmatprep.subr.mxu0 0.0
      %2208 = vmatpush1.msra.mxu0 0.0
      %2209 = vmatprep.subr.mxu0 0.0
      %2210 = vmatpush1.msra.mxu0 0.0
      %2211 = vmatprep.subr.mxu0 0.0
      %2212 = vmatpush1.msra.mxu0 0.0
      %2213 = vmatprep.subr.mxu0 0.0
      %2214 = vmatpush1.msra.mxu0 0.0
      %2215 = vmatprep.subr.mxu0 0.0
      %2216 = vmatpush1.msra.mxu0 0.0
      %2217 = vmatprep.subr.mxu0 0.0
      %2218 = vmatpush1.msra.mxu0 0.0
      %2219 = vmatprep.subr.mxu0 0.0
      %2220 = vmatpush1.msra.mxu0 0.0
      %2221 = vmatprep.subr.mxu0 0.0
      %2222 = vmatpush1.msra.mxu0 0.0
      %2223 = vmatprep.subr.mxu0 0.0
      %2224 = vmatpush1.msra.mxu0 0.0
      %2225 = vmatprep.subr.mxu0 0.0
      %2226 = vmatpush1.msra.mxu0 0.0
      %2227 = vmatprep.subr.mxu0 0.0
      %2228 = vmatpush1.msra.mxu0 0.0
      %2229 = vmatprep.subr.mxu0 0.0
      %2230 = vmatpush1.msra.mxu0 0.0
      %2231 = vmatprep.subr.mxu0 0.0
      %2232 = vmatpush1.msra.mxu0 0.0
      %2233 = vmatprep.subr.mxu0 0.0
      %2234 = vmatpush1.msra.mxu0 0.0
      %2235 = vmatprep.subr.mxu0 0.0
      %2236 = vmatpush1.msra.mxu0 0.0
      %2237 = vmatprep.subr.mxu0 0.0
      %2238 = vmatpush1.msra.mxu0 0.0
      %2239 = vmatprep.subr.mxu0 0.0
      %2240 = vmatpush1.msra.mxu0 0.0
      %2241 = vmatprep.subr.mxu0 0.0
      %2242 = vmatpush1.msra.mxu0 0.0
      %2243 = vmatprep.subr.mxu0 0.0
      %2244 = vmatpush1.msra.mxu0 0.0
      %2245 = vmatprep.subr.mxu0 0.0
      %2246 = vmatpush1.msra.mxu0 0.0
      %2247 = vmatprep.subr.mxu0 0.0
      %2248 = vmatpush1.msra.mxu0 0.0
      %2249 = vmatprep.subr.mxu0 0.0
      %2250 = vmatpush1.msra.mxu0 0.0
      %2251 = vmatprep.subr.mxu0 0.0
      %2252 = vmatpush1.msra.mxu0 0.0
      %2253 = vmatprep.subr.mxu0 0.0
      %2254 = vmatpush1.msra.mxu0 0.0
      %2255 = vmatprep.subr.mxu0 0.0
      %2256 = vmatpush1.msra.mxu0 0.0
      %2257 = vmatprep.subr.mxu0 0.0
      %2258 = vmatpush1.msra.mxu0 0.0
      %2259 = vmatprep.subr.mxu0 0.0
      %2260 = vmatpush1.msra.mxu0 0.0
      %2261 = vmatprep.mubr.f32.mxu0 0.0
      %2262 = vmatmul.mubr.f32.gmra.mrb[0].mxu0 %v2189
      %v2263 = vpop.f32.mrb[0].mxu0
      %v2264 = vadd.f32 %v2186, %v2263
      %v2265 = vpop.f32.mrb[0].mxu0
      %2266 = vmatprep.mubr.f32.mxu0 0.0
      %2267 = vmatmul.mubr.f32.gmra.mrb[0].mxu0 %v2192
      %v2268 = vpop.f32.mrb[0].mxu0
      %v2269 = vadd.f32 %v2186, %v2268
      %v2270 = vpop.f32.mrb[0].mxu0
      %2271 = vmatprep.mubr.f32.mxu0 0.0
      %2272 = vmatmul.mubr.f32.gmra.mrb[0].mxu0 %v2195
      %v2273 = vpop.f32.mrb[0].mxu0
      %v2274 = vadd.f32 %v2186, %v2273
      %v2275 = vpop.f32.mrb[0].mxu0
      %2276 = vdwg.mxu0
      %2280 = vrot.lane.b32.xlu0 %v2264, 96
      %v2281 = vpop.permute.xlu0 %2280
      %2282 = vrot.lane.b32.xlu0 %v2269, 96
      %v2283 = vpop.permute.xlu0 %2282
      %2284 = vrot.lane.b32.xlu0 %v2274, 96
      %v2285 = vpop.permute.xlu0 %2284
      %vm2286 = vcmask 64512
      %v2287 = vsel %vm2286, %v2264, 0
      %v2289 = vsel %vm2286, %v2269, 0
      %v2291 = vsel %vm2286, %v2274, 0
      %v2293 = vsel %vm2286, %v2281, 0
      %v2295 = vsel %vm2286, %v2283, 0
      %v2297 = vsel %vm2286, %v2285, 0
      %2299 = vmatprep.subr.mxu0 0.0
      %2300 = vmatpush1.xpose.msra.mxu0 %v2293
      %2301 = vmatprep.subr.mxu0 0.0
      %2302 = vmatpush1.xpose.msra.mxu0 %v2295
      %2303 = vmatprep.subr.mxu0 0.0
      %2304 = vmatpush1.xpose.msra.mxu0 %v2297
      %2305 = vmatprep.subr.mxu0 0.0
      %2306 = vmatpush1.xpose.msra.mxu0 0.0
      %2307 = vmatprep.subr.mxu0 0.0
      %2308 = vmatpush1.xpose.msra.mxu0 0.0
      %2309 = vmatprep.subr.mxu0 0.0
      %2310 = vmatpush1.xpose.msra.mxu0 0.0
      %2311 = vmatprep.subr.mxu0 0.0
      %2312 = vmatpush1.xpose.msra.mxu0 0.0
      %2313 = vmatprep.subr.mxu0 0.0
      %2314 = vmatpush1.xpose.msra.mxu0 0.0
      %2315 = vmatprep.subr.mxu0 0.0
      %2316 = vmatpush1.xpose.msra.mxu0 0.0
      %2317 = vmatprep.subr.mxu0 0.0
      %2318 = vmatpush1.xpose.msra.mxu0 0.0
      %2319 = vmatprep.subr.mxu0 0.0
      %2320 = vmatpush1.xpose.msra.mxu0 0.0
      %2321 = vmatprep.subr.mxu0 0.0
      %2322 = vmatpush1.xpose.msra.mxu0 0.0
      %2323 = vmatprep.subr.mxu0 0.0
      %2324 = vmatpush1.xpose.msra.mxu0 0.0
      %2325 = vmatprep.subr.mxu0 0.0
      %2326 = vmatpush1.xpose.msra.mxu0 0.0
      %2327 = vmatprep.subr.mxu0 0.0
      %2328 = vmatpush1.xpose.msra.mxu0 0.0
      %2329 = vmatprep.subr.mxu0 0.0
      %2330 = vmatpush1.xpose.msra.mxu0 0.0
      %2331 = vmatprep.subr.mxu0 0.0
      %2332 = vmatpush1.xpose.msra.mxu0 0.0
      %2333 = vmatprep.subr.mxu0 0.0
      %2334 = vmatpush1.xpose.msra.mxu0 0.0
      %2335 = vmatprep.subr.mxu0 0.0
      %2336 = vmatpush1.xpose.msra.mxu0 0.0
      %2337 = vmatprep.subr.mxu0 0.0
      %2338 = vmatpush1.xpose.msra.mxu0 0.0
      %2339 = vmatprep.subr.mxu0 0.0
      %2340 = vmatpush1.xpose.msra.mxu0 0.0
      %2341 = vmatprep.subr.mxu0 0.0
      %2342 = vmatpush1.xpose.msra.mxu0 0.0
      %2343 = vmatprep.subr.mxu0 0.0
      %2344 = vmatpush1.xpose.msra.mxu0 0.0
      %2345 = vmatprep.subr.mxu0 0.0
      %2346 = vmatpush1.xpose.msra.mxu0 0.0
      %2347 = vmatprep.subr.mxu0 0.0
      %2348 = vmatpush1.xpose.msra.mxu0 0.0
      %2349 = vmatprep.subr.mxu0 0.0
      %2350 = vmatpush1.xpose.msra.mxu0 0.0
      %2351 = vmatprep.subr.mxu0 0.0
      %2352 = vmatpush1.xpose.msra.mxu0 0.0
      %2353 = vmatprep.subr.mxu0 0.0
      %2354 = vmatpush1.xpose.msra.mxu0 0.0
      %2355 = vmatprep.subr.mxu0 0.0
      %2356 = vmatpush1.xpose.msra.mxu0 0.0
      %2357 = vmatprep.subr.mxu0 0.0
      %2358 = vmatpush1.xpose.msra.mxu0 0.0
      %2359 = vmatprep.subr.mxu0 0.0
      %2360 = vmatpush1.xpose.msra.mxu0 0.0
      %2361 = vmatprep.subr.mxu0 0.0
      %2362 = vmatpush1.xpose.msra.mxu0 0.0
      %2363 = vmatprep.mubr.f32.mxu0 0.0
      %2364 = vmatmul.mubr.f32.gmra.mrb[0].mxu0 %v2287
      %v2365 = vpop.f32.mrb[0].mxu0
      %v2366 = vadd.f32 0.0, %v2365
      %v2367 = vpop.f32.mrb[0].mxu0
      %2368 = vmatprep.mubr.f32.mxu0 0.0
      %2369 = vmatmul.mubr.f32.gmra.mrb[0].mxu0 %v2289
      %v2370 = vpop.f32.mrb[0].mxu0
      %v2371 = vadd.f32 0.0, %v2370
      %v2372 = vpop.f32.mrb[0].mxu0
      %2373 = vmatprep.mubr.f32.mxu0 0.0
      %2374 = vmatmul.mubr.f32.gmra.mrb[0].mxu0 %v2291
      %v2375 = vpop.f32.mrb[0].mxu0
      %v2376 = vadd.f32 0.0, %v2375
      %v2377 = vpop.f32.mrb[0].mxu0
      %2378 = vdwg.mxu0
      %v2379 = vmul.f32 %v2366, 0.35355338
      %v2380 = vmul.f32 %v2371, 0.35355338
      %v2381 = vmul.f32 %v2376, 0.35355338
      %vm2382 = vcmask 138240
      %v2383 = vsel %vm2382, %v2379, -inf
      %2384 = vmax.xlane.f32.xlu0 %v2383
      %v2385 = vpop.xlane.xlu0 %2384
      %v2386 = vsel %vm2382, %v2380, -inf
      %2387 = vmax.xlane.f32.xlu0 %v2386
      %v2388 = vpop.xlane.xlu0 %2387
      %vm2389 = vcmask 131072
      %v2390 = vsel %vm2389, %v2381, -inf
      %2391 = vmax.xlane.f32.xlu0 %v2390
      %v2392 = vpop.xlane.xlu0 %2391
      %v2393 = vsub.f32 %v2379, %v2385
      %v2394 = vsub.f32 %v2380, %v2388
      %v2395 = vsub.f32 %v2381, %v2392
      %v2396 = vmul.f32 %v2393, 1.442695
      %v2397 = vpow.pop %v2396
      %v2398 = vmul.f32 %v2394, 1.442695
      %v2399 = vpow.pop %v2398
      %v2400 = vmul.f32 %v2395, 1.442695
      %v2401 = vpow.pop %v2400
      %v2402 = vsel %vm2382, %v2397, 0.0
      %2403 = vadd.xlane.f32.xlu0 %v2402
      %v2404 = vpop.xlane.xlu0 %2403
      %v2405 = vsel %vm2382, %v2399, 0.0
      %2406 = vadd.xlane.f32.xlu0 %v2405
      %v2407 = vpop.xlane.xlu0 %2406
      %v2408 = vsel %vm2389, %v2401, 0.0
      %2409 = vadd.xlane.f32.xlu0 %v2408
      %v2410 = vpop.xlane.xlu0 %2409
      %v2411 = vrcp.pop %v2404
      %v2412 = vrcp.pop %v2407
      %v2413 = vrcp.pop %v2410
      %v2414 = vmul.f32 %v2397, %v2411
      %v2415 = vmul.f32 %v2399, %v2412
      %v2416 = vmul.f32 %v2401, %v2413
      %2417 = vrot.lane.b32.xlu0 %v2264, 64
      %v2418 = vpop.permute.xlu0 %2417
      %2419 = vrot.lane.b32.xlu0 %v2269, 64
      %v2420 = vpop.permute.xlu0 %2419
      %2421 = vrot.lane.b32.xlu0 %v2274, 64
      %v2422 = vpop.permute.xlu0 %2421
      %v2426 = vsel %vm2382, %v2414, 0
      %v2429 = vsel %vm2382, %v2415, 0
      %v2432 = vsel %vm2382, %v2416, 0
      %vm2434 = vcmask 1040384
      %v2435 = vsel %vm2434, %v2422, 0
      %2437 = vmatprep.subr.mxu0 0.0
      %2438 = vmatpush1.msra.mxu0 %v2418
      %2439 = vmatprep.subr.mxu0 0.0
      %2440 = vmatpush1.msra.mxu0 %v2420
      %2441 = vmatprep.subr.mxu0 0.0
      %2442 = vmatpush1.msra.mxu0 %v2435
      %2443 = vmatprep.subr.mxu0 0.0
      %2444 = vmatpush1.msra.mxu0 0.0
      %2445 = vmatprep.subr.mxu0 0.0
      %2446 = vmatpush1.msra.mxu0 0.0
      %2447 = vmatprep.subr.mxu0 0.0
      %2448 = vmatpush1.msra.mxu0 0.0
      %2449 = vmatprep.subr.mxu0 0.0
      %2450 = vmatpush1.msra.mxu0 0.0
      %2451 = vmatprep.subr.mxu0 0.0
      %2452 = vmatpush1.msra.mxu0 0.0
      %2453 = vmatprep.subr.mxu0 0.0
      %2454 = vmatpush1.msra.mxu0 0.0
      %2455 = vmatprep.subr.mxu0 0.0
      %2456 = vmatpush1.msra.mxu0 0.0
      %2457 = vmatprep.subr.mxu0 0.0
      %2458 = vmatpush1.msra.mxu0 0.0
      %2459 = vmatprep.subr.mxu0 0.0
      %2460 = vmatpush1.msra.mxu0 0.0
      %2461 = vmatprep.subr.mxu0 0.0
      %2462 = vmatpush1.msra.mxu0 0.0
      %2463 = vmatprep.subr.mxu0 0.0
      %2464 = vmatpush1.msra.mxu0 0.0
      %2465 = vmatprep.subr.mxu0 0.0
      %2466 = vmatpush1.msra.mxu0 0.0
      %2467 = vmatprep.subr.mxu0 0.0
      %2468 = vmatpush1.msra.mxu0 0.0
      %2469 = vmatprep.subr.mxu0 0.0
      %2470 = vmatpush1.msra.mxu0 0.0
      %2471 = vmatprep.subr.mxu0 0.0
      %2472 = vmatpush1.msra.mxu0 0.0
      %2473 = vmatprep.subr.mxu0 0.0
      %2474 = vmatpush1.msra.mxu0 0.0
      %2475 = vmatprep.subr.mxu0 0.0
      %2476 = vmatpush1.msra.mxu0 0.0
      %2477 = vmatprep.subr.mxu0 0.0
      %2478 = vmatpush1.msra.mxu0 0.0
      %2479 = vmatprep.subr.mxu0 0.0
      %2480 = vmatpush1.msra.mxu0 0.0
      %2481 = vmatprep.subr.mxu0 0.0
      %2482 = vmatpush1.msra.mxu0 0.0
      %2483 = vmatprep.subr.mxu0 0.0
      %2484 = vmatpush1.msra.mxu0 0.0
      %2485 = vmatprep.subr.mxu0 0.0
      %2486 = vmatpush1.msra.mxu0 0.0
      %2487 = vmatprep.subr.mxu0 0.0
      %2488 = vmatpush1.msra.mxu0 0.0
      %2489 = vmatprep.subr.mxu0 0.0
      %2490 = vmatpush1.msra.mxu0 0.0
      %2491 = vmatprep.subr.mxu0 0.0
      %2492 = vmatpush1.msra.mxu0 0.0
      %2493 = vmatprep.subr.mxu0 0.0
      %2494 = vmatpush1.msra.mxu0 0.0
      %2495 = vmatprep.subr.mxu0 0.0
      %2496 = vmatpush1.msra.mxu0 0.0
      %2497 = vmatprep.subr.mxu0 0.0
      %2498 = vmatpush1.msra.mxu0 0.0
      %2499 = vmatprep.subr.mxu0 0.0
      %2500 = vmatpush1.msra.mxu0 0.0
      %2501 = vmatprep.mubr.f32.mxu0 0.0
      %2502 = vmatmul.mubr.f32.gmra.mrb[0].mxu0 %v2426
      %v2503 = vpop.f32.mrb[0].mxu0
      %v2504 = vadd.f32 0.0, %v2503
      %v2505 = vpop.f32.mrb[0].mxu0
      %2506 = vmatprep.mubr.f32.mxu0 0.0
      %2507 = vmatmul.mubr.f32.gmra.mrb[0].mxu0 %v2429
      %v2508 = vpop.f32.mrb[0].mxu0
      %v2509 = vadd.f32 0.0, %v2508
      %v2510 = vpop.f32.mrb[0].mxu0
      %2511 = vmatprep.mubr.f32.mxu0 0.0
      %2512 = vmatmul.mubr.f32.gmra.mrb[0].mxu0 %v2432
      %v2513 = vpop.f32.mrb[0].mxu0
      %v2514 = vadd.f32 0.0, %v2513
      %v2515 = vpop.f32.mrb[0].mxu0
      %2516 = vdwg.mxu0
      %2517 = vrot.lane.b32.xlu0 %v2264, 120
      %v2518 = vpop.permute.xlu0 %2517
      %2519 = vrot.lane.b32.xlu0 %v2269, 120
      %v2520 = vpop.permute.xlu0 %2519
      %2521 = vrot.lane.b32.xlu0 %v2274, 120
      %v2522 = vpop.permute.xlu0 %2521
      %2523 = vrot.lane.b32.xlu0 %v2264, 88
      %v2524 = vpop.permute.xlu0 %2523
      %2525 = vrot.lane.b32.xlu0 %v2269, 88
      %v2526 = vpop.permute.xlu0 %2525
      %2527 = vrot.lane.b32.xlu0 %v2274, 88
      %v2528 = vpop.permute.xlu0 %2527
      %v2529 = vsel %vm2286, %v2518, 0
      %v2531 = vsel %vm2286, %v2520, 0
      %v2533 = vsel %vm2286, %v2522, 0
      %v2535 = vsel %vm2286, %v2524, 0
      %v2537 = vsel %vm2286, %v2526, 0
      %v2539 = vsel %vm2286, %v2528, 0
      %2541 = vmatprep.subr.mxu0 0.0
      %2542 = vmatpush1.xpose.msra.mxu0 %v2535
      %2543 = vmatprep.subr.mxu0 0.0
      %2544 = vmatpush1.xpose.msra.mxu0 %v2537
      %2545 = vmatprep.subr.mxu0 0.0
      %2546 = vmatpush1.xpose.msra.mxu0 %v2539
      %2547 = vmatprep.subr.mxu0 0.0
      %2548 = vmatpush1.xpose.msra.mxu0 0.0
      %2549 = vmatprep.subr.mxu0 0.0
      %2550 = vmatpush1.xpose.msra.mxu0 0.0
      %2551 = vmatprep.subr.mxu0 0.0
      %2552 = vmatpush1.xpose.msra.mxu0 0.0
      %2553 = vmatprep.subr.mxu0 0.0
      %2554 = vmatpush1.xpose.msra.mxu0 0.0
      %2555 = vmatprep.subr.mxu0 0.0
      %2556 = vmatpush1.xpose.msra.mxu0 0.0
      %2557 = vmatprep.subr.mxu0 0.0
      %2558 = vmatpush1.xpose.msra.mxu0 0.0
      %2559 = vmatprep.subr.mxu0 0.0
      %2560 = vmatpush1.xpose.msra.mxu0 0.0
      %2561 = vmatprep.subr.mxu0 0.0
      %2562 = vmatpush1.xpose.msra.mxu0 0.0
      %2563 = vmatprep.subr.mxu0 0.0
      %2564 = vmatpush1.xpose.msra.mxu0 0.0
      %2565 = vmatprep.subr.mxu0 0.0
      %2566 = vmatpush1.xpose.msra.mxu0 0.0
      %2567 = vmatprep.subr.mxu0 0.0
      %2568 = vmatpush1.xpose.msra.mxu0 0.0
      %2569 = vmatprep.subr.mxu0 0.0
      %2570 = vmatpush1.xpose.msra.mxu0 0.0
      %2571 = vmatprep.subr.mxu0 0.0
      %2572 = vmatpush1.xpose.msra.mxu0 0.0
      %2573 = vmatprep.subr.mxu0 0.0
      %2574 = vmatpush1.xpose.msra.mxu0 0.0
      %2575 = vmatprep.subr.mxu0 0.0
      %2576 = vmatpush1.xpose.msra.mxu0 0.0
      %2577 = vmatprep.subr.mxu0 0.0
      %2578 = vmatpush1.xpose.msra.mxu0 0.0
      %2579 = vmatprep.subr.mxu0 0.0
      %2580 = vmatpush1.xpose.msra.mxu0 0.0
      %2581 = vmatprep.subr.mxu0 0.0
      %2582 = vmatpush1.xpose.msra.mxu0 0.0
      %2583 = vmatprep.subr.mxu0 0.0
      %2584 = vmatpush1.xpose.msra.mxu0 0.0
      %2585 = vmatprep.subr.mxu0 0.0
      %2586 = vmatpush1.xpose.msra.mxu0 0.0
      %2587 = vmatprep.subr.mxu0 0.0
      %2588 = vmatpush1.xpose.msra.mxu0 0.0
      %2589 = vmatprep.subr.mxu0 0.0
      %2590 = vmatpush1.xpose.msra.mxu0 0.0
      %2591 = vmatprep.subr.mxu0 0.0
      %2592 = vmatpush1.xpose.msra.mxu0 0.0
      %2593 = vmatprep.subr.mxu0 0.0
      %2594 = vmatpush1.xpose.msra.mxu0 0.0
      %2595 = vmatprep.subr.mxu0 0.0
      %2596 = vmatpush1.xpose.msra.mxu0 0.0
      %2597 = vmatprep.subr.mxu0 0.0
      %2598 = vmatpush1.xpose.msra.mxu0 0.0
      %2599 = vmatprep.subr.mxu0 0.0
      %2600 = vmatpush1.xpose.msra.mxu0 0.0
      %2601 = vmatprep.subr.mxu0 0.0
      %2602 = vmatpush1.xpose.msra.mxu0 0.0
      %2603 = vmatprep.subr.mxu0 0.0
      %2604 = vmatpush1.xpose.msra.mxu0 0.0
      %2605 = vmatprep.mubr.f32.mxu0 0.0
      %2606 = vmatmul.mubr.f32.gmra.mrb[0].mxu0 %v2529
      %v2607 = vpop.f32.mrb[0].mxu0
      %v2608 = vadd.f32 0.0, %v2607
      %v2609 = vpop.f32.mrb[0].mxu0
      %2610 = vmatprep.mubr.f32.mxu0 0.0
      %2611 = vmatmul.mubr.f32.gmra.mrb[0].mxu0 %v2531
      %v2612 = vpop.f32.mrb[0].mxu0
      %v2613 = vadd.f32 0.0, %v2612
      %v2614 = vpop.f32.mrb[0].mxu0
      %2615 = vmatprep.mubr.f32.mxu0 0.0
      %2616 = vmatmul.mubr.f32.gmra.mrb[0].mxu0 %v2533
      %v2617 = vpop.f32.mrb[0].mxu0
      %v2618 = vadd.f32 0.0, %v2617
      %v2619 = vpop.f32.mrb[0].mxu0
      %2620 = vdwg.mxu0
      %v2621 = vmul.f32 %v2608, 0.35355338
      %v2622 = vmul.f32 %v2613, 0.35355338
      %v2623 = vmul.f32 %v2618, 0.35355338
      %v2624 = vsel %vm2382, %v2621, -inf
      %2625 = vmax.xlane.f32.xlu0 %v2624
      %v2626 = vpop.xlane.xlu0 %2625
      %v2627 = vsel %vm2382, %v2622, -inf
      %2628 = vmax.xlane.f32.xlu0 %v2627
      %v2629 = vpop.xlane.xlu0 %2628
      %v2630 = vsel %vm2389, %v2623, -inf
      %2631 = vmax.xlane.f32.xlu0 %v2630
      %v2632 = vpop.xlane.xlu0 %2631
      %v2633 = vsub.f32 %v2621, %v2626
      %v2634 = vsub.f32 %v2622, %v2629
      %v2635 = vsub.f32 %v2623, %v2632
      %v2636 = vmul.f32 %v2633, 1.442695
      %v2637 = vpow.pop %v2636
      %v2638 = vmul.f32 %v2634, 1.442695
      %v2639 = vpow.pop %v2638
      %v2640 = vmul.f32 %v2635, 1.442695
      %v2641 = vpow.pop %v2640
      %v2642 = vsel %vm2382, %v2637, 0.0
      %2643 = vadd.xlane.f32.xlu0 %v2642
      %v2644 = vpop.xlane.xlu0 %2643
      %v2645 = vsel %vm2382, %v2639, 0.0
      %2646 = vadd.xlane.f32.xlu0 %v2645
      %v2647 = vpop.xlane.xlu0 %2646
      %v2648 = vsel %vm2389, %v2641, 0.0
      %2649 = vadd.xlane.f32.xlu0 %v2648
      %v2650 = vpop.xlane.xlu0 %2649
      %v2651 = vrcp.pop %v2644
      %v2652 = vrcp.pop %v2647
      %v2653 = vrcp.pop %v2650
      %v2654 = vmul.f32 %v2637, %v2651
      %v2655 = vmul.f32 %v2639, %v2652
      %v2656 = vmul.f32 %v2641, %v2653
      %2657 = vrot.lane.b32.xlu0 %v2264, 56
      %v2658 = vpop.permute.xlu0 %2657
      %2659 = vrot.lane.b32.xlu0 %v2269, 56
      %v2660 = vpop.permute.xlu0 %2659
      %2661 = vrot.lane.b32.xlu0 %v2274, 56
      %v2662 = vpop.permute.xlu0 %2661
      %v2666 = vsel %vm2382, %v2654, 0
      %v2669 = vsel %vm2382, %v2655, 0
      %v2672 = vsel %vm2382, %v2656, 0
      %v2674 = vsel %vm2434, %v2662, 0
      %2676 = vmatprep.subr.mxu0 0.0
      %2677 = vmatpush1.msra.mxu0 %v2658
      %2678 = vmatprep.subr.mxu0 0.0
      %2679 = vmatpush1.msra.mxu0 %v2660
      %2680 = vmatprep.subr.mxu0 0.0
      %2681 = vmatpush1.msra.mxu0 %v2674
      %2682 = vmatprep.subr.mxu0 0.0
      %2683 = vmatpush1.msra.mxu0 0.0
      %2684 = vmatprep.subr.mxu0 0.0
      %2685 = vmatpush1.msra.mxu0 0.0
      %2686 = vmatprep.subr.mxu0 0.0
      %2687 = vmatpush1.msra.mxu0 0.0
      %2688 = vmatprep.subr.mxu0 0.0
      %2689 = vmatpush1.msra.mxu0 0.0
      %2690 = vmatprep.subr.mxu0 0.0
      %2691 = vmatpush1.msra.mxu0 0.0
      %2692 = vmatprep.subr.mxu0 0.0
      %2693 = vmatpush1.msra.mxu0 0.0
      %2694 = vmatprep.subr.mxu0 0.0
      %2695 = vmatpush1.msra.mxu0 0.0
      %2696 = vmatprep.subr.mxu0 0.0
      %2697 = vmatpush1.msra.mxu0 0.0
      %2698 = vmatprep.subr.mxu0 0.0
      %2699 = vmatpush1.msra.mxu0 0.0
      %2700 = vmatprep.subr.mxu0 0.0
      %2701 = vmatpush1.msra.mxu0 0.0
      %2702 = vmatprep.subr.mxu0 0.0
      %2703 = vmatpush1.msra.mxu0 0.0
      %2704 = vmatprep.subr.mxu0 0.0
      %2705 = vmatpush1.msra.mxu0 0.0
      %2706 = vmatprep.subr.mxu0 0.0
      %2707 = vmatpush1.msra.mxu0 0.0
      %2708 = vmatprep.subr.mxu0 0.0
      %2709 = vmatpush1.msra.mxu0 0.0
      %2710 = vmatprep.subr.mxu0 0.0
      %2711 = vmatpush1.msra.mxu0 0.0
      %2712 = vmatprep.subr.mxu0 0.0
      %2713 = vmatpush1.msra.mxu0 0.0
      %2714 = vmatprep.subr.mxu0 0.0
      %2715 = vmatpush1.msra.mxu0 0.0
      %2716 = vmatprep.subr.mxu0 0.0
      %2717 = vmatpush1.msra.mxu0 0.0
      %2718 = vmatprep.subr.mxu0 0.0
      %2719 = vmatpush1.msra.mxu0 0.0
      %2720 = vmatprep.subr.mxu0 0.0
      %2721 = vmatpush1.msra.mxu0 0.0
      %2722 = vmatprep.subr.mxu0 0.0
      %2723 = vmatpush1.msra.mxu0 0.0
      %2724 = vmatprep.subr.mxu0 0.0
      %2725 = vmatpush1.msra.mxu0 0.0
      %2726 = vmatprep.subr.mxu0 0.0
      %2727 = vmatpush1.msra.mxu0 0.0
      %2728 = vmatprep.subr.mxu0 0.0
      %2729 = vmatpush1.msra.mxu0 0.0
      %2730 = vmatprep.subr.mxu0 0.0
      %2731 = vmatpush1.msra.mxu0 0.0
      %2732 = vmatprep.subr.mxu0 0.0
      %2733 = vmatpush1.msra.mxu0 0.0
      %2734 = vmatprep.subr.mxu0 0.0
      %2735 = vmatpush1.msra.mxu0 0.0
      %2736 = vmatprep.subr.mxu0 0.0
      %2737 = vmatpush1.msra.mxu0 0.0
      %2738 = vmatprep.subr.mxu0 0.0
      %2739 = vmatpush1.msra.mxu0 0.0
      %2740 = vmatprep.mubr.f32.mxu0 0.0
      %2741 = vmatmul.mubr.f32.gmra.mrb[0].mxu0 %v2666
      %v2742 = vpop.f32.mrb[0].mxu0
      %v2743 = vadd.f32 0.0, %v2742
      %v2744 = vpop.f32.mrb[0].mxu0
      %2745 = vmatprep.mubr.f32.mxu0 0.0
      %2746 = vmatmul.mubr.f32.gmra.mrb[0].mxu0 %v2669
      %v2747 = vpop.f32.mrb[0].mxu0
      %v2748 = vadd.f32 0.0, %v2747
      %v2749 = vpop.f32.mrb[0].mxu0
      %2750 = vmatprep.mubr.f32.mxu0 0.0
      %2751 = vmatmul.mubr.f32.gmra.mrb[0].mxu0 %v2672
      %v2752 = vpop.f32.mrb[0].mxu0
      %v2753 = vadd.f32 0.0, %v2752
      %v2754 = vpop.f32.mrb[0].mxu0
      %2755 = vdwg.mxu0
      %v2757 = vsel %vm2286, %v2743, 0
      %v2760 = vsel %vm2286, %v2748, 0
      %v2763 = vsel %vm2286, %v2753, 0
      %2765 = vmatprep.subr.mxu0 0.0
      %2766 = vmatpush1.msra.mxu0 %v2104
      %2767 = vmatprep.subr.mxu0 0.0
      %2768 = vmatpush1.msra.mxu0 0.0
      %2769 = vmatprep.subr.mxu0 0.0
      %2770 = vmatpush1.msra.mxu0 0.0
      %2771 = vmatprep.subr.mxu0 0.0
      %2772 = vmatpush1.msra.mxu0 0.0
      %2773 = vmatprep.subr.mxu0 0.0
      %2774 = vmatpush1.msra.mxu0 0.0
      %2775 = vmatprep.subr.mxu0 0.0
      %2776 = vmatpush1.msra.mxu0 0.0
      %2777 = vmatprep.subr.mxu0 0.0
      %2778 = vmatpush1.msra.mxu0 0.0
      %2779 = vmatprep.subr.mxu0 0.0
      %2780 = vmatpush1.msra.mxu0 0.0
      %2781 = vmatprep.subr.mxu0 0.0
      %2782 = vmatpush1.msra.mxu0 0.0
      %2783 = vmatprep.subr.mxu0 0.0
      %2784 = vmatpush1.msra.mxu0 0.0
      %2785 = vmatprep.subr.mxu0 0.0
      %2786 = vmatpush1.msra.mxu0 0.0
      %2787 = vmatprep.subr.mxu0 0.0
      %2788 = vmatpush1.msra.mxu0 0.0
      %2789 = vmatprep.subr.mxu0 0.0
      %2790 = vmatpush1.msra.mxu0 0.0
      %2791 = vmatprep.subr.mxu0 0.0
      %2792 = vmatpush1.msra.mxu0 0.0
      %2793 = vmatprep.subr.mxu0 0.0
      %2794 = vmatpush1.msra.mxu0 0.0
      %2795 = vmatprep.subr.mxu0 0.0
      %2796 = vmatpush1.msra.mxu0 0.0
      %2797 = vmatprep.subr.mxu0 0.0
      %2798 = vmatpush1.msra.mxu0 0.0
      %2799 = vmatprep.subr.mxu0 0.0
      %2800 = vmatpush1.msra.mxu0 0.0
      %2801 = vmatprep.subr.mxu0 0.0
      %2802 = vmatpush1.msra.mxu0 0.0
      %2803 = vmatprep.subr.mxu0 0.0
      %2804 = vmatpush1.msra.mxu0 0.0
      %2805 = vmatprep.subr.mxu0 0.0
      %2806 = vmatpush1.msra.mxu0 0.0
      %2807 = vmatprep.subr.mxu0 0.0
      %2808 = vmatpush1.msra.mxu0 0.0
      %2809 = vmatprep.subr.mxu0 0.0
      %2810 = vmatpush1.msra.mxu0 0.0
      %2811 = vmatprep.subr.mxu0 0.0
      %2812 = vmatpush1.msra.mxu0 0.0
      %2813 = vmatprep.subr.mxu0 0.0
      %2814 = vmatpush1.msra.mxu0 0.0
      %2815 = vmatprep.subr.mxu0 0.0
      %2816 = vmatpush1.msra.mxu0 0.0
      %2817 = vmatprep.subr.mxu0 0.0
      %2818 = vmatpush1.msra.mxu0 0.0
      %2819 = vmatprep.subr.mxu0 0.0
      %2820 = vmatpush1.msra.mxu0 0.0
      %2821 = vmatprep.subr.mxu0 0.0
      %2822 = vmatpush1.msra.mxu0 0.0
      %2823 = vmatprep.subr.mxu0 0.0
      %2824 = vmatpush1.msra.mxu0 0.0
      %2825 = vmatprep.subr.mxu0 0.0
      %2826 = vmatpush1.msra.mxu0 0.0
      %2827 = vmatprep.subr.mxu0 0.0
      %2828 = vmatpush1.msra.mxu0 0.0
      %2829 = vmatprep.mubr.f32.mxu0 0.0
      %2830 = vmatmul.mubr.f32.gmra.mrb[0].mxu0 %v2757
      %v2831 = vpop.f32.mrb[0].mxu0
      %v2832 = vadd.f32 0.0, %v2831
      %v2833 = vpop.f32.mrb[0].mxu0
      %2834 = vmatprep.mubr.f32.mxu0 0.0
      %2835 = vmatmul.mubr.f32.gmra.mrb[0].mxu0 %v2760
      %v2836 = vpop.f32.mrb[0].mxu0
      %v2837 = vadd.f32 0.0, %v2836
      %v2838 = vpop.f32.mrb[0].mxu0
      %2839 = vmatprep.mubr.f32.mxu0 0.0
      %2840 = vmatmul.mubr.f32.gmra.mrb[0].mxu0 %v2763
      %v2841 = vpop.f32.mrb[0].mxu0
      %v2842 = vadd.f32 0.0, %v2841
      %v2843 = vpop.f32.mrb[0].mxu0
      %2844 = vdwg.mxu0
      %v2846 = vsel %vm2286, %v2504, 0
      %v2849 = vsel %vm2286, %v2509, 0
      %v2852 = vsel %vm2286, %v2514, 0
      %2854 = vmatprep.subr.mxu0 0.0
      %2855 = vmatpush1.msra.mxu0 %v2103
      %2856 = vmatprep.subr.mxu0 0.0
      %2857 = vmatpush1.msra.mxu0 0.0
      %2858 = vmatprep.subr.mxu0 0.0
      %2859 = vmatpush1.msra.mxu0 0.0
      %2860 = vmatprep.subr.mxu0 0.0
      %2861 = vmatpush1.msra.mxu0 0.0
      %2862 = vmatprep.subr.mxu0 0.0
      %2863 = vmatpush1.msra.mxu0 0.0
      %2864 = vmatprep.subr.mxu0 0.0
      %2865 = vmatpush1.msra.mxu0 0.0
      %2866 = vmatprep.subr.mxu0 0.0
      %2867 = vmatpush1.msra.mxu0 0.0
      %2868 = vmatprep.subr.mxu0 0.0
      %2869 = vmatpush1.msra.mxu0 0.0
      %2870 = vmatprep.subr.mxu0 0.0
      %2871 = vmatpush1.msra.mxu0 0.0
      %2872 = vmatprep.subr.mxu0 0.0
      %2873 = vmatpush1.msra.mxu0 0.0
      %2874 = vmatprep.subr.mxu0 0.0
      %2875 = vmatpush1.msra.mxu0 0.0
      %2876 = vmatprep.subr.mxu0 0.0
      %2877 = vmatpush1.msra.mxu0 0.0
      %2878 = vmatprep.subr.mxu0 0.0
      %2879 = vmatpush1.msra.mxu0 0.0
      %2880 = vmatprep.subr.mxu0 0.0
      %2881 = vmatpush1.msra.mxu0 0.0
      %2882 = vmatprep.subr.mxu0 0.0
      %2883 = vmatpush1.msra.mxu0 0.0
      %2884 = vmatprep.subr.mxu0 0.0
      %2885 = vmatpush1.msra.mxu0 0.0
      %2886 = vmatprep.subr.mxu0 0.0
      %2887 = vmatpush1.msra.mxu0 0.0
      %2888 = vmatprep.subr.mxu0 0.0
      %2889 = vmatpush1.msra.mxu0 0.0
      %2890 = vmatprep.subr.mxu0 0.0
      %2891 = vmatpush1.msra.mxu0 0.0
      %2892 = vmatprep.subr.mxu0 0.0
      %2893 = vmatpush1.msra.mxu0 0.0
      %2894 = vmatprep.subr.mxu0 0.0
      %2895 = vmatpush1.msra.mxu0 0.0
      %2896 = vmatprep.subr.mxu0 0.0
      %2897 = vmatpush1.msra.mxu0 0.0
      %2898 = vmatprep.subr.mxu0 0.0
      %2899 = vmatpush1.msra.mxu0 0.0
      %2900 = vmatprep.subr.mxu0 0.0
      %2901 = vmatpush1.msra.mxu0 0.0
      %2902 = vmatprep.subr.mxu0 0.0
      %2903 = vmatpush1.msra.mxu0 0.0
      %2904 = vmatprep.subr.mxu0 0.0
      %2905 = vmatpush1.msra.mxu0 0.0
      %2906 = vmatprep.subr.mxu0 0.0
      %2907 = vmatpush1.msra.mxu0 0.0
      %2908 = vmatprep.subr.mxu0 0.0
      %2909 = vmatpush1.msra.mxu0 0.0
      %2910 = vmatprep.subr.mxu0 0.0
      %2911 = vmatpush1.msra.mxu0 0.0
      %2912 = vmatprep.subr.mxu0 0.0
      %2913 = vmatpush1.msra.mxu0 0.0
      %2914 = vmatprep.subr.mxu0 0.0
      %2915 = vmatpush1.msra.mxu0 0.0
      %2916 = vmatprep.subr.mxu0 0.0
      %2917 = vmatpush1.msra.mxu0 0.0
      %2918 = vmatprep.mubr.f32.mxu0 0.0
      %2919 = vmatmul.mubr.f32.gmra.mrb[0].mxu0 %v2846
      %v2920 = vpop.f32.mrb[0].mxu0
      %v2921 = vadd.f32 %v2832, %v2920
      %v2922 = vpop.f32.mrb[0].mxu0
      %2923 = vmatprep.mubr.f32.mxu0 0.0
      %2924 = vmatmul.mubr.f32.gmra.mrb[0].mxu0 %v2849
      %v2925 = vpop.f32.mrb[0].mxu0
      %v2926 = vadd.f32 %v2837, %v2925
      %v2927 = vpop.f32.mrb[0].mxu0
      %2928 = vmatprep.mubr.f32.mxu0 0.0
      %2929 = vmatmul.mubr.f32.gmra.mrb[0].mxu0 %v2852
      %v2930 = vpop.f32.mrb[0].mxu0
      %v2931 = vadd.f32 %v2842, %v2930
      %v2932 = vpop.f32.mrb[0].mxu0
      %2933 = vdwg.mxu0
      %2934 = vrot.lane.b32.xlu0 %v2264, 112
      %v2935 = vpop.permute.xlu0 %2934
      %2936 = vrot.lane.b32.xlu0 %v2269, 112
      %v2937 = vpop.permute.xlu0 %2936
      %2938 = vrot.lane.b32.xlu0 %v2274, 112
      %v2939 = vpop.permute.xlu0 %2938
      %2940 = vrot.lane.b32.xlu0 %v2264, 80
      %v2941 = vpop.permute.xlu0 %2940
      %2942 = vrot.lane.b32.xlu0 %v2269, 80
      %v2943 = vpop.permute.xlu0 %2942
      %2944 = vrot.lane.b32.xlu0 %v2274, 80
      %v2945 = vpop.permute.xlu0 %2944
      %v2946 = vsel %vm2286, %v2935, 0
      %v2948 = vsel %vm2286, %v2937, 0
      %v2950 = vsel %vm2286, %v2939, 0
      %v2952 = vsel %vm2286, %v2941, 0
      %v2954 = vsel %vm2286, %v2943, 0
      %v2956 = vsel %vm2286, %v2945, 0
      %2958 = vmatprep.subr.mxu0 0.0
      %2959 = vmatpush1.xpose.msra.mxu0 %v2952
      %2960 = vmatprep.subr.mxu0 0.0
      %2961 = vmatpush1.xpose.msra.mxu0 %v2954
      %2962 = vmatprep.subr.mxu0 0.0
      %2963 = vmatpush1.xpose.msra.mxu0 %v2956
      %2964 = vmatprep.subr.mxu0 0.0
      %2965 = vmatpush1.xpose.msra.mxu0 0.0
      %2966 = vmatprep.subr.mxu0 0.0
      %2967 = vmatpush1.xpose.msra.mxu0 0.0
      %2968 = vmatprep.subr.mxu0 0.0
      %2969 = vmatpush1.xpose.msra.mxu0 0.0
      %2970 = vmatprep.subr.mxu0 0.0
      %2971 = vmatpush1.xpose.msra.mxu0 0.0
      %2972 = vmatprep.subr.mxu0 0.0
      %2973 = vmatpush1.xpose.msra.mxu0 0.0
      %2974 = vmatprep.subr.mxu0 0.0
      %2975 = vmatpush1.xpose.msra.mxu0 0.0
      %2976 = vmatprep.subr.mxu0 0.0
      %2977 = vmatpush1.xpose.msra.mxu0 0.0
      %2978 = vmatprep.subr.mxu0 0.0
      %2979 = vmatpush1.xpose.msra.mxu0 0.0
      %2980 = vmatprep.subr.mxu0 0.0
      %2981 = vmatpush1.xpose.msra.mxu0 0.0
      %2982 = vmatprep.subr.mxu0 0.0
      %2983 = vmatpush1.xpose.msra.mxu0 0.0
      %2984 = vmatprep.subr.mxu0 0.0
      %2985 = vmatpush1.xpose.msra.mxu0 0.0
      %2986 = vmatprep.subr.mxu0 0.0
      %2987 = vmatpush1.xpose.msra.mxu0 0.0
      %2988 = vmatprep.subr.mxu0 0.0
      %2989 = vmatpush1.xpose.msra.mxu0 0.0
      %2990 = vmatprep.subr.mxu0 0.0
      %2991 = vmatpush1.xpose.msra.mxu0 0.0
      %2992 = vmatprep.subr.mxu0 0.0
      %2993 = vmatpush1.xpose.msra.mxu0 0.0
      %2994 = vmatprep.subr.mxu0 0.0
      %2995 = vmatpush1.xpose.msra.mxu0 0.0
      %2996 = vmatprep.subr.mxu0 0.0
      %2997 = vmatpush1.xpose.msra.mxu0 0.0
      %2998 = vmatprep.subr.mxu0 0.0
      %2999 = vmatpush1.xpose.msra.mxu0 0.0
      %3000 = vmatprep.subr.mxu0 0.0
      %3001 = vmatpush1.xpose.msra.mxu0 0.0
      %3002 = vmatprep.subr.mxu0 0.0
      %3003 = vmatpush1.xpose.msra.mxu0 0.0
      %3004 = vmatprep.subr.mxu0 0.0
      %3005 = vmatpush1.xpose.msra.mxu0 0.0
      %3006 = vmatprep.subr.mxu0 0.0
      %3007 = vmatpush1.xpose.msra.mxu0 0.0
      %3008 = vmatprep.subr.mxu0 0.0
      %3009 = vmatpush1.xpose.msra.mxu0 0.0
      %3010 = vmatprep.subr.mxu0 0.0
      %3011 = vmatpush1.xpose.msra.mxu0 0.0
      %3012 = vmatprep.subr.mxu0 0.0
      %3013 = vmatpush1.xpose.msra.mxu0 0.0
      %3014 = vmatprep.subr.mxu0 0.0
      %3015 = vmatpush1.xpose.msra.mxu0 0.0
      %3016 = vmatprep.subr.mxu0 0.0
      %3017 = vmatpush1.xpose.msra.mxu0 0.0
      %3018 = vmatprep.subr.mxu0 0.0
      %3019 = vmatpush1.xpose.msra.mxu0 0.0
      %3020 = vmatprep.subr.mxu0 0.0
      %3021 = vmatpush1.xpose.msra.mxu0 0.0
      %3022 = vmatprep.mubr.f32.mxu0 0.0
      %3023 = vmatmul.mubr.f32.gmra.mrb[0].mxu0 %v2946
      %v3024 = vpop.f32.mrb[0].mxu0
      %v3025 = vadd.f32 0.0, %v3024
      %v3026 = vpop.f32.mrb[0].mxu0
      %3027 = vmatprep.mubr.f32.mxu0 0.0
      %3028 = vmatmul.mubr.f32.gmra.mrb[0].mxu0 %v2948
      %v3029 = vpop.f32.mrb[0].mxu0
      %v3030 = vadd.f32 0.0, %v3029
      %v3031 = vpop.f32.mrb[0].mxu0
      %3032 = vmatprep.mubr.f32.mxu0 0.0
      %3033 = vmatmul.mubr.f32.gmra.mrb[0].mxu0 %v2950
      %v3034 = vpop.f32.mrb[0].mxu0
      %v3035 = vadd.f32 0.0, %v3034
      %v3036 = vpop.f32.mrb[0].mxu0
      %3037 = vdwg.mxu0
      %v3038 = vmul.f32 %v3025, 0.35355338
      %v3039 = vmul.f32 %v3030, 0.35355338
      %v3040 = vmul.f32 %v3035, 0.35355338
      %v3041 = vsel %vm2382, %v3038, -inf
      %3042 = vmax.xlane.f32.xlu0 %v3041
      %v3043 = vpop.xlane.xlu0 %3042
      %v3044 = vsel %vm2382, %v3039, -inf
      %3045 = vmax.xlane.f32.xlu0 %v3044
      %v3046 = vpop.xlane.xlu0 %3045
      %v3047 = vsel %vm2389, %v3040, -inf
      %3048 = vmax.xlane.f32.xlu0 %v3047
      %v3049 = vpop.xlane.xlu0 %3048
      %v3050 = vsub.f32 %v3038, %v3043
      %v3051 = vsub.f32 %v3039, %v3046
      %v3052 = vsub.f32 %v3040, %v3049
      %v3053 = vmul.f32 %v3050, 1.442695
      %v3054 = vpow.pop %v3053
      %v3055 = vmul.f32 %v3051, 1.442695
      %v3056 = vpow.pop %v3055
      %v3057 = vmul.f32 %v3052, 1.442695
      %v3058 = vpow.pop %v3057
      %v3059 = vsel %vm2382, %v3054, 0.0
      %3060 = vadd.xlane.f32.xlu0 %v3059
      %v3061 = vpop.xlane.xlu0 %3060
      %v3062 = vsel %vm2382, %v3056, 0.0
      %3063 = vadd.xlane.f32.xlu0 %v3062
      %v3064 = vpop.xlane.xlu0 %3063
      %v3065 = vsel %vm2389, %v3058, 0.0
      %3066 = vadd.xlane.f32.xlu0 %v3065
      %v3067 = vpop.xlane.xlu0 %3066
      %v3068 = vrcp.pop %v3061
      %v3069 = vrcp.pop %v3064
      %v3070 = vrcp.pop %v3067
      %v3071 = vmul.f32 %v3054, %v3068
      %v3072 = vmul.f32 %v3056, %v3069
      %v3073 = vmul.f32 %v3058, %v3070
      %3074 = vrot.lane.b32.xlu0 %v2264, 48
      %v3075 = vpop.permute.xlu0 %3074
      %3076 = vrot.lane.b32.xlu0 %v2269, 48
      %v3077 = vpop.permute.xlu0 %3076
      %3078 = vrot.lane.b32.xlu0 %v2274, 48
      %v3079 = vpop.permute.xlu0 %3078
      %v3083 = vsel %vm2382, %v3071, 0
      %v3086 = vsel %vm2382, %v3072, 0
      %v3089 = vsel %vm2382, %v3073, 0
      %v3091 = vsel %vm2434, %v3079, 0
      %3093 = vmatprep.subr.mxu0 0.0
      %3094 = vmatpush1.msra.mxu0 %v3075
      %3095 = vmatprep.subr.mxu0 0.0
      %3096 = vmatpush1.msra.mxu0 %v3077
      %3097 = vmatprep.subr.mxu0 0.0
      %3098 = vmatpush1.msra.mxu0 %v3091
      %3099 = vmatprep.subr.mxu0 0.0
      %3100 = vmatpush1.msra.mxu0 0.0
      %3101 = vmatprep.subr.mxu0 0.0
      %3102 = vmatpush1.msra.mxu0 0.0
      %3103 = vmatprep.subr.mxu0 0.0
      %3104 = vmatpush1.msra.mxu0 0.0
      %3105 = vmatprep.subr.mxu0 0.0
      %3106 = vmatpush1.msra.mxu0 0.0
      %3107 = vmatprep.subr.mxu0 0.0
      %3108 = vmatpush1.msra.mxu0 0.0
      %3109 = vmatprep.subr.mxu0 0.0
      %3110 = vmatpush1.msra.mxu0 0.0
      %3111 = vmatprep.subr.mxu0 0.0
      %3112 = vmatpush1.msra.mxu0 0.0
      %3113 = vmatprep.subr.mxu0 0.0
      %3114 = vmatpush1.msra.mxu0 0.0
      %3115 = vmatprep.subr.mxu0 0.0
      %3116 = vmatpush1.msra.mxu0 0.0
      %3117 = vmatprep.subr.mxu0 0.0
      %3118 = vmatpush1.msra.mxu0 0.0
      %3119 = vmatprep.subr.mxu0 0.0
      %3120 = vmatpush1.msra.mxu0 0.0
      %3121 = vmatprep.subr.mxu0 0.0
      %3122 = vmatpush1.msra.mxu0 0.0
      %3123 = vmatprep.subr.mxu0 0.0
      %3124 = vmatpush1.msra.mxu0 0.0
      %3125 = vmatprep.subr.mxu0 0.0
      %3126 = vmatpush1.msra.mxu0 0.0
      %3127 = vmatprep.subr.mxu0 0.0
      %3128 = vmatpush1.msra.mxu0 0.0
      %3129 = vmatprep.subr.mxu0 0.0
      %3130 = vmatpush1.msra.mxu0 0.0
      %3131 = vmatprep.subr.mxu0 0.0
      %3132 = vmatpush1.msra.mxu0 0.0
      %3133 = vmatprep.subr.mxu0 0.0
      %3134 = vmatpush1.msra.mxu0 0.0
      %3135 = vmatprep.subr.mxu0 0.0
      %3136 = vmatpush1.msra.mxu0 0.0
      %3137 = vmatprep.subr.mxu0 0.0
      %3138 = vmatpush1.msra.mxu0 0.0
      %3139 = vmatprep.subr.mxu0 0.0
      %3140 = vmatpush1.msra.mxu0 0.0
      %3141 = vmatprep.subr.mxu0 0.0
      %3142 = vmatpush1.msra.mxu0 0.0
      %3143 = vmatprep.subr.mxu0 0.0
      %3144 = vmatpush1.msra.mxu0 0.0
      %3145 = vmatprep.subr.mxu0 0.0
      %3146 = vmatpush1.msra.mxu0 0.0
      %3147 = vmatprep.subr.mxu0 0.0
      %3148 = vmatpush1.msra.mxu0 0.0
      %3149 = vmatprep.subr.mxu0 0.0
      %3150 = vmatpush1.msra.mxu0 0.0
      %3151 = vmatprep.subr.mxu0 0.0
      %3152 = vmatpush1.msra.mxu0 0.0
      %3153 = vmatprep.subr.mxu0 0.0
      %3154 = vmatpush1.msra.mxu0 0.0
      %3155 = vmatprep.subr.mxu0 0.0
      %3156 = vmatpush1.msra.mxu0 0.0
      %3157 = vmatprep.mubr.f32.mxu0 0.0
      %3158 = vmatmul.mubr.f32.gmra.mrb[0].mxu0 %v3083
      %v3159 = vpop.f32.mrb[0].mxu0
      %v3160 = vadd.f32 0.0, %v3159
      %v3161 = vpop.f32.mrb[0].mxu0
      %3162 = vmatprep.mubr.f32.mxu0 0.0
      %3163 = vmatmul.mubr.f32.gmra.mrb[0].mxu0 %v3086
      %v3164 = vpop.f32.mrb[0].mxu0
      %v3165 = vadd.f32 0.0, %v3164
      %v3166 = vpop.f32.mrb[0].mxu0
      %3167 = vmatprep.mubr.f32.mxu0 0.0
      %3168 = vmatmul.mubr.f32.gmra.mrb[0].mxu0 %v3089
      %v3169 = vpop.f32.mrb[0].mxu0
      %v3170 = vadd.f32 0.0, %v3169
      %v3171 = vpop.f32.mrb[0].mxu0
      %3172 = vdwg.mxu0
      %v3174 = vsel %vm2286, %v3160, 0
      %v3177 = vsel %vm2286, %v3165, 0
      %v3180 = vsel %vm2286, %v3170, 0
      %3182 = vmatprep.subr.mxu0 0.0
      %3183 = vmatpush1.msra.mxu0 %v2105
      %3184 = vmatprep.subr.mxu0 0.0
      %3185 = vmatpush1.msra.mxu0 0.0
      %3186 = vmatprep.subr.mxu0 0.0
      %3187 = vmatpush1.msra.mxu0 0.0
      %3188 = vmatprep.subr.mxu0 0.0
      %3189 = vmatpush1.msra.mxu0 0.0
      %3190 = vmatprep.subr.mxu0 0.0
      %3191 = vmatpush1.msra.mxu0 0.0
      %3192 = vmatprep.subr.mxu0 0.0
      %3193 = vmatpush1.msra.mxu0 0.0
      %3194 = vmatprep.subr.mxu0 0.0
      %3195 = vmatpush1.msra.mxu0 0.0
      %3196 = vmatprep.subr.mxu0 0.0
      %3197 = vmatpush1.msra.mxu0 0.0
      %3198 = vmatprep.subr.mxu0 0.0
      %3199 = vmatpush1.msra.mxu0 0.0
      %3200 = vmatprep.subr.mxu0 0.0
      %3201 = vmatpush1.msra.mxu0 0.0
      %3202 = vmatprep.subr.mxu0 0.0
      %3203 = vmatpush1.msra.mxu0 0.0
      %3204 = vmatprep.subr.mxu0 0.0
      %3205 = vmatpush1.msra.mxu0 0.0
      %3206 = vmatprep.subr.mxu0 0.0
      %3207 = vmatpush1.msra.mxu0 0.0
      %3208 = vmatprep.subr.mxu0 0.0
      %3209 = vmatpush1.msra.mxu0 0.0
      %3210 = vmatprep.subr.mxu0 0.0
      %3211 = vmatpush1.msra.mxu0 0.0
      %3212 = vmatprep.subr.mxu0 0.0
      %3213 = vmatpush1.msra.mxu0 0.0
      %3214 = vmatprep.subr.mxu0 0.0
      %3215 = vmatpush1.msra.mxu0 0.0
      %3216 = vmatprep.subr.mxu0 0.0
      %3217 = vmatpush1.msra.mxu0 0.0
      %3218 = vmatprep.subr.mxu0 0.0
      %3219 = vmatpush1.msra.mxu0 0.0
      %3220 = vmatprep.subr.mxu0 0.0
      %3221 = vmatpush1.msra.mxu0 0.0
      %3222 = vmatprep.subr.mxu0 0.0
      %3223 = vmatpush1.msra.mxu0 0.0
      %3224 = vmatprep.subr.mxu0 0.0
      %3225 = vmatpush1.msra.mxu0 0.0
      %3226 = vmatprep.subr.mxu0 0.0
      %3227 = vmatpush1.msra.mxu0 0.0
      %3228 = vmatprep.subr.mxu0 0.0
      %3229 = vmatpush1.msra.mxu0 0.0
      %3230 = vmatprep.subr.mxu0 0.0
      %3231 = vmatpush1.msra.mxu0 0.0
      %3232 = vmatprep.subr.mxu0 0.0
      %3233 = vmatpush1.msra.mxu0 0.0
      %3234 = vmatprep.subr.mxu0 0.0
      %3235 = vmatpush1.msra.mxu0 0.0
      %3236 = vmatprep.subr.mxu0 0.0
      %3237 = vmatpush1.msra.mxu0 0.0
      %3238 = vmatprep.subr.mxu0 0.0
      %3239 = vmatpush1.msra.mxu0 0.0
      %3240 = vmatprep.subr.mxu0 0.0
      %3241 = vmatpush1.msra.mxu0 0.0
      %3242 = vmatprep.subr.mxu0 0.0
      %3243 = vmatpush1.msra.mxu0 0.0
      %3244 = vmatprep.subr.mxu0 0.0
      %3245 = vmatpush1.msra.mxu0 0.0
      %3246 = vmatprep.mubr.f32.mxu0 0.0
      %3247 = vmatmul.mubr.f32.gmra.mrb[0].mxu0 %v3174
      %v3248 = vpop.f32.mrb[0].mxu0
      %v3249 = vadd.f32 0.0, %v3248
      %v3250 = vpop.f32.mrb[0].mxu0
      %3251 = vmatprep.mubr.f32.mxu0 0.0
      %3252 = vmatmul.mubr.f32.gmra.mrb[0].mxu0 %v3177
      %v3253 = vpop.f32.mrb[0].mxu0
      %v3254 = vadd.f32 0.0, %v3253
      %v3255 = vpop.f32.mrb[0].mxu0
      %3256 = vmatprep.mubr.f32.mxu0 0.0
      %3257 = vmatmul.mubr.f32.gmra.mrb[0].mxu0 %v3180
      %v3258 = vpop.f32.mrb[0].mxu0
      %v3259 = vadd.f32 0.0, %v3258
      %v3260 = vpop.f32.mrb[0].mxu0
      %3261 = vdwg.mxu0
      %v3262 = vadd.f32 %v2921, %v3249
      %v3263 = vadd.f32 %v2926, %v3254
      %v3264 = vadd.f32 %v2931, %v3259
      %3265 = vrot.lane.b32.xlu0 %v2264, 104
      %v3266 = vpop.permute.xlu0 %3265
      %3267 = vrot.lane.b32.xlu0 %v2269, 104
      %v3268 = vpop.permute.xlu0 %3267
      %3269 = vrot.lane.b32.xlu0 %v2274, 104
      %v3270 = vpop.permute.xlu0 %3269
      %3271 = vrot.lane.b32.xlu0 %v2264, 72
      %v3272 = vpop.permute.xlu0 %3271
      %3273 = vrot.lane.b32.xlu0 %v2269, 72
      %v3274 = vpop.permute.xlu0 %3273
      %3275 = vrot.lane.b32.xlu0 %v2274, 72
      %v3276 = vpop.permute.xlu0 %3275
      %v3277 = vsel %vm2286, %v3266, 0
      %v3279 = vsel %vm2286, %v3268, 0
      %v3281 = vsel %vm2286, %v3270, 0
      %v3283 = vsel %vm2286, %v3272, 0
      %v3285 = vsel %vm2286, %v3274, 0
      %v3287 = vsel %vm2286, %v3276, 0
      %3289 = vmatprep.subr.mxu0 0.0
      %3290 = vmatpush1.xpose.msra.mxu0 %v3283
      %3291 = vmatprep.subr.mxu0 0.0
      %3292 = vmatpush1.xpose.msra.mxu0 %v3285
      %3293 = vmatprep.subr.mxu0 0.0
      %3294 = vmatpush1.xpose.msra.mxu0 %v3287
      %3295 = vmatprep.subr.mxu0 0.0
      %3296 = vmatpush1.xpose.msra.mxu0 0.0
      %3297 = vmatprep.subr.mxu0 0.0
      %3298 = vmatpush1.xpose.msra.mxu0 0.0
      %3299 = vmatprep.subr.mxu0 0.0
      %3300 = vmatpush1.xpose.msra.mxu0 0.0
      %3301 = vmatprep.subr.mxu0 0.0
      %3302 = vmatpush1.xpose.msra.mxu0 0.0
      %3303 = vmatprep.subr.mxu0 0.0
      %3304 = vmatpush1.xpose.msra.mxu0 0.0
      %3305 = vmatprep.subr.mxu0 0.0
      %3306 = vmatpush1.xpose.msra.mxu0 0.0
      %3307 = vmatprep.subr.mxu0 0.0
      %3308 = vmatpush1.xpose.msra.mxu0 0.0
      %3309 = vmatprep.subr.mxu0 0.0
      %3310 = vmatpush1.xpose.msra.mxu0 0.0
      %3311 = vmatprep.subr.mxu0 0.0
      %3312 = vmatpush1.xpose.msra.mxu0 0.0
      %3313 = vmatprep.subr.mxu0 0.0
      %3314 = vmatpush1.xpose.msra.mxu0 0.0
      %3315 = vmatprep.subr.mxu0 0.0
      %3316 = vmatpush1.xpose.msra.mxu0 0.0
      %3317 = vmatprep.subr.mxu0 0.0
      %3318 = vmatpush1.xpose.msra.mxu0 0.0
      %3319 = vmatprep.subr.mxu0 0.0
      %3320 = vmatpush1.xpose.msra.mxu0 0.0
      %3321 = vmatprep.subr.mxu0 0.0
      %3322 = vmatpush1.xpose.msra.mxu0 0.0
      %3323 = vmatprep.subr.mxu0 0.0
      %3324 = vmatpush1.xpose.msra.mxu0 0.0
      %3325 = vmatprep.subr.mxu0 0.0
      %3326 = vmatpush1.xpose.msra.mxu0 0.0
      %3327 = vmatprep.subr.mxu0 0.0
      %3328 = vmatpush1.xpose.msra.mxu0 0.0
      %3329 = vmatprep.subr.mxu0 0.0
      %3330 = vmatpush1.xpose.msra.mxu0 0.0
      %3331 = vmatprep.subr.mxu0 0.0
      %3332 = vmatpush1.xpose.msra.mxu0 0.0
      %3333 = vmatprep.subr.mxu0 0.0
      %3334 = vmatpush1.xpose.msra.mxu0 0.0
      %3335 = vmatprep.subr.mxu0 0.0
      %3336 = vmatpush1.xpose.msra.mxu0 0.0
      %3337 = vmatprep.subr.mxu0 0.0
      %3338 = vmatpush1.xpose.msra.mxu0 0.0
      %3339 = vmatprep.subr.mxu0 0.0
      %3340 = vmatpush1.xpose.msra.mxu0 0.0
      %3341 = vmatprep.subr.mxu0 0.0
      %3342 = vmatpush1.xpose.msra.mxu0 0.0
      %3343 = vmatprep.subr.mxu0 0.0
      %3344 = vmatpush1.xpose.msra.mxu0 0.0
      %3345 = vmatprep.subr.mxu0 0.0
      %3346 = vmatpush1.xpose.msra.mxu0 0.0
      %3347 = vmatprep.subr.mxu0 0.0
      %3348 = vmatpush1.xpose.msra.mxu0 0.0
      %3349 = vmatprep.subr.mxu0 0.0
      %3350 = vmatpush1.xpose.msra.mxu0 0.0
      %3351 = vmatprep.subr.mxu0 0.0
      %3352 = vmatpush1.xpose.msra.mxu0 0.0
      %3353 = vmatprep.mubr.f32.mxu0 0.0
      %3354 = vmatmul.mubr.f32.gmra.mrb[0].mxu0 %v3277
      %v3355 = vpop.f32.mrb[0].mxu0
      %v3356 = vadd.f32 0.0, %v3355
      %v3357 = vpop.f32.mrb[0].mxu0
      %3358 = vmatprep.mubr.f32.mxu0 0.0
      %3359 = vmatmul.mubr.f32.gmra.mrb[0].mxu0 %v3279
      %v3360 = vpop.f32.mrb[0].mxu0
      %v3361 = vadd.f32 0.0, %v3360
      %v3362 = vpop.f32.mrb[0].mxu0
      %3363 = vmatprep.mubr.f32.mxu0 0.0
      %3364 = vmatmul.mubr.f32.gmra.mrb[0].mxu0 %v3281
      %v3365 = vpop.f32.mrb[0].mxu0
      %v3366 = vadd.f32 0.0, %v3365
      %v3367 = vpop.f32.mrb[0].mxu0
      %3368 = vdwg.mxu0
      %v3369 = vmul.f32 %v3356, 0.35355338
      %v3370 = vmul.f32 %v3361, 0.35355338
      %v3371 = vmul.f32 %v3366, 0.35355338
      %v3372 = vsel %vm2382, %v3369, -inf
      %3373 = vmax.xlane.f32.xlu0 %v3372
      %v3374 = vpop.xlane.xlu0 %3373
      %v3375 = vsel %vm2382, %v3370, -inf
      %3376 = vmax.xlane.f32.xlu0 %v3375
      %v3377 = vpop.xlane.xlu0 %3376
      %v3378 = vsel %vm2389, %v3371, -inf
      %3379 = vmax.xlane.f32.xlu0 %v3378
      %v3380 = vpop.xlane.xlu0 %3379
      %v3381 = vsub.f32 %v3369, %v3374
      %v3382 = vsub.f32 %v3370, %v3377
      %v3383 = vsub.f32 %v3371, %v3380
      %v3384 = vmul.f32 %v3381, 1.442695
      %v3385 = vpow.pop %v3384
      %v3386 = vmul.f32 %v3382, 1.442695
      %v3387 = vpow.pop %v3386
      %v3388 = vmul.f32 %v3383, 1.442695
      %v3389 = vpow.pop %v3388
      %v3390 = vsel %vm2382, %v3385, 0.0
      %3391 = vadd.xlane.f32.xlu0 %v3390
      %v3392 = vpop.xlane.xlu0 %3391
      %v3393 = vsel %vm2382, %v3387, 0.0
      %3394 = vadd.xlane.f32.xlu0 %v3393
      %v3395 = vpop.xlane.xlu0 %3394
      %v3396 = vsel %vm2389, %v3389, 0.0
      %3397 = vadd.xlane.f32.xlu0 %v3396
      %v3398 = vpop.xlane.xlu0 %3397
      %v3399 = vrcp.pop %v3392
      %v3400 = vrcp.pop %v3395
      %v3401 = vrcp.pop %v3398
      %v3402 = vmul.f32 %v3385, %v3399
      %v3403 = vmul.f32 %v3387, %v3400
      %v3404 = vmul.f32 %v3389, %v3401
      %3405 = vrot.lane.b32.xlu0 %v2264, 40
      %v3406 = vpop.permute.xlu0 %3405
      %3407 = vrot.lane.b32.xlu0 %v2269, 40
      %v3408 = vpop.permute.xlu0 %3407
      %3409 = vrot.lane.b32.xlu0 %v2274, 40
      %v3410 = vpop.permute.xlu0 %3409
      %v3414 = vsel %vm2382, %v3402, 0
      %v3417 = vsel %vm2382, %v3403, 0
      %v3420 = vsel %vm2382, %v3404, 0
      %v3422 = vsel %vm2434, %v3410, 0
      %3424 = vmatprep.subr.mxu0 0.0
      %3425 = vmatpush1.msra.mxu0 %v3406
      %3426 = vmatprep.subr.mxu0 0.0
      %3427 = vmatpush1.msra.mxu0 %v3408
      %3428 = vmatprep.subr.mxu0 0.0
      %3429 = vmatpush1.msra.mxu0 %v3422
      %3430 = vmatprep.subr.mxu0 0.0
      %3431 = vmatpush1.msra.mxu0 0.0
      %3432 = vmatprep.subr.mxu0 0.0
      %3433 = vmatpush1.msra.mxu0 0.0
      %3434 = vmatprep.subr.mxu0 0.0
      %3435 = vmatpush1.msra.mxu0 0.0
      %3436 = vmatprep.subr.mxu0 0.0
      %3437 = vmatpush1.msra.mxu0 0.0
      %3438 = vmatprep.subr.mxu0 0.0
      %3439 = vmatpush1.msra.mxu0 0.0
      %3440 = vmatprep.subr.mxu0 0.0
      %3441 = vmatpush1.msra.mxu0 0.0
      %3442 = vmatprep.subr.mxu0 0.0
      %3443 = vmatpush1.msra.mxu0 0.0
      %3444 = vmatprep.subr.mxu0 0.0
      %3445 = vmatpush1.msra.mxu0 0.0
      %3446 = vmatprep.subr.mxu0 0.0
      %3447 = vmatpush1.msra.mxu0 0.0
      %3448 = vmatprep.subr.mxu0 0.0
      %3449 = vmatpush1.msra.mxu0 0.0
      %3450 = vmatprep.subr.mxu0 0.0
      %3451 = vmatpush1.msra.mxu0 0.0
      %3452 = vmatprep.subr.mxu0 0.0
      %3453 = vmatpush1.msra.mxu0 0.0
      %3454 = vmatprep.subr.mxu0 0.0
      %3455 = vmatpush1.msra.mxu0 0.0
      %3456 = vmatprep.subr.mxu0 0.0
      %3457 = vmatpush1.msra.mxu0 0.0
      %3458 = vmatprep.subr.mxu0 0.0
      %3459 = vmatpush1.msra.mxu0 0.0
      %3460 = vmatprep.subr.mxu0 0.0
      %3461 = vmatpush1.msra.mxu0 0.0
      %3462 = vmatprep.subr.mxu0 0.0
      %3463 = vmatpush1.msra.mxu0 0.0
      %3464 = vmatprep.subr.mxu0 0.0
      %3465 = vmatpush1.msra.mxu0 0.0
      %3466 = vmatprep.subr.mxu0 0.0
      %3467 = vmatpush1.msra.mxu0 0.0
      %3468 = vmatprep.subr.mxu0 0.0
      %3469 = vmatpush1.msra.mxu0 0.0
      %3470 = vmatprep.subr.mxu0 0.0
      %3471 = vmatpush1.msra.mxu0 0.0
      %3472 = vmatprep.subr.mxu0 0.0
      %3473 = vmatpush1.msra.mxu0 0.0
      %3474 = vmatprep.subr.mxu0 0.0
      %3475 = vmatpush1.msra.mxu0 0.0
      %3476 = vmatprep.subr.mxu0 0.0
      %3477 = vmatpush1.msra.mxu0 0.0
      %3478 = vmatprep.subr.mxu0 0.0
      %3479 = vmatpush1.msra.mxu0 0.0
      %3480 = vmatprep.subr.mxu0 0.0
      %3481 = vmatpush1.msra.mxu0 0.0
      %3482 = vmatprep.subr.mxu0 0.0
      %3483 = vmatpush1.msra.mxu0 0.0
      %3484 = vmatprep.subr.mxu0 0.0
      %3485 = vmatpush1.msra.mxu0 0.0
      %3486 = vmatprep.subr.mxu0 0.0
      %3487 = vmatpush1.msra.mxu0 0.0
      %3488 = vmatprep.mubr.f32.mxu0 0.0
      %3489 = vmatmul.mubr.f32.gmra.mrb[0].mxu0 %v3414
      %v3490 = vpop.f32.mrb[0].mxu0
      %v3491 = vadd.f32 0.0, %v3490
      %v3492 = vpop.f32.mrb[0].mxu0
      %3493 = vmatprep.mubr.f32.mxu0 0.0
      %3494 = vmatmul.mubr.f32.gmra.mrb[0].mxu0 %v3417
      %v3495 = vpop.f32.mrb[0].mxu0
      %v3496 = vadd.f32 0.0, %v3495
      %v3497 = vpop.f32.mrb[0].mxu0
      %3498 = vmatprep.mubr.f32.mxu0 0.0
      %3499 = vmatmul.mubr.f32.gmra.mrb[0].mxu0 %v3420
      %v3500 = vpop.f32.mrb[0].mxu0
      %v3501 = vadd.f32 0.0, %v3500
      %v3502 = vpop.f32.mrb[0].mxu0
      %3503 = vdwg.mxu0
      %v3505 = vsel %vm2286, %v3491, 0
      %v3508 = vsel %vm2286, %v3496, 0
      %v3511 = vsel %vm2286, %v3501, 0
      %3513 = vmatprep.subr.mxu0 0.0
      %3514 = vmatpush1.msra.mxu0 %v2106
      %3515 = vmatprep.subr.mxu0 0.0
      %3516 = vmatpush1.msra.mxu0 0.0
      %3517 = vmatprep.subr.mxu0 0.0
      %3518 = vmatpush1.msra.mxu0 0.0
      %3519 = vmatprep.subr.mxu0 0.0
      %3520 = vmatpush1.msra.mxu0 0.0
      %3521 = vmatprep.subr.mxu0 0.0
      %3522 = vmatpush1.msra.mxu0 0.0
      %3523 = vmatprep.subr.mxu0 0.0
      %3524 = vmatpush1.msra.mxu0 0.0
      %3525 = vmatprep.subr.mxu0 0.0
      %3526 = vmatpush1.msra.mxu0 0.0
      %3527 = vmatprep.subr.mxu0 0.0
      %3528 = vmatpush1.msra.mxu0 0.0
      %3529 = vmatprep.subr.mxu0 0.0
      %3530 = vmatpush1.msra.mxu0 0.0
      %3531 = vmatprep.subr.mxu0 0.0
      %3532 = vmatpush1.msra.mxu0 0.0
      %3533 = vmatprep.subr.mxu0 0.0
      %3534 = vmatpush1.msra.mxu0 0.0
      %3535 = vmatprep.subr.mxu0 0.0
      %3536 = vmatpush1.msra.mxu0 0.0
      %3537 = vmatprep.subr.mxu0 0.0
      %3538 = vmatpush1.msra.mxu0 0.0
      %3539 = vmatprep.subr.mxu0 0.0
      %3540 = vmatpush1.msra.mxu0 0.0
      %3541 = vmatprep.subr.mxu0 0.0
      %3542 = vmatpush1.msra.mxu0 0.0
      %3543 = vmatprep.subr.mxu0 0.0
      %3544 = vmatpush1.msra.mxu0 0.0
      %3545 = vmatprep.subr.mxu0 0.0
      %3546 = vmatpush1.msra.mxu0 0.0
      %3547 = vmatprep.subr.mxu0 0.0
      %3548 = vmatpush1.msra.mxu0 0.0
      %3549 = vmatprep.subr.mxu0 0.0
      %3550 = vmatpush1.msra.mxu0 0.0
      %3551 = vmatprep.subr.mxu0 0.0
      %3552 = vmatpush1.msra.mxu0 0.0
      %3553 = vmatprep.subr.mxu0 0.0
      %3554 = vmatpush1.msra.mxu0 0.0
      %3555 = vmatprep.subr.mxu0 0.0
      %3556 = vmatpush1.msra.mxu0 0.0
      %3557 = vmatprep.subr.mxu0 0.0
      %3558 = vmatpush1.msra.mxu0 0.0
      %3559 = vmatprep.subr.mxu0 0.0
      %3560 = vmatpush1.msra.mxu0 0.0
      %3561 = vmatprep.subr.mxu0 0.0
      %3562 = vmatpush1.msra.mxu0 0.0
      %3563 = vmatprep.subr.mxu0 0.0
      %3564 = vmatpush1.msra.mxu0 0.0
      %3565 = vmatprep.subr.mxu0 0.0
      %3566 = vmatpush1.msra.mxu0 0.0
      %3567 = vmatprep.subr.mxu0 0.0
      %3568 = vmatpush1.msra.mxu0 0.0
      %3569 = vmatprep.subr.mxu0 0.0
      %3570 = vmatpush1.msra.mxu0 0.0
      %3571 = vmatprep.subr.mxu0 0.0
      %3572 = vmatpush1.msra.mxu0 0.0
      %3573 = vmatprep.subr.mxu0 0.0
      %3574 = vmatpush1.msra.mxu0 0.0
      %3575 = vmatprep.subr.mxu0 0.0
      %3576 = vmatpush1.msra.mxu0 0.0
      %3577 = vmatprep.mubr.f32.mxu0 0.0
      %3578 = vmatmul.mubr.f32.gmra.mrb[0].mxu0 %v3505
      %v3579 = vpop.f32.mrb[0].mxu0
      %v3580 = vadd.f32 0.0, %v3579
      %v3581 = vpop.f32.mrb[0].mxu0
      %3582 = vmatprep.mubr.f32.mxu0 0.0
      %3583 = vmatmul.mubr.f32.gmra.mrb[0].mxu0 %v3508
      %v3584 = vpop.f32.mrb[0].mxu0
      %v3585 = vadd.f32 0.0, %v3584
      %v3586 = vpop.f32.mrb[0].mxu0
      %3587 = vmatprep.mubr.f32.mxu0 0.0
      %3588 = vmatmul.mubr.f32.gmra.mrb[0].mxu0 %v3511
      %v3589 = vpop.f32.mrb[0].mxu0
      %v3590 = vadd.f32 0.0, %v3589
      %v3591 = vpop.f32.mrb[0].mxu0
      %3592 = vdwg.mxu0
      %v3593 = vadd.f32 %v3262, %v3580
      %v3594 = vadd.f32 %v3263, %v3585
      %v3595 = vadd.f32 %v3264, %v3590
      %v3596 = vadd.f32 %v2093, %v3593
      %v3597 = vadd.f32 %v2094, %v3594
      %v3598 = vadd.f32 %v2095, %v3595
      %v3600 = vlaneseq
      %v3601 = vshrl.u32 %v3600, 7
      %v3602 = vsub.s32 0, %v3601
      %v3603 = vrot.slane %v2107, %v3602
      %v3605 = vadd.f32 %v3596, %v3603
      %v3606 = vadd.f32 %v3597, %v3603
      %v3607 = vadd.f32 %v3598, %v3603
      %v3608 = vsel %vm1592, %v3605, 0.0
      %3609 = vadd.xlane.f32.xlu0 %v3608
      %v3610 = vpop.xlane.xlu0 %3609
      %v3611 = vsel %vm1592, %v3606, 0.0
      %3612 = vadd.xlane.f32.xlu0 %v3611
      %v3613 = vpop.xlane.xlu0 %3612
      %v3614 = vsel %vm2091, %v3607, 0.0
      %3615 = vadd.xlane.f32.xlu0 %v3614
      %v3616 = vpop.xlane.xlu0 %3615
      %v3617 = vmul.f32 %v3610, %v2133
      %v3618 = vmul.f32 %v3613, %v2133
      %v3619 = vmul.f32 %v3616, %v2133
      %v3620 = vsub.f32 %v3605, %v3617
      %v3621 = vsub.f32 %v3606, %v3618
      %v3622 = vsub.f32 %v3607, %v3619
      %v3623 = vmul.f32 %v3620, %v3620
      %v3624 = vmul.f32 %v3621, %v3621
      %v3625 = vmul.f32 %v3622, %v3622
      %v3626 = vsel %vm1592, %v3623, 0.0
      %3627 = vadd.xlane.f32.xlu0 %v3626
      %v3628 = vpop.xlane.xlu0 %3627
      %v3629 = vsel %vm1592, %v3624, 0.0
      %3630 = vadd.xlane.f32.xlu0 %v3629
      %v3631 = vpop.xlane.xlu0 %3630
      %v3632 = vsel %vm2091, %v3625, 0.0
      %3633 = vadd.xlane.f32.xlu0 %v3632
      %v3634 = vpop.xlane.xlu0 %3633
      %v3635 = vmul.f32 %v3628, %v2133
      %v3636 = vmul.f32 %v3631, %v2133
      %v3637 = vmul.f32 %v3634, %v2133
      %v3638 = vadd.f32 %v3635, 1e-06
      %v3639 = vadd.f32 %v3636, 1e-06
      %v3640 = vadd.f32 %v3637, 1e-06
      %v3641 = vrsqrt.pop %v3638
      %v3642 = vrsqrt.pop %v3639
      %v3643 = vrsqrt.pop %v3640
      %v3644 = vmul.f32 %v3620, %v3641
      %v3645 = vmul.f32 %v3621, %v3642
      %v3646 = vmul.f32 %v3622, %v3643
      %v3648 = vlaneseq
      %v3649 = vshrl.u32 %v3648, 7
      %v3650 = vsub.s32 0, %v3649
      %v3651 = vrot.slane %v2108, %v3650
      %v3653 = vmul.f32 %v3644, %v3651
      %v3654 = vmul.f32 %v3645, %v3651
      %v3655 = vmul.f32 %v3646, %v3651
      %v3657 = vlaneseq
      %v3658 = vshrl.u32 %v3657, 7
      %v3659 = vsub.s32 0, %v3658
      %v3660 = vrot.slane %v2109, %v3659
      %v3662 = vadd.f32 %v3653, %v3660
      %v3663 = vadd.f32 %v3654, %v3660
      %v3664 = vadd.f32 %v3655, %v3660
      %v3666 = vlaneseq
      %v3667 = vshrl.u32 %v3666, 7
      %v3668 = vsub.s32 0, %v3667
      %v3669 = vrot.slane %v2114, %v3668
      %v3672 = vsel %vm1592, %v3662, 0
      %v3675 = vsel %vm1592, %v3663, 0
      %v3678 = vsel %vm1592, %v3664, 0
      %3680 = vmatprep.subr.mxu0 0.0
      %3681 = vmatpush1.msra.mxu0 %v2110
      %3682 = vmatprep.subr.mxu0 0.0
      %3683 = vmatpush1.msra.mxu0 %v2111
      %3684 = vmatprep.subr.mxu0 0.0
      %3685 = vmatpush1.msra.mxu0 %v2112
      %3686 = vmatprep.subr.mxu0 0.0
      %3687 = vmatpush1.msra.mxu0 %v2113
      %3688 = vmatprep.subr.mxu0 0.0
      %3689 = vmatpush1.msra.mxu0 0.0
      %3690 = vmatprep.subr.mxu0 0.0
      %3691 = vmatpush1.msra.mxu0 0.0
      %3692 = vmatprep.subr.mxu0 0.0
      %3693 = vmatpush1.msra.mxu0 0.0
      %3694 = vmatprep.subr.mxu0 0.0
      %3695 = vmatpush1.msra.mxu0 0.0
      %3696 = vmatprep.subr.mxu0 0.0
      %3697 = vmatpush1.msra.mxu0 0.0
      %3698 = vmatprep.subr.mxu0 0.0
      %3699 = vmatpush1.msra.mxu0 0.0
      %3700 = vmatprep.subr.mxu0 0.0
      %3701 = vmatpush1.msra.mxu0 0.0
      %3702 = vmatprep.subr.mxu0 0.0
      %3703 = vmatpush1.msra.mxu0 0.0
      %3704 = vmatprep.subr.mxu0 0.0
      %3705 = vmatpush1.msra.mxu0 0.0
      %3706 = vmatprep.subr.mxu0 0.0
      %3707 = vmatpush1.msra.mxu0 0.0
      %3708 = vmatprep.subr.mxu0 0.0
      %3709 = vmatpush1.msra.mxu0 0.0
      %3710 = vmatprep.subr.mxu0 0.0
      %3711 = vmatpush1.msra.mxu0 0.0
      %3712 = vmatprep.subr.mxu0 0.0
      %3713 = vmatpush1.msra.mxu0 0.0
      %3714 = vmatprep.subr.mxu0 0.0
      %3715 = vmatpush1.msra.mxu0 0.0
      %3716 = vmatprep.subr.mxu0 0.0
      %3717 = vmatpush1.msra.mxu0 0.0
      %3718 = vmatprep.subr.mxu0 0.0
      %3719 = vmatpush1.msra.mxu0 0.0
      %3720 = vmatprep.subr.mxu0 0.0
      %3721 = vmatpush1.msra.mxu0 0.0
      %3722 = vmatprep.subr.mxu0 0.0
      %3723 = vmatpush1.msra.mxu0 0.0
      %3724 = vmatprep.subr.mxu0 0.0
      %3725 = vmatpush1.msra.mxu0 0.0
      %3726 = vmatprep.subr.mxu0 0.0
      %3727 = vmatpush1.msra.mxu0 0.0
      %3728 = vmatprep.subr.mxu0 0.0
      %3729 = vmatpush1.msra.mxu0 0.0
      %3730 = vmatprep.subr.mxu0 0.0
      %3731 = vmatpush1.msra.mxu0 0.0
      %3732 = vmatprep.subr.mxu0 0.0
      %3733 = vmatpush1.msra.mxu0 0.0
      %3734 = vmatprep.subr.mxu0 0.0
      %3735 = vmatpush1.msra.mxu0 0.0
      %3736 = vmatprep.subr.mxu0 0.0
      %3737 = vmatpush1.msra.mxu0 0.0
      %3738 = vmatprep.subr.mxu0 0.0
      %3739 = vmatpush1.msra.mxu0 0.0
      %3740 = vmatprep.subr.mxu0 0.0
      %3741 = vmatpush1.msra.mxu0 0.0
      %3742 = vmatprep.subr.mxu0 0.0
      %3743 = vmatpush1.msra.mxu0 0.0
      %3744 = vmatprep.mubr.f32.mxu0 0.0
      %3745 = vmatmul.mubr.f32.gmra.mrb[0].mxu0 %v3672
      %v3746 = vpop.f32.mrb[0].mxu0
      %v3747 = vadd.f32 %v3669, %v3746
      %v3748 = vpop.f32.mrb[0].mxu0
      %3749 = vmatprep.mubr.f32.mxu0 0.0
      %3750 = vmatmul.mubr.f32.gmra.mrb[0].mxu0 %v3675
      %v3751 = vpop.f32.mrb[0].mxu0
      %v3752 = vadd.f32 %v3669, %v3751
      %v3753 = vpop.f32.mrb[0].mxu0
      %3754 = vmatprep.mubr.f32.mxu0 0.0
      %3755 = vmatmul.mubr.f32.gmra.mrb[0].mxu0 %v3678
      %v3756 = vpop.f32.mrb[0].mxu0
      %v3757 = vadd.f32 %v3669, %v3756
      %v3758 = vpop.f32.mrb[0].mxu0
      %3759 = vdwg.mxu0
      %v3760 = vmul.f32 %v3747, %v3747
      %v3761 = vmul.f32 %v3752, %v3752
      %v3762 = vmul.f32 %v3757, %v3757
      %v3763 = vmul.f32 %v3747, %v3760
      %v3764 = vmul.f32 %v3752, %v3761
      %v3765 = vmul.f32 %v3757, %v3762
      %v3766 = vmul.f32 %v3763, 0.044715
      %v3767 = vmul.f32 %v3764, 0.044715
      %v3768 = vmul.f32 %v3765, 0.044715
      %v3769 = vadd.f32 %v3747, %v3766
      %v3770 = vadd.f32 %v3752, %v3767
      %v3771 = vadd.f32 %v3757, %v3768
      %v3772 = vmul.f32 %v3769, 0.7978846
      %v3773 = vmul.f32 %v3770, 0.7978846
      %v3774 = vmul.f32 %v3771, 0.7978846
      %v3775 = vtanh.pop %v3772
      %v3776 = vtanh.pop %v3773
      %v3777 = vtanh.pop %v3774
      %v3778 = vadd.f32 %v3775, 1.0
      %v3779 = vadd.f32 %v3776, 1.0
      %v3780 = vadd.f32 %v3777, 1.0
      %v3781 = vmul.f32 %v3778, 0.5
      %v3782 = vmul.f32 %v3779, 0.5
      %v3783 = vmul.f32 %v3780, 0.5
      %v3784 = vmul.f32 %v3747, %v3781
      %v3785 = vmul.f32 %v3752, %v3782
      %v3786 = vmul.f32 %v3757, %v3783
      %vm3787 = vcmask 523264
      %v3789 = vsel %vm3787, %v3784, 0
      %v3792 = vsel %vm3787, %v3785, 0
      %v3795 = vsel %vm3787, %v3786, 0
      %3797 = vmatprep.subr.mxu0 0.0
      %3798 = vmatpush1.msra.mxu0 %v2115
      %3799 = vmatprep.subr.mxu0 0.0
      %3800 = vmatpush1.msra.mxu0 %v2116
      %3801 = vmatprep.subr.mxu0 0.0
      %3802 = vmatpush1.msra.mxu0 %v2117
      %3803 = vmatprep.subr.mxu0 0.0
      %3804 = vmatpush1.msra.mxu0 %v2118
      %3805 = vmatprep.subr.mxu0 0.0
      %3806 = vmatpush1.msra.mxu0 %v2119
      %3807 = vmatprep.subr.mxu0 0.0
      %3808 = vmatpush1.msra.mxu0 %v2120
      %3809 = vmatprep.subr.mxu0 0.0
      %3810 = vmatpush1.msra.mxu0 %v2121
      %3811 = vmatprep.subr.mxu0 0.0
      %3812 = vmatpush1.msra.mxu0 %v2122
      %3813 = vmatprep.subr.mxu0 0.0
      %3814 = vmatpush1.msra.mxu0 0.0
      %3815 = vmatprep.subr.mxu0 0.0
      %3816 = vmatpush1.msra.mxu0 0.0
      %3817 = vmatprep.subr.mxu0 0.0
      %3818 = vmatpush1.msra.mxu0 0.0
      %3819 = vmatprep.subr.mxu0 0.0
      %3820 = vmatpush1.msra.mxu0 0.0
      %3821 = vmatprep.subr.mxu0 0.0
      %3822 = vmatpush1.msra.mxu0 0.0
      %3823 = vmatprep.subr.mxu0 0.0
      %3824 = vmatpush1.msra.mxu0 0.0
      %3825 = vmatprep.subr.mxu0 0.0
      %3826 = vmatpush1.msra.mxu0 0.0
      %3827 = vmatprep.subr.mxu0 0.0
      %3828 = vmatpush1.msra.mxu0 0.0
      %3829 = vmatprep.subr.mxu0 0.0
      %3830 = vmatpush1.msra.mxu0 0.0
      %3831 = vmatprep.subr.mxu0 0.0
      %3832 = vmatpush1.msra.mxu0 0.0
      %3833 = vmatprep.subr.mxu0 0.0
      %3834 = vmatpush1.msra.mxu0 0.0
      %3835 = vmatprep.subr.mxu0 0.0
      %3836 = vmatpush1.msra.mxu0 0.0
      %3837 = vmatprep.subr.mxu0 0.0
      %3838 = vmatpush1.msra.mxu0 0.0
      %3839 = vmatprep.subr.mxu0 0.0
      %3840 = vmatpush1.msra.mxu0 0.0
      %3841 = vmatprep.subr.mxu0 0.0
      %3842 = vmatpush1.msra.mxu0 0.0
      %3843 = vmatprep.subr.mxu0 0.0
      %3844 = vmatpush1.msra.mxu0 0.0
      %3845 = vmatprep.subr.mxu0 0.0
      %3846 = vmatpush1.msra.mxu0 0.0
      %3847 = vmatprep.subr.mxu0 0.0
      %3848 = vmatpush1.msra.mxu0 0.0
      %3849 = vmatprep.subr.mxu0 0.0
      %3850 = vmatpush1.msra.mxu0 0.0
      %3851 = vmatprep.subr.mxu0 0.0
      %3852 = vmatpush1.msra.mxu0 0.0
      %3853 = vmatprep.subr.mxu0 0.0
      %3854 = vmatpush1.msra.mxu0 0.0
      %3855 = vmatprep.subr.mxu0 0.0
      %3856 = vmatpush1.msra.mxu0 0.0
      %3857 = vmatprep.subr.mxu0 0.0
      %3858 = vmatpush1.msra.mxu0 0.0
      %3859 = vmatprep.subr.mxu0 0.0
      %3860 = vmatpush1.msra.mxu0 0.0
      %3861 = vmatprep.mubr.f32.mxu0 0.0
      %3862 = vmatmul.mubr.f32.gmra.mrb[0].mxu0 %v3789
      %v3863 = vpop.f32.mrb[0].mxu0
      %v3864 = vadd.f32 0.0, %v3863
      %v3865 = vpop.f32.mrb[0].mxu0
      %3866 = vmatprep.mubr.f32.mxu0 0.0
      %3867 = vmatmul.mubr.f32.gmra.mrb[0].mxu0 %v3792
      %v3868 = vpop.f32.mrb[0].mxu0
      %v3869 = vadd.f32 0.0, %v3868
      %v3870 = vpop.f32.mrb[0].mxu0
      %3871 = vmatprep.mubr.f32.mxu0 0.0
      %3872 = vmatmul.mubr.f32.gmra.mrb[0].mxu0 %v3795
      %v3873 = vpop.f32.mrb[0].mxu0
      %v3874 = vadd.f32 0.0, %v3873
      %v3875 = vpop.f32.mrb[0].mxu0
      %3876 = vdwg.mxu0
      %v3877 = vadd.f32 %v3605, %v3864
      %v3878 = vadd.f32 %v3606, %v3869
      %v3879 = vadd.f32 %v3607, %v3874
      %v3881 = vlaneseq
      %v3882 = vshrl.u32 %v3881, 7
      %v3883 = vsub.s32 0, %v3882
      %v3884 = vrot.slane %v2123, %v3883
      %v3886 = vadd.f32 %v3877, %v3884
      %v3887 = vadd.f32 %v3878, %v3884
      %v3888 = vadd.f32 %v3879, %v3884
      %v3889 = vld [vmem:[%s51] sm:$0x1]
      %v3890 = vld [vmem:[%s53] sm:$0x1]
      %v3891 = vld [vmem:[%s55] sm:$0xff]
      %v3892 = vld [vmem:[%s55 + $0x8] sm:$0xff]
      %v3893 = vld [vmem:[%s55 + $0x10] sm:$0xff]
      %v3894 = vld [vmem:[%s55 + $0x18] sm:$0xff]
      %v3895 = vld [vmem:[%s57] sm:$0x1]
      %v3896 = vld [vmem:[%s59] sm:$0xff]
      %v3897 = vld [vmem:[%s59 + $0x8] sm:$0xff]
      %v3898 = vld [vmem:[%s59 + $0x10] sm:$0xff]
      %v3899 = vld [vmem:[%s59 + $0x18] sm:$0xff]
      %v3900 = vld [vmem:[%s61] sm:$0x1]
      %v3901 = vld [vmem:[%s63] sm:$0x1]
      %v3902 = vld [vmem:[%s65] sm:$0x1]
      %v3903 = vld [vmem:[%s67] sm:$0xff]
      %v3904 = vld [vmem:[%s67 + $0x8] sm:$0xff]
      %v3905 = vld [vmem:[%s67 + $0x10] sm:$0xff]
      %v3906 = vld [vmem:[%s67 + $0x18] sm:$0xff]
      %v3907 = vld [vmem:[%s69] sm:$0x1]
      %v3908 = vld [vmem:[%s71] sm:$0xff]
      %v3909 = vld [vmem:[%s71 + $0x8] sm:$0xff]
      %v3910 = vld [vmem:[%s71 + $0x10] sm:$0xff]
      %v3911 = vld [vmem:[%s71 + $0x18] sm:$0xff]
      %v3912 = vld [vmem:[%s71 + $0x20] sm:$0xff]
      %v3913 = vld [vmem:[%s71 + $0x28] sm:$0xff]
      %v3914 = vld [vmem:[%s71 + $0x30] sm:$0xff]
      %v3915 = vld [vmem:[%s71 + $0x38] sm:$0xff]
      %v3916 = vld [vmem:[%s73] sm:$0x1]
      %v3917 = vsel %vm1592, %v3886, 0.0
      %3918 = vadd.xlane.f32.xlu0 %v3917
      %v3919 = vpop.xlane.xlu0 %3918
      %v3920 = vsel %vm1592, %v3887, 0.0
      %3921 = vadd.xlane.f32.xlu0 %v3920
      %v3922 = vpop.xlane.xlu0 %3921
      %v3923 = vsel %vm2091, %v3888, 0.0
      %3924 = vadd.xlane.f32.xlu0 %v3923
      %v3925 = vpop.xlane.xlu0 %3924
      %v3926 = vmul.f32 %v3919, %v2133
      %v3927 = vmul.f32 %v3922, %v2133
      %v3928 = vmul.f32 %v3925, %v2133
      %v3929 = vsub.f32 %v3886, %v3926
      %v3930 = vsub.f32 %v3887, %v3927
      %v3931 = vsub.f32 %v3888, %v3928
      %v3932 = vmul.f32 %v3929, %v3929
      %v3933 = vmul.f32 %v3930, %v3930
      %v3934 = vmul.f32 %v3931, %v3931
      %v3935 = vsel %vm1592, %v3932, 0.0
      %3936 = vadd.xlane.f32.xlu0 %v3935
      %v3937 = vpop.xlane.xlu0 %3936
      %v3938 = vsel %vm1592, %v3933, 0.0
      %3939 = vadd.xlane.f32.xlu0 %v3938
      %v3940 = vpop.xlane.xlu0 %3939
      %v3941 = vsel %vm2091, %v3934, 0.0
      %3942 = vadd.xlane.f32.xlu0 %v3941
      %v3943 = vpop.xlane.xlu0 %3942
      %v3944 = vmul.f32 %v3937, %v2133
      %v3945 = vmul.f32 %v3940, %v2133
      %v3946 = vmul.f32 %v3943, %v2133
      %v3947 = vadd.f32 %v3944, 1e-06
      %v3948 = vadd.f32 %v3945, 1e-06
      %v3949 = vadd.f32 %v3946, 1e-06
      %v3950 = vrsqrt.pop %v3947
      %v3951 = vrsqrt.pop %v3948
      %v3952 = vrsqrt.pop %v3949
      %v3953 = vmul.f32 %v3929, %v3950
      %v3954 = vmul.f32 %v3930, %v3951
      %v3955 = vmul.f32 %v3931, %v3952
      %v3957 = vlaneseq
      %v3958 = vshrl.u32 %v3957, 7
      %v3959 = vsub.s32 0, %v3958
      %v3960 = vrot.slane %v3889, %v3959
      %v3962 = vmul.f32 %v3953, %v3960
      %v3963 = vmul.f32 %v3954, %v3960
      %v3964 = vmul.f32 %v3955, %v3960
      %v3966 = vlaneseq
      %v3967 = vshrl.u32 %v3966, 7
      %v3968 = vsub.s32 0, %v3967
      %v3969 = vrot.slane %v3890, %v3968
      %v3971 = vadd.f32 %v3962, %v3969
      %v3972 = vadd.f32 %v3963, %v3969
      %v3973 = vadd.f32 %v3964, %v3969
      %v3975 = vlaneseq
      %v3976 = vshrl.u32 %v3975, 7
      %v3977 = vsub.s32 0, %v3976
      %v3978 = vrot.slane %v3895, %v3977
      %v3981 = vsel %vm1592, %v3971, 0
      %v3984 = vsel %vm1592, %v3972, 0
      %v3987 = vsel %vm1592, %v3973, 0
      %3989 = vmatprep.subr.mxu0 0.0
      %3990 = vmatpush1.msra.mxu0 %v3891
      %3991 = vmatprep.subr.mxu0 0.0
      %3992 = vmatpush1.msra.mxu0 %v3892
      %3993 = vmatprep.subr.mxu0 0.0
      %3994 = vmatpush1.msra.mxu0 %v3893
      %3995 = vmatprep.subr.mxu0 0.0
      %3996 = vmatpush1.msra.mxu0 %v3894
      %3997 = vmatprep.subr.mxu0 0.0
      %3998 = vmatpush1.msra.mxu0 0.0
      %3999 = vmatprep.subr.mxu0 0.0
      %4000 = vmatpush1.msra.mxu0 0.0
      %4001 = vmatprep.subr.mxu0 0.0
      %4002 = vmatpush1.msra.mxu0 0.0
      %4003 = vmatprep.subr.mxu0 0.0
      %4004 = vmatpush1.msra.mxu0 0.0
      %4005 = vmatprep.subr.mxu0 0.0
      %4006 = vmatpush1.msra.mxu0 0.0
      %4007 = vmatprep.subr.mxu0 0.0
      %4008 = vmatpush1.msra.mxu0 0.0
      %4009 = vmatprep.subr.mxu0 0.0
      %4010 = vmatpush1.msra.mxu0 0.0
      %4011 = vmatprep.subr.mxu0 0.0
      %4012 = vmatpush1.msra.mxu0 0.0
      %4013 = vmatprep.subr.mxu0 0.0
      %4014 = vmatpush1.msra.mxu0 0.0
      %4015 = vmatprep.subr.mxu0 0.0
      %4016 = vmatpush1.msra.mxu0 0.0
      %4017 = vmatprep.subr.mxu0 0.0
      %4018 = vmatpush1.msra.mxu0 0.0
      %4019 = vmatprep.subr.mxu0 0.0
      %4020 = vmatpush1.msra.mxu0 0.0
      %4021 = vmatprep.subr.mxu0 0.0
      %4022 = vmatpush1.msra.mxu0 0.0
      %4023 = vmatprep.subr.mxu0 0.0
      %4024 = vmatpush1.msra.mxu0 0.0
      %4025 = vmatprep.subr.mxu0 0.0
      %4026 = vmatpush1.msra.mxu0 0.0
      %4027 = vmatprep.subr.mxu0 0.0
      %4028 = vmatpush1.msra.mxu0 0.0
      %4029 = vmatprep.subr.mxu0 0.0
      %4030 = vmatpush1.msra.mxu0 0.0
      %4031 = vmatprep.subr.mxu0 0.0
      %4032 = vmatpush1.msra.mxu0 0.0
      %4033 = vmatprep.subr.mxu0 0.0
      %4034 = vmatpush1.msra.mxu0 0.0
      %4035 = vmatprep.subr.mxu0 0.0
      %4036 = vmatpush1.msra.mxu0 0.0
      %4037 = vmatprep.subr.mxu0 0.0
      %4038 = vmatpush1.msra.mxu0 0.0
      %4039 = vmatprep.subr.mxu0 0.0
      %4040 = vmatpush1.msra.mxu0 0.0
      %4041 = vmatprep.subr.mxu0 0.0
      %4042 = vmatpush1.msra.mxu0 0.0
      %4043 = vmatprep.subr.mxu0 0.0
      %4044 = vmatpush1.msra.mxu0 0.0
      %4045 = vmatprep.subr.mxu0 0.0
      %4046 = vmatpush1.msra.mxu0 0.0
      %4047 = vmatprep.subr.mxu0 0.0
      %4048 = vmatpush1.msra.mxu0 0.0
      %4049 = vmatprep.subr.mxu0 0.0
      %4050 = vmatpush1.msra.mxu0 0.0
      %4051 = vmatprep.subr.mxu0 0.0
      %4052 = vmatpush1.msra.mxu0 0.0
      %4053 = vmatprep.mubr.f32.mxu0 0.0
      %4054 = vmatmul.mubr.f32.gmra.mrb[0].mxu0 %v3981
      %v4055 = vpop.f32.mrb[0].mxu0
      %v4056 = vadd.f32 %v3978, %v4055
      %v4057 = vpop.f32.mrb[0].mxu0
      %4058 = vmatprep.mubr.f32.mxu0 0.0
      %4059 = vmatmul.mubr.f32.gmra.mrb[0].mxu0 %v3984
      %v4060 = vpop.f32.mrb[0].mxu0
      %v4061 = vadd.f32 %v3978, %v4060
      %v4062 = vpop.f32.mrb[0].mxu0
      %4063 = vmatprep.mubr.f32.mxu0 0.0
      %4064 = vmatmul.mubr.f32.gmra.mrb[0].mxu0 %v3987
      %v4065 = vpop.f32.mrb[0].mxu0
      %v4066 = vadd.f32 %v3978, %v4065
      %v4067 = vpop.f32.mrb[0].mxu0
      %4068 = vdwg.mxu0
      %4072 = vrot.lane.b32.xlu0 %v4056, 96
      %v4073 = vpop.permute.xlu0 %4072
      %4074 = vrot.lane.b32.xlu0 %v4061, 96
      %v4075 = vpop.permute.xlu0 %4074
      %4076 = vrot.lane.b32.xlu0 %v4066, 96
      %v4077 = vpop.permute.xlu0 %4076
      %v4078 = vsel %vm2286, %v4056, 0
      %v4080 = vsel %vm2286, %v4061, 0
      %v4082 = vsel %vm2286, %v4066, 0
      %v4084 = vsel %vm2286, %v4073, 0
      %v4086 = vsel %vm2286, %v4075, 0
      %v4088 = vsel %vm2286, %v4077, 0
      %4090 = vmatprep.subr.mxu0 0.0
      %4091 = vmatpush1.xpose.msra.mxu0 %v4084
      %4092 = vmatprep.subr.mxu0 0.0
      %4093 = vmatpush1.xpose.msra.mxu0 %v4086
      %4094 = vmatprep.subr.mxu0 0.0
      %4095 = vmatpush1.xpose.msra.mxu0 %v4088
      %4096 = vmatprep.subr.mxu0 0.0
      %4097 = vmatpush1.xpose.msra.mxu0 0.0
      %4098 = vmatprep.subr.mxu0 0.0
      %4099 = vmatpush1.xpose.msra.mxu0 0.0
      %4100 = vmatprep.subr.mxu0 0.0
      %4101 = vmatpush1.xpose.msra.mxu0 0.0
      %4102 = vmatprep.subr.mxu0 0.0
      %4103 = vmatpush1.xpose.msra.mxu0 0.0
      %4104 = vmatprep.subr.mxu0 0.0
      %4105 = vmatpush1.xpose.msra.mxu0 0.0
      %4106 = vmatprep.subr.mxu0 0.0
      %4107 = vmatpush1.xpose.msra.mxu0 0.0
      %4108 = vmatprep.subr.mxu0 0.0
      %4109 = vmatpush1.xpose.msra.mxu0 0.0
      %4110 = vmatprep.subr.mxu0 0.0
      %4111 = vmatpush1.xpose.msra.mxu0 0.0
      %4112 = vmatprep.subr.mxu0 0.0
      %4113 = vmatpush1.xpose.msra.mxu0 0.0
      %4114 = vmatprep.subr.mxu0 0.0
      %4115 = vmatpush1.xpose.msra.mxu0 0.0
      %4116 = vmatprep.subr.mxu0 0.0
      %4117 = vmatpush1.xpose.msra.mxu0 0.0
      %4118 = vmatprep.subr.mxu0 0.0
      %4119 = vmatpush1.xpose.msra.mxu0 0.0
      %4120 = vmatprep.subr.mxu0 0.0
      %4121 = vmatpush1.xpose.msra.mxu0 0.0
      %4122 = vmatprep.subr.mxu0 0.0
      %4123 = vmatpush1.xpose.msra.mxu0 0.0
      %4124 = vmatprep.subr.mxu0 0.0
      %4125 = vmatpush1.xpose.msra.mxu0 0.0
      %4126 = vmatprep.subr.mxu0 0.0
      %4127 = vmatpush1.xpose.msra.mxu0 0.0
      %4128 = vmatprep.subr.mxu0 0.0
      %4129 = vmatpush1.xpose.msra.mxu0 0.0
      %4130 = vmatprep.subr.mxu0 0.0
      %4131 = vmatpush1.xpose.msra.mxu0 0.0
      %4132 = vmatprep.subr.mxu0 0.0
      %4133 = vmatpush1.xpose.msra.mxu0 0.0
      %4134 = vmatprep.subr.mxu0 0.0
      %4135 = vmatpush1.xpose.msra.mxu0 0.0
      %4136 = vmatprep.subr.mxu0 0.0
      %4137 = vmatpush1.xpose.msra.mxu0 0.0
      %4138 = vmatprep.subr.mxu0 0.0
      %4139 = vmatpush1.xpose.msra.mxu0 0.0
      %4140 = vmatprep.subr.mxu0 0.0
      %4141 = vmatpush1.xpose.msra.mxu0 0.0
      %4142 = vmatprep.subr.mxu0 0.0
      %4143 = vmatpush1.xpose.msra.mxu0 0.0
      %4144 = vmatprep.subr.mxu0 0.0
      %4145 = vmatpush1.xpose.msra.mxu0 0.0
      %4146 = vmatprep.subr.mxu0 0.0
      %4147 = vmatpush1.xpose.msra.mxu0 0.0
      %4148 = vmatprep.subr.mxu0 0.0
      %4149 = vmatpush1.xpose.msra.mxu0 0.0
      %4150 = vmatprep.subr.mxu0 0.0
      %4151 = vmatpush1.xpose.msra.mxu0 0.0
      %4152 = vmatprep.subr.mxu0 0.0
      %4153 = vmatpush1.xpose.msra.mxu0 0.0
      %4154 = vmatprep.mubr.f32.mxu0 0.0
      %4155 = vmatmul.mubr.f32.gmra.mrb[0].mxu0 %v4078
      %v4156 = vpop.f32.mrb[0].mxu0
      %v4157 = vadd.f32 0.0, %v4156
      %v4158 = vpop.f32.mrb[0].mxu0
      %4159 = vmatprep.mubr.f32.mxu0 0.0
      %4160 = vmatmul.mubr.f32.gmra.mrb[0].mxu0 %v4080
      %v4161 = vpop.f32.mrb[0].mxu0
      %v4162 = vadd.f32 0.0, %v4161
      %v4163 = vpop.f32.mrb[0].mxu0
      %4164 = vmatprep.mubr.f32.mxu0 0.0
      %4165 = vmatmul.mubr.f32.gmra.mrb[0].mxu0 %v4082
      %v4166 = vpop.f32.mrb[0].mxu0
      %v4167 = vadd.f32 0.0, %v4166
      %v4168 = vpop.f32.mrb[0].mxu0
      %4169 = vdwg.mxu0
      %v4170 = vmul.f32 %v4157, 0.35355338
      %v4171 = vmul.f32 %v4162, 0.35355338
      %v4172 = vmul.f32 %v4167, 0.35355338
      %v4173 = vsel %vm2382, %v4170, -inf
      %4174 = vmax.xlane.f32.xlu0 %v4173
      %v4175 = vpop.xlane.xlu0 %4174
      %v4176 = vsel %vm2382, %v4171, -inf
      %4177 = vmax.xlane.f32.xlu0 %v4176
      %v4178 = vpop.xlane.xlu0 %4177
      %v4179 = vsel %vm2389, %v4172, -inf
      %4180 = vmax.xlane.f32.xlu0 %v4179
      %v4181 = vpop.xlane.xlu0 %4180
      %v4182 = vsub.f32 %v4170, %v4175
      %v4183 = vsub.f32 %v4171, %v4178
      %v4184 = vsub.f32 %v4172, %v4181
      %v4185 = vmul.f32 %v4182, 1.442695
      %v4186 = vpow.pop %v4185
      %v4187 = vmul.f32 %v4183, 1.442695
      %v4188 = vpow.pop %v4187
      %v4189 = vmul.f32 %v4184, 1.442695
      %v4190 = vpow.pop %v4189
      %v4191 = vsel %vm2382, %v4186, 0.0
      %4192 = vadd.xlane.f32.xlu0 %v4191
      %v4193 = vpop.xlane.xlu0 %4192
      %v4194 = vsel %vm2382, %v4188, 0.0
      %4195 = vadd.xlane.f32.xlu0 %v4194
      %v4196 = vpop.xlane.xlu0 %4195
      %v4197 = vsel %vm2389, %v4190, 0.0
      %4198 = vadd.xlane.f32.xlu0 %v4197
      %v4199 = vpop.xlane.xlu0 %4198
      %v4200 = vrcp.pop %v4193
      %v4201 = vrcp.pop %v4196
      %v4202 = vrcp.pop %v4199
      %v4203 = vmul.f32 %v4186, %v4200
      %v4204 = vmul.f32 %v4188, %v4201
      %v4205 = vmul.f32 %v4190, %v4202
      %4206 = vrot.lane.b32.xlu0 %v4056, 64
      %v4207 = vpop.permute.xlu0 %4206
      %4208 = vrot.lane.b32.xlu0 %v4061, 64
      %v4209 = vpop.permute.xlu0 %4208
      %4210 = vrot.lane.b32.xlu0 %v4066, 64
      %v4211 = vpop.permute.xlu0 %4210
      %v4215 = vsel %vm2382, %v4203, 0
      %v4218 = vsel %vm2382, %v4204, 0
      %v4221 = vsel %vm2382, %v4205, 0
      %v4223 = vsel %vm2434, %v4211, 0
      %4225 = vmatprep.subr.mxu0 0.0
      %4226 = vmatpush1.msra.mxu0 %v4207
      %4227 = vmatprep.subr.mxu0 0.0
      %4228 = vmatpush1.msra.mxu0 %v4209
      %4229 = vmatprep.subr.mxu0 0.0
      %4230 = vmatpush1.msra.mxu0 %v4223
      %4231 = vmatprep.subr.mxu0 0.0
      %4232 = vmatpush1.msra.mxu0 0.0
      %4233 = vmatprep.subr.mxu0 0.0
      %4234 = vmatpush1.msra.mxu0 0.0
      %4235 = vmatprep.subr.mxu0 0.0
      %4236 = vmatpush1.msra.mxu0 0.0
      %4237 = vmatprep.subr.mxu0 0.0
      %4238 = vmatpush1.msra.mxu0 0.0
      %4239 = vmatprep.subr.mxu0 0.0
      %4240 = vmatpush1.msra.mxu0 0.0
      %4241 = vmatprep.subr.mxu0 0.0
      %4242 = vmatpush1.msra.mxu0 0.0
      %4243 = vmatprep.subr.mxu0 0.0
      %4244 = vmatpush1.msra.mxu0 0.0
      %4245 = vmatprep.subr.mxu0 0.0
      %4246 = vmatpush1.msra.mxu0 0.0
      %4247 = vmatprep.subr.mxu0 0.0
      %4248 = vmatpush1.msra.mxu0 0.0
      %4249 = vmatprep.subr.mxu0 0.0
      %4250 = vmatpush1.msra.mxu0 0.0
      %4251 = vmatprep.subr.mxu0 0.0
      %4252 = vmatpush1.msra.mxu0 0.0
      %4253 = vmatprep.subr.mxu0 0.0
      %4254 = vmatpush1.msra.mxu0 0.0
      %4255 = vmatprep.subr.mxu0 0.0
      %4256 = vmatpush1.msra.mxu0 0.0
      %4257 = vmatprep.subr.mxu0 0.0
      %4258 = vmatpush1.msra.mxu0 0.0
      %4259 = vmatprep.subr.mxu0 0.0
      %4260 = vmatpush1.msra.mxu0 0.0
      %4261 = vmatprep.subr.mxu0 0.0
      %4262 = vmatpush1.msra.mxu0 0.0
      %4263 = vmatprep.subr.mxu0 0.0
      %4264 = vmatpush1.msra.mxu0 0.0
      %4265 = vmatprep.subr.mxu0 0.0
      %4266 = vmatpush1.msra.mxu0 0.0
      %4267 = vmatprep.subr.mxu0 0.0
      %4268 = vmatpush1.msra.mxu0 0.0
      %4269 = vmatprep.subr.mxu0 0.0
      %4270 = vmatpush1.msra.mxu0 0.0
      %4271 = vmatprep.subr.mxu0 0.0
      %4272 = vmatpush1.msra.mxu0 0.0
      %4273 = vmatprep.subr.mxu0 0.0
      %4274 = vmatpush1.msra.mxu0 0.0
      %4275 = vmatprep.subr.mxu0 0.0
      %4276 = vmatpush1.msra.mxu0 0.0
      %4277 = vmatprep.subr.mxu0 0.0
      %4278 = vmatpush1.msra.mxu0 0.0
      %4279 = vmatprep.subr.mxu0 0.0
      %4280 = vmatpush1.msra.mxu0 0.0
      %4281 = vmatprep.subr.mxu0 0.0
      %4282 = vmatpush1.msra.mxu0 0.0
      %4283 = vmatprep.subr.mxu0 0.0
      %4284 = vmatpush1.msra.mxu0 0.0
      %4285 = vmatprep.subr.mxu0 0.0
      %4286 = vmatpush1.msra.mxu0 0.0
      %4287 = vmatprep.subr.mxu0 0.0
      %4288 = vmatpush1.msra.mxu0 0.0
      %4289 = vmatprep.mubr.f32.mxu0 0.0
      %4290 = vmatmul.mubr.f32.gmra.mrb[0].mxu0 %v4215
      %v4291 = vpop.f32.mrb[0].mxu0
      %v4292 = vadd.f32 0.0, %v4291
      %v4293 = vpop.f32.mrb[0].mxu0
      %4294 = vmatprep.mubr.f32.mxu0 0.0
      %4295 = vmatmul.mubr.f32.gmra.mrb[0].mxu0 %v4218
      %v4296 = vpop.f32.mrb[0].mxu0
      %v4297 = vadd.f32 0.0, %v4296
      %v4298 = vpop.f32.mrb[0].mxu0
      %4299 = vmatprep.mubr.f32.mxu0 0.0
      %4300 = vmatmul.mubr.f32.gmra.mrb[0].mxu0 %v4221
      %v4301 = vpop.f32.mrb[0].mxu0
      %v4302 = vadd.f32 0.0, %v4301
      %v4303 = vpop.f32.mrb[0].mxu0
      %4304 = vdwg.mxu0
      %4305 = vrot.lane.b32.xlu0 %v4056, 120
      %v4306 = vpop.permute.xlu0 %4305
      %4307 = vrot.lane.b32.xlu0 %v4061, 120
      %v4308 = vpop.permute.xlu0 %4307
      %4309 = vrot.lane.b32.xlu0 %v4066, 120
      %v4310 = vpop.permute.xlu0 %4309
      %4311 = vrot.lane.b32.xlu0 %v4056, 88
      %v4312 = vpop.permute.xlu0 %4311
      %4313 = vrot.lane.b32.xlu0 %v4061, 88
      %v4314 = vpop.permute.xlu0 %4313
      %4315 = vrot.lane.b32.xlu0 %v4066, 88
      %v4316 = vpop.permute.xlu0 %4315
      %v4317 = vsel %vm2286, %v4306, 0
      %v4319 = vsel %vm2286, %v4308, 0
      %v4321 = vsel %vm2286, %v4310, 0
      %v4323 = vsel %vm2286, %v4312, 0
      %v4325 = vsel %vm2286, %v4314, 0
      %v4327 = vsel %vm2286, %v4316, 0
      %4329 = vmatprep.subr.mxu0 0.0
      %4330 = vmatpush1.xpose.msra.mxu0 %v4323
      %4331 = vmatprep.subr.mxu0 0.0
      %4332 = vmatpush1.xpose.msra.mxu0 %v4325
      %4333 = vmatprep.subr.mxu0 0.0
      %4334 = vmatpush1.xpose.msra.mxu0 %v4327
      %4335 = vmatprep.subr.mxu0 0.0
      %4336 = vmatpush1.xpose.msra.mxu0 0.0
      %4337 = vmatprep.subr.mxu0 0.0
      %4338 = vmatpush1.xpose.msra.mxu0 0.0
      %4339 = vmatprep.subr.mxu0 0.0
      %4340 = vmatpush1.xpose.msra.mxu0 0.0
      %4341 = vmatprep.subr.mxu0 0.0
      %4342 = vmatpush1.xpose.msra.mxu0 0.0
      %4343 = vmatprep.subr.mxu0 0.0
      %4344 = vmatpush1.xpose.msra.mxu0 0.0
      %4345 = vmatprep.subr.mxu0 0.0
      %4346 = vmatpush1.xpose.msra.mxu0 0.0
      %4347 = vmatprep.subr.mxu0 0.0
      %4348 = vmatpush1.xpose.msra.mxu0 0.0
      %4349 = vmatprep.subr.mxu0 0.0
      %4350 = vmatpush1.xpose.msra.mxu0 0.0
      %4351 = vmatprep.subr.mxu0 0.0
      %4352 = vmatpush1.xpose.msra.mxu0 0.0
      %4353 = vmatprep.subr.mxu0 0.0
      %4354 = vmatpush1.xpose.msra.mxu0 0.0
      %4355 = vmatprep.subr.mxu0 0.0
      %4356 = vmatpush1.xpose.msra.mxu0 0.0
      %4357 = vmatprep.subr.mxu0 0.0
      %4358 = vmatpush1.xpose.msra.mxu0 0.0
      %4359 = vmatprep.subr.mxu0 0.0
      %4360 = vmatpush1.xpose.msra.mxu0 0.0
      %4361 = vmatprep.subr.mxu0 0.0
      %4362 = vmatpush1.xpose.msra.mxu0 0.0
      %4363 = vmatprep.subr.mxu0 0.0
      %4364 = vmatpush1.xpose.msra.mxu0 0.0
      %4365 = vmatprep.subr.mxu0 0.0
      %4366 = vmatpush1.xpose.msra.mxu0 0.0
      %4367 = vmatprep.subr.mxu0 0.0
      %4368 = vmatpush1.xpose.msra.mxu0 0.0
      %4369 = vmatprep.subr.mxu0 0.0
      %4370 = vmatpush1.xpose.msra.mxu0 0.0
      %4371 = vmatprep.subr.mxu0 0.0
      %4372 = vmatpush1.xpose.msra.mxu0 0.0
      %4373 = vmatprep.subr.mxu0 0.0
      %4374 = vmatpush1.xpose.msra.mxu0 0.0
      %4375 = vmatprep.subr.mxu0 0.0
      %4376 = vmatpush1.xpose.msra.mxu0 0.0
      %4377 = vmatprep.subr.mxu0 0.0
      %4378 = vmatpush1.xpose.msra.mxu0 0.0
      %4379 = vmatprep.subr.mxu0 0.0
      %4380 = vmatpush1.xpose.msra.mxu0 0.0
      %4381 = vmatprep.subr.mxu0 0.0
      %4382 = vmatpush1.xpose.msra.mxu0 0.0
      %4383 = vmatprep.subr.mxu0 0.0
      %4384 = vmatpush1.xpose.msra.mxu0 0.0
      %4385 = vmatprep.subr.mxu0 0.0
      %4386 = vmatpush1.xpose.msra.mxu0 0.0
      %4387 = vmatprep.subr.mxu0 0.0
      %4388 = vmatpush1.xpose.msra.mxu0 0.0
      %4389 = vmatprep.subr.mxu0 0.0
      %4390 = vmatpush1.xpose.msra.mxu0 0.0
      %4391 = vmatprep.subr.mxu0 0.0
      %4392 = vmatpush1.xpose.msra.mxu0 0.0
      %4393 = vmatprep.mubr.f32.mxu0 0.0
      %4394 = vmatmul.mubr.f32.gmra.mrb[0].mxu0 %v4317
      %v4395 = vpop.f32.mrb[0].mxu0
      %v4396 = vadd.f32 0.0, %v4395
      %v4397 = vpop.f32.mrb[0].mxu0
      %4398 = vmatprep.mubr.f32.mxu0 0.0
      %4399 = vmatmul.mubr.f32.gmra.mrb[0].mxu0 %v4319
      %v4400 = vpop.f32.mrb[0].mxu0
      %v4401 = vadd.f32 0.0, %v4400
      %v4402 = vpop.f32.mrb[0].mxu0
      %4403 = vmatprep.mubr.f32.mxu0 0.0
      %4404 = vmatmul.mubr.f32.gmra.mrb[0].mxu0 %v4321
      %v4405 = vpop.f32.mrb[0].mxu0
      %v4406 = vadd.f32 0.0, %v4405
      %v4407 = vpop.f32.mrb[0].mxu0
      %4408 = vdwg.mxu0
      %v4409 = vmul.f32 %v4396, 0.35355338
      %v4410 = vmul.f32 %v4401, 0.35355338
      %v4411 = vmul.f32 %v4406, 0.35355338
      %v4412 = vsel %vm2382, %v4409, -inf
      %4413 = vmax.xlane.f32.xlu0 %v4412
      %v4414 = vpop.xlane.xlu0 %4413
      %v4415 = vsel %vm2382, %v4410, -inf
      %4416 = vmax.xlane.f32.xlu0 %v4415
      %v4417 = vpop.xlane.xlu0 %4416
      %v4418 = vsel %vm2389, %v4411, -inf
      %4419 = vmax.xlane.f32.xlu0 %v4418
      %v4420 = vpop.xlane.xlu0 %4419
      %v4421 = vsub.f32 %v4409, %v4414
      %v4422 = vsub.f32 %v4410, %v4417
      %v4423 = vsub.f32 %v4411, %v4420
      %v4424 = vmul.f32 %v4421, 1.442695
      %v4425 = vpow.pop %v4424
      %v4426 = vmul.f32 %v4422, 1.442695
      %v4427 = vpow.pop %v4426
      %v4428 = vmul.f32 %v4423, 1.442695
      %v4429 = vpow.pop %v4428
      %v4430 = vsel %vm2382, %v4425, 0.0
      %4431 = vadd.xlane.f32.xlu0 %v4430
      %v4432 = vpop.xlane.xlu0 %4431
      %v4433 = vsel %vm2382, %v4427, 0.0
      %4434 = vadd.xlane.f32.xlu0 %v4433
      %v4435 = vpop.xlane.xlu0 %4434
      %v4436 = vsel %vm2389, %v4429, 0.0
      %4437 = vadd.xlane.f32.xlu0 %v4436
      %v4438 = vpop.xlane.xlu0 %4437
      %v4439 = vrcp.pop %v4432
      %v4440 = vrcp.pop %v4435
      %v4441 = vrcp.pop %v4438
      %v4442 = vmul.f32 %v4425, %v4439
      %v4443 = vmul.f32 %v4427, %v4440
      %v4444 = vmul.f32 %v4429, %v4441
      %4445 = vrot.lane.b32.xlu0 %v4056, 56
      %v4446 = vpop.permute.xlu0 %4445
      %4447 = vrot.lane.b32.xlu0 %v4061, 56
      %v4448 = vpop.permute.xlu0 %4447
      %4449 = vrot.lane.b32.xlu0 %v4066, 56
      %v4450 = vpop.permute.xlu0 %4449
      %v4454 = vsel %vm2382, %v4442, 0
      %v4457 = vsel %vm2382, %v4443, 0
      %v4460 = vsel %vm2382, %v4444, 0
      %v4462 = vsel %vm2434, %v4450, 0
      %4464 = vmatprep.subr.mxu0 0.0
      %4465 = vmatpush1.msra.mxu0 %v4446
      %4466 = vmatprep.subr.mxu0 0.0
      %4467 = vmatpush1.msra.mxu0 %v4448
      %4468 = vmatprep.subr.mxu0 0.0
      %4469 = vmatpush1.msra.mxu0 %v4462
      %4470 = vmatprep.subr.mxu0 0.0
      %4471 = vmatpush1.msra.mxu0 0.0
      %4472 = vmatprep.subr.mxu0 0.0
      %4473 = vmatpush1.msra.mxu0 0.0
      %4474 = vmatprep.subr.mxu0 0.0
      %4475 = vmatpush1.msra.mxu0 0.0
      %4476 = vmatprep.subr.mxu0 0.0
      %4477 = vmatpush1.msra.mxu0 0.0
      %4478 = vmatprep.subr.mxu0 0.0
      %4479 = vmatpush1.msra.mxu0 0.0
      %4480 = vmatprep.subr.mxu0 0.0
      %4481 = vmatpush1.msra.mxu0 0.0
      %4482 = vmatprep.subr.mxu0 0.0
      %4483 = vmatpush1.msra.mxu0 0.0
      %4484 = vmatprep.subr.mxu0 0.0
      %4485 = vmatpush1.msra.mxu0 0.0
      %4486 = vmatprep.subr.mxu0 0.0
      %4487 = vmatpush1.msra.mxu0 0.0
      %4488 = vmatprep.subr.mxu0 0.0
      %4489 = vmatpush1.msra.mxu0 0.0
      %4490 = vmatprep.subr.mxu0 0.0
      %4491 = vmatpush1.msra.mxu0 0.0
      %4492 = vmatprep.subr.mxu0 0.0
      %4493 = vmatpush1.msra.mxu0 0.0
      %4494 = vmatprep.subr.mxu0 0.0
      %4495 = vmatpush1.msra.mxu0 0.0
      %4496 = vmatprep.subr.mxu0 0.0
      %4497 = vmatpush1.msra.mxu0 0.0
      %4498 = vmatprep.subr.mxu0 0.0
      %4499 = vmatpush1.msra.mxu0 0.0
      %4500 = vmatprep.subr.mxu0 0.0
      %4501 = vmatpush1.msra.mxu0 0.0
      %4502 = vmatprep.subr.mxu0 0.0
      %4503 = vmatpush1.msra.mxu0 0.0
      %4504 = vmatprep.subr.mxu0 0.0
      %4505 = vmatpush1.msra.mxu0 0.0
      %4506 = vmatprep.subr.mxu0 0.0
      %4507 = vmatpush1.msra.mxu0 0.0
      %4508 = vmatprep.subr.mxu0 0.0
      %4509 = vmatpush1.msra.mxu0 0.0
      %4510 = vmatprep.subr.mxu0 0.0
      %4511 = vmatpush1.msra.mxu0 0.0
      %4512 = vmatprep.subr.mxu0 0.0
      %4513 = vmatpush1.msra.mxu0 0.0
      %4514 = vmatprep.subr.mxu0 0.0
      %4515 = vmatpush1.msra.mxu0 0.0
      %4516 = vmatprep.subr.mxu0 0.0
      %4517 = vmatpush1.msra.mxu0 0.0
      %4518 = vmatprep.subr.mxu0 0.0
      %4519 = vmatpush1.msra.mxu0 0.0
      %4520 = vmatprep.subr.mxu0 0.0
      %4521 = vmatpush1.msra.mxu0 0.0
      %4522 = vmatprep.subr.mxu0 0.0
      %4523 = vmatpush1.msra.mxu0 0.0
      %4524 = vmatprep.subr.mxu0 0.0
      %4525 = vmatpush1.msra.mxu0 0.0
      %4526 = vmatprep.subr.mxu0 0.0
      %4527 = vmatpush1.msra.mxu0 0.0
      %4528 = vmatprep.mubr.f32.mxu0 0.0
      %4529 = vmatmul.mubr.f32.gmra.mrb[0].mxu0 %v4454
      %v4530 = vpop.f32.mrb[0].mxu0
      %v4531 = vadd.f32 0.0, %v4530
      %v4532 = vpop.f32.mrb[0].mxu0
      %4533 = vmatprep.mubr.f32.mxu0 0.0
      %4534 = vmatmul.mubr.f32.gmra.mrb[0].mxu0 %v4457
      %v4535 = vpop.f32.mrb[0].mxu0
      %v4536 = vadd.f32 0.0, %v4535
      %v4537 = vpop.f32.mrb[0].mxu0
      %4538 = vmatprep.mubr.f32.mxu0 0.0
      %4539 = vmatmul.mubr.f32.gmra.mrb[0].mxu0 %v4460
      %v4540 = vpop.f32.mrb[0].mxu0
      %v4541 = vadd.f32 0.0, %v4540
      %v4542 = vpop.f32.mrb[0].mxu0
      %4543 = vdwg.mxu0
      %v4545 = vsel %vm2286, %v4531, 0
      %v4548 = vsel %vm2286, %v4536, 0
      %v4551 = vsel %vm2286, %v4541, 0
      %4553 = vmatprep.subr.mxu0 0.0
      %4554 = vmatpush1.msra.mxu0 %v3897
      %4555 = vmatprep.subr.mxu0 0.0
      %4556 = vmatpush1.msra.mxu0 0.0
      %4557 = vmatprep.subr.mxu0 0.0
      %4558 = vmatpush1.msra.mxu0 0.0
      %4559 = vmatprep.subr.mxu0 0.0
      %4560 = vmatpush1.msra.mxu0 0.0
      %4561 = vmatprep.subr.mxu0 0.0
      %4562 = vmatpush1.msra.mxu0 0.0
      %4563 = vmatprep.subr.mxu0 0.0
      %4564 = vmatpush1.msra.mxu0 0.0
      %4565 = vmatprep.subr.mxu0 0.0
      %4566 = vmatpush1.msra.mxu0 0.0
      %4567 = vmatprep.subr.mxu0 0.0
      %4568 = vmatpush1.msra.mxu0 0.0
      %4569 = vmatprep.subr.mxu0 0.0
      %4570 = vmatpush1.msra.mxu0 0.0
      %4571 = vmatprep.subr.mxu0 0.0
      %4572 = vmatpush1.msra.mxu0 0.0
      %4573 = vmatprep.subr.mxu0 0.0
      %4574 = vmatpush1.msra.mxu0 0.0
      %4575 = vmatprep.subr.mxu0 0.0
      %4576 = vmatpush1.msra.mxu0 0.0
      %4577 = vmatprep.subr.mxu0 0.0
      %4578 = vmatpush1.msra.mxu0 0.0
      %4579 = vmatprep.subr.mxu0 0.0
      %4580 = vmatpush1.msra.mxu0 0.0
      %4581 = vmatprep.subr.mxu0 0.0
      %4582 = vmatpush1.msra.mxu0 0.0
      %4583 = vmatprep.subr.mxu0 0.0
      %4584 = vmatpush1.msra.mxu0 0.0
      %4585 = vmatprep.subr.mxu0 0.0
      %4586 = vmatpush1.msra.mxu0 0.0
      %4587 = vmatprep.subr.mxu0 0.0
      %4588 = vmatpush1.msra.mxu0 0.0
      %4589 = vmatprep.subr.mxu0 0.0
      %4590 = vmatpush1.msra.mxu0 0.0
      %4591 = vmatprep.subr.mxu0 0.0
      %4592 = vmatpush1.msra.mxu0 0.0
      %4593 = vmatprep.subr.mxu0 0.0
      %4594 = vmatpush1.msra.mxu0 0.0
      %4595 = vmatprep.subr.mxu0 0.0
      %4596 = vmatpush1.msra.mxu0 0.0
      %4597 = vmatprep.subr.mxu0 0.0
      %4598 = vmatpush1.msra.mxu0 0.0
      %4599 = vmatprep.subr.mxu0 0.0
      %4600 = vmatpush1.msra.mxu0 0.0
      %4601 = vmatprep.subr.mxu0 0.0
      %4602 = vmatpush1.msra.mxu0 0.0
      %4603 = vmatprep.subr.mxu0 0.0
      %4604 = vmatpush1.msra.mxu0 0.0
      %4605 = vmatprep.subr.mxu0 0.0
      %4606 = vmatpush1.msra.mxu0 0.0
      %4607 = vmatprep.subr.mxu0 0.0
      %4608 = vmatpush1.msra.mxu0 0.0
      %4609 = vmatprep.subr.mxu0 0.0
      %4610 = vmatpush1.msra.mxu0 0.0
      %4611 = vmatprep.subr.mxu0 0.0
      %4612 = vmatpush1.msra.mxu0 0.0
      %4613 = vmatprep.subr.mxu0 0.0
      %4614 = vmatpush1.msra.mxu0 0.0
      %4615 = vmatprep.subr.mxu0 0.0
      %4616 = vmatpush1.msra.mxu0 0.0
      %4617 = vmatprep.mubr.f32.mxu0 0.0
      %4618 = vmatmul.mubr.f32.gmra.mrb[0].mxu0 %v4545
      %v4619 = vpop.f32.mrb[0].mxu0
      %v4620 = vadd.f32 0.0, %v4619
      %v4621 = vpop.f32.mrb[0].mxu0
      %4622 = vmatprep.mubr.f32.mxu0 0.0
      %4623 = vmatmul.mubr.f32.gmra.mrb[0].mxu0 %v4548
      %v4624 = vpop.f32.mrb[0].mxu0
      %v4625 = vadd.f32 0.0, %v4624
      %v4626 = vpop.f32.mrb[0].mxu0
      %4627 = vmatprep.mubr.f32.mxu0 0.0
      %4628 = vmatmul.mubr.f32.gmra.mrb[0].mxu0 %v4551
      %v4629 = vpop.f32.mrb[0].mxu0
      %v4630 = vadd.f32 0.0, %v4629
      %v4631 = vpop.f32.mrb[0].mxu0
      %4632 = vdwg.mxu0
      %v4634 = vsel %vm2286, %v4292, 0
      %v4637 = vsel %vm2286, %v4297, 0
      %v4640 = vsel %vm2286, %v4302, 0
      %4642 = vmatprep.subr.mxu0 0.0
      %4643 = vmatpush1.msra.mxu0 %v3896
      %4644 = vmatprep.subr.mxu0 0.0
      %4645 = vmatpush1.msra.mxu0 0.0
      %4646 = vmatprep.subr.mxu0 0.0
      %4647 = vmatpush1.msra.mxu0 0.0
      %4648 = vmatprep.subr.mxu0 0.0
      %4649 = vmatpush1.msra.mxu0 0.0
      %4650 = vmatprep.subr.mxu0 0.0
      %4651 = vmatpush1.msra.mxu0 0.0
      %4652 = vmatprep.subr.mxu0 0.0
      %4653 = vmatpush1.msra.mxu0 0.0
      %4654 = vmatprep.subr.mxu0 0.0
      %4655 = vmatpush1.msra.mxu0 0.0
      %4656 = vmatprep.subr.mxu0 0.0
      %4657 = vmatpush1.msra.mxu0 0.0
      %4658 = vmatprep.subr.mxu0 0.0
      %4659 = vmatpush1.msra.mxu0 0.0
      %4660 = vmatprep.subr.mxu0 0.0
      %4661 = vmatpush1.msra.mxu0 0.0
      %4662 = vmatprep.subr.mxu0 0.0
      %4663 = vmatpush1.msra.mxu0 0.0
      %4664 = vmatprep.subr.mxu0 0.0
      %4665 = vmatpush1.msra.mxu0 0.0
      %4666 = vmatprep.subr.mxu0 0.0
      %4667 = vmatpush1.msra.mxu0 0.0
      %4668 = vmatprep.subr.mxu0 0.0
      %4669 = vmatpush1.msra.mxu0 0.0
      %4670 = vmatprep.subr.mxu0 0.0
      %4671 = vmatpush1.msra.mxu0 0.0
      %4672 = vmatprep.subr.mxu0 0.0
      %4673 = vmatpush1.msra.mxu0 0.0
      %4674 = vmatprep.subr.mxu0 0.0
      %4675 = vmatpush1.msra.mxu0 0.0
      %4676 = vmatprep.subr.mxu0 0.0
      %4677 = vmatpush1.msra.mxu0 0.0
      %4678 = vmatprep.subr.mxu0 0.0
      %4679 = vmatpush1.msra.mxu0 0.0
      %4680 = vmatprep.subr.mxu0 0.0
      %4681 = vmatpush1.msra.mxu0 0.0
      %4682 = vmatprep.subr.mxu0 0.0
      %4683 = vmatpush1.msra.mxu0 0.0
      %4684 = vmatprep.subr.mxu0 0.0
      %4685 = vmatpush1.msra.mxu0 0.0
      %4686 = vmatprep.subr.mxu0 0.0
      %4687 = vmatpush1.msra.mxu0 0.0
      %4688 = vmatprep.subr.mxu0 0.0
      %4689 = vmatpush1.msra.mxu0 0.0
      %4690 = vmatprep.subr.mxu0 0.0
      %4691 = vmatpush1.msra.mxu0 0.0
      %4692 = vmatprep.subr.mxu0 0.0
      %4693 = vmatpush1.msra.mxu0 0.0
      %4694 = vmatprep.subr.mxu0 0.0
      %4695 = vmatpush1.msra.mxu0 0.0
      %4696 = vmatprep.subr.mxu0 0.0
      %4697 = vmatpush1.msra.mxu0 0.0
      %4698 = vmatprep.subr.mxu0 0.0
      %4699 = vmatpush1.msra.mxu0 0.0
      %4700 = vmatprep.subr.mxu0 0.0
      %4701 = vmatpush1.msra.mxu0 0.0
      %4702 = vmatprep.subr.mxu0 0.0
      %4703 = vmatpush1.msra.mxu0 0.0
      %4704 = vmatprep.subr.mxu0 0.0
      %4705 = vmatpush1.msra.mxu0 0.0
      %4706 = vmatprep.mubr.f32.mxu0 0.0
      %4707 = vmatmul.mubr.f32.gmra.mrb[0].mxu0 %v4634
      %v4708 = vpop.f32.mrb[0].mxu0
      %v4709 = vadd.f32 %v4620, %v4708
      %v4710 = vpop.f32.mrb[0].mxu0
      %4711 = vmatprep.mubr.f32.mxu0 0.0
      %4712 = vmatmul.mubr.f32.gmra.mrb[0].mxu0 %v4637
      %v4713 = vpop.f32.mrb[0].mxu0
      %v4714 = vadd.f32 %v4625, %v4713
      %v4715 = vpop.f32.mrb[0].mxu0
      %4716 = vmatprep.mubr.f32.mxu0 0.0
      %4717 = vmatmul.mubr.f32.gmra.mrb[0].mxu0 %v4640
      %v4718 = vpop.f32.mrb[0].mxu0
      %v4719 = vadd.f32 %v4630, %v4718
      %v4720 = vpop.f32.mrb[0].mxu0
      %4721 = vdwg.mxu0
      %4722 = vrot.lane.b32.xlu0 %v4056, 112
      %v4723 = vpop.permute.xlu0 %4722
      %4724 = vrot.lane.b32.xlu0 %v4061, 112
      %v4725 = vpop.permute.xlu0 %4724
      %4726 = vrot.lane.b32.xlu0 %v4066, 112
      %v4727 = vpop.permute.xlu0 %4726
      %4728 = vrot.lane.b32.xlu0 %v4056, 80
      %v4729 = vpop.permute.xlu0 %4728
      %4730 = vrot.lane.b32.xlu0 %v4061, 80
      %v4731 = vpop.permute.xlu0 %4730
      %4732 = vrot.lane.b32.xlu0 %v4066, 80
      %v4733 = vpop.permute.xlu0 %4732
      %v4734 = vsel %vm2286, %v4723, 0
      %v4736 = vsel %vm2286, %v4725, 0
      %v4738 = vsel %vm2286, %v4727, 0
      %v4740 = vsel %vm2286, %v4729, 0
      %v4742 = vsel %vm2286, %v4731, 0
      %v4744 = vsel %vm2286, %v4733, 0
      %4746 = vmatprep.subr.mxu0 0.0
      %4747 = vmatpush1.xpose.msra.mxu0 %v4740
      %4748 = vmatprep.subr.mxu0 0.0
      %4749 = vmatpush1.xpose.msra.mxu0 %v4742
      %4750 = vmatprep.subr.mxu0 0.0
      %4751 = vmatpush1.xpose.msra.mxu0 %v4744
      %4752 = vmatprep.subr.mxu0 0.0
      %4753 = vmatpush1.xpose.msra.mxu0 0.0
      %4754 = vmatprep.subr.mxu0 0.0
      %4755 = vmatpush1.xpose.msra.mxu0 0.0
      %4756 = vmatprep.subr.mxu0 0.0
      %4757 = vmatpush1.xpose.msra.mxu0 0.0
      %4758 = vmatprep.subr.mxu0 0.0
      %4759 = vmatpush1.xpose.msra.mxu0 0.0
      %4760 = vmatprep.subr.mxu0 0.0
      %4761 = vmatpush1.xpose.msra.mxu0 0.0
      %4762 = vmatprep.subr.mxu0 0.0
      %4763 = vmatpush1.xpose.msra.mxu0 0.0
      %4764 = vmatprep.subr.mxu0 0.0
      %4765 = vmatpush1.xpose.msra.mxu0 0.0
      %4766 = vmatprep.subr.mxu0 0.0
      %4767 = vmatpush1.xpose.msra.mxu0 0.0
      %4768 = vmatprep.subr.mxu0 0.0
      %4769 = vmatpush1.xpose.msra.mxu0 0.0
      %4770 = vmatprep.subr.mxu0 0.0
      %4771 = vmatpush1.xpose.msra.mxu0 0.0
      %4772 = vmatprep.subr.mxu0 0.0
      %4773 = vmatpush1.xpose.msra.mxu0 0.0
      %4774 = vmatprep.subr.mxu0 0.0
      %4775 = vmatpush1.xpose.msra.mxu0 0.0
      %4776 = vmatprep.subr.mxu0 0.0
      %4777 = vmatpush1.xpose.msra.mxu0 0.0
      %4778 = vmatprep.subr.mxu0 0.0
      %4779 = vmatpush1.xpose.msra.mxu0 0.0
      %4780 = vmatprep.subr.mxu0 0.0
      %4781 = vmatpush1.xpose.msra.mxu0 0.0
      %4782 = vmatprep.subr.mxu0 0.0
      %4783 = vmatpush1.xpose.msra.mxu0 0.0
      %4784 = vmatprep.subr.mxu0 0.0
      %4785 = vmatpush1.xpose.msra.mxu0 0.0
      %4786 = vmatprep.subr.mxu0 0.0
      %4787 = vmatpush1.xpose.msra.mxu0 0.0
      %4788 = vmatprep.subr.mxu0 0.0
      %4789 = vmatpush1.xpose.msra.mxu0 0.0
      %4790 = vmatprep.subr.mxu0 0.0
      %4791 = vmatpush1.xpose.msra.mxu0 0.0
      %4792 = vmatprep.subr.mxu0 0.0
      %4793 = vmatpush1.xpose.msra.mxu0 0.0
      %4794 = vmatprep.subr.mxu0 0.0
      %4795 = vmatpush1.xpose.msra.mxu0 0.0
      %4796 = vmatprep.subr.mxu0 0.0
      %4797 = vmatpush1.xpose.msra.mxu0 0.0
      %4798 = vmatprep.subr.mxu0 0.0
      %4799 = vmatpush1.xpose.msra.mxu0 0.0
      %4800 = vmatprep.subr.mxu0 0.0
      %4801 = vmatpush1.xpose.msra.mxu0 0.0
      %4802 = vmatprep.subr.mxu0 0.0
      %4803 = vmatpush1.xpose.msra.mxu0 0.0
      %4804 = vmatprep.subr.mxu0 0.0
      %4805 = vmatpush1.xpose.msra.mxu0 0.0
      %4806 = vmatprep.subr.mxu0 0.0
      %4807 = vmatpush1.xpose.msra.mxu0 0.0
      %4808 = vmatprep.subr.mxu0 0.0
      %4809 = vmatpush1.xpose.msra.mxu0 0.0
      %4810 = vmatprep.mubr.f32.mxu0 0.0
      %4811 = vmatmul.mubr.f32.gmra.mrb[0].mxu0 %v4734
      %v4812 = vpop.f32.mrb[0].mxu0
      %v4813 = vadd.f32 0.0, %v4812
      %v4814 = vpop.f32.mrb[0].mxu0
      %4815 = vmatprep.mubr.f32.mxu0 0.0
      %4816 = vmatmul.mubr.f32.gmra.mrb[0].mxu0 %v4736
      %v4817 = vpop.f32.mrb[0].mxu0
      %v4818 = vadd.f32 0.0, %v4817
      %v4819 = vpop.f32.mrb[0].mxu0
      %4820 = vmatprep.mubr.f32.mxu0 0.0
      %4821 = vmatmul.mubr.f32.gmra.mrb[0].mxu0 %v4738
      %v4822 = vpop.f32.mrb[0].mxu0
      %v4823 = vadd.f32 0.0, %v4822
      %v4824 = vpop.f32.mrb[0].mxu0
      %4825 = vdwg.mxu0
      %v4826 = vmul.f32 %v4813, 0.35355338
      %v4827 = vmul.f32 %v4818, 0.35355338
      %v4828 = vmul.f32 %v4823, 0.35355338
      %v4829 = vsel %vm2382, %v4826, -inf
      %4830 = vmax.xlane.f32.xlu0 %v4829
      %v4831 = vpop.xlane.xlu0 %4830
      %v4832 = vsel %vm2382, %v4827, -inf
      %4833 = vmax.xlane.f32.xlu0 %v4832
      %v4834 = vpop.xlane.xlu0 %4833
      %v4835 = vsel %vm2389, %v4828, -inf
      %4836 = vmax.xlane.f32.xlu0 %v4835
      %v4837 = vpop.xlane.xlu0 %4836
      %v4838 = vsub.f32 %v4826, %v4831
      %v4839 = vsub.f32 %v4827, %v4834
      %v4840 = vsub.f32 %v4828, %v4837
      %v4841 = vmul.f32 %v4838, 1.442695
      %v4842 = vpow.pop %v4841
      %v4843 = vmul.f32 %v4839, 1.442695
      %v4844 = vpow.pop %v4843
      %v4845 = vmul.f32 %v4840, 1.442695
      %v4846 = vpow.pop %v4845
      %v4847 = vsel %vm2382, %v4842, 0.0
      %4848 = vadd.xlane.f32.xlu0 %v4847
      %v4849 = vpop.xlane.xlu0 %4848
      %v4850 = vsel %vm2382, %v4844, 0.0
      %4851 = vadd.xlane.f32.xlu0 %v4850
      %v4852 = vpop.xlane.xlu0 %4851
      %v4853 = vsel %vm2389, %v4846, 0.0
      %4854 = vadd.xlane.f32.xlu0 %v4853
      %v4855 = vpop.xlane.xlu0 %4854
      %v4856 = vrcp.pop %v4849
      %v4857 = vrcp.pop %v4852
      %v4858 = vrcp.pop %v4855
      %v4859 = vmul.f32 %v4842, %v4856
      %v4860 = vmul.f32 %v4844, %v4857
      %v4861 = vmul.f32 %v4846, %v4858
      %4862 = vrot.lane.b32.xlu0 %v4056, 48
      %v4863 = vpop.permute.xlu0 %4862
      %4864 = vrot.lane.b32.xlu0 %v4061, 48
      %v4865 = vpop.permute.xlu0 %4864
      %4866 = vrot.lane.b32.xlu0 %v4066, 48
      %v4867 = vpop.permute.xlu0 %4866
      %v4871 = vsel %vm2382, %v4859, 0
      %v4874 = vsel %vm2382, %v4860, 0
      %v4877 = vsel %vm2382, %v4861, 0
      %v4879 = vsel %vm2434, %v4867, 0
      %4881 = vmatprep.subr.mxu0 0.0
      %4882 = vmatpush1.msra.mxu0 %v4863
      %4883 = vmatprep.subr.mxu0 0.0
      %4884 = vmatpush1.msra.mxu0 %v4865
      %4885 = vmatprep.subr.mxu0 0.0
      %4886 = vmatpush1.msra.mxu0 %v4879
      %4887 = vmatprep.subr.mxu0 0.0
      %4888 = vmatpush1.msra.mxu0 0.0
      %4889 = vmatprep.subr.mxu0 0.0
      %4890 = vmatpush1.msra.mxu0 0.0
      %4891 = vmatprep.subr.mxu0 0.0
      %4892 = vmatpush1.msra.mxu0 0.0
      %4893 = vmatprep.subr.mxu0 0.0
      %4894 = vmatpush1.msra.mxu0 0.0
      %4895 = vmatprep.subr.mxu0 0.0
      %4896 = vmatpush1.msra.mxu0 0.0
      %4897 = vmatprep.subr.mxu0 0.0
      %4898 = vmatpush1.msra.mxu0 0.0
      %4899 = vmatprep.subr.mxu0 0.0
      %4900 = vmatpush1.msra.mxu0 0.0
      %4901 = vmatprep.subr.mxu0 0.0
      %4902 = vmatpush1.msra.mxu0 0.0
      %4903 = vmatprep.subr.mxu0 0.0
      %4904 = vmatpush1.msra.mxu0 0.0
      %4905 = vmatprep.subr.mxu0 0.0
      %4906 = vmatpush1.msra.mxu0 0.0
      %4907 = vmatprep.subr.mxu0 0.0
      %4908 = vmatpush1.msra.mxu0 0.0
      %4909 = vmatprep.subr.mxu0 0.0
      %4910 = vmatpush1.msra.mxu0 0.0
      %4911 = vmatprep.subr.mxu0 0.0
      %4912 = vmatpush1.msra.mxu0 0.0
      %4913 = vmatprep.subr.mxu0 0.0
      %4914 = vmatpush1.msra.mxu0 0.0
      %4915 = vmatprep.subr.mxu0 0.0
      %4916 = vmatpush1.msra.mxu0 0.0
      %4917 = vmatprep.subr.mxu0 0.0
      %4918 = vmatpush1.msra.mxu0 0.0
      %4919 = vmatprep.subr.mxu0 0.0
      %4920 = vmatpush1.msra.mxu0 0.0
      %4921 = vmatprep.subr.mxu0 0.0
      %4922 = vmatpush1.msra.mxu0 0.0
      %4923 = vmatprep.subr.mxu0 0.0
      %4924 = vmatpush1.msra.mxu0 0.0
      %4925 = vmatprep.subr.mxu0 0.0
      %4926 = vmatpush1.msra.mxu0 0.0
      %4927 = vmatprep.subr.mxu0 0.0
      %4928 = vmatpush1.msra.mxu0 0.0
      %4929 = vmatprep.subr.mxu0 0.0
      %4930 = vmatpush1.msra.mxu0 0.0
      %4931 = vmatprep.subr.mxu0 0.0
      %4932 = vmatpush1.msra.mxu0 0.0
      %4933 = vmatprep.subr.mxu0 0.0
      %4934 = vmatpush1.msra.mxu0 0.0
      %4935 = vmatprep.subr.mxu0 0.0
      %4936 = vmatpush1.msra.mxu0 0.0
      %4937 = vmatprep.subr.mxu0 0.0
      %4938 = vmatpush1.msra.mxu0 0.0
      %4939 = vmatprep.subr.mxu0 0.0
      %4940 = vmatpush1.msra.mxu0 0.0
      %4941 = vmatprep.subr.mxu0 0.0
      %4942 = vmatpush1.msra.mxu0 0.0
      %4943 = vmatprep.subr.mxu0 0.0
      %4944 = vmatpush1.msra.mxu0 0.0
      %4945 = vmatprep.mubr.f32.mxu0 0.0
      %4946 = vmatmul.mubr.f32.gmra.mrb[0].mxu0 %v4871
      %v4947 = vpop.f32.mrb[0].mxu0
      %v4948 = vadd.f32 0.0, %v4947
      %v4949 = vpop.f32.mrb[0].mxu0
      %4950 = vmatprep.mubr.f32.mxu0 0.0
      %4951 = vmatmul.mubr.f32.gmra.mrb[0].mxu0 %v4874
      %v4952 = vpop.f32.mrb[0].mxu0
      %v4953 = vadd.f32 0.0, %v4952
      %v4954 = vpop.f32.mrb[0].mxu0
      %4955 = vmatprep.mubr.f32.mxu0 0.0
      %4956 = vmatmul.mubr.f32.gmra.mrb[0].mxu0 %v4877
      %v4957 = vpop.f32.mrb[0].mxu0
      %v4958 = vadd.f32 0.0, %v4957
      %v4959 = vpop.f32.mrb[0].mxu0
      %4960 = vdwg.mxu0
      %v4962 = vsel %vm2286, %v4948, 0
      %v4965 = vsel %vm2286, %v4953, 0
      %v4968 = vsel %vm2286, %v4958, 0
      %4970 = vmatprep.subr.mxu0 0.0
      %4971 = vmatpush1.msra.mxu0 %v3898
      %4972 = vmatprep.subr.mxu0 0.0
      %4973 = vmatpush1.msra.mxu0 0.0
      %4974 = vmatprep.subr.mxu0 0.0
      %4975 = vmatpush1.msra.mxu0 0.0
      %4976 = vmatprep.subr.mxu0 0.0
      %4977 = vmatpush1.msra.mxu0 0.0
      %4978 = vmatprep.subr.mxu0 0.0
      %4979 = vmatpush1.msra.mxu0 0.0
      %4980 = vmatprep.subr.mxu0 0.0
      %4981 = vmatpush1.msra.mxu0 0.0
      %4982 = vmatprep.subr.mxu0 0.0
      %4983 = vmatpush1.msra.mxu0 0.0
      %4984 = vmatprep.subr.mxu0 0.0
      %4985 = vmatpush1.msra.mxu0 0.0
      %4986 = vmatprep.subr.mxu0 0.0
      %4987 = vmatpush1.msra.mxu0 0.0
      %4988 = vmatprep.subr.mxu0 0.0
      %4989 = vmatpush1.msra.mxu0 0.0
      %4990 = vmatprep.subr.mxu0 0.0
      %4991 = vmatpush1.msra.mxu0 0.0
      %4992 = vmatprep.subr.mxu0 0.0
      %4993 = vmatpush1.msra.mxu0 0.0
      %4994 = vmatprep.subr.mxu0 0.0
      %4995 = vmatpush1.msra.mxu0 0.0
      %4996 = vmatprep.subr.mxu0 0.0
      %4997 = vmatpush1.msra.mxu0 0.0
      %4998 = vmatprep.subr.mxu0 0.0
      %4999 = vmatpush1.msra.mxu0 0.0
      %5000 = vmatprep.subr.mxu0 0.0
      %5001 = vmatpush1.msra.mxu0 0.0
      %5002 = vmatprep.subr.mxu0 0.0
      %5003 = vmatpush1.msra.mxu0 0.0
      %5004 = vmatprep.subr.mxu0 0.0
      %5005 = vmatpush1.msra.mxu0 0.0
      %5006 = vmatprep.subr.mxu0 0.0
      %5007 = vmatpush1.msra.mxu0 0.0
      %5008 = vmatprep.subr.mxu0 0.0
      %5009 = vmatpush1.msra.mxu0 0.0
      %5010 = vmatprep.subr.mxu0 0.0
      %5011 = vmatpush1.msra.mxu0 0.0
      %5012 = vmatprep.subr.mxu0 0.0
      %5013 = vmatpush1.msra.mxu0 0.0
      %5014 = vmatprep.subr.mxu0 0.0
      %5015 = vmatpush1.msra.mxu0 0.0
      %5016 = vmatprep.subr.mxu0 0.0
      %5017 = vmatpush1.msra.mxu0 0.0
      %5018 = vmatprep.subr.mxu0 0.0
      %5019 = vmatpush1.msra.mxu0 0.0
      %5020 = vmatprep.subr.mxu0 0.0
      %5021 = vmatpush1.msra.mxu0 0.0
      %5022 = vmatprep.subr.mxu0 0.0
      %5023 = vmatpush1.msra.mxu0 0.0
      %5024 = vmatprep.subr.mxu0 0.0
      %5025 = vmatpush1.msra.mxu0 0.0
      %5026 = vmatprep.subr.mxu0 0.0
      %5027 = vmatpush1.msra.mxu0 0.0
      %5028 = vmatprep.subr.mxu0 0.0
      %5029 = vmatpush1.msra.mxu0 0.0
      %5030 = vmatprep.subr.mxu0 0.0
      %5031 = vmatpush1.msra.mxu0 0.0
      %5032 = vmatprep.subr.mxu0 0.0
      %5033 = vmatpush1.msra.mxu0 0.0
      %5034 = vmatprep.mubr.f32.mxu0 0.0
      %5035 = vmatmul.mubr.f32.gmra.mrb[0].mxu0 %v4962
      %v5036 = vpop.f32.mrb[0].mxu0
      %v5037 = vadd.f32 0.0, %v5036
      %v5038 = vpop.f32.mrb[0].mxu0
      %5039 = vmatprep.mubr.f32.mxu0 0.0
      %5040 = vmatmul.mubr.f32.gmra.mrb[0].mxu0 %v4965
      %v5041 = vpop.f32.mrb[0].mxu0
      %v5042 = vadd.f32 0.0, %v5041
      %v5043 = vpop.f32.mrb[0].mxu0
      %5044 = vmatprep.mubr.f32.mxu0 0.0
      %5045 = vmatmul.mubr.f32.gmra.mrb[0].mxu0 %v4968
      %v5046 = vpop.f32.mrb[0].mxu0
      %v5047 = vadd.f32 0.0, %v5046
      %v5048 = vpop.f32.mrb[0].mxu0
      %5049 = vdwg.mxu0
      %v5050 = vadd.f32 %v4709, %v5037
      %v5051 = vadd.f32 %v4714, %v5042
      %v5052 = vadd.f32 %v4719, %v5047
      %5053 = vrot.lane.b32.xlu0 %v4056, 104
      %v5054 = vpop.permute.xlu0 %5053
      %5055 = vrot.lane.b32.xlu0 %v4061, 104
      %v5056 = vpop.permute.xlu0 %5055
      %5057 = vrot.lane.b32.xlu0 %v4066, 104
      %v5058 = vpop.permute.xlu0 %5057
      %5059 = vrot.lane.b32.xlu0 %v4056, 72
      %v5060 = vpop.permute.xlu0 %5059
      %5061 = vrot.lane.b32.xlu0 %v4061, 72
      %v5062 = vpop.permute.xlu0 %5061
      %5063 = vrot.lane.b32.xlu0 %v4066, 72
      %v5064 = vpop.permute.xlu0 %5063
      %v5065 = vsel %vm2286, %v5054, 0
      %v5067 = vsel %vm2286, %v5056, 0
      %v5069 = vsel %vm2286, %v5058, 0
      %v5071 = vsel %vm2286, %v5060, 0
      %v5073 = vsel %vm2286, %v5062, 0
      %v5075 = vsel %vm2286, %v5064, 0
      %5077 = vmatprep.subr.mxu0 0.0
      %5078 = vmatpush1.xpose.msra.mxu0 %v5071
      %5079 = vmatprep.subr.mxu0 0.0
      %5080 = vmatpush1.xpose.msra.mxu0 %v5073
      %5081 = vmatprep.subr.mxu0 0.0
      %5082 = vmatpush1.xpose.msra.mxu0 %v5075
      %5083 = vmatprep.subr.mxu0 0.0
      %5084 = vmatpush1.xpose.msra.mxu0 0.0
      %5085 = vmatprep.subr.mxu0 0.0
      %5086 = vmatpush1.xpose.msra.mxu0 0.0
      %5087 = vmatprep.subr.mxu0 0.0
      %5088 = vmatpush1.xpose.msra.mxu0 0.0
      %5089 = vmatprep.subr.mxu0 0.0
      %5090 = vmatpush1.xpose.msra.mxu0 0.0
      %5091 = vmatprep.subr.mxu0 0.0
      %5092 = vmatpush1.xpose.msra.mxu0 0.0
      %5093 = vmatprep.subr.mxu0 0.0
      %5094 = vmatpush1.xpose.msra.mxu0 0.0
      %5095 = vmatprep.subr.mxu0 0.0
      %5096 = vmatpush1.xpose.msra.mxu0 0.0
      %5097 = vmatprep.subr.mxu0 0.0
      %5098 = vmatpush1.xpose.msra.mxu0 0.0
      %5099 = vmatprep.subr.mxu0 0.0
      %5100 = vmatpush1.xpose.msra.mxu0 0.0
      %5101 = vmatprep.subr.mxu0 0.0
      %5102 = vmatpush1.xpose.msra.mxu0 0.0
      %5103 = vmatprep.subr.mxu0 0.0
      %5104 = vmatpush1.xpose.msra.mxu0 0.0
      %5105 = vmatprep.subr.mxu0 0.0
      %5106 = vmatpush1.xpose.msra.mxu0 0.0
      %5107 = vmatprep.subr.mxu0 0.0
      %5108 = vmatpush1.xpose.msra.mxu0 0.0
      %5109 = vmatprep.subr.mxu0 0.0
      %5110 = vmatpush1.xpose.msra.mxu0 0.0
      %5111 = vmatprep.subr.mxu0 0.0
      %5112 = vmatpush1.xpose.msra.mxu0 0.0
      %5113 = vmatprep.subr.mxu0 0.0
      %5114 = vmatpush1.xpose.msra.mxu0 0.0
      %5115 = vmatprep.subr.mxu0 0.0
      %5116 = vmatpush1.xpose.msra.mxu0 0.0
      %5117 = vmatprep.subr.mxu0 0.0
      %5118 = vmatpush1.xpose.msra.mxu0 0.0
      %5119 = vmatprep.subr.mxu0 0.0
      %5120 = vmatpush1.xpose.msra.mxu0 0.0
      %5121 = vmatprep.subr.mxu0 0.0
      %5122 = vmatpush1.xpose.msra.mxu0 0.0
      %5123 = vmatprep.subr.mxu0 0.0
      %5124 = vmatpush1.xpose.msra.mxu0 0.0
      %5125 = vmatprep.subr.mxu0 0.0
      %5126 = vmatpush1.xpose.msra.mxu0 0.0
      %5127 = vmatprep.subr.mxu0 0.0
      %5128 = vmatpush1.xpose.msra.mxu0 0.0
      %5129 = vmatprep.subr.mxu0 0.0
      %5130 = vmatpush1.xpose.msra.mxu0 0.0
      %5131 = vmatprep.subr.mxu0 0.0
      %5132 = vmatpush1.xpose.msra.mxu0 0.0
      %5133 = vmatprep.subr.mxu0 0.0
      %5134 = vmatpush1.xpose.msra.mxu0 0.0
      %5135 = vmatprep.subr.mxu0 0.0
      %5136 = vmatpush1.xpose.msra.mxu0 0.0
      %5137 = vmatprep.subr.mxu0 0.0
      %5138 = vmatpush1.xpose.msra.mxu0 0.0
      %5139 = vmatprep.subr.mxu0 0.0
      %5140 = vmatpush1.xpose.msra.mxu0 0.0
      %5141 = vmatprep.mubr.f32.mxu0 0.0
      %5142 = vmatmul.mubr.f32.gmra.mrb[0].mxu0 %v5065
      %v5143 = vpop.f32.mrb[0].mxu0
      %v5144 = vadd.f32 0.0, %v5143
      %v5145 = vpop.f32.mrb[0].mxu0
      %5146 = vmatprep.mubr.f32.mxu0 0.0
      %5147 = vmatmul.mubr.f32.gmra.mrb[0].mxu0 %v5067
      %v5148 = vpop.f32.mrb[0].mxu0
      %v5149 = vadd.f32 0.0, %v5148
      %v5150 = vpop.f32.mrb[0].mxu0
      %5151 = vmatprep.mubr.f32.mxu0 0.0
      %5152 = vmatmul.mubr.f32.gmra.mrb[0].mxu0 %v5069
      %v5153 = vpop.f32.mrb[0].mxu0
      %v5154 = vadd.f32 0.0, %v5153
      %v5155 = vpop.f32.mrb[0].mxu0
      %5156 = vdwg.mxu0
      %v5157 = vmul.f32 %v5144, 0.35355338
      %v5158 = vmul.f32 %v5149, 0.35355338
      %v5159 = vmul.f32 %v5154, 0.35355338
      %v5160 = vsel %vm2382, %v5157, -inf
      %5161 = vmax.xlane.f32.xlu0 %v5160
      %v5162 = vpop.xlane.xlu0 %5161
      %v5163 = vsel %vm2382, %v5158, -inf
      %5164 = vmax.xlane.f32.xlu0 %v5163
      %v5165 = vpop.xlane.xlu0 %5164
      %v5166 = vsel %vm2389, %v5159, -inf
      %5167 = vmax.xlane.f32.xlu0 %v5166
      %v5168 = vpop.xlane.xlu0 %5167
      %v5169 = vsub.f32 %v5157, %v5162
      %v5170 = vsub.f32 %v5158, %v5165
      %v5171 = vsub.f32 %v5159, %v5168
      %v5172 = vmul.f32 %v5169, 1.442695
      %v5173 = vpow.pop %v5172
      %v5174 = vmul.f32 %v5170, 1.442695
      %v5175 = vpow.pop %v5174
      %v5176 = vmul.f32 %v5171, 1.442695
      %v5177 = vpow.pop %v5176
      %v5178 = vsel %vm2382, %v5173, 0.0
      %5179 = vadd.xlane.f32.xlu0 %v5178
      %v5180 = vpop.xlane.xlu0 %5179
      %v5181 = vsel %vm2382, %v5175, 0.0
      %5182 = vadd.xlane.f32.xlu0 %v5181
      %v5183 = vpop.xlane.xlu0 %5182
      %v5184 = vsel %vm2389, %v5177, 0.0
      %5185 = vadd.xlane.f32.xlu0 %v5184
      %v5186 = vpop.xlane.xlu0 %5185
      %v5187 = vrcp.pop %v5180
      %v5188 = vrcp.pop %v5183
      %v5189 = vrcp.pop %v5186
      %v5190 = vmul.f32 %v5173, %v5187
      %v5191 = vmul.f32 %v5175, %v5188
      %v5192 = vmul.f32 %v5177, %v5189
      %5193 = vrot.lane.b32.xlu0 %v4056, 40
      %v5194 = vpop.permute.xlu0 %5193
      %5195 = vrot.lane.b32.xlu0 %v4061, 40
      %v5196 = vpop.permute.xlu0 %5195
      %5197 = vrot.lane.b32.xlu0 %v4066, 40
      %v5198 = vpop.permute.xlu0 %5197
      %v5202 = vsel %vm2382, %v5190, 0
      %v5205 = vsel %vm2382, %v5191, 0
      %v5208 = vsel %vm2382, %v5192, 0
      %v5210 = vsel %vm2434, %v5198, 0
      %5212 = vmatprep.subr.mxu0 0.0
      %5213 = vmatpush1.msra.mxu0 %v5194
      %5214 = vmatprep.subr.mxu0 0.0
      %5215 = vmatpush1.msra.mxu0 %v5196
      %5216 = vmatprep.subr.mxu0 0.0
      %5217 = vmatpush1.msra.mxu0 %v5210
      %5218 = vmatprep.subr.mxu0 0.0
      %5219 = vmatpush1.msra.mxu0 0.0
      %5220 = vmatprep.subr.mxu0 0.0
      %5221 = vmatpush1.msra.mxu0 0.0
      %5222 = vmatprep.subr.mxu0 0.0
      %5223 = vmatpush1.msra.mxu0 0.0
      %5224 = vmatprep.subr.mxu0 0.0
      %5225 = vmatpush1.msra.mxu0 0.0
      %5226 = vmatprep.subr.mxu0 0.0
      %5227 = vmatpush1.msra.mxu0 0.0
      %5228 = vmatprep.subr.mxu0 0.0
      %5229 = vmatpush1.msra.mxu0 0.0
      %5230 = vmatprep.subr.mxu0 0.0
      %5231 = vmatpush1.msra.mxu0 0.0
      %5232 = vmatprep.subr.mxu0 0.0
      %5233 = vmatpush1.msra.mxu0 0.0
      %5234 = vmatprep.subr.mxu0 0.0
      %5235 = vmatpush1.msra.mxu0 0.0
      %5236 = vmatprep.subr.mxu0 0.0
      %5237 = vmatpush1.msra.mxu0 0.0
      %5238 = vmatprep.subr.mxu0 0.0
      %5239 = vmatpush1.msra.mxu0 0.0
      %5240 = vmatprep.subr.mxu0 0.0
      %5241 = vmatpush1.msra.mxu0 0.0
      %5242 = vmatprep.subr.mxu0 0.0
      %5243 = vmatpush1.msra.mxu0 0.0
      %5244 = vmatprep.subr.mxu0 0.0
      %5245 = vmatpush1.msra.mxu0 0.0
      %5246 = vmatprep.subr.mxu0 0.0
      %5247 = vmatpush1.msra.mxu0 0.0
      %5248 = vmatprep.subr.mxu0 0.0
      %5249 = vmatpush1.msra.mxu0 0.0
      %5250 = vmatprep.subr.mxu0 0.0
      %5251 = vmatpush1.msra.mxu0 0.0
      %5252 = vmatprep.subr.mxu0 0.0
      %5253 = vmatpush1.msra.mxu0 0.0
      %5254 = vmatprep.subr.mxu0 0.0
      %5255 = vmatpush1.msra.mxu0 0.0
      %5256 = vmatprep.subr.mxu0 0.0
      %5257 = vmatpush1.msra.mxu0 0.0
      %5258 = vmatprep.subr.mxu0 0.0
      %5259 = vmatpush1.msra.mxu0 0.0
      %5260 = vmatprep.subr.mxu0 0.0
      %5261 = vmatpush1.msra.mxu0 0.0
      %5262 = vmatprep.subr.mxu0 0.0
      %5263 = vmatpush1.msra.mxu0 0.0
      %5264 = vmatprep.subr.mxu0 0.0
      %5265 = vmatpush1.msra.mxu0 0.0
      %5266 = vmatprep.subr.mxu0 0.0
      %5267 = vmatpush1.msra.mxu0 0.0
      %5268 = vmatprep.subr.mxu0 0.0
      %5269 = vmatpush1.msra.mxu0 0.0
      %5270 = vmatprep.subr.mxu0 0.0
      %5271 = vmatpush1.msra.mxu0 0.0
      %5272 = vmatprep.subr.mxu0 0.0
      %5273 = vmatpush1.msra.mxu0 0.0
      %5274 = vmatprep.subr.mxu0 0.0
      %5275 = vmatpush1.msra.mxu0 0.0
      %5276 = vmatprep.mubr.f32.mxu0 0.0
      %5277 = vmatmul.mubr.f32.gmra.mrb[0].mxu0 %v5202
      %v5278 = vpop.f32.mrb[0].mxu0
      %v5279 = vadd.f32 0.0, %v5278
      %v5280 = vpop.f32.mrb[0].mxu0
      %5281 = vmatprep.mubr.f32.mxu0 0.0
      %5282 = vmatmul.mubr.f32.gmra.mrb[0].mxu0 %v5205
      %v5283 = vpop.f32.mrb[0].mxu0
      %v5284 = vadd.f32 0.0, %v5283
      %v5285 = vpop.f32.mrb[0].mxu0
      %5286 = vmatprep.mubr.f32.mxu0 0.0
      %5287 = vmatmul.mubr.f32.gmra.mrb[0].mxu0 %v5208
      %v5288 = vpop.f32.mrb[0].mxu0
      %v5289 = vadd.f32 0.0, %v5288
      %v5290 = vpop.f32.mrb[0].mxu0
      %5291 = vdwg.mxu0
      %v5293 = vsel %vm2286, %v5279, 0
      %v5296 = vsel %vm2286, %v5284, 0
      %v5299 = vsel %vm2286, %v5289, 0
      %5301 = vmatprep.subr.mxu0 0.0
      %5302 = vmatpush1.msra.mxu0 %v3899
      %5303 = vmatprep.subr.mxu0 0.0
      %5304 = vmatpush1.msra.mxu0 0.0
      %5305 = vmatprep.subr.mxu0 0.0
      %5306 = vmatpush1.msra.mxu0 0.0
      %5307 = vmatprep.subr.mxu0 0.0
      %5308 = vmatpush1.msra.mxu0 0.0
      %5309 = vmatprep.subr.mxu0 0.0
      %5310 = vmatpush1.msra.mxu0 0.0
      %5311 = vmatprep.subr.mxu0 0.0
      %5312 = vmatpush1.msra.mxu0 0.0
      %5313 = vmatprep.subr.mxu0 0.0
      %5314 = vmatpush1.msra.mxu0 0.0
      %5315 = vmatprep.subr.mxu0 0.0
      %5316 = vmatpush1.msra.mxu0 0.0
      %5317 = vmatprep.subr.mxu0 0.0
      %5318 = vmatpush1.msra.mxu0 0.0
      %5319 = vmatprep.subr.mxu0 0.0
      %5320 = vmatpush1.msra.mxu0 0.0
      %5321 = vmatprep.subr.mxu0 0.0
      %5322 = vmatpush1.msra.mxu0 0.0
      %5323 = vmatprep.subr.mxu0 0.0
      %5324 = vmatpush1.msra.mxu0 0.0
      %5325 = vmatprep.subr.mxu0 0.0
      %5326 = vmatpush1.msra.mxu0 0.0
      %5327 = vmatprep.subr.mxu0 0.0
      %5328 = vmatpush1.msra.mxu0 0.0
      %5329 = vmatprep.subr.mxu0 0.0
      %5330 = vmatpush1.msra.mxu0 0.0
      %5331 = vmatprep.subr.mxu0 0.0
      %5332 = vmatpush1.msra.mxu0 0.0
      %5333 = vmatprep.subr.mxu0 0.0
      %5334 = vmatpush1.msra.mxu0 0.0
      %5335 = vmatprep.subr.mxu0 0.0
      %5336 = vmatpush1.msra.mxu0 0.0
      %5337 = vmatprep.subr.mxu0 0.0
      %5338 = vmatpush1.msra.mxu0 0.0
      %5339 = vmatprep.subr.mxu0 0.0
      %5340 = vmatpush1.msra.mxu0 0.0
      %5341 = vmatprep.subr.mxu0 0.0
      %5342 = vmatpush1.msra.mxu0 0.0
      %5343 = vmatprep.subr.mxu0 0.0
      %5344 = vmatpush1.msra.mxu0 0.0
      %5345 = vmatprep.subr.mxu0 0.0
      %5346 = vmatpush1.msra.mxu0 0.0
      %5347 = vmatprep.subr.mxu0 0.0
      %5348 = vmatpush1.msra.mxu0 0.0
      %5349 = vmatprep.subr.mxu0 0.0
      %5350 = vmatpush1.msra.mxu0 0.0
      %5351 = vmatprep.subr.mxu0 0.0
      %5352 = vmatpush1.msra.mxu0 0.0
      %5353 = vmatprep.subr.mxu0 0.0
      %5354 = vmatpush1.msra.mxu0 0.0
      %5355 = vmatprep.subr.mxu0 0.0
      %5356 = vmatpush1.msra.mxu0 0.0
      %5357 = vmatprep.subr.mxu0 0.0
      %5358 = vmatpush1.msra.mxu0 0.0
      %5359 = vmatprep.subr.mxu0 0.0
      %5360 = vmatpush1.msra.mxu0 0.0
      %5361 = vmatprep.subr.mxu0 0.0
      %5362 = vmatpush1.msra.mxu0 0.0
      %5363 = vmatprep.subr.mxu0 0.0
      %5364 = vmatpush1.msra.mxu0 0.0
      %5365 = vmatprep.mubr.f32.mxu0 0.0
      %5366 = vmatmul.mubr.f32.gmra.mrb[0].mxu0 %v5293
      %v5367 = vpop.f32.mrb[0].mxu0
      %v5368 = vadd.f32 0.0, %v5367
      %v5369 = vpop.f32.mrb[0].mxu0
      %5370 = vmatprep.mubr.f32.mxu0 0.0
      %5371 = vmatmul.mubr.f32.gmra.mrb[0].mxu0 %v5296
      %v5372 = vpop.f32.mrb[0].mxu0
      %v5373 = vadd.f32 0.0, %v5372
      %v5374 = vpop.f32.mrb[0].mxu0
      %5375 = vmatprep.mubr.f32.mxu0 0.0
      %5376 = vmatmul.mubr.f32.gmra.mrb[0].mxu0 %v5299
      %v5377 = vpop.f32.mrb[0].mxu0
      %v5378 = vadd.f32 0.0, %v5377
      %v5379 = vpop.f32.mrb[0].mxu0
      %5380 = vdwg.mxu0
      %v5381 = vadd.f32 %v5050, %v5368
      %v5382 = vadd.f32 %v5051, %v5373
      %v5383 = vadd.f32 %v5052, %v5378
      %v5384 = vadd.f32 %v3886, %v5381
      %v5385 = vadd.f32 %v3887, %v5382
      %v5386 = vadd.f32 %v3888, %v5383
      %v5388 = vlaneseq
      %v5389 = vshrl.u32 %v5388, 7
      %v5390 = vsub.s32 0, %v5389
      %v5391 = vrot.slane %v3900, %v5390
      %v5393 = vadd.f32 %v5384, %v5391
      %v5394 = vadd.f32 %v5385, %v5391
      %v5395 = vadd.f32 %v5386, %v5391
      %v5396 = vsel %vm1592, %v5393, 0.0
      %5397 = vadd.xlane.f32.xlu0 %v5396
      %v5398 = vpop.xlane.xlu0 %5397
      %v5399 = vsel %vm1592, %v5394, 0.0
      %5400 = vadd.xlane.f32.xlu0 %v5399
      %v5401 = vpop.xlane.xlu0 %5400
      %v5402 = vsel %vm2091, %v5395, 0.0
      %5403 = vadd.xlane.f32.xlu0 %v5402
      %v5404 = vpop.xlane.xlu0 %5403
      %v5405 = vmul.f32 %v5398, %v2133
      %v5406 = vmul.f32 %v5401, %v2133
      %v5407 = vmul.f32 %v5404, %v2133
      %v5408 = vsub.f32 %v5393, %v5405
      %v5409 = vsub.f32 %v5394, %v5406
      %v5410 = vsub.f32 %v5395, %v5407
      %v5411 = vmul.f32 %v5408, %v5408
      %v5412 = vmul.f32 %v5409, %v5409
      %v5413 = vmul.f32 %v5410, %v5410
      %v5414 = vsel %vm1592, %v5411, 0.0
      %5415 = vadd.xlane.f32.xlu0 %v5414
      %v5416 = vpop.xlane.xlu0 %5415
      %v5417 = vsel %vm1592, %v5412, 0.0
      %5418 = vadd.xlane.f32.xlu0 %v5417
      %v5419 = vpop.xlane.xlu0 %5418
      %v5420 = vsel %vm2091, %v5413, 0.0
      %5421 = vadd.xlane.f32.xlu0 %v5420
      %v5422 = vpop.xlane.xlu0 %5421
      %v5423 = vmul.f32 %v5416, %v2133
      %v5424 = vmul.f32 %v5419, %v2133
      %v5425 = vmul.f32 %v5422, %v2133
      %v5426 = vadd.f32 %v5423, 1e-06
      %v5427 = vadd.f32 %v5424, 1e-06
      %v5428 = vadd.f32 %v5425, 1e-06
      %v5429 = vrsqrt.pop %v5426
      %v5430 = vrsqrt.pop %v5427
      %v5431 = vrsqrt.pop %v5428
      %v5432 = vmul.f32 %v5408, %v5429
      %v5433 = vmul.f32 %v5409, %v5430
      %v5434 = vmul.f32 %v5410, %v5431
      %v5436 = vlaneseq
      %v5437 = vshrl.u32 %v5436, 7
      %v5438 = vsub.s32 0, %v5437
      %v5439 = vrot.slane %v3901, %v5438
      %v5441 = vmul.f32 %v5432, %v5439
      %v5442 = vmul.f32 %v5433, %v5439
      %v5443 = vmul.f32 %v5434, %v5439
      %v5445 = vlaneseq
      %v5446 = vshrl.u32 %v5445, 7
      %v5447 = vsub.s32 0, %v5446
      %v5448 = vrot.slane %v3902, %v5447
      %v5450 = vadd.f32 %v5441, %v5448
      %v5451 = vadd.f32 %v5442, %v5448
      %v5452 = vadd.f32 %v5443, %v5448
      %v5454 = vlaneseq
      %v5455 = vshrl.u32 %v5454, 7
      %v5456 = vsub.s32 0, %v5455
      %v5457 = vrot.slane %v3907, %v5456
      %v5460 = vsel %vm1592, %v5450, 0
      %v5463 = vsel %vm1592, %v5451, 0
      %v5466 = vsel %vm1592, %v5452, 0
      %5468 = vmatprep.subr.mxu0 0.0
      %5469 = vmatpush1.msra.mxu0 %v3903
      %5470 = vmatprep.subr.mxu0 0.0
      %5471 = vmatpush1.msra.mxu0 %v3904
      %5472 = vmatprep.subr.mxu0 0.0
      %5473 = vmatpush1.msra.mxu0 %v3905
      %5474 = vmatprep.subr.mxu0 0.0
      %5475 = vmatpush1.msra.mxu0 %v3906
      %5476 = vmatprep.subr.mxu0 0.0
      %5477 = vmatpush1.msra.mxu0 0.0
      %5478 = vmatprep.subr.mxu0 0.0
      %5479 = vmatpush1.msra.mxu0 0.0
      %5480 = vmatprep.subr.mxu0 0.0
      %5481 = vmatpush1.msra.mxu0 0.0
      %5482 = vmatprep.subr.mxu0 0.0
      %5483 = vmatpush1.msra.mxu0 0.0
      %5484 = vmatprep.subr.mxu0 0.0
      %5485 = vmatpush1.msra.mxu0 0.0
      %5486 = vmatprep.subr.mxu0 0.0
      %5487 = vmatpush1.msra.mxu0 0.0
      %5488 = vmatprep.subr.mxu0 0.0
      %5489 = vmatpush1.msra.mxu0 0.0
      %5490 = vmatprep.subr.mxu0 0.0
      %5491 = vmatpush1.msra.mxu0 0.0
      %5492 = vmatprep.subr.mxu0 0.0
      %5493 = vmatpush1.msra.mxu0 0.0
      %5494 = vmatprep.subr.mxu0 0.0
      %5495 = vmatpush1.msra.mxu0 0.0
      %5496 = vmatprep.subr.mxu0 0.0
      %5497 = vmatpush1.msra.mxu0 0.0
      %5498 = vmatprep.subr.mxu0 0.0
      %5499 = vmatpush1.msra.mxu0 0.0
      %5500 = vmatprep.subr.mxu0 0.0
      %5501 = vmatpush1.msra.mxu0 0.0
      %5502 = vmatprep.subr.mxu0 0.0
      %5503 = vmatpush1.msra.mxu0 0.0
      %5504 = vmatprep.subr.mxu0 0.0
      %5505 = vmatpush1.msra.mxu0 0.0
      %5506 = vmatprep.subr.mxu0 0.0
      %5507 = vmatpush1.msra.mxu0 0.0
      %5508 = vmatprep.subr.mxu0 0.0
      %5509 = vmatpush1.msra.mxu0 0.0
      %5510 = vmatprep.subr.mxu0 0.0
      %5511 = vmatpush1.msra.mxu0 0.0
      %5512 = vmatprep.subr.mxu0 0.0
      %5513 = vmatpush1.msra.mxu0 0.0
      %5514 = vmatprep.subr.mxu0 0.0
      %5515 = vmatpush1.msra.mxu0 0.0
      %5516 = vmatprep.subr.mxu0 0.0
      %5517 = vmatpush1.msra.mxu0 0.0
      %5518 = vmatprep.subr.mxu0 0.0
      %5519 = vmatpush1.msra.mxu0 0.0
      %5520 = vmatprep.subr.mxu0 0.0
      %5521 = vmatpush1.msra.mxu0 0.0
      %5522 = vmatprep.subr.mxu0 0.0
      %5523 = vmatpush1.msra.mxu0 0.0
      %5524 = vmatprep.subr.mxu0 0.0
      %5525 = vmatpush1.msra.mxu0 0.0
      %5526 = vmatprep.subr.mxu0 0.0
      %5527 = vmatpush1.msra.mxu0 0.0
      %5528 = vmatprep.subr.mxu0 0.0
      %5529 = vmatpush1.msra.mxu0 0.0
      %5530 = vmatprep.subr.mxu0 0.0
      %5531 = vmatpush1.msra.mxu0 0.0
      %5532 = vmatprep.mubr.f32.mxu0 0.0
      %5533 = vmatmul.mubr.f32.gmra.mrb[0].mxu0 %v5460
      %v5534 = vpop.f32.mrb[0].mxu0
      %v5535 = vadd.f32 %v5457, %v5534
      %v5536 = vpop.f32.mrb[0].mxu0
      %5537 = vmatprep.mubr.f32.mxu0 0.0
      %5538 = vmatmul.mubr.f32.gmra.mrb[0].mxu0 %v5463
      %v5539 = vpop.f32.mrb[0].mxu0
      %v5540 = vadd.f32 %v5457, %v5539
      %v5541 = vpop.f32.mrb[0].mxu0
      %5542 = vmatprep.mubr.f32.mxu0 0.0
      %5543 = vmatmul.mubr.f32.gmra.mrb[0].mxu0 %v5466
      %v5544 = vpop.f32.mrb[0].mxu0
      %v5545 = vadd.f32 %v5457, %v5544
      %v5546 = vpop.f32.mrb[0].mxu0
      %5547 = vdwg.mxu0
      %v5548 = vmul.f32 %v5535, %v5535
      %v5549 = vmul.f32 %v5540, %v5540
      %v5550 = vmul.f32 %v5545, %v5545
      %v5551 = vmul.f32 %v5535, %v5548
      %v5552 = vmul.f32 %v5540, %v5549
      %v5553 = vmul.f32 %v5545, %v5550
      %v5554 = vmul.f32 %v5551, 0.044715
      %v5555 = vmul.f32 %v5552, 0.044715
      %v5556 = vmul.f32 %v5553, 0.044715
      %v5557 = vadd.f32 %v5535, %v5554
      %v5558 = vadd.f32 %v5540, %v5555
      %v5559 = vadd.f32 %v5545, %v5556
      %v5560 = vmul.f32 %v5557, 0.7978846
      %v5561 = vmul.f32 %v5558, 0.7978846
      %v5562 = vmul.f32 %v5559, 0.7978846
      %v5563 = vtanh.pop %v5560
      %v5564 = vtanh.pop %v5561
      %v5565 = vtanh.pop %v5562
      %v5566 = vadd.f32 %v5563, 1.0
      %v5567 = vadd.f32 %v5564, 1.0
      %v5568 = vadd.f32 %v5565, 1.0
      %v5569 = vmul.f32 %v5566, 0.5
      %v5570 = vmul.f32 %v5567, 0.5
      %v5571 = vmul.f32 %v5568, 0.5
      %v5572 = vmul.f32 %v5535, %v5569
      %v5573 = vmul.f32 %v5540, %v5570
      %v5574 = vmul.f32 %v5545, %v5571
      %v5576 = vsel %vm3787, %v5572, 0
      %v5579 = vsel %vm3787, %v5573, 0
      %v5582 = vsel %vm3787, %v5574, 0
      %5584 = vmatprep.subr.mxu0 0.0
      %5585 = vmatpush1.msra.mxu0 %v3908
      %5586 = vmatprep.subr.mxu0 0.0
      %5587 = vmatpush1.msra.mxu0 %v3909
      %5588 = vmatprep.subr.mxu0 0.0
      %5589 = vmatpush1.msra.mxu0 %v3910
      %5590 = vmatprep.subr.mxu0 0.0
      %5591 = vmatpush1.msra.mxu0 %v3911
      %5592 = vmatprep.subr.mxu0 0.0
      %5593 = vmatpush1.msra.mxu0 %v3912
      %5594 = vmatprep.subr.mxu0 0.0
      %5595 = vmatpush1.msra.mxu0 %v3913
      %5596 = vmatprep.subr.mxu0 0.0
      %5597 = vmatpush1.msra.mxu0 %v3914
      %5598 = vmatprep.subr.mxu0 0.0
      %5599 = vmatpush1.msra.mxu0 %v3915
      %5600 = vmatprep.subr.mxu0 0.0
      %5601 = vmatpush1.msra.mxu0 0.0
      %5602 = vmatprep.subr.mxu0 0.0
      %5603 = vmatpush1.msra.mxu0 0.0
      %5604 = vmatprep.subr.mxu0 0.0
      %5605 = vmatpush1.msra.mxu0 0.0
      %5606 = vmatprep.subr.mxu0 0.0
      %5607 = vmatpush1.msra.mxu0 0.0
      %5608 = vmatprep.subr.mxu0 0.0
      %5609 = vmatpush1.msra.mxu0 0.0
      %5610 = vmatprep.subr.mxu0 0.0
      %5611 = vmatpush1.msra.mxu0 0.0
      %5612 = vmatprep.subr.mxu0 0.0
      %5613 = vmatpush1.msra.mxu0 0.0
      %5614 = vmatprep.subr.mxu0 0.0
      %5615 = vmatpush1.msra.mxu0 0.0
      %5616 = vmatprep.subr.mxu0 0.0
      %5617 = vmatpush1.msra.mxu0 0.0
      %5618 = vmatprep.subr.mxu0 0.0
      %5619 = vmatpush1.msra.mxu0 0.0
      %5620 = vmatprep.subr.mxu0 0.0
      %5621 = vmatpush1.msra.mxu0 0.0
      %5622 = vmatprep.subr.mxu0 0.0
      %5623 = vmatpush1.msra.mxu0 0.0
      %5624 = vmatprep.subr.mxu0 0.0
      %5625 = vmatpush1.msra.mxu0 0.0
      %5626 = vmatprep.subr.mxu0 0.0
      %5627 = vmatpush1.msra.mxu0 0.0
      %5628 = vmatprep.subr.mxu0 0.0
      %5629 = vmatpush1.msra.mxu0 0.0
      %5630 = vmatprep.subr.mxu0 0.0
      %5631 = vmatpush1.msra.mxu0 0.0
      %5632 = vmatprep.subr.mxu0 0.0
      %5633 = vmatpush1.msra.mxu0 0.0
      %5634 = vmatprep.subr.mxu0 0.0
      %5635 = vmatpush1.msra.mxu0 0.0
      %5636 = vmatprep.subr.mxu0 0.0
      %5637 = vmatpush1.msra.mxu0 0.0
      %5638 = vmatprep.subr.mxu0 0.0
      %5639 = vmatpush1.msra.mxu0 0.0
      %5640 = vmatprep.subr.mxu0 0.0
      %5641 = vmatpush1.msra.mxu0 0.0
      %5642 = vmatprep.subr.mxu0 0.0
      %5643 = vmatpush1.msra.mxu0 0.0
      %5644 = vmatprep.subr.mxu0 0.0
      %5645 = vmatpush1.msra.mxu0 0.0
      %5646 = vmatprep.subr.mxu0 0.0
      %5647 = vmatpush1.msra.mxu0 0.0
      %5648 = vmatprep.mubr.f32.mxu0 0.0
      %5649 = vmatmul.mubr.f32.gmra.mrb[0].mxu0 %v5576
      %v5650 = vpop.f32.mrb[0].mxu0
      %v5651 = vadd.f32 0.0, %v5650
      %v5652 = vpop.f32.mrb[0].mxu0
      %5653 = vmatprep.mubr.f32.mxu0 0.0
      %5654 = vmatmul.mubr.f32.gmra.mrb[0].mxu0 %v5579
      %v5655 = vpop.f32.mrb[0].mxu0
      %v5656 = vadd.f32 0.0, %v5655
      %v5657 = vpop.f32.mrb[0].mxu0
      %5658 = vmatprep.mubr.f32.mxu0 0.0
      %5659 = vmatmul.mubr.f32.gmra.mrb[0].mxu0 %v5582
      %v5660 = vpop.f32.mrb[0].mxu0
      %v5661 = vpop.f32.mrb[0].mxu0
      %5662 = vdwg.mxu0
      %v5663 = vadd.f32 %v5393, %v5651
      %v5664 = vadd.f32 %v5394, %v5656
      %v5666 = vlaneseq
      %v5667 = vshrl.u32 %v5666, 7
      %v5668 = vsub.s32 0, %v5667
      %v5669 = vrot.slane %v3916, %v5668
      %v5671 = vadd.f32 %v5663, %v5669
      %v5672 = vadd.f32 %v5664, %v5669
      %v5673 = vld [vmem:[%s75] sm:$0x1]
      %v5674 = vld [vmem:[%s77] sm:$0x1]
      %v5675 = vsel %vm1592, %v5671, 0.0
      %5676 = vadd.xlane.f32.xlu0 %v5675
      %v5677 = vpop.xlane.xlu0 %5676
      %v5678 = vsel %vm1592, %v5672, 0.0
      %5679 = vadd.xlane.f32.xlu0 %v5678
      %v5680 = vpop.xlane.xlu0 %5679
      %v5681 = vmul.f32 %v5677, %v2133
      %v5682 = vmul.f32 %v5680, %v2133
      %v5683 = vsub.f32 %v5671, %v5681
      %v5684 = vsub.f32 %v5672, %v5682
      %v5685 = vmul.f32 %v5683, %v5683
      %v5686 = vmul.f32 %v5684, %v5684
      %v5687 = vsel %vm1592, %v5685, 0.0
      %5688 = vadd.xlane.f32.xlu0 %v5687
      %v5689 = vpop.xlane.xlu0 %5688
      %v5690 = vsel %vm1592, %v5686, 0.0
      %5691 = vadd.xlane.f32.xlu0 %v5690
      %v5692 = vpop.xlane.xlu0 %5691
      %v5693 = vmul.f32 %v5689, %v2133
      %v5694 = vmul.f32 %v5692, %v2133
      %v5695 = vadd.f32 %v5693, 1e-06
      %v5696 = vadd.f32 %v5694, 1e-06
      %v5697 = vrsqrt.pop %v5695
      %v5698 = vrsqrt.pop %v5696
      %v5699 = vmul.f32 %v5683, %v5697
      %v5700 = vmul.f32 %v5684, %v5698
      %v5702 = vlaneseq
      %v5703 = vshrl.u32 %v5702, 7
      %v5704 = vsub.s32 0, %v5703
      %v5705 = vrot.slane %v5673, %v5704
      %v5707 = vmul.f32 %v5699, %v5705
      %v5708 = vmul.f32 %v5700, %v5705
      %v5710 = vlaneseq
      %v5711 = vshrl.u32 %v5710, 7
      %v5712 = vsub.s32 0, %v5711
      %v5713 = vrot.slane %v5674, %v5712
      %v5715 = vadd.f32 %v5707, %v5713
      %v5716 = vadd.f32 %v5708, %v5713
      %5717 = vst.msk [vmem:[%s1202] sm:$0xff] %vm1592, %v5715
      %5718 = vst.msk [vmem:[%s1202 + $0x8] sm:$0xff] %vm1592, %v5716
      %p5719 = scmp.lt.s32.totalorder %s90, 1
      %s5720 = scalar_select %p5719, %s90, 1
      %s5721 = smul.addr %s5720, 2
      %s5722 = smul.addr %s5721, 8
      %s5723 = scalar_lea.vmem %s79, %s5722
      // Predicated region
      $region177: #{point_vit_seg_forward.3} parent=175 // pred_check
        %p5724 = pneg %p937
      $region178: #{point_vit_seg_forward.3} parent=175 // pred_check_branch
        %5726 = sbr.rel (%p5724) target = $region180
      $region179: #{point_vit_seg_forward.3} parent=175 // pred_region
        _
      $region180: #{point_vit_seg_forward.3} parent=175 // pred_fallthru
        _
    $region176: #{point_vit_seg_forward.3} parent=5 // pred_fallthru
      _
    %p5727 = scmp.le.s32.totalorder 2, %s85
    // Predicated region
    $region181: #{point_vit_seg_forward.3} parent=5 // pred_check
      %p5728 = pneg %p5727
    $region182: #{point_vit_seg_forward.3} parent=5 // pred_check_branch
      %5730 = sbr.rel (%p5728) target = $region184
    $region183: #{point_vit_seg_forward.3} parent=5 // pred_region
      %s5731 = ssub.s32 %s85, 2
      // Predicated region
      $region185: #{point_vit_seg_forward.3} parent=183 // pred_check
        %p5732 = pneg %p943
      $region186: #{point_vit_seg_forward.3} parent=183 // pred_check_branch
        %5734 = sbr.rel (%p5732) target = $region188
      $region187: #{point_vit_seg_forward.3} parent=183 // pred_region
        %p5735 = scmp.lt.s32.totalorder %s91, 1
        %s5736 = scalar_select %p5735, %s91, 1
        %s5737 = smul.addr %s5736, 2
        %s5738 = smul.addr %s5737, 8
        %s5739 = scalar_lea.vmem %s79, %s5738
      $region188: #{point_vit_seg_forward.3} parent=183 // pred_fallthru
        _
    $region184: #{point_vit_seg_forward.3} parent=5 // pred_fallthru
      _
  $region6: #{point_vit_seg_forward.3} parent=0 // loop_footer
    %s89 = sadd.s32 1, %s85
  $region7: #{point_vit_seg_forward.3} parent=0 // loop_footer_branch
    %84 = sbr.rel target = $region3
  $region8: #{point_vit_seg_forward.3} parent=0 // loop_exit
    _

// kernel: neg.8
$region0: #{neg.8}
  #allocation0 [shape = 's32[1]{0}', space=sflag, size = 0x4, scoped, tag = 'scoped memory for neg.8']
  %s0 = inlined_call_operand.vmem [shape: f32[2,64,32], index: 0, kind: input, shape index: {}]
  %s1 = inlined_call_operand.vmem [shape: f32[2,64,32], index: 1, kind: output, shape index: {}]
  %v2 = vld [vmem:[%s0] sm:$0xff]
  %3 = xla_tuple %v2
  %4 = xla_tuple %3
  %v5 = vxor.u32 %v2, 2147483648
  %6 = xla_tuple %v5
  %7 = vst [vmem:[%s1] sm:$0xff] %v5
  %s8 = scalar_lea.vmem %s0, 32
  %v9 = vld [vmem:[%s8] sm:$0xff]
  %10 = xla_tuple %v9
  %11 = xla_tuple %10
  %v12 = vxor.u32 %v9, 2147483648
  %13 = xla_tuple %v12
  %s14 = scalar_lea.vmem %s1, 32
  %15 = vst [vmem:[%s14] sm:$0xff] %v12
  %s16 = scalar_lea.vmem %s0, 8
  %v17 = vld [vmem:[%s16] sm:$0xff]
  %18 = xla_tuple %v17
  %19 = xla_tuple %18
  %v20 = vxor.u32 %v17, 2147483648
  %21 = xla_tuple %v20
  %s22 = scalar_lea.vmem %s1, 8
  %23 = vst [vmem:[%s22] sm:$0xff] %v20
  %s24 = scalar_lea.vmem %s0, 40
  %v25 = vld [vmem:[%s24] sm:$0xff]
  %26 = xla_tuple %v25
  %27 = xla_tuple %26
  %v28 = vxor.u32 %v25, 2147483648
  %29 = xla_tuple %v28
  %s30 = scalar_lea.vmem %s1, 40
  %31 = vst [vmem:[%s30] sm:$0xff] %v28
  %s32 = scalar_lea.vmem %s0, 16
  %v33 = vld [vmem:[%s32] sm:$0xff]
  %34 = xla_tuple %v33
  %35 = xla_tuple %34
  %v36 = vxor.u32 %v33, 2147483648
  %37 = xla_tuple %v36
  %s38 = scalar_lea.vmem %s1, 16
  %39 = vst [vmem:[%s38] sm:$0xff] %v36
  %s40 = scalar_lea.vmem %s0, 48
  %v41 = vld [vmem:[%s40] sm:$0xff]
  %42 = xla_tuple %v41
  %43 = xla_tuple %42
  %v44 = vxor.u32 %v41, 2147483648
  %45 = xla_tuple %v44
  %s46 = scalar_lea.vmem %s1, 48
  %47 = vst [vmem:[%s46] sm:$0xff] %v44
  %s48 = scalar_lea.vmem %s0, 24
  %v49 = vld [vmem:[%s48] sm:$0xff]
  %50 = xla_tuple %v49
  %51 = xla_tuple %50
  %v52 = vxor.u32 %v49, 2147483648
  %53 = xla_tuple %v52
  %s54 = scalar_lea.vmem %s1, 24
  %55 = vst [vmem:[%s54] sm:$0xff] %v52
  %s56 = scalar_lea.vmem %s0, 56
  %v57 = vld [vmem:[%s56] sm:$0xff]
  %58 = xla_tuple %v57
  %59 = xla_tuple %58
  %v60 = vxor.u32 %v57, 2147483648
  %61 = xla_tuple %v60
  %s62 = scalar_lea.vmem %s1, 56
  %63 = vst [vmem:[%s62] sm:$0xff] %v60

// kernel: point_vit_seg_forward.4
$region0: #{point_vit_seg_forward.4}
  #allocation0 [shape = 'u32[]', space=smem, size = 0x4, offset = 0x4, fixed_abs, tag = 'smem constant byte address 0x4 - core index']
  #allocation1 [shape = 'u32[144,128]{1,0:T(1,128)}', space=vmem, size = 0x12000, scoped, tag = 'internal scratch']
  %s0 = inlined_call_operand.vmem [shape: f32[64,38], index: 0, kind: input, shape index: {}]
  %s1 = inlined_call_operand.vmem [shape: f32[38,32], index: 1, kind: input, shape index: {}]
  %s2 = inlined_call_operand.vmem [shape: f32[1,32], index: 2, kind: input, shape index: {}]
  %s3 = inlined_call_operand.vmem [shape: f32[32,32], index: 3, kind: input, shape index: {}]
  %s4 = inlined_call_operand.vmem [shape: f32[1,32], index: 4, kind: input, shape index: {}]
  %s5 = inlined_call_operand.vmem [shape: f32[64,32], index: 5, kind: output, shape index: {}]
  %s6 = sld [smem:[#allocation0]]
  $region30: #{point_vit_seg_forward.4} parent=0
    _
  %s8 = ssub.s32 1, %s6
  %s9 = scalar_select 0, %s8, %s6
  // Predicated region
  $region2: #{point_vit_seg_forward.4} parent=0 // pred_check
    _
  $region3: #{point_vit_seg_forward.4} parent=0 // pred_check_branch
    %11 = sbr.rel (0) target = $region5
  $region4: #{point_vit_seg_forward.4} parent=0 // pred_region
    _
  $region5: #{point_vit_seg_forward.4} parent=0 // pred_fallthru
    _
  // Predicated region
  $region6: #{point_vit_seg_forward.4} parent=0 // pred_check
    _
  $region7: #{point_vit_seg_forward.4} parent=0 // pred_check_branch
    %13 = sbr.rel (0) target = $region9
  $region8: #{point_vit_seg_forward.4} parent=0 // pred_region
    _
  $region9: #{point_vit_seg_forward.4} parent=0 // pred_fallthru
    _
  // Predicated region
  $region10: #{point_vit_seg_forward.4} parent=0 // pred_check
    _
  $region11: #{point_vit_seg_forward.4} parent=0 // pred_check_branch
    %15 = sbr.rel (0) target = $region13
  $region12: #{point_vit_seg_forward.4} parent=0 // pred_region
    _
  $region13: #{point_vit_seg_forward.4} parent=0 // pred_fallthru
    _
  // Predicated region
  $region14: #{point_vit_seg_forward.4} parent=0 // pred_check
    _
  $region15: #{point_vit_seg_forward.4} parent=0 // pred_check_branch
    %17 = sbr.rel (0) target = $region17
  $region16: #{point_vit_seg_forward.4} parent=0 // pred_region
    _
  $region17: #{point_vit_seg_forward.4} parent=0 // pred_fallthru
    _
  // Predicated region
  $region18: #{point_vit_seg_forward.4} parent=0 // pred_check
    _
  $region19: #{point_vit_seg_forward.4} parent=0 // pred_check_branch
    %19 = sbr.rel (0) target = $region21
  $region20: #{point_vit_seg_forward.4} parent=0 // pred_region
    _
  $region21: #{point_vit_seg_forward.4} parent=0 // pred_fallthru
    _
  %v20 = vld [vmem:[%s0] sm:$0xff]
  %v21 = vld [vmem:[%s0 + $0x8] sm:$0xff]
  %v22 = vld [vmem:[%s0 + $0x10] sm:$0xff]
  %v23 = vld [vmem:[%s0 + $0x18] sm:$0xff]
  %v24 = vld [vmem:[%s0 + $0x20] sm:$0xff]
  %v25 = vld [vmem:[%s0 + $0x28] sm:$0xff]
  %v26 = vld [vmem:[%s0 + $0x30] sm:$0xff]
  %v27 = vld [vmem:[%s0 + $0x38] sm:$0xff]
  %v28 = vld [vmem:[%s1] sm:$0xff]
  %v29 = vld [vmem:[%s1 + $0x8] sm:$0xff]
  %v30 = vld [vmem:[%s1 + $0x10] sm:$0xff]
  %v31 = vld [vmem:[%s1 + $0x18] sm:$0xff]
  %v32 = vld [vmem:[%s1 + $0x20] sm:$0x3f]
  %v33 = vld [vmem:[%s2] sm:$0x1]
  %v35 = vlaneseq
  %v36 = vshrl.u32 %v35, 7
  %v37 = vsub.s32 0, %v36
  %v38 = vrot.slane %v33, %v37
  %vm40 = vcmask 310272
  %v42 = vsel %vm40, %v20, 0
  %v45 = vsel %vm40, %v21, 0
  %v48 = vsel %vm40, %v22, 0
  %v51 = vsel %vm40, %v23, 0
  %v54 = vsel %vm40, %v24, 0
  %v57 = vsel %vm40, %v25, 0
  %v60 = vsel %vm40, %v26, 0
  %v63 = vsel %vm40, %v27, 0
  %vm65 = vcmask 1045504
  %v67 = vsel %vm65, %v32, 0
  %69 = vmatprep.subr.mxu0 0.0
  %70 = vmatpush1.msra.mxu0 %v28
  %71 = vmatprep.subr.mxu0 0.0
  %72 = vmatpush1.msra.mxu0 %v29
  %73 = vmatprep.subr.mxu0 0.0
  %74 = vmatpush1.msra.mxu0 %v30
  %75 = vmatprep.subr.mxu0 0.0
  %76 = vmatpush1.msra.mxu0 %v31
  %77 = vmatprep.subr.mxu0 0.0
  %78 = vmatpush1.msra.mxu0 %v67
  %79 = vmatprep.subr.mxu0 0.0
  %80 = vmatpush1.msra.mxu0 0.0
  %81 = vmatprep.subr.mxu0 0.0
  %82 = vmatpush1.msra.mxu0 0.0
  %83 = vmatprep.subr.mxu0 0.0
  %84 = vmatpush1.msra.mxu0 0.0
  %85 = vmatprep.subr.mxu0 0.0
  %86 = vmatpush1.msra.mxu0 0.0
  %87 = vmatprep.subr.mxu0 0.0
  %88 = vmatpush1.msra.mxu0 0.0
  %89 = vmatprep.subr.mxu0 0.0
  %90 = vmatpush1.msra.mxu0 0.0
  %91 = vmatprep.subr.mxu0 0.0
  %92 = vmatpush1.msra.mxu0 0.0
  %93 = vmatprep.subr.mxu0 0.0
  %94 = vmatpush1.msra.mxu0 0.0
  %95 = vmatprep.subr.mxu0 0.0
  %96 = vmatpush1.msra.mxu0 0.0
  %97 = vmatprep.subr.mxu0 0.0
  %98 = vmatpush1.msra.mxu0 0.0
  %99 = vmatprep.subr.mxu0 0.0
  %100 = vmatpush1.msra.mxu0 0.0
  %101 = vmatprep.subr.mxu0 0.0
  %102 = vmatpush1.msra.mxu0 0.0
  %103 = vmatprep.subr.mxu0 0.0
  %104 = vmatpush1.msra.mxu0 0.0
  %105 = vmatprep.subr.mxu0 0.0
  %106 = vmatpush1.msra.mxu0 0.0
  %107 = vmatprep.subr.mxu0 0.0
  %108 = vmatpush1.msra.mxu0 0.0
  %109 = vmatprep.subr.mxu0 0.0
  %110 = vmatpush1.msra.mxu0 0.0
  %111 = vmatprep.subr.mxu0 0.0
  %112 = vmatpush1.msra.mxu0 0.0
  %113 = vmatprep.subr.mxu0 0.0
  %114 = vmatpush1.msra.mxu0 0.0
  %115 = vmatprep.subr.mxu0 0.0
  %116 = vmatpush1.msra.mxu0 0.0
  %117 = vmatprep.subr.mxu0 0.0
  %118 = vmatpush1.msra.mxu0 0.0
  %119 = vmatprep.subr.mxu0 0.0
  %120 = vmatpush1.msra.mxu0 0.0
  %121 = vmatprep.subr.mxu0 0.0
  %122 = vmatpush1.msra.mxu0 0.0
  %123 = vmatprep.subr.mxu0 0.0
  %124 = vmatpush1.msra.mxu0 0.0
  %125 = vmatprep.subr.mxu0 0.0
  %126 = vmatpush1.msra.mxu0 0.0
  %127 = vmatprep.subr.mxu0 0.0
  %128 = vmatpush1.msra.mxu0 0.0
  %129 = vmatprep.subr.mxu0 0.0
  %130 = vmatpush1.msra.mxu0 0.0
  %131 = vmatprep.subr.mxu0 0.0
  %132 = vmatpush1.msra.mxu0 0.0
  %133 = vmatprep.mubr.f32.mxu0 0.0
  %134 = vmatmul.mubr.f32.gmra.mrb[0].mxu0 %v42
  %v135 = vpop.f32.mrb[0].mxu0
  %v136 = vadd.f32 %v38, %v135
  %v137 = vpop.f32.mrb[0].mxu0
  %138 = vmatprep.mubr.f32.mxu0 0.0
  %139 = vmatmul.mubr.f32.gmra.mrb[0].mxu0 %v45
  %v140 = vpop.f32.mrb[0].mxu0
  %v141 = vadd.f32 %v38, %v140
  %v142 = vpop.f32.mrb[0].mxu0
  %143 = vmatprep.mubr.f32.mxu0 0.0
  %144 = vmatmul.mubr.f32.gmra.mrb[0].mxu0 %v48
  %v145 = vpop.f32.mrb[0].mxu0
  %v146 = vadd.f32 %v38, %v145
  %v147 = vpop.f32.mrb[0].mxu0
  %148 = vmatprep.mubr.f32.mxu0 0.0
  %149 = vmatmul.mubr.f32.gmra.mrb[0].mxu0 %v51
  %v150 = vpop.f32.mrb[0].mxu0
  %v151 = vadd.f32 %v38, %v150
  %v152 = vpop.f32.mrb[0].mxu0
  %153 = vmatprep.mubr.f32.mxu0 0.0
  %154 = vmatmul.mubr.f32.gmra.mrb[0].mxu0 %v54
  %v155 = vpop.f32.mrb[0].mxu0
  %v156 = vadd.f32 %v38, %v155
  %v157 = vpop.f32.mrb[0].mxu0
  %158 = vmatprep.mubr.f32.mxu0 0.0
  %159 = vmatmul.mubr.f32.gmra.mrb[0].mxu0 %v57
  %v160 = vpop.f32.mrb[0].mxu0
  %v161 = vadd.f32 %v38, %v160
  %v162 = vpop.f32.mrb[0].mxu0
  %163 = vmatprep.mubr.f32.mxu0 0.0
  %164 = vmatmul.mubr.f32.gmra.mrb[0].mxu0 %v60
  %v165 = vpop.f32.mrb[0].mxu0
  %v166 = vadd.f32 %v38, %v165
  %v167 = vpop.f32.mrb[0].mxu0
  %168 = vmatprep.mubr.f32.mxu0 0.0
  %169 = vmatmul.mubr.f32.gmra.mrb[0].mxu0 %v63
  %v170 = vpop.f32.mrb[0].mxu0
  %v171 = vadd.f32 %v38, %v170
  %v172 = vpop.f32.mrb[0].mxu0
  %173 = vdwg.mxu0
  %v174 = vmul.f32 %v136, %v136
  %v175 = vmul.f32 %v141, %v141
  %v176 = vmul.f32 %v146, %v146
  %v177 = vmul.f32 %v151, %v151
  %v178 = vmul.f32 %v156, %v156
  %v179 = vmul.f32 %v161, %v161
  %v180 = vmul.f32 %v166, %v166
  %v181 = vmul.f32 %v171, %v171
  %v182 = vmul.f32 %v136, %v174
  %v183 = vmul.f32 %v141, %v175
  %v184 = vmul.f32 %v146, %v176
  %v185 = vmul.f32 %v151, %v177
  %v186 = vmul.f32 %v156, %v178
  %v187 = vmul.f32 %v161, %v179
  %v188 = vmul.f32 %v166, %v180
  %v189 = vmul.f32 %v171, %v181
  %v190 = vmul.f32 %v182, 0.044715
  %v191 = vmul.f32 %v183, 0.044715
  %v192 = vmul.f32 %v184, 0.044715
  %v193 = vmul.f32 %v185, 0.044715
  %v194 = vmul.f32 %v186, 0.044715
  %v195 = vmul.f32 %v187, 0.044715
  %v196 = vmul.f32 %v188, 0.044715
  %v197 = vmul.f32 %v189, 0.044715
  %v198 = vadd.f32 %v136, %v190
  %v199 = vadd.f32 %v141, %v191
  %v200 = vadd.f32 %v146, %v192
  %v201 = vadd.f32 %v151, %v193
  %v202 = vadd.f32 %v156, %v194
  %v203 = vadd.f32 %v161, %v195
  %v204 = vadd.f32 %v166, %v196
  %v205 = vadd.f32 %v171, %v197
  %v206 = vmul.f32 %v198, 0.7978846
  %v207 = vmul.f32 %v199, 0.7978846
  %v208 = vmul.f32 %v200, 0.7978846
  %v209 = vmul.f32 %v201, 0.7978846
  %v210 = vmul.f32 %v202, 0.7978846
  %v211 = vmul.f32 %v203, 0.7978846
  %v212 = vmul.f32 %v204, 0.7978846
  %v213 = vmul.f32 %v205, 0.7978846
  %v214 = vtanh.pop %v206
  %v215 = vtanh.pop %v207
  %v216 = vtanh.pop %v208
  %v217 = vtanh.pop %v209
  %v218 = vtanh.pop %v210
  %v219 = vtanh.pop %v211
  %v220 = vtanh.pop %v212
  %v221 = vtanh.pop %v213
  %v222 = vadd.f32 %v214, 1.0
  %v223 = vadd.f32 %v215, 1.0
  %v224 = vadd.f32 %v216, 1.0
  %v225 = vadd.f32 %v217, 1.0
  %v226 = vadd.f32 %v218, 1.0
  %v227 = vadd.f32 %v219, 1.0
  %v228 = vadd.f32 %v220, 1.0
  %v229 = vadd.f32 %v221, 1.0
  %v230 = vmul.f32 %v222, 0.5
  %v231 = vmul.f32 %v223, 0.5
  %v232 = vmul.f32 %v224, 0.5
  %v233 = vmul.f32 %v225, 0.5
  %v234 = vmul.f32 %v226, 0.5
  %v235 = vmul.f32 %v227, 0.5
  %v236 = vmul.f32 %v228, 0.5
  %v237 = vmul.f32 %v229, 0.5
  %v238 = vmul.f32 %v136, %v230
  %v239 = vmul.f32 %v141, %v231
  %v240 = vmul.f32 %v146, %v232
  %v241 = vmul.f32 %v151, %v233
  %v242 = vmul.f32 %v156, %v234
  %v243 = vmul.f32 %v161, %v235
  %v244 = vmul.f32 %v166, %v236
  %v245 = vmul.f32 %v171, %v237
  %v246 = vld [vmem:[%s3] sm:$0xff]
  %v247 = vld [vmem:[%s3 + $0x8] sm:$0xff]
  %v248 = vld [vmem:[%s3 + $0x10] sm:$0xff]
  %v249 = vld [vmem:[%s3 + $0x18] sm:$0xff]
  %v250 = vld [vmem:[%s4] sm:$0x1]
  %v252 = vlaneseq
  %v253 = vshrl.u32 %v252, 7
  %v254 = vsub.s32 0, %v253
  %v255 = vrot.slane %v250, %v254
  %vm257 = vcmask 261120
  %v259 = vsel %vm257, %v238, 0
  %v262 = vsel %vm257, %v239, 0
  %v265 = vsel %vm257, %v240, 0
  %v268 = vsel %vm257, %v241, 0
  %v271 = vsel %vm257, %v242, 0
  %v274 = vsel %vm257, %v243, 0
  %v277 = vsel %vm257, %v244, 0
  %v280 = vsel %vm257, %v245, 0
  %282 = vmatprep.subr.mxu0 0.0
  %283 = vmatpush1.msra.mxu0 %v246
  %284 = vmatprep.subr.mxu0 0.0
  %285 = vmatpush1.msra.mxu0 %v247
  %286 = vmatprep.subr.mxu0 0.0
  %287 = vmatpush1.msra.mxu0 %v248
  %288 = vmatprep.subr.mxu0 0.0
  %289 = vmatpush1.msra.mxu0 %v249
  %290 = vmatprep.subr.mxu0 0.0
  %291 = vmatpush1.msra.mxu0 0.0
  %292 = vmatprep.subr.mxu0 0.0
  %293 = vmatpush1.msra.mxu0 0.0
  %294 = vmatprep.subr.mxu0 0.0
  %295 = vmatpush1.msra.mxu0 0.0
  %296 = vmatprep.subr.mxu0 0.0
  %297 = vmatpush1.msra.mxu0 0.0
  %298 = vmatprep.subr.mxu0 0.0
  %299 = vmatpush1.msra.mxu0 0.0
  %300 = vmatprep.subr.mxu0 0.0
  %301 = vmatpush1.msra.mxu0 0.0
  %302 = vmatprep.subr.mxu0 0.0
  %303 = vmatpush1.msra.mxu0 0.0
  %304 = vmatprep.subr.mxu0 0.0
  %305 = vmatpush1.msra.mxu0 0.0
  %306 = vmatprep.subr.mxu0 0.0
  %307 = vmatpush1.msra.mxu0 0.0
  %308 = vmatprep.subr.mxu0 0.0
  %309 = vmatpush1.msra.mxu0 0.0
  %310 = vmatprep.subr.mxu0 0.0
  %311 = vmatpush1.msra.mxu0 0.0
  %312 = vmatprep.subr.mxu0 0.0
  %313 = vmatpush1.msra.mxu0 0.0
  %314 = vmatprep.subr.mxu0 0.0
  %315 = vmatpush1.msra.mxu0 0.0
  %316 = vmatprep.subr.mxu0 0.0
  %317 = vmatpush1.msra.mxu0 0.0
  %318 = vmatprep.subr.mxu0 0.0
  %319 = vmatpush1.msra.mxu0 0.0
  %320 = vmatprep.subr.mxu0 0.0
  %321 = vmatpush1.msra.mxu0 0.0
  %322 = vmatprep.subr.mxu0 0.0
  %323 = vmatpush1.msra.mxu0 0.0
  %324 = vmatprep.subr.mxu0 0.0
  %325 = vmatpush1.msra.mxu0 0.0
  %326 = vmatprep.subr.mxu0 0.0
  %327 = vmatpush1.msra.mxu0 0.0
  %328 = vmatprep.subr.mxu0 0.0
  %329 = vmatpush1.msra.mxu0 0.0
  %330 = vmatprep.subr.mxu0 0.0
  %331 = vmatpush1.msra.mxu0 0.0
  %332 = vmatprep.subr.mxu0 0.0
  %333 = vmatpush1.msra.mxu0 0.0
  %334 = vmatprep.subr.mxu0 0.0
  %335 = vmatpush1.msra.mxu0 0.0
  %336 = vmatprep.subr.mxu0 0.0
  %337 = vmatpush1.msra.mxu0 0.0
  %338 = vmatprep.subr.mxu0 0.0
  %339 = vmatpush1.msra.mxu0 0.0
  %340 = vmatprep.subr.mxu0 0.0
  %341 = vmatpush1.msra.mxu0 0.0
  %342 = vmatprep.subr.mxu0 0.0
  %343 = vmatpush1.msra.mxu0 0.0
  %344 = vmatprep.subr.mxu0 0.0
  %345 = vmatpush1.msra.mxu0 0.0
  %346 = vmatprep.mubr.f32.mxu0 0.0
  %347 = vmatmul.mubr.f32.gmra.mrb[0].mxu0 %v259
  %v348 = vpop.f32.mrb[0].mxu0
  %v349 = vadd.f32 %v255, %v348
  %v350 = vpop.f32.mrb[0].mxu0
  %351 = vmatprep.mubr.f32.mxu0 0.0
  %352 = vmatmul.mubr.f32.gmra.mrb[0].mxu0 %v262
  %v353 = vpop.f32.mrb[0].mxu0
  %v354 = vadd.f32 %v255, %v353
  %v355 = vpop.f32.mrb[0].mxu0
  %356 = vmatprep.mubr.f32.mxu0 0.0
  %357 = vmatmul.mubr.f32.gmra.mrb[0].mxu0 %v265
  %v358 = vpop.f32.mrb[0].mxu0
  %v359 = vadd.f32 %v255, %v358
  %v360 = vpop.f32.mrb[0].mxu0
  %361 = vmatprep.mubr.f32.mxu0 0.0
  %362 = vmatmul.mubr.f32.gmra.mrb[0].mxu0 %v268
  %v363 = vpop.f32.mrb[0].mxu0
  %v364 = vadd.f32 %v255, %v363
  %v365 = vpop.f32.mrb[0].mxu0
  %366 = vmatprep.mubr.f32.mxu0 0.0
  %367 = vmatmul.mubr.f32.gmra.mrb[0].mxu0 %v271
  %v368 = vpop.f32.mrb[0].mxu0
  %v369 = vadd.f32 %v255, %v368
  %v370 = vpop.f32.mrb[0].mxu0
  %371 = vmatprep.mubr.f32.mxu0 0.0
  %372 = vmatmul.mubr.f32.gmra.mrb[0].mxu0 %v274
  %v373 = vpop.f32.mrb[0].mxu0
  %v374 = vadd.f32 %v255, %v373
  %v375 = vpop.f32.mrb[0].mxu0
  %376 = vmatprep.mubr.f32.mxu0 0.0
  %377 = vmatmul.mubr.f32.gmra.mrb[0].mxu0 %v277
  %v378 = vpop.f32.mrb[0].mxu0
  %v379 = vadd.f32 %v255, %v378
  %v380 = vpop.f32.mrb[0].mxu0
  %381 = vmatprep.mubr.f32.mxu0 0.0
  %382 = vmatmul.mubr.f32.gmra.mrb[0].mxu0 %v280
  %v383 = vpop.f32.mrb[0].mxu0
  %v384 = vadd.f32 %v255, %v383
  %v385 = vpop.f32.mrb[0].mxu0
  %386 = vdwg.mxu0
  %v387 = vmul.f32 %v349, %v349
  %v388 = vmul.f32 %v354, %v354
  %v389 = vmul.f32 %v359, %v359
  %v390 = vmul.f32 %v364, %v364
  %v391 = vmul.f32 %v369, %v369
  %v392 = vmul.f32 %v374, %v374
  %v393 = vmul.f32 %v379, %v379
  %v394 = vmul.f32 %v384, %v384
  %v395 = vmul.f32 %v349, %v387
  %v396 = vmul.f32 %v354, %v388
  %v397 = vmul.f32 %v359, %v389
  %v398 = vmul.f32 %v364, %v390
  %v399 = vmul.f32 %v369, %v391
  %v400 = vmul.f32 %v374, %v392
  %v401 = vmul.f32 %v379, %v393
  %v402 = vmul.f32 %v384, %v394
  %v403 = vmul.f32 %v395, 0.044715
  %v404 = vmul.f32 %v396, 0.044715
  %v405 = vmul.f32 %v397, 0.044715
  %v406 = vmul.f32 %v398, 0.044715
  %v407 = vmul.f32 %v399, 0.044715
  %v408 = vmul.f32 %v400, 0.044715
  %v409 = vmul.f32 %v401, 0.044715
  %v410 = vmul.f32 %v402, 0.044715
  %v411 = vadd.f32 %v349, %v403
  %v412 = vadd.f32 %v354, %v404
  %v413 = vadd.f32 %v359, %v405
  %v414 = vadd.f32 %v364, %v406
  %v415 = vadd.f32 %v369, %v407
  %v416 = vadd.f32 %v374, %v408
  %v417 = vadd.f32 %v379, %v409
  %v418 = vadd.f32 %v384, %v410
  %v419 = vmul.f32 %v411, 0.7978846
  %v420 = vmul.f32 %v412, 0.7978846
  %v421 = vmul.f32 %v413, 0.7978846
  %v422 = vmul.f32 %v414, 0.7978846
  %v423 = vmul.f32 %v415, 0.7978846
  %v424 = vmul.f32 %v416, 0.7978846
  %v425 = vmul.f32 %v417, 0.7978846
  %v426 = vmul.f32 %v418, 0.7978846
  %v427 = vtanh.pop %v419
  %v428 = vtanh.pop %v420
  %v429 = vtanh.pop %v421
  %v430 = vtanh.pop %v422
  %v431 = vtanh.pop %v423
  %v432 = vtanh.pop %v424
  %v433 = vtanh.pop %v425
  %v434 = vtanh.pop %v426
  %v435 = vadd.f32 %v427, 1.0
  %v436 = vadd.f32 %v428, 1.0
  %v437 = vadd.f32 %v429, 1.0
  %v438 = vadd.f32 %v430, 1.0
  %v439 = vadd.f32 %v431, 1.0
  %v440 = vadd.f32 %v432, 1.0
  %v441 = vadd.f32 %v433, 1.0
  %v442 = vadd.f32 %v434, 1.0
  %v443 = vmul.f32 %v435, 0.5
  %v444 = vmul.f32 %v436, 0.5
  %v445 = vmul.f32 %v437, 0.5
  %v446 = vmul.f32 %v438, 0.5
  %v447 = vmul.f32 %v439, 0.5
  %v448 = vmul.f32 %v440, 0.5
  %v449 = vmul.f32 %v441, 0.5
  %v450 = vmul.f32 %v442, 0.5
  %v451 = vmul.f32 %v349, %v443
  %v452 = vmul.f32 %v354, %v444
  %v453 = vmul.f32 %v359, %v445
  %v454 = vmul.f32 %v364, %v446
  %v455 = vmul.f32 %v369, %v447
  %v456 = vmul.f32 %v374, %v448
  %v457 = vmul.f32 %v379, %v449
  %v458 = vmul.f32 %v384, %v450
  %459 = vst.msk [vmem:[%s5] sm:$0xff] %vm257, %v451
  %460 = vst.msk [vmem:[%s5 + $0x8] sm:$0xff] %vm257, %v452
  %461 = vst.msk [vmem:[%s5 + $0x10] sm:$0xff] %vm257, %v453
  %462 = vst.msk [vmem:[%s5 + $0x18] sm:$0xff] %vm257, %v454
  %463 = vst.msk [vmem:[%s5 + $0x20] sm:$0xff] %vm257, %v455
  %464 = vst.msk [vmem:[%s5 + $0x28] sm:$0xff] %vm257, %v456
  %465 = vst.msk [vmem:[%s5 + $0x30] sm:$0xff] %vm257, %v457
  %466 = vst.msk [vmem:[%s5 + $0x38] sm:$0xff] %vm257, %v458
  // Predicated region
  $region22: #{point_vit_seg_forward.4} parent=0 // pred_check
    _
  $region23: #{point_vit_seg_forward.4} parent=0 // pred_check_branch
    %468 = sbr.rel (0) target = $region25
  $region24: #{point_vit_seg_forward.4} parent=0 // pred_region
    _
  $region25: #{point_vit_seg_forward.4} parent=0 // pred_fallthru
    _
  // Predicated region
  $region26: #{point_vit_seg_forward.4} parent=0 // pred_check
    _
  $region27: #{point_vit_seg_forward.4} parent=0 // pred_check_branch
    %470 = sbr.rel (0) target = $region29
  $region28: #{point_vit_seg_forward.4} parent=0 // pred_region
    _
  $region29: #{point_vit_seg_forward.4} parent=0 // pred_fallthru
    _

// kernel: point_vit_seg_forward.5
$region0: #{point_vit_seg_forward.5}
  #allocation0 [shape = 'u32[]', space=smem, size = 0x4, offset = 0x4, fixed_abs, tag = 'smem constant byte address 0x4 - core index']
  #allocation1 [shape = 'u32[144,128]{1,0:T(1,128)}', space=vmem, size = 0x12000, scoped, tag = 'internal scratch']
  %s0 = inlined_call_operand.vmem [shape: f32[128,38], index: 0, kind: input, shape index: {}]
  %s1 = inlined_call_operand.vmem [shape: f32[38,32], index: 1, kind: input, shape index: {}]
  %s2 = inlined_call_operand.vmem [shape: f32[1,32], index: 2, kind: input, shape index: {}]
  %s3 = inlined_call_operand.vmem [shape: f32[32,32], index: 3, kind: input, shape index: {}]
  %s4 = inlined_call_operand.vmem [shape: f32[1,32], index: 4, kind: input, shape index: {}]
  %s5 = inlined_call_operand.vmem [shape: f32[32,64], index: 5, kind: input, shape index: {}]
  %s6 = inlined_call_operand.vmem [shape: f32[1,64], index: 6, kind: input, shape index: {}]
  %s7 = inlined_call_operand.vmem [shape: f32[64,5], index: 7, kind: input, shape index: {}]
  %s8 = inlined_call_operand.vmem [shape: f32[1,5], index: 8, kind: input, shape index: {}]
  %s9 = inlined_call_operand.vmem [shape: f32[128,5], index: 9, kind: output, shape index: {}]
  %s10 = sld [smem:[#allocation0]]
  $region46: #{point_vit_seg_forward.5} parent=0
    _
  %s12 = ssub.s32 1, %s10
  %s13 = scalar_select 0, %s12, %s10
  // Predicated region
  $region2: #{point_vit_seg_forward.5} parent=0 // pred_check
    _
  $region3: #{point_vit_seg_forward.5} parent=0 // pred_check_branch
    %15 = sbr.rel (0) target = $region5
  $region4: #{point_vit_seg_forward.5} parent=0 // pred_region
    _
  $region5: #{point_vit_seg_forward.5} parent=0 // pred_fallthru
    _
  // Predicated region
  $region6: #{point_vit_seg_forward.5} parent=0 // pred_check
    _
  $region7: #{point_vit_seg_forward.5} parent=0 // pred_check_branch
    %17 = sbr.rel (0) target = $region9
  $region8: #{point_vit_seg_forward.5} parent=0 // pred_region
    _
  $region9: #{point_vit_seg_forward.5} parent=0 // pred_fallthru
    _
  // Predicated region
  $region10: #{point_vit_seg_forward.5} parent=0 // pred_check
    _
  $region11: #{point_vit_seg_forward.5} parent=0 // pred_check_branch
    %19 = sbr.rel (0) target = $region13
  $region12: #{point_vit_seg_forward.5} parent=0 // pred_region
    _
  $region13: #{point_vit_seg_forward.5} parent=0 // pred_fallthru
    _
  // Predicated region
  $region14: #{point_vit_seg_forward.5} parent=0 // pred_check
    _
  $region15: #{point_vit_seg_forward.5} parent=0 // pred_check_branch
    %21 = sbr.rel (0) target = $region17
  $region16: #{point_vit_seg_forward.5} parent=0 // pred_region
    _
  $region17: #{point_vit_seg_forward.5} parent=0 // pred_fallthru
    _
  // Predicated region
  $region18: #{point_vit_seg_forward.5} parent=0 // pred_check
    _
  $region19: #{point_vit_seg_forward.5} parent=0 // pred_check_branch
    %23 = sbr.rel (0) target = $region21
  $region20: #{point_vit_seg_forward.5} parent=0 // pred_region
    _
  $region21: #{point_vit_seg_forward.5} parent=0 // pred_fallthru
    _
  // Predicated region
  $region22: #{point_vit_seg_forward.5} parent=0 // pred_check
    _
  $region23: #{point_vit_seg_forward.5} parent=0 // pred_check_branch
    %25 = sbr.rel (0) target = $region25
  $region24: #{point_vit_seg_forward.5} parent=0 // pred_region
    _
  $region25: #{point_vit_seg_forward.5} parent=0 // pred_fallthru
    _
  // Predicated region
  $region26: #{point_vit_seg_forward.5} parent=0 // pred_check
    _
  $region27: #{point_vit_seg_forward.5} parent=0 // pred_check_branch
    %27 = sbr.rel (0) target = $region29
  $region28: #{point_vit_seg_forward.5} parent=0 // pred_region
    _
  $region29: #{point_vit_seg_forward.5} parent=0 // pred_fallthru
    _
  // Predicated region
  $region30: #{point_vit_seg_forward.5} parent=0 // pred_check
    _
  $region31: #{point_vit_seg_forward.5} parent=0 // pred_check_branch
    %29 = sbr.rel (0) target = $region33
  $region32: #{point_vit_seg_forward.5} parent=0 // pred_region
    _
  $region33: #{point_vit_seg_forward.5} parent=0 // pred_fallthru
    _
  // Predicated region
  $region34: #{point_vit_seg_forward.5} parent=0 // pred_check
    _
  $region35: #{point_vit_seg_forward.5} parent=0 // pred_check_branch
    %31 = sbr.rel (0) target = $region37
  $region36: #{point_vit_seg_forward.5} parent=0 // pred_region
    _
  $region37: #{point_vit_seg_forward.5} parent=0 // pred_fallthru
    _
  %v32 = vld [vmem:[%s0] sm:$0xff]
  %v33 = vld [vmem:[%s0 + $0x8] sm:$0xff]
  %v34 = vld [vmem:[%s0 + $0x10] sm:$0xff]
  %v35 = vld [vmem:[%s0 + $0x18] sm:$0xff]
  %v36 = vld [vmem:[%s0 + $0x20] sm:$0xff]
  %v37 = vld [vmem:[%s0 + $0x28] sm:$0xff]
  %v38 = vld [vmem:[%s0 + $0x30] sm:$0xff]
  %v39 = vld [vmem:[%s0 + $0x38] sm:$0xff]
  %v40 = vld [vmem:[%s0 + $0x40] sm:$0xff]
  %v41 = vld [vmem:[%s0 + $0x48] sm:$0xff]
  %v42 = vld [vmem:[%s0 + $0x50] sm:$0xff]
  %v43 = vld [vmem:[%s0 + $0x58] sm:$0xff]
  %v44 = vld [vmem:[%s0 + $0x60] sm:$0xff]
  %v45 = vld [vmem:[%s0 + $0x68] sm:$0xff]
  %v46 = vld [vmem:[%s0 + $0x70] sm:$0xff]
  %v47 = vld [vmem:[%s0 + $0x78] sm:$0xff]
  %v48 = vld [vmem:[%s1] sm:$0xff]
  %v49 = vld [vmem:[%s1 + $0x8] sm:$0xff]
  %v50 = vld [vmem:[%s1 + $0x10] sm:$0xff]
  %v51 = vld [vmem:[%s1 + $0x18] sm:$0xff]
  %v52 = vld [vmem:[%s1 + $0x20] sm:$0x3f]
  %v53 = vld [vmem:[%s2] sm:$0x1]
  %v55 = vlaneseq
  %v56 = vshrl.u32 %v55, 7
  %v57 = vsub.s32 0, %v56
  %v58 = vrot.slane %v53, %v57
  %vm60 = vcmask 310272
  %v62 = vsel %vm60, %v32, 0
  %v65 = vsel %vm60, %v33, 0
  %v68 = vsel %vm60, %v34, 0
  %v71 = vsel %vm60, %v35, 0
  %v74 = vsel %vm60, %v36, 0
  %v77 = vsel %vm60, %v37, 0
  %v80 = vsel %vm60, %v38, 0
  %v83 = vsel %vm60, %v39, 0
  %v86 = vsel %vm60, %v40, 0
  %v89 = vsel %vm60, %v41, 0
  %v92 = vsel %vm60, %v42, 0
  %v95 = vsel %vm60, %v43, 0
  %v98 = vsel %vm60, %v44, 0
  %v101 = vsel %vm60, %v45, 0
  %v104 = vsel %vm60, %v46, 0
  %v107 = vsel %vm60, %v47, 0
  %vm109 = vcmask 1045504
  %v111 = vsel %vm109, %v52, 0
  %113 = vmatprep.subr.mxu0 0.0
  %114 = vmatpush1.msra.mxu0 %v48
  %115 = vmatprep.subr.mxu0 0.0
  %116 = vmatpush1.msra.mxu0 %v49
  %117 = vmatprep.subr.mxu0 0.0
  %118 = vmatpush1.msra.mxu0 %v50
  %119 = vmatprep.subr.mxu0 0.0
  %120 = vmatpush1.msra.mxu0 %v51
  %121 = vmatprep.subr.mxu0 0.0
  %122 = vmatpush1.msra.mxu0 %v111
  %123 = vmatprep.subr.mxu0 0.0
  %124 = vmatpush1.msra.mxu0 0.0
  %125 = vmatprep.subr.mxu0 0.0
  %126 = vmatpush1.msra.mxu0 0.0
  %127 = vmatprep.subr.mxu0 0.0
  %128 = vmatpush1.msra.mxu0 0.0
  %129 = vmatprep.subr.mxu0 0.0
  %130 = vmatpush1.msra.mxu0 0.0
  %131 = vmatprep.subr.mxu0 0.0
  %132 = vmatpush1.msra.mxu0 0.0
  %133 = vmatprep.subr.mxu0 0.0
  %134 = vmatpush1.msra.mxu0 0.0
  %135 = vmatprep.subr.mxu0 0.0
  %136 = vmatpush1.msra.mxu0 0.0
  %137 = vmatprep.subr.mxu0 0.0
  %138 = vmatpush1.msra.mxu0 0.0
  %139 = vmatprep.subr.mxu0 0.0
  %140 = vmatpush1.msra.mxu0 0.0
  %141 = vmatprep.subr.mxu0 0.0
  %142 = vmatpush1.msra.mxu0 0.0
  %143 = vmatprep.subr.mxu0 0.0
  %144 = vmatpush1.msra.mxu0 0.0
  %145 = vmatprep.subr.mxu0 0.0
  %146 = vmatpush1.msra.mxu0 0.0
  %147 = vmatprep.subr.mxu0 0.0
  %148 = vmatpush1.msra.mxu0 0.0
  %149 = vmatprep.subr.mxu0 0.0
  %150 = vmatpush1.msra.mxu0 0.0
  %151 = vmatprep.subr.mxu0 0.0
  %152 = vmatpush1.msra.mxu0 0.0
  %153 = vmatprep.subr.mxu0 0.0
  %154 = vmatpush1.msra.mxu0 0.0
  %155 = vmatprep.subr.mxu0 0.0
  %156 = vmatpush1.msra.mxu0 0.0
  %157 = vmatprep.subr.mxu0 0.0
  %158 = vmatpush1.msra.mxu0 0.0
  %159 = vmatprep.subr.mxu0 0.0
  %160 = vmatpush1.msra.mxu0 0.0
  %161 = vmatprep.subr.mxu0 0.0
  %162 = vmatpush1.msra.mxu0 0.0
  %163 = vmatprep.subr.mxu0 0.0
  %164 = vmatpush1.msra.mxu0 0.0
  %165 = vmatprep.subr.mxu0 0.0
  %166 = vmatpush1.msra.mxu0 0.0
  %167 = vmatprep.subr.mxu0 0.0
  %168 = vmatpush1.msra.mxu0 0.0
  %169 = vmatprep.subr.mxu0 0.0
  %170 = vmatpush1.msra.mxu0 0.0
  %171 = vmatprep.subr.mxu0 0.0
  %172 = vmatpush1.msra.mxu0 0.0
  %173 = vmatprep.subr.mxu0 0.0
  %174 = vmatpush1.msra.mxu0 0.0
  %175 = vmatprep.subr.mxu0 0.0
  %176 = vmatpush1.msra.mxu0 0.0
  %177 = vmatprep.mubr.f32.mxu0 0.0
  %178 = vmatmul.mubr.f32.gmra.mrb[0].mxu0 %v62
  %v179 = vpop.f32.mrb[0].mxu0
  %v180 = vadd.f32 %v58, %v179
  %v181 = vpop.f32.mrb[0].mxu0
  %182 = vmatprep.mubr.f32.mxu0 0.0
  %183 = vmatmul.mubr.f32.gmra.mrb[0].mxu0 %v65
  %v184 = vpop.f32.mrb[0].mxu0
  %v185 = vadd.f32 %v58, %v184
  %v186 = vpop.f32.mrb[0].mxu0
  %187 = vmatprep.mubr.f32.mxu0 0.0
  %188 = vmatmul.mubr.f32.gmra.mrb[0].mxu0 %v68
  %v189 = vpop.f32.mrb[0].mxu0
  %v190 = vadd.f32 %v58, %v189
  %v191 = vpop.f32.mrb[0].mxu0
  %192 = vmatprep.mubr.f32.mxu0 0.0
  %193 = vmatmul.mubr.f32.gmra.mrb[0].mxu0 %v71
  %v194 = vpop.f32.mrb[0].mxu0
  %v195 = vadd.f32 %v58, %v194
  %v196 = vpop.f32.mrb[0].mxu0
  %197 = vmatprep.mubr.f32.mxu0 0.0
  %198 = vmatmul.mubr.f32.gmra.mrb[0].mxu0 %v74
  %v199 = vpop.f32.mrb[0].mxu0
  %v200 = vadd.f32 %v58, %v199
  %v201 = vpop.f32.mrb[0].mxu0
  %202 = vmatprep.mubr.f32.mxu0 0.0
  %203 = vmatmul.mubr.f32.gmra.mrb[0].mxu0 %v77
  %v204 = vpop.f32.mrb[0].mxu0
  %v205 = vadd.f32 %v58, %v204
  %v206 = vpop.f32.mrb[0].mxu0
  %207 = vmatprep.mubr.f32.mxu0 0.0
  %208 = vmatmul.mubr.f32.gmra.mrb[0].mxu0 %v80
  %v209 = vpop.f32.mrb[0].mxu0
  %v210 = vadd.f32 %v58, %v209
  %v211 = vpop.f32.mrb[0].mxu0
  %212 = vmatprep.mubr.f32.mxu0 0.0
  %213 = vmatmul.mubr.f32.gmra.mrb[0].mxu0 %v83
  %v214 = vpop.f32.mrb[0].mxu0
  %v215 = vadd.f32 %v58, %v214
  %v216 = vpop.f32.mrb[0].mxu0
  %217 = vmatprep.mubr.f32.mxu0 0.0
  %218 = vmatmul.mubr.f32.gmra.mrb[0].mxu0 %v86
  %v219 = vpop.f32.mrb[0].mxu0
  %v220 = vadd.f32 %v58, %v219
  %v221 = vpop.f32.mrb[0].mxu0
  %222 = vmatprep.mubr.f32.mxu0 0.0
  %223 = vmatmul.mubr.f32.gmra.mrb[0].mxu0 %v89
  %v224 = vpop.f32.mrb[0].mxu0
  %v225 = vadd.f32 %v58, %v224
  %v226 = vpop.f32.mrb[0].mxu0
  %227 = vmatprep.mubr.f32.mxu0 0.0
  %228 = vmatmul.mubr.f32.gmra.mrb[0].mxu0 %v92
  %v229 = vpop.f32.mrb[0].mxu0
  %v230 = vadd.f32 %v58, %v229
  %v231 = vpop.f32.mrb[0].mxu0
  %232 = vmatprep.mubr.f32.mxu0 0.0
  %233 = vmatmul.mubr.f32.gmra.mrb[0].mxu0 %v95
  %v234 = vpop.f32.mrb[0].mxu0
  %v235 = vadd.f32 %v58, %v234
  %v236 = vpop.f32.mrb[0].mxu0
  %237 = vmatprep.mubr.f32.mxu0 0.0
  %238 = vmatmul.mubr.f32.gmra.mrb[0].mxu0 %v98
  %v239 = vpop.f32.mrb[0].mxu0
  %v240 = vadd.f32 %v58, %v239
  %v241 = vpop.f32.mrb[0].mxu0
  %242 = vmatprep.mubr.f32.mxu0 0.0
  %243 = vmatmul.mubr.f32.gmra.mrb[0].mxu0 %v101
  %v244 = vpop.f32.mrb[0].mxu0
  %v245 = vadd.f32 %v58, %v244
  %v246 = vpop.f32.mrb[0].mxu0
  %247 = vmatprep.mubr.f32.mxu0 0.0
  %248 = vmatmul.mubr.f32.gmra.mrb[0].mxu0 %v104
  %v249 = vpop.f32.mrb[0].mxu0
  %v250 = vadd.f32 %v58, %v249
  %v251 = vpop.f32.mrb[0].mxu0
  %252 = vmatprep.mubr.f32.mxu0 0.0
  %253 = vmatmul.mubr.f32.gmra.mrb[0].mxu0 %v107
  %v254 = vpop.f32.mrb[0].mxu0
  %v255 = vadd.f32 %v58, %v254
  %v256 = vpop.f32.mrb[0].mxu0
  %257 = vdwg.mxu0
  %v258 = vmul.f32 %v180, %v180
  %v259 = vmul.f32 %v185, %v185
  %v260 = vmul.f32 %v190, %v190
  %v261 = vmul.f32 %v195, %v195
  %v262 = vmul.f32 %v200, %v200
  %v263 = vmul.f32 %v205, %v205
  %v264 = vmul.f32 %v210, %v210
  %v265 = vmul.f32 %v215, %v215
  %v266 = vmul.f32 %v220, %v220
  %v267 = vmul.f32 %v225, %v225
  %v268 = vmul.f32 %v230, %v230
  %v269 = vmul.f32 %v235, %v235
  %v270 = vmul.f32 %v240, %v240
  %v271 = vmul.f32 %v245, %v245
  %v272 = vmul.f32 %v250, %v250
  %v273 = vmul.f32 %v255, %v255
  %v274 = vmul.f32 %v180, %v258
  %v275 = vmul.f32 %v185, %v259
  %v276 = vmul.f32 %v190, %v260
  %v277 = vmul.f32 %v195, %v261
  %v278 = vmul.f32 %v200, %v262
  %v279 = vmul.f32 %v205, %v263
  %v280 = vmul.f32 %v210, %v264
  %v281 = vmul.f32 %v215, %v265
  %v282 = vmul.f32 %v220, %v266
  %v283 = vmul.f32 %v225, %v267
  %v284 = vmul.f32 %v230, %v268
  %v285 = vmul.f32 %v235, %v269
  %v286 = vmul.f32 %v240, %v270
  %v287 = vmul.f32 %v245, %v271
  %v288 = vmul.f32 %v250, %v272
  %v289 = vmul.f32 %v255, %v273
  %v290 = vmul.f32 %v274, 0.044715
  %v291 = vmul.f32 %v275, 0.044715
  %v292 = vmul.f32 %v276, 0.044715
  %v293 = vmul.f32 %v277, 0.044715
  %v294 = vmul.f32 %v278, 0.044715
  %v295 = vmul.f32 %v279, 0.044715
  %v296 = vmul.f32 %v280, 0.044715
  %v297 = vmul.f32 %v281, 0.044715
  %v298 = vmul.f32 %v282, 0.044715
  %v299 = vmul.f32 %v283, 0.044715
  %v300 = vmul.f32 %v284, 0.044715
  %v301 = vmul.f32 %v285, 0.044715
  %v302 = vmul.f32 %v286, 0.044715
  %v303 = vmul.f32 %v287, 0.044715
  %v304 = vmul.f32 %v288, 0.044715
  %v305 = vmul.f32 %v289, 0.044715
  %v306 = vadd.f32 %v180, %v290
  %v307 = vadd.f32 %v185, %v291
  %v308 = vadd.f32 %v190, %v292
  %v309 = vadd.f32 %v195, %v293
  %v310 = vadd.f32 %v200, %v294
  %v311 = vadd.f32 %v205, %v295
  %v312 = vadd.f32 %v210, %v296
  %v313 = vadd.f32 %v215, %v297
  %v314 = vadd.f32 %v220, %v298
  %v315 = vadd.f32 %v225, %v299
  %v316 = vadd.f32 %v230, %v300
  %v317 = vadd.f32 %v235, %v301
  %v318 = vadd.f32 %v240, %v302
  %v319 = vadd.f32 %v245, %v303
  %v320 = vadd.f32 %v250, %v304
  %v321 = vadd.f32 %v255, %v305
  %v322 = vmul.f32 %v306, 0.7978846
  %v323 = vmul.f32 %v307, 0.7978846
  %v324 = vmul.f32 %v308, 0.7978846
  %v325 = vmul.f32 %v309, 0.7978846
  %v326 = vmul.f32 %v310, 0.7978846
  %v327 = vmul.f32 %v311, 0.7978846
  %v328 = vmul.f32 %v312, 0.7978846
  %v329 = vmul.f32 %v313, 0.7978846
  %v330 = vmul.f32 %v314, 0.7978846
  %v331 = vmul.f32 %v315, 0.7978846
  %v332 = vmul.f32 %v316, 0.7978846
  %v333 = vmul.f32 %v317, 0.7978846
  %v334 = vmul.f32 %v318, 0.7978846
  %v335 = vmul.f32 %v319, 0.7978846
  %v336 = vmul.f32 %v320, 0.7978846
  %v337 = vmul.f32 %v321, 0.7978846
  %v338 = vtanh.pop %v322
  %v339 = vtanh.pop %v323
  %v340 = vtanh.pop %v324
  %v341 = vtanh.pop %v325
  %v342 = vtanh.pop %v326
  %v343 = vtanh.pop %v327
  %v344 = vtanh.pop %v328
  %v345 = vtanh.pop %v329
  %v346 = vtanh.pop %v330
  %v347 = vtanh.pop %v331
  %v348 = vtanh.pop %v332
  %v349 = vtanh.pop %v333
  %v350 = vtanh.pop %v334
  %v351 = vtanh.pop %v335
  %v352 = vtanh.pop %v336
  %v353 = vtanh.pop %v337
  %v354 = vadd.f32 %v338, 1.0
  %v355 = vadd.f32 %v339, 1.0
  %v356 = vadd.f32 %v340, 1.0
  %v357 = vadd.f32 %v341, 1.0
  %v358 = vadd.f32 %v342, 1.0
  %v359 = vadd.f32 %v343, 1.0
  %v360 = vadd.f32 %v344, 1.0
  %v361 = vadd.f32 %v345, 1.0
  %v362 = vadd.f32 %v346, 1.0
  %v363 = vadd.f32 %v347, 1.0
  %v364 = vadd.f32 %v348, 1.0
  %v365 = vadd.f32 %v349, 1.0
  %v366 = vadd.f32 %v350, 1.0
  %v367 = vadd.f32 %v351, 1.0
  %v368 = vadd.f32 %v352, 1.0
  %v369 = vadd.f32 %v353, 1.0
  %v370 = vmul.f32 %v354, 0.5
  %v371 = vmul.f32 %v355, 0.5
  %v372 = vmul.f32 %v356, 0.5
  %v373 = vmul.f32 %v357, 0.5
  %v374 = vmul.f32 %v358, 0.5
  %v375 = vmul.f32 %v359, 0.5
  %v376 = vmul.f32 %v360, 0.5
  %v377 = vmul.f32 %v361, 0.5
  %v378 = vmul.f32 %v362, 0.5
  %v379 = vmul.f32 %v363, 0.5
  %v380 = vmul.f32 %v364, 0.5
  %v381 = vmul.f32 %v365, 0.5
  %v382 = vmul.f32 %v366, 0.5
  %v383 = vmul.f32 %v367, 0.5
  %v384 = vmul.f32 %v368, 0.5
  %v385 = vmul.f32 %v369, 0.5
  %v386 = vmul.f32 %v180, %v370
  %v387 = vmul.f32 %v185, %v371
  %v388 = vmul.f32 %v190, %v372
  %v389 = vmul.f32 %v195, %v373
  %v390 = vmul.f32 %v200, %v374
  %v391 = vmul.f32 %v205, %v375
  %v392 = vmul.f32 %v210, %v376
  %v393 = vmul.f32 %v215, %v377
  %v394 = vmul.f32 %v220, %v378
  %v395 = vmul.f32 %v225, %v379
  %v396 = vmul.f32 %v230, %v380
  %v397 = vmul.f32 %v235, %v381
  %v398 = vmul.f32 %v240, %v382
  %v399 = vmul.f32 %v245, %v383
  %v400 = vmul.f32 %v250, %v384
  %v401 = vmul.f32 %v255, %v385
  %v402 = vld [vmem:[%s3] sm:$0xff]
  %v403 = vld [vmem:[%s3 + $0x8] sm:$0xff]
  %v404 = vld [vmem:[%s3 + $0x10] sm:$0xff]
  %v405 = vld [vmem:[%s3 + $0x18] sm:$0xff]
  %v406 = vld [vmem:[%s4] sm:$0x1]
  %v408 = vlaneseq
  %v409 = vshrl.u32 %v408, 7
  %v410 = vsub.s32 0, %v409
  %v411 = vrot.slane %v406, %v410
  %vm413 = vcmask 261120
  %v415 = vsel %vm413, %v386, 0
  %v418 = vsel %vm413, %v387, 0
  %v421 = vsel %vm413, %v388, 0
  %v424 = vsel %vm413, %v389, 0
  %v427 = vsel %vm413, %v390, 0
  %v430 = vsel %vm413, %v391, 0
  %v433 = vsel %vm413, %v392, 0
  %v436 = vsel %vm413, %v393, 0
  %v439 = vsel %vm413, %v394, 0
  %v442 = vsel %vm413, %v395, 0
  %v445 = vsel %vm413, %v396, 0
  %v448 = vsel %vm413, %v397, 0
  %v451 = vsel %vm413, %v398, 0
  %v454 = vsel %vm413, %v399, 0
  %v457 = vsel %vm413, %v400, 0
  %v460 = vsel %vm413, %v401, 0
  %462 = vmatprep.subr.mxu0 0.0
  %463 = vmatpush1.msra.mxu0 %v402
  %464 = vmatprep.subr.mxu0 0.0
  %465 = vmatpush1.msra.mxu0 %v403
  %466 = vmatprep.subr.mxu0 0.0
  %467 = vmatpush1.msra.mxu0 %v404
  %468 = vmatprep.subr.mxu0 0.0
  %469 = vmatpush1.msra.mxu0 %v405
  %470 = vmatprep.subr.mxu0 0.0
  %471 = vmatpush1.msra.mxu0 0.0
  %472 = vmatprep.subr.mxu0 0.0
  %473 = vmatpush1.msra.mxu0 0.0
  %474 = vmatprep.subr.mxu0 0.0
  %475 = vmatpush1.msra.mxu0 0.0
  %476 = vmatprep.subr.mxu0 0.0
  %477 = vmatpush1.msra.mxu0 0.0
  %478 = vmatprep.subr.mxu0 0.0
  %479 = vmatpush1.msra.mxu0 0.0
  %480 = vmatprep.subr.mxu0 0.0
  %481 = vmatpush1.msra.mxu0 0.0
  %482 = vmatprep.subr.mxu0 0.0
  %483 = vmatpush1.msra.mxu0 0.0
  %484 = vmatprep.subr.mxu0 0.0
  %485 = vmatpush1.msra.mxu0 0.0
  %486 = vmatprep.subr.mxu0 0.0
  %487 = vmatpush1.msra.mxu0 0.0
  %488 = vmatprep.subr.mxu0 0.0
  %489 = vmatpush1.msra.mxu0 0.0
  %490 = vmatprep.subr.mxu0 0.0
  %491 = vmatpush1.msra.mxu0 0.0
  %492 = vmatprep.subr.mxu0 0.0
  %493 = vmatpush1.msra.mxu0 0.0
  %494 = vmatprep.subr.mxu0 0.0
  %495 = vmatpush1.msra.mxu0 0.0
  %496 = vmatprep.subr.mxu0 0.0
  %497 = vmatpush1.msra.mxu0 0.0
  %498 = vmatprep.subr.mxu0 0.0
  %499 = vmatpush1.msra.mxu0 0.0
  %500 = vmatprep.subr.mxu0 0.0
  %501 = vmatpush1.msra.mxu0 0.0
  %502 = vmatprep.subr.mxu0 0.0
  %503 = vmatpush1.msra.mxu0 0.0
  %504 = vmatprep.subr.mxu0 0.0
  %505 = vmatpush1.msra.mxu0 0.0
  %506 = vmatprep.subr.mxu0 0.0
  %507 = vmatpush1.msra.mxu0 0.0
  %508 = vmatprep.subr.mxu0 0.0
  %509 = vmatpush1.msra.mxu0 0.0
  %510 = vmatprep.subr.mxu0 0.0
  %511 = vmatpush1.msra.mxu0 0.0
  %512 = vmatprep.subr.mxu0 0.0
  %513 = vmatpush1.msra.mxu0 0.0
  %514 = vmatprep.subr.mxu0 0.0
  %515 = vmatpush1.msra.mxu0 0.0
  %516 = vmatprep.subr.mxu0 0.0
  %517 = vmatpush1.msra.mxu0 0.0
  %518 = vmatprep.subr.mxu0 0.0
  %519 = vmatpush1.msra.mxu0 0.0
  %520 = vmatprep.subr.mxu0 0.0
  %521 = vmatpush1.msra.mxu0 0.0
  %522 = vmatprep.subr.mxu0 0.0
  %523 = vmatpush1.msra.mxu0 0.0
  %524 = vmatprep.subr.mxu0 0.0
  %525 = vmatpush1.msra.mxu0 0.0
  %526 = vmatprep.mubr.f32.mxu0 0.0
  %527 = vmatmul.mubr.f32.gmra.mrb[0].mxu0 %v415
  %v528 = vpop.f32.mrb[0].mxu0
  %v529 = vadd.f32 %v411, %v528
  %v530 = vpop.f32.mrb[0].mxu0
  %531 = vmatprep.mubr.f32.mxu0 0.0
  %532 = vmatmul.mubr.f32.gmra.mrb[0].mxu0 %v418
  %v533 = vpop.f32.mrb[0].mxu0
  %v534 = vadd.f32 %v411, %v533
  %v535 = vpop.f32.mrb[0].mxu0
  %536 = vmatprep.mubr.f32.mxu0 0.0
  %537 = vmatmul.mubr.f32.gmra.mrb[0].mxu0 %v421
  %v538 = vpop.f32.mrb[0].mxu0
  %v539 = vadd.f32 %v411, %v538
  %v540 = vpop.f32.mrb[0].mxu0
  %541 = vmatprep.mubr.f32.mxu0 0.0
  %542 = vmatmul.mubr.f32.gmra.mrb[0].mxu0 %v424
  %v543 = vpop.f32.mrb[0].mxu0
  %v544 = vadd.f32 %v411, %v543
  %v545 = vpop.f32.mrb[0].mxu0
  %546 = vmatprep.mubr.f32.mxu0 0.0
  %547 = vmatmul.mubr.f32.gmra.mrb[0].mxu0 %v427
  %v548 = vpop.f32.mrb[0].mxu0
  %v549 = vadd.f32 %v411, %v548
  %v550 = vpop.f32.mrb[0].mxu0
  %551 = vmatprep.mubr.f32.mxu0 0.0
  %552 = vmatmul.mubr.f32.gmra.mrb[0].mxu0 %v430
  %v553 = vpop.f32.mrb[0].mxu0
  %v554 = vadd.f32 %v411, %v553
  %v555 = vpop.f32.mrb[0].mxu0
  %556 = vmatprep.mubr.f32.mxu0 0.0
  %557 = vmatmul.mubr.f32.gmra.mrb[0].mxu0 %v433
  %v558 = vpop.f32.mrb[0].mxu0
  %v559 = vadd.f32 %v411, %v558
  %v560 = vpop.f32.mrb[0].mxu0
  %561 = vmatprep.mubr.f32.mxu0 0.0
  %562 = vmatmul.mubr.f32.gmra.mrb[0].mxu0 %v436
  %v563 = vpop.f32.mrb[0].mxu0
  %v564 = vadd.f32 %v411, %v563
  %v565 = vpop.f32.mrb[0].mxu0
  %566 = vmatprep.mubr.f32.mxu0 0.0
  %567 = vmatmul.mubr.f32.gmra.mrb[0].mxu0 %v439
  %v568 = vpop.f32.mrb[0].mxu0
  %v569 = vadd.f32 %v411, %v568
  %v570 = vpop.f32.mrb[0].mxu0
  %571 = vmatprep.mubr.f32.mxu0 0.0
  %572 = vmatmul.mubr.f32.gmra.mrb[0].mxu0 %v442
  %v573 = vpop.f32.mrb[0].mxu0
  %v574 = vadd.f32 %v411, %v573
  %v575 = vpop.f32.mrb[0].mxu0
  %576 = vmatprep.mubr.f32.mxu0 0.0
  %577 = vmatmul.mubr.f32.gmra.mrb[0].mxu0 %v445
  %v578 = vpop.f32.mrb[0].mxu0
  %v579 = vadd.f32 %v411, %v578
  %v580 = vpop.f32.mrb[0].mxu0
  %581 = vmatprep.mubr.f32.mxu0 0.0
  %582 = vmatmul.mubr.f32.gmra.mrb[0].mxu0 %v448
  %v583 = vpop.f32.mrb[0].mxu0
  %v584 = vadd.f32 %v411, %v583
  %v585 = vpop.f32.mrb[0].mxu0
  %586 = vmatprep.mubr.f32.mxu0 0.0
  %587 = vmatmul.mubr.f32.gmra.mrb[0].mxu0 %v451
  %v588 = vpop.f32.mrb[0].mxu0
  %v589 = vadd.f32 %v411, %v588
  %v590 = vpop.f32.mrb[0].mxu0
  %591 = vmatprep.mubr.f32.mxu0 0.0
  %592 = vmatmul.mubr.f32.gmra.mrb[0].mxu0 %v454
  %v593 = vpop.f32.mrb[0].mxu0
  %v594 = vadd.f32 %v411, %v593
  %v595 = vpop.f32.mrb[0].mxu0
  %596 = vmatprep.mubr.f32.mxu0 0.0
  %597 = vmatmul.mubr.f32.gmra.mrb[0].mxu0 %v457
  %v598 = vpop.f32.mrb[0].mxu0
  %v599 = vadd.f32 %v411, %v598
  %v600 = vpop.f32.mrb[0].mxu0
  %601 = vmatprep.mubr.f32.mxu0 0.0
  %602 = vmatmul.mubr.f32.gmra.mrb[0].mxu0 %v460
  %v603 = vpop.f32.mrb[0].mxu0
  %v604 = vadd.f32 %v411, %v603
  %v605 = vpop.f32.mrb[0].mxu0
  %606 = vdwg.mxu0
  %v607 = vmul.f32 %v529, %v529
  %v608 = vmul.f32 %v534, %v534
  %v609 = vmul.f32 %v539, %v539
  %v610 = vmul.f32 %v544, %v544
  %v611 = vmul.f32 %v549, %v549
  %v612 = vmul.f32 %v554, %v554
  %v613 = vmul.f32 %v559, %v559
  %v614 = vmul.f32 %v564, %v564
  %v615 = vmul.f32 %v569, %v569
  %v616 = vmul.f32 %v574, %v574
  %v617 = vmul.f32 %v579, %v579
  %v618 = vmul.f32 %v584, %v584
  %v619 = vmul.f32 %v589, %v589
  %v620 = vmul.f32 %v594, %v594
  %v621 = vmul.f32 %v599, %v599
  %v622 = vmul.f32 %v604, %v604
  %v623 = vmul.f32 %v529, %v607
  %v624 = vmul.f32 %v534, %v608
  %v625 = vmul.f32 %v539, %v609
  %v626 = vmul.f32 %v544, %v610
  %v627 = vmul.f32 %v549, %v611
  %v628 = vmul.f32 %v554, %v612
  %v629 = vmul.f32 %v559, %v613
  %v630 = vmul.f32 %v564, %v614
  %v631 = vmul.f32 %v569, %v615
  %v632 = vmul.f32 %v574, %v616
  %v633 = vmul.f32 %v579, %v617
  %v634 = vmul.f32 %v584, %v618
  %v635 = vmul.f32 %v589, %v619
  %v636 = vmul.f32 %v594, %v620
  %v637 = vmul.f32 %v599, %v621
  %v638 = vmul.f32 %v604, %v622
  %v639 = vmul.f32 %v623, 0.044715
  %v640 = vmul.f32 %v624, 0.044715
  %v641 = vmul.f32 %v625, 0.044715
  %v642 = vmul.f32 %v626, 0.044715
  %v643 = vmul.f32 %v627, 0.044715
  %v644 = vmul.f32 %v628, 0.044715
  %v645 = vmul.f32 %v629, 0.044715
  %v646 = vmul.f32 %v630, 0.044715
  %v647 = vmul.f32 %v631, 0.044715
  %v648 = vmul.f32 %v632, 0.044715
  %v649 = vmul.f32 %v633, 0.044715
  %v650 = vmul.f32 %v634, 0.044715
  %v651 = vmul.f32 %v635, 0.044715
  %v652 = vmul.f32 %v636, 0.044715
  %v653 = vmul.f32 %v637, 0.044715
  %v654 = vmul.f32 %v638, 0.044715
  %v655 = vadd.f32 %v529, %v639
  %v656 = vadd.f32 %v534, %v640
  %v657 = vadd.f32 %v539, %v641
  %v658 = vadd.f32 %v544, %v642
  %v659 = vadd.f32 %v549, %v643
  %v660 = vadd.f32 %v554, %v644
  %v661 = vadd.f32 %v559, %v645
  %v662 = vadd.f32 %v564, %v646
  %v663 = vadd.f32 %v569, %v647
  %v664 = vadd.f32 %v574, %v648
  %v665 = vadd.f32 %v579, %v649
  %v666 = vadd.f32 %v584, %v650
  %v667 = vadd.f32 %v589, %v651
  %v668 = vadd.f32 %v594, %v652
  %v669 = vadd.f32 %v599, %v653
  %v670 = vadd.f32 %v604, %v654
  %v671 = vmul.f32 %v655, 0.7978846
  %v672 = vmul.f32 %v656, 0.7978846
  %v673 = vmul.f32 %v657, 0.7978846
  %v674 = vmul.f32 %v658, 0.7978846
  %v675 = vmul.f32 %v659, 0.7978846
  %v676 = vmul.f32 %v660, 0.7978846
  %v677 = vmul.f32 %v661, 0.7978846
  %v678 = vmul.f32 %v662, 0.7978846
  %v679 = vmul.f32 %v663, 0.7978846
  %v680 = vmul.f32 %v664, 0.7978846
  %v681 = vmul.f32 %v665, 0.7978846
  %v682 = vmul.f32 %v666, 0.7978846
  %v683 = vmul.f32 %v667, 0.7978846
  %v684 = vmul.f32 %v668, 0.7978846
  %v685 = vmul.f32 %v669, 0.7978846
  %v686 = vmul.f32 %v670, 0.7978846
  %v687 = vtanh.pop %v671
  %v688 = vtanh.pop %v672
  %v689 = vtanh.pop %v673
  %v690 = vtanh.pop %v674
  %v691 = vtanh.pop %v675
  %v692 = vtanh.pop %v676
  %v693 = vtanh.pop %v677
  %v694 = vtanh.pop %v678
  %v695 = vtanh.pop %v679
  %v696 = vtanh.pop %v680
  %v697 = vtanh.pop %v681
  %v698 = vtanh.pop %v682
  %v699 = vtanh.pop %v683
  %v700 = vtanh.pop %v684
  %v701 = vtanh.pop %v685
  %v702 = vtanh.pop %v686
  %v703 = vadd.f32 %v687, 1.0
  %v704 = vadd.f32 %v688, 1.0
  %v705 = vadd.f32 %v689, 1.0
  %v706 = vadd.f32 %v690, 1.0
  %v707 = vadd.f32 %v691, 1.0
  %v708 = vadd.f32 %v692, 1.0
  %v709 = vadd.f32 %v693, 1.0
  %v710 = vadd.f32 %v694, 1.0
  %v711 = vadd.f32 %v695, 1.0
  %v712 = vadd.f32 %v696, 1.0
  %v713 = vadd.f32 %v697, 1.0
  %v714 = vadd.f32 %v698, 1.0
  %v715 = vadd.f32 %v699, 1.0
  %v716 = vadd.f32 %v700, 1.0
  %v717 = vadd.f32 %v701, 1.0
  %v718 = vadd.f32 %v702, 1.0
  %v719 = vmul.f32 %v703, 0.5
  %v720 = vmul.f32 %v704, 0.5
  %v721 = vmul.f32 %v705, 0.5
  %v722 = vmul.f32 %v706, 0.5
  %v723 = vmul.f32 %v707, 0.5
  %v724 = vmul.f32 %v708, 0.5
  %v725 = vmul.f32 %v709, 0.5
  %v726 = vmul.f32 %v710, 0.5
  %v727 = vmul.f32 %v711, 0.5
  %v728 = vmul.f32 %v712, 0.5
  %v729 = vmul.f32 %v713, 0.5
  %v730 = vmul.f32 %v714, 0.5
  %v731 = vmul.f32 %v715, 0.5
  %v732 = vmul.f32 %v716, 0.5
  %v733 = vmul.f32 %v717, 0.5
  %v734 = vmul.f32 %v718, 0.5
  %v735 = vmul.f32 %v529, %v719
  %v736 = vmul.f32 %v534, %v720
  %v737 = vmul.f32 %v539, %v721
  %v738 = vmul.f32 %v544, %v722
  %v739 = vmul.f32 %v549, %v723
  %v740 = vmul.f32 %v554, %v724
  %v741 = vmul.f32 %v559, %v725
  %v742 = vmul.f32 %v564, %v726
  %v743 = vmul.f32 %v569, %v727
  %v744 = vmul.f32 %v574, %v728
  %v745 = vmul.f32 %v579, %v729
  %v746 = vmul.f32 %v584, %v730
  %v747 = vmul.f32 %v589, %v731
  %v748 = vmul.f32 %v594, %v732
  %v749 = vmul.f32 %v599, %v733
  %v750 = vmul.f32 %v604, %v734
  %v751 = vld [vmem:[%s5] sm:$0xff]
  %v752 = vld [vmem:[%s5 + $0x8] sm:$0xff]
  %v753 = vld [vmem:[%s5 + $0x10] sm:$0xff]
  %v754 = vld [vmem:[%s5 + $0x18] sm:$0xff]
  %v755 = vld [vmem:[%s6] sm:$0x1]
  %v757 = vlaneseq
  %v758 = vshrl.u32 %v757, 7
  %v759 = vsub.s32 0, %v758
  %v760 = vrot.slane %v755, %v759
  %v763 = vsel %vm413, %v735, 0
  %v766 = vsel %vm413, %v736, 0
  %v769 = vsel %vm413, %v737, 0
  %v772 = vsel %vm413, %v738, 0
  %v775 = vsel %vm413, %v739, 0
  %v778 = vsel %vm413, %v740, 0
  %v781 = vsel %vm413, %v741, 0
  %v784 = vsel %vm413, %v742, 0
  %v787 = vsel %vm413, %v743, 0
  %v790 = vsel %vm413, %v744, 0
  %v793 = vsel %vm413, %v745, 0
  %v796 = vsel %vm413, %v746, 0
  %v799 = vsel %vm413, %v747, 0
  %v802 = vsel %vm413, %v748, 0
  %v805 = vsel %vm413, %v749, 0
  %v808 = vsel %vm413, %v750, 0
  %810 = vmatprep.subr.mxu0 0.0
  %811 = vmatpush1.msra.mxu0 %v751
  %812 = vmatprep.subr.mxu0 0.0
  %813 = vmatpush1.msra.mxu0 %v752
  %814 = vmatprep.subr.mxu0 0.0
  %815 = vmatpush1.msra.mxu0 %v753
  %816 = vmatprep.subr.mxu0 0.0
  %817 = vmatpush1.msra.mxu0 %v754
  %818 = vmatprep.subr.mxu0 0.0
  %819 = vmatpush1.msra.mxu0 0.0
  %820 = vmatprep.subr.mxu0 0.0
  %821 = vmatpush1.msra.mxu0 0.0
  %822 = vmatprep.subr.mxu0 0.0
  %823 = vmatpush1.msra.mxu0 0.0
  %824 = vmatprep.subr.mxu0 0.0
  %825 = vmatpush1.msra.mxu0 0.0
  %826 = vmatprep.subr.mxu0 0.0
  %827 = vmatpush1.msra.mxu0 0.0
  %828 = vmatprep.subr.mxu0 0.0
  %829 = vmatpush1.msra.mxu0 0.0
  %830 = vmatprep.subr.mxu0 0.0
  %831 = vmatpush1.msra.mxu0 0.0
  %832 = vmatprep.subr.mxu0 0.0
  %833 = vmatpush1.msra.mxu0 0.0
  %834 = vmatprep.subr.mxu0 0.0
  %835 = vmatpush1.msra.mxu0 0.0
  %836 = vmatprep.subr.mxu0 0.0
  %837 = vmatpush1.msra.mxu0 0.0
  %838 = vmatprep.subr.mxu0 0.0
  %839 = vmatpush1.msra.mxu0 0.0
  %840 = vmatprep.subr.mxu0 0.0
  %841 = vmatpush1.msra.mxu0 0.0
  %842 = vmatprep.subr.mxu0 0.0
  %843 = vmatpush1.msra.mxu0 0.0
  %844 = vmatprep.subr.mxu0 0.0
  %845 = vmatpush1.msra.mxu0 0.0
  %846 = vmatprep.subr.mxu0 0.0
  %847 = vmatpush1.msra.mxu0 0.0
  %848 = vmatprep.subr.mxu0 0.0
  %849 = vmatpush1.msra.mxu0 0.0
  %850 = vmatprep.subr.mxu0 0.0
  %851 = vmatpush1.msra.mxu0 0.0
  %852 = vmatprep.subr.mxu0 0.0
  %853 = vmatpush1.msra.mxu0 0.0
  %854 = vmatprep.subr.mxu0 0.0
  %855 = vmatpush1.msra.mxu0 0.0
  %856 = vmatprep.subr.mxu0 0.0
  %857 = vmatpush1.msra.mxu0 0.0
  %858 = vmatprep.subr.mxu0 0.0
  %859 = vmatpush1.msra.mxu0 0.0
  %860 = vmatprep.subr.mxu0 0.0
  %861 = vmatpush1.msra.mxu0 0.0
  %862 = vmatprep.subr.mxu0 0.0
  %863 = vmatpush1.msra.mxu0 0.0
  %864 = vmatprep.subr.mxu0 0.0
  %865 = vmatpush1.msra.mxu0 0.0
  %866 = vmatprep.subr.mxu0 0.0
  %867 = vmatpush1.msra.mxu0 0.0
  %868 = vmatprep.subr.mxu0 0.0
  %869 = vmatpush1.msra.mxu0 0.0
  %870 = vmatprep.subr.mxu0 0.0
  %871 = vmatpush1.msra.mxu0 0.0
  %872 = vmatprep.subr.mxu0 0.0
  %873 = vmatpush1.msra.mxu0 0.0
  %874 = vmatprep.mubr.f32.mxu0 0.0
  %875 = vmatmul.mubr.f32.gmra.mrb[0].mxu0 %v763
  %v876 = vpop.f32.mrb[0].mxu0
  %v877 = vadd.f32 %v760, %v876
  %v878 = vpop.f32.mrb[0].mxu0
  %879 = vmatprep.mubr.f32.mxu0 0.0
  %880 = vmatmul.mubr.f32.gmra.mrb[0].mxu0 %v766
  %v881 = vpop.f32.mrb[0].mxu0
  %v882 = vadd.f32 %v760, %v881
  %v883 = vpop.f32.mrb[0].mxu0
  %884 = vmatprep.mubr.f32.mxu0 0.0
  %885 = vmatmul.mubr.f32.gmra.mrb[0].mxu0 %v769
  %v886 = vpop.f32.mrb[0].mxu0
  %v887 = vadd.f32 %v760, %v886
  %v888 = vpop.f32.mrb[0].mxu0
  %889 = vmatprep.mubr.f32.mxu0 0.0
  %890 = vmatmul.mubr.f32.gmra.mrb[0].mxu0 %v772
  %v891 = vpop.f32.mrb[0].mxu0
  %v892 = vadd.f32 %v760, %v891
  %v893 = vpop.f32.mrb[0].mxu0
  %894 = vmatprep.mubr.f32.mxu0 0.0
  %895 = vmatmul.mubr.f32.gmra.mrb[0].mxu0 %v775
  %v896 = vpop.f32.mrb[0].mxu0
  %v897 = vadd.f32 %v760, %v896
  %v898 = vpop.f32.mrb[0].mxu0
  %899 = vmatprep.mubr.f32.mxu0 0.0
  %900 = vmatmul.mubr.f32.gmra.mrb[0].mxu0 %v778
  %v901 = vpop.f32.mrb[0].mxu0
  %v902 = vadd.f32 %v760, %v901
  %v903 = vpop.f32.mrb[0].mxu0
  %904 = vmatprep.mubr.f32.mxu0 0.0
  %905 = vmatmul.mubr.f32.gmra.mrb[0].mxu0 %v781
  %v906 = vpop.f32.mrb[0].mxu0
  %v907 = vadd.f32 %v760, %v906
  %v908 = vpop.f32.mrb[0].mxu0
  %909 = vmatprep.mubr.f32.mxu0 0.0
  %910 = vmatmul.mubr.f32.gmra.mrb[0].mxu0 %v784
  %v911 = vpop.f32.mrb[0].mxu0
  %v912 = vadd.f32 %v760, %v911
  %v913 = vpop.f32.mrb[0].mxu0
  %914 = vmatprep.mubr.f32.mxu0 0.0
  %915 = vmatmul.mubr.f32.gmra.mrb[0].mxu0 %v787
  %v916 = vpop.f32.mrb[0].mxu0
  %v917 = vadd.f32 %v760, %v916
  %v918 = vpop.f32.mrb[0].mxu0
  %919 = vmatprep.mubr.f32.mxu0 0.0
  %920 = vmatmul.mubr.f32.gmra.mrb[0].mxu0 %v790
  %v921 = vpop.f32.mrb[0].mxu0
  %v922 = vadd.f32 %v760, %v921
  %v923 = vpop.f32.mrb[0].mxu0
  %924 = vmatprep.mubr.f32.mxu0 0.0
  %925 = vmatmul.mubr.f32.gmra.mrb[0].mxu0 %v793
  %v926 = vpop.f32.mrb[0].mxu0
  %v927 = vadd.f32 %v760, %v926
  %v928 = vpop.f32.mrb[0].mxu0
  %929 = vmatprep.mubr.f32.mxu0 0.0
  %930 = vmatmul.mubr.f32.gmra.mrb[0].mxu0 %v796
  %v931 = vpop.f32.mrb[0].mxu0
  %v932 = vadd.f32 %v760, %v931
  %v933 = vpop.f32.mrb[0].mxu0
  %934 = vmatprep.mubr.f32.mxu0 0.0
  %935 = vmatmul.mubr.f32.gmra.mrb[0].mxu0 %v799
  %v936 = vpop.f32.mrb[0].mxu0
  %v937 = vadd.f32 %v760, %v936
  %v938 = vpop.f32.mrb[0].mxu0
  %939 = vmatprep.mubr.f32.mxu0 0.0
  %940 = vmatmul.mubr.f32.gmra.mrb[0].mxu0 %v802
  %v941 = vpop.f32.mrb[0].mxu0
  %v942 = vadd.f32 %v760, %v941
  %v943 = vpop.f32.mrb[0].mxu0
  %944 = vmatprep.mubr.f32.mxu0 0.0
  %945 = vmatmul.mubr.f32.gmra.mrb[0].mxu0 %v805
  %v946 = vpop.f32.mrb[0].mxu0
  %v947 = vadd.f32 %v760, %v946
  %v948 = vpop.f32.mrb[0].mxu0
  %949 = vmatprep.mubr.f32.mxu0 0.0
  %950 = vmatmul.mubr.f32.gmra.mrb[0].mxu0 %v808
  %v951 = vpop.f32.mrb[0].mxu0
  %v952 = vadd.f32 %v760, %v951
  %v953 = vpop.f32.mrb[0].mxu0
  %954 = vdwg.mxu0
  %v955 = vmax.f32 %v877, 0.0
  %v956 = vmax.f32 %v882, 0.0
  %v957 = vmax.f32 %v887, 0.0
  %v958 = vmax.f32 %v892, 0.0
  %v959 = vmax.f32 %v897, 0.0
  %v960 = vmax.f32 %v902, 0.0
  %v961 = vmax.f32 %v907, 0.0
  %v962 = vmax.f32 %v912, 0.0
  %v963 = vmax.f32 %v917, 0.0
  %v964 = vmax.f32 %v922, 0.0
  %v965 = vmax.f32 %v927, 0.0
  %v966 = vmax.f32 %v932, 0.0
  %v967 = vmax.f32 %v937, 0.0
  %v968 = vmax.f32 %v942, 0.0
  %v969 = vmax.f32 %v947, 0.0
  %v970 = vmax.f32 %v952, 0.0
  %v971 = vld [vmem:[%s7] sm:$0xff]
  %v972 = vld [vmem:[%s7 + $0x8] sm:$0xff]
  %v973 = vld [vmem:[%s7 + $0x10] sm:$0xff]
  %v974 = vld [vmem:[%s7 + $0x18] sm:$0xff]
  %v975 = vld [vmem:[%s7 + $0x20] sm:$0xff]
  %v976 = vld [vmem:[%s7 + $0x28] sm:$0xff]
  %v977 = vld [vmem:[%s7 + $0x30] sm:$0xff]
  %v978 = vld [vmem:[%s7 + $0x38] sm:$0xff]
  %v979 = vld [vmem:[%s8] sm:$0x1]
  %v981 = vlaneseq
  %v982 = vshrl.u32 %v981, 7
  %v983 = vsub.s32 0, %v982
  %v984 = vrot.slane %v979, %v983
  %vm986 = vcmask 523264
  %v988 = vsel %vm986, %v955, 0
  %v991 = vsel %vm986, %v956, 0
  %v994 = vsel %vm986, %v957, 0
  %v997 = vsel %vm986, %v958, 0
  %v1000 = vsel %vm986, %v959, 0
  %v1003 = vsel %vm986, %v960, 0
  %v1006 = vsel %vm986, %v961, 0
  %v1009 = vsel %vm986, %v962, 0
  %v1012 = vsel %vm986, %v963, 0
  %v1015 = vsel %vm986, %v964, 0
  %v1018 = vsel %vm986, %v965, 0
  %v1021 = vsel %vm986, %v966, 0
  %v1024 = vsel %vm986, %v967, 0
  %v1027 = vsel %vm986, %v968, 0
  %v1030 = vsel %vm986, %v969, 0
  %v1033 = vsel %vm986, %v970, 0
  %1035 = vmatprep.subr.mxu0 0.0
  %1036 = vmatpush1.msra.mxu0 %v971
  %1037 = vmatprep.subr.mxu0 0.0
  %1038 = vmatpush1.msra.mxu0 %v972
  %1039 = vmatprep.subr.mxu0 0.0
  %1040 = vmatpush1.msra.mxu0 %v973
  %1041 = vmatprep.subr.mxu0 0.0
  %1042 = vmatpush1.msra.mxu0 %v974
  %1043 = vmatprep.subr.mxu0 0.0
  %1044 = vmatpush1.msra.mxu0 %v975
  %1045 = vmatprep.subr.mxu0 0.0
  %1046 = vmatpush1.msra.mxu0 %v976
  %1047 = vmatprep.subr.mxu0 0.0
  %1048 = vmatpush1.msra.mxu0 %v977
  %1049 = vmatprep.subr.mxu0 0.0
  %1050 = vmatpush1.msra.mxu0 %v978
  %1051 = vmatprep.subr.mxu0 0.0
  %1052 = vmatpush1.msra.mxu0 0.0
  %1053 = vmatprep.subr.mxu0 0.0
  %1054 = vmatpush1.msra.mxu0 0.0
  %1055 = vmatprep.subr.mxu0 0.0
  %1056 = vmatpush1.msra.mxu0 0.0
  %1057 = vmatprep.subr.mxu0 0.0
  %1058 = vmatpush1.msra.mxu0 0.0
  %1059 = vmatprep.subr.mxu0 0.0
  %1060 = vmatpush1.msra.mxu0 0.0
  %1061 = vmatprep.subr.mxu0 0.0
  %1062 = vmatpush1.msra.mxu0 0.0
  %1063 = vmatprep.subr.mxu0 0.0
  %1064 = vmatpush1.msra.mxu0 0.0
  %1065 = vmatprep.subr.mxu0 0.0
  %1066 = vmatpush1.msra.mxu0 0.0
  %1067 = vmatprep.subr.mxu0 0.0
  %1068 = vmatpush1.msra.mxu0 0.0
  %1069 = vmatprep.subr.mxu0 0.0
  %1070 = vmatpush1.msra.mxu0 0.0
  %1071 = vmatprep.subr.mxu0 0.0
  %1072 = vmatpush1.msra.mxu0 0.0
  %1073 = vmatprep.subr.mxu0 0.0
  %1074 = vmatpush1.msra.mxu0 0.0
  %1075 = vmatprep.subr.mxu0 0.0
  %1076 = vmatpush1.msra.mxu0 0.0
  %1077 = vmatprep.subr.mxu0 0.0
  %1078 = vmatpush1.msra.mxu0 0.0
  %1079 = vmatprep.subr.mxu0 0.0
  %1080 = vmatpush1.msra.mxu0 0.0
  %1081 = vmatprep.subr.mxu0 0.0
  %1082 = vmatpush1.msra.mxu0 0.0
  %1083 = vmatprep.subr.mxu0 0.0
  %1084 = vmatpush1.msra.mxu0 0.0
  %1085 = vmatprep.subr.mxu0 0.0
  %1086 = vmatpush1.msra.mxu0 0.0
  %1087 = vmatprep.subr.mxu0 0.0
  %1088 = vmatpush1.msra.mxu0 0.0
  %1089 = vmatprep.subr.mxu0 0.0
  %1090 = vmatpush1.msra.mxu0 0.0
  %1091 = vmatprep.subr.mxu0 0.0
  %1092 = vmatpush1.msra.mxu0 0.0
  %1093 = vmatprep.subr.mxu0 0.0
  %1094 = vmatpush1.msra.mxu0 0.0
  %1095 = vmatprep.subr.mxu0 0.0
  %1096 = vmatpush1.msra.mxu0 0.0
  %1097 = vmatprep.subr.mxu0 0.0
  %1098 = vmatpush1.msra.mxu0 0.0
  %1099 = vmatprep.mubr.f32.mxu0 0.0
  %1100 = vmatmul.mubr.f32.gmra.mrb[0].mxu0 %v988
  %v1101 = vpop.f32.mrb[0].mxu0
  %v1102 = vadd.f32 %v984, %v1101
  %v1103 = vpop.f32.mrb[0].mxu0
  %1104 = vmatprep.mubr.f32.mxu0 0.0
  %1105 = vmatmul.mubr.f32.gmra.mrb[0].mxu0 %v991
  %v1106 = vpop.f32.mrb[0].mxu0
  %v1107 = vadd.f32 %v984, %v1106
  %v1108 = vpop.f32.mrb[0].mxu0
  %1109 = vmatprep.mubr.f32.mxu0 0.0
  %1110 = vmatmul.mubr.f32.gmra.mrb[0].mxu0 %v994
  %v1111 = vpop.f32.mrb[0].mxu0
  %v1112 = vadd.f32 %v984, %v1111
  %v1113 = vpop.f32.mrb[0].mxu0
  %1114 = vmatprep.mubr.f32.mxu0 0.0
  %1115 = vmatmul.mubr.f32.gmra.mrb[0].mxu0 %v997
  %v1116 = vpop.f32.mrb[0].mxu0
  %v1117 = vadd.f32 %v984, %v1116
  %v1118 = vpop.f32.mrb[0].mxu0
  %1119 = vmatprep.mubr.f32.mxu0 0.0
  %1120 = vmatmul.mubr.f32.gmra.mrb[0].mxu0 %v1000
  %v1121 = vpop.f32.mrb[0].mxu0
  %v1122 = vadd.f32 %v984, %v1121
  %v1123 = vpop.f32.mrb[0].mxu0
  %1124 = vmatprep.mubr.f32.mxu0 0.0
  %1125 = vmatmul.mubr.f32.gmra.mrb[0].mxu0 %v1003
  %v1126 = vpop.f32.mrb[0].mxu0
  %v1127 = vadd.f32 %v984, %v1126
  %v1128 = vpop.f32.mrb[0].mxu0
  %1129 = vmatprep.mubr.f32.mxu0 0.0
  %1130 = vmatmul.mubr.f32.gmra.mrb[0].mxu0 %v1006
  %v1131 = vpop.f32.mrb[0].mxu0
  %v1132 = vadd.f32 %v984, %v1131
  %v1133 = vpop.f32.mrb[0].mxu0
  %1134 = vmatprep.mubr.f32.mxu0 0.0
  %1135 = vmatmul.mubr.f32.gmra.mrb[0].mxu0 %v1009
  %v1136 = vpop.f32.mrb[0].mxu0
  %v1137 = vadd.f32 %v984, %v1136
  %v1138 = vpop.f32.mrb[0].mxu0
  %1139 = vmatprep.mubr.f32.mxu0 0.0
  %1140 = vmatmul.mubr.f32.gmra.mrb[0].mxu0 %v1012
  %v1141 = vpop.f32.mrb[0].mxu0
  %v1142 = vadd.f32 %v984, %v1141
  %v1143 = vpop.f32.mrb[0].mxu0
  %1144 = vmatprep.mubr.f32.mxu0 0.0
  %1145 = vmatmul.mubr.f32.gmra.mrb[0].mxu0 %v1015
  %v1146 = vpop.f32.mrb[0].mxu0
  %v1147 = vadd.f32 %v984, %v1146
  %v1148 = vpop.f32.mrb[0].mxu0
  %1149 = vmatprep.mubr.f32.mxu0 0.0
  %1150 = vmatmul.mubr.f32.gmra.mrb[0].mxu0 %v1018
  %v1151 = vpop.f32.mrb[0].mxu0
  %v1152 = vadd.f32 %v984, %v1151
  %v1153 = vpop.f32.mrb[0].mxu0
  %1154 = vmatprep.mubr.f32.mxu0 0.0
  %1155 = vmatmul.mubr.f32.gmra.mrb[0].mxu0 %v1021
  %v1156 = vpop.f32.mrb[0].mxu0
  %v1157 = vadd.f32 %v984, %v1156
  %v1158 = vpop.f32.mrb[0].mxu0
  %1159 = vmatprep.mubr.f32.mxu0 0.0
  %1160 = vmatmul.mubr.f32.gmra.mrb[0].mxu0 %v1024
  %v1161 = vpop.f32.mrb[0].mxu0
  %v1162 = vadd.f32 %v984, %v1161
  %v1163 = vpop.f32.mrb[0].mxu0
  %1164 = vmatprep.mubr.f32.mxu0 0.0
  %1165 = vmatmul.mubr.f32.gmra.mrb[0].mxu0 %v1027
  %v1166 = vpop.f32.mrb[0].mxu0
  %v1167 = vadd.f32 %v984, %v1166
  %v1168 = vpop.f32.mrb[0].mxu0
  %1169 = vmatprep.mubr.f32.mxu0 0.0
  %1170 = vmatmul.mubr.f32.gmra.mrb[0].mxu0 %v1030
  %v1171 = vpop.f32.mrb[0].mxu0
  %v1172 = vadd.f32 %v984, %v1171
  %v1173 = vpop.f32.mrb[0].mxu0
  %1174 = vmatprep.mubr.f32.mxu0 0.0
  %1175 = vmatmul.mubr.f32.gmra.mrb[0].mxu0 %v1033
  %v1176 = vpop.f32.mrb[0].mxu0
  %v1177 = vadd.f32 %v984, %v1176
  %v1178 = vpop.f32.mrb[0].mxu0
  %1179 = vdwg.mxu0
  %vm1180 = vcmask 39936
  %1181 = vst.msk [vmem:[%s9] sm:$0xff] %vm1180, %v1102
  %1182 = vst.msk [vmem:[%s9 + $0x8] sm:$0xff] %vm1180, %v1107
  %1183 = vst.msk [vmem:[%s9 + $0x10] sm:$0xff] %vm1180, %v1112
  %1184 = vst.msk [vmem:[%s9 + $0x18] sm:$0xff] %vm1180, %v1117
  %1185 = vst.msk [vmem:[%s9 + $0x20] sm:$0xff] %vm1180, %v1122
  %1186 = vst.msk [vmem:[%s9 + $0x28] sm:$0xff] %vm1180, %v1127
  %1187 = vst.msk [vmem:[%s9 + $0x30] sm:$0xff] %vm1180, %v1132
  %1188 = vst.msk [vmem:[%s9 + $0x38] sm:$0xff] %vm1180, %v1137
  %1189 = vst.msk [vmem:[%s9 + $0x40] sm:$0xff] %vm1180, %v1142
  %1190 = vst.msk [vmem:[%s9 + $0x48] sm:$0xff] %vm1180, %v1147
  %1191 = vst.msk [vmem:[%s9 + $0x50] sm:$0xff] %vm1180, %v1152
  %1192 = vst.msk [vmem:[%s9 + $0x58] sm:$0xff] %vm1180, %v1157
  %1193 = vst.msk [vmem:[%s9 + $0x60] sm:$0xff] %vm1180, %v1162
  %1194 = vst.msk [vmem:[%s9 + $0x68] sm:$0xff] %vm1180, %v1167
  %1195 = vst.msk [vmem:[%s9 + $0x70] sm:$0xff] %vm1180, %v1172
  %1196 = vst.msk [vmem:[%s9 + $0x78] sm:$0xff] %vm1180, %v1177
  // Predicated region
  $region38: #{point_vit_seg_forward.5} parent=0 // pred_check
    _
  $region39: #{point_vit_seg_forward.5} parent=0 // pred_check_branch
    %1198 = sbr.rel (0) target = $region41
  $region40: #{point_vit_seg_forward.5} parent=0 // pred_region
    _
  $region41: #{point_vit_seg_forward.5} parent=0 // pred_fallthru
    _
  // Predicated region
  $region42: #{point_vit_seg_forward.5} parent=0 // pred_check
    _
  $region43: #{point_vit_seg_forward.5} parent=0 // pred_check_branch
    %1200 = sbr.rel (0) target = $region45
  $region44: #{point_vit_seg_forward.5} parent=0 // pred_region
    _
  $region45: #{point_vit_seg_forward.5} parent=0 // pred_fallthru
    _

</llo_original>
